<compile_context>
chip_gen: v6e
topology: v6e:2x2x1
jax: 0.10.0
libtpu: 0.0.40
codegen_flags: <defaults>
</compile_context>

<pallas_src>
import functools

import jax
import jax.numpy as jnp
from jax.experimental import pallas as pl
from jax.experimental.pallas import tpu as pltpu

EPS = 1e-5
LANES = 128


def _round_up(x, m):
    return ((x + m - 1) // m) * m


# ---------------------------------------------------------------------------
# Kernel 1: 3x3 "same" conv + bias (+ optional fused input BN-apply + ReLU)
#           + fused per-step BatchNorm partial statistics.
# One batch element per grid step.
# ---------------------------------------------------------------------------
def _conv_kernel(fuse_in_bn, x_ref, *refs):
    if fuse_in_bn:
        (scale_ref, shift_ref, w_ref, b_ref,
         o_ref, sum_ref, ssq_ref, xpad_ref) = refs
    else:
        w_ref, b_ref, o_ref, sum_ref, ssq_ref, xpad_ref = refs

    H, W, Cp = o_ref.shape[1], o_ref.shape[2], o_ref.shape[3]
    Cin = x_ref.shape[3]

    x = x_ref[0].astype(jnp.float32)                        # (H, W, Cin)
    if fuse_in_bn:
        # Previous stage's folded BatchNorm + ReLU, applied on the input path.
        s = scale_ref[...].reshape(1, 1, Cin)
        t = shift_ref[...].reshape(1, 1, Cin)
        x = jnp.maximum(x * s + t, 0.0)

    # In-kernel zero halo (replaces an HBM-side jnp.pad round trip).
    xpad_ref[...] = jnp.zeros_like(xpad_ref)
    xpad_ref[1:H + 1, 1:W + 1, :] = x

    taps = [xpad_ref[kh:kh + H, kw:kw + W, :].reshape(H * W, Cin)
            for kh in range(3) for kw in range(3)]

    if Cin % LANES == 0:
        # Lane-aligned channels: one im2col matmul with K = 9*Cin.
        patches = jnp.concatenate(taps, axis=-1)            # (H*W, 9*Cin)
        acc = jnp.dot(patches, w_ref[...],
                      preferred_element_type=jnp.float32)
    else:
        # Tiny Cin (first conv): accumulate the 9 taps; compute is negligible.
        acc = jnp.zeros((H * W, Cp), jnp.float32)
        for k, tap in enumerate(taps):
            acc = acc + jnp.dot(tap, w_ref[k * Cin:(k + 1) * Cin, :],
                                preferred_element_type=jnp.float32)

    acc = acc + b_ref[...]                                  # (H*W, Cp)

    o_ref[0] = acc.reshape(H, W, Cp).astype(o_ref.dtype)
    # Fused BatchNorm partial statistics (combined over N in tiny JAX glue).
    sum_ref[0] = jnp.sum(acc, axis=0, keepdims=True)
    ssq_ref[0] = jnp.sum(acc * acc, axis=0, keepdims=True)


def _conv_stage(x_nhwc, w_mat, bias_row, scale_row=None, shift_row=None):
    """x: (N,H,W,Cin), w_mat: (9*Cin, Cp), bias_row/scale/shift: (1, Cp_or_Cin).

    Returns (y, partial_sum, partial_sumsq) with y: (N,H,W,Cp) and partial
    stats of shape (N, 1, Cp).
    """
    N, H, W, Cin = x_nhwc.shape
    K, Cp = w_mat.shape
    assert K == 9 * Cin
    fuse = scale_row is not None

    in_arrays = [x_nhwc]
    in_specs = [pl.BlockSpec((1, H, W, Cin), lambda n: (n, 0, 0, 0))]
    if fuse:
        in_arrays += [scale_row, shift_row]
        in_specs += [pl.BlockSpec((1, Cin), lambda n: (0, 0)),
                     pl.BlockSpec((1, Cin), lambda n: (0, 0))]
    in_arrays += [w_mat, bias_row]
    in_specs += [pl.BlockSpec((K, Cp), lambda n: (0, 0)),
                 pl.BlockSpec((1, Cp), lambda n: (0, 0))]

    out_shape = (jax.ShapeDtypeStruct((N, H, W, Cp), jnp.float32),
                 jax.ShapeDtypeStruct((N, 1, Cp), jnp.float32),
                 jax.ShapeDtypeStruct((N, 1, Cp), jnp.float32))
    out_specs = (pl.BlockSpec((1, H, W, Cp), lambda n: (n, 0, 0, 0)),
                 pl.BlockSpec((1, 1, Cp), lambda n: (n, 0, 0)),
                 pl.BlockSpec((1, 1, Cp), lambda n: (n, 0, 0)))

    return pl.pallas_call(
        functools.partial(_conv_kernel, fuse),
        out_shape=out_shape,
        grid=(N,),
        in_specs=in_specs,
        out_specs=out_specs,
        scratch_shapes=[pltpu.VMEM((H + 2, W + 2, Cin), jnp.float32)],
        compiler_params=pltpu.CompilerParams(
            dimension_semantics=("parallel",)),
    )(*in_arrays)


# ---------------------------------------------------------------------------
# Kernel 2: final per-channel affine (folded BatchNorm) + ReLU, lane-dense.
# ---------------------------------------------------------------------------
def _bn_relu_kernel(y_ref, scale_ref, shift_ref, o_ref):
    Cp = y_ref.shape[3]
    s = scale_ref[...].reshape(1, 1, Cp)
    t = shift_ref[...].reshape(1, 1, Cp)
    o_ref[0] = jnp.maximum(y_ref[0].astype(jnp.float32) * s + t,
                           0.0).astype(o_ref.dtype)


def _bn_relu(y_nhwc, scale_row, shift_row):
    N, H, W, Cp = y_nhwc.shape
    return pl.pallas_call(
        _bn_relu_kernel,
        out_shape=jax.ShapeDtypeStruct((N, H, W, Cp), y_nhwc.dtype),
        grid=(N,),
        in_specs=[pl.BlockSpec((1, H, W, Cp), lambda n: (n, 0, 0, 0)),
                  pl.BlockSpec((1, Cp), lambda n: (0, 0)),
                  pl.BlockSpec((1, Cp), lambda n: (0, 0))],
        out_specs=pl.BlockSpec((1, H, W, Cp), lambda n: (n, 0, 0, 0)),
        compiler_params=pltpu.CompilerParams(
            dimension_semantics=("parallel",)),
    )(y_nhwc, scale_row, shift_row)


# ---------------------------------------------------------------------------
# Tiny C-length BN combine (JAX glue on (N, 1, Cp) partials).
# ---------------------------------------------------------------------------
def _bn_fold(psum, pssq, count, gamma_p, beta_p):
    s = jnp.sum(psum, axis=(0, 1))
    q = jnp.sum(pssq, axis=(0, 1))
    mean = s / count
    var = jnp.maximum(q / count - mean * mean, 0.0)   # biased, like PyTorch train
    scale = gamma_p * jax.lax.rsqrt(var + EPS)
    shift = beta_p - mean * scale
    return scale.reshape(1, -1), shift.reshape(1, -1)


# ---------------------------------------------------------------------------
# Full DoubleConv forward (NCHW in / NCHW out, matching the nn.Module).
# ---------------------------------------------------------------------------
@jax.jit
def double_conv_forward(x_nchw, params):
    N, Cin, H, W = x_nchw.shape
    Cout = params["w1"].shape[3]
    Cp = max(LANES, _round_up(Cout, LANES))
    pc = Cp - Cout

    x = jnp.transpose(x_nchw, (0, 2, 3, 1))                 # NCHW -> NHWC

    # Parameter prep (tiny): im2col weight layout + zero-pad Cout to 128 lanes.
    w1 = jnp.pad(params["w1"].reshape(9 * Cin, Cout), ((0, 0), (0, pc)))
    b1 = jnp.pad(params["b1"], (0, pc)).reshape(1, Cp)
    g1 = jnp.pad(params["g1"], (0, pc))
    be1 = jnp.pad(params["be1"], (0, pc))
    w2 = jnp.pad(params["w2"],
                 ((0, 0), (0, 0), (0, pc), (0, pc))).reshape(9 * Cp, Cp)
    b2 = jnp.pad(params["b2"], (0, pc)).reshape(1, Cp)
    g2 = jnp.pad(params["g2"], (0, pc))
    be2 = jnp.pad(params["be2"], (0, pc))

    cnt = float(N * H * W)

    # Stage 1: conv1 + fused BN1 partial stats.
    y1, s1, q1 = _conv_stage(x, w1, b1)
    sc1, sh1 = _bn_fold(s1, q1, cnt, g1, be1)
    # Stage 2: BN1-apply + ReLU fused into conv2's input, + BN2 partial stats.
    y2, s2, q2 = _conv_stage(y1, w2, b2, sc1, sh1)
    sc2, sh2 = _bn_fold(s2, q2, cnt, g2, be2)
    # Final BN2-apply + ReLU (lane-dense, padded channels stay zero).
    out_p = _bn_relu(y2, sc2, sh2)

    return jnp.transpose(out_p[..., :Cout], (0, 3, 1, 2))   # NHWC -> NCHW


# ---------------------------------------------------------------------------
# Pure-JAX reference (NCHW, same math) for correctness check.
# ---------------------------------------------------------------------------
def _ref_stage(x, w_oihw, b, g, be):
    y = jax.lax.conv_general_dilated(
        x, w_oihw, window_strides=(1, 1), padding="SAME",
        dimension_numbers=("NCHW", "OIHW", "NCHW"))
    y = y + b[None, :, None, None]
    mean = jnp.mean(y, axis=(0, 2, 3))
    var = jnp.var(y, axis=(0, 2, 3))
    yh = (y - mean[None, :, None, None]) \
        * jax.lax.rsqrt(var + EPS)[None, :, None, None]
    return jnp.maximum(yh * g[None, :, None, None] + be[None, :, None, None], 0.0)


def ref_double_conv(x_nchw, params):
    w1 = jnp.transpose(params["w1"], (3, 2, 0, 1))  # HWIO -> OIHW
    w2 = jnp.transpose(params["w2"], (3, 2, 0, 1))
    x = _ref_stage(x_nchw, w1, params["b1"], params["g1"], params["be1"])
    return _ref_stage(x, w2, params["b2"], params["g2"], params["be2"])


# ---------------------------------------------------------------------------
if __name__ == "__main__":
    key = jax.random.PRNGKey(0)
    N, Cin, Cout, H, W = 2, 4, 8, 16, 16

    ks = jax.random.split(key, 9)
    x = jax.random.normal(ks[0], (N, Cin, H, W), jnp.float32)

    # Deterministic synthetic parameters (shapes follow nn.Conv2d / BatchNorm2d).
    params = {
        "w1": 0.1 * jax.random.normal(ks[1], (3, 3, Cin, Cout), jnp.float32),   # HWIO
        "b1": 0.1 * jax.random.normal(ks[2], (Cout,), jnp.float32),
        "g1": 1.0 + 0.1 * jax.random.normal(ks[3], (Cout,), jnp.float32),
        "be1": 0.1 * jax.random.normal(ks[4], (Cout,), jnp.float32),
        "w2": 0.1 * jax.random.normal(ks[5], (3, 3, Cout, Cout), jnp.float32),  # HWIO
        "b2": 0.1 * jax.random.normal(ks[6], (Cout,), jnp.float32),
        "g2": 1.0 + 0.1 * jax.random.normal(ks[7], (Cout,), jnp.float32),
        "be2": 0.1 * jax.random.normal(ks[8], (Cout,), jnp.float32),
    }
    # TODO(synk): nn.Dropout(0.1) branch (dropout=True) not implemented; module
    # default dropout=False so this forward path is complete.  BN running
    # stats (buffers) are not updated; forward output is unaffected.

    out = jax.block_until_ready(double_conv_forward(x, params))
    ref = jax.block_until_ready(ref_double_conv(x, params))

    assert out.shape == (N, Cout, H, W), out.shape
    err = float(jnp.max(jnp.abs(out - ref)))
    assert jnp.allclose(out, ref, atol=1e-4, rtol=1e-4), err

    print("KERNEL_OK")
</pallas_src>

<mosaic_0001>
module attributes {stable_mosaic.version = 11 : i64} {
  func.func @_bn_relu_kernel(%arg0: i32, %arg1: memref<1x16x16x128xf32, #tpu.memory_space<vmem>>, %arg2: memref<1x128xf32, #tpu.memory_space<vmem>>, %arg3: memref<1x128xf32, #tpu.memory_space<vmem>>, %arg4: memref<1x16x16x128xf32, #tpu.memory_space<vmem>>) attributes {dimension_semantics = [#tpu.dimension_semantics<parallel>], iteration_bounds = array<i64: 2>, scalar_prefetch = 0 : i64, scratch_operands = 0 : i64, tpu.core_type = #tpu.core_type<tc>, window_params = [{transform_indices = @transform_0, window_bounds = array<i64: 1, 16, 16, 128>}, {pipeline_mode = #tpu.pipeline_mode<synchronous>, transform_indices = @transform_1, window_bounds = array<i64: 1, 128>}, {pipeline_mode = #tpu.pipeline_mode<synchronous>, transform_indices = @transform_2, window_bounds = array<i64: 1, 128>}, {transform_indices = @transform_3, window_bounds = array<i64: 1, 16, 16, 128>}]} {
    %c0 = arith.constant 0 : index
    %c0_0 = arith.constant 0 : index
    %0 = vector.load %arg2[%c0, %c0_0] : memref<1x128xf32, #tpu.memory_space<vmem>>, vector<1x128xf32>
    %1 = vector.shape_cast %0 : vector<1x128xf32> to vector<1x1x128xf32>
    %c0_1 = arith.constant 0 : index
    %c0_2 = arith.constant 0 : index
    %2 = vector.load %arg3[%c0_1, %c0_2] : memref<1x128xf32, #tpu.memory_space<vmem>>, vector<1x128xf32>
    %3 = vector.shape_cast %2 : vector<1x128xf32> to vector<1x1x128xf32>
    %c0_3 = arith.constant 0 : index
    %c0_4 = arith.constant 0 : index
    %c0_5 = arith.constant 0 : index
    %c0_6 = arith.constant 0 : index
    %4 = vector.load %arg1[%c0_3, %c0_4, %c0_5, %c0_6] : memref<1x16x16x128xf32, #tpu.memory_space<vmem>>, vector<1x16x16x128xf32>
    %5 = vector.shape_cast %4 : vector<1x16x16x128xf32> to vector<16x16x128xf32>
    %6 = vector.broadcast %1 : vector<1x1x128xf32> to vector<16x16x128xf32>
    %7 = arith.mulf %5, %6 : vector<16x16x128xf32>
    %8 = vector.broadcast %3 : vector<1x1x128xf32> to vector<16x16x128xf32>
    %9 = arith.addf %7, %8 : vector<16x16x128xf32>
    %cst = arith.constant 0.000000e+00 : f32
    %10 = vector.broadcast %cst : f32 to vector<16x16x128xf32>
    %11 = arith.maximumf %9, %10 : vector<16x16x128xf32>
    %c0_7 = arith.constant 0 : index
    %c0_8 = arith.constant 0 : index
    %c0_9 = arith.constant 0 : index
    %c0_10 = arith.constant 0 : index
    %12 = vector.load %arg4[%c0_7, %c0_8, %c0_9, %c0_10] : memref<1x16x16x128xf32, #tpu.memory_space<vmem>>, vector<1x16x16x128xf32>
    %13 = vector.shape_cast %12 : vector<1x16x16x128xf32> to vector<16x16x128xf32>
    %14 = vector.shape_cast %11 : vector<16x16x128xf32> to vector<1x16x16x128xf32>
    tpu.vector_store %arg4[%c0_7, %c0_8, %c0_9, %c0_10], %14 {strides = array<i32>} : memref<1x16x16x128xf32, #tpu.memory_space<vmem>>, vector<1x16x16x128xf32>,
    return
  }
  func.func @transform_0(%arg0: i32) -> (i32, i32, i32, i32) {
    %c0_i32 = arith.constant 0 : i32
    %c0_i32_0 = arith.constant 0 : i32
    %c0_i32_1 = arith.constant 0 : i32
    %c0_i32_2 = arith.constant 0 : i32
    return %arg0, %c0_i32, %c0_i32_0, %c0_i32_1 : i32, i32, i32, i32
  }
  func.func @transform_1(%arg0: i32) -> (i32, i32) {
    %c0_i32 = arith.constant 0 : i32
    %c0_i32_0 = arith.constant 0 : i32
    %c0_i32_1 = arith.constant 0 : i32
    return %c0_i32, %c0_i32_0 : i32, i32
  }
  func.func @transform_2(%arg0: i32) -> (i32, i32) {
    %c0_i32 = arith.constant 0 : i32
    %c0_i32_0 = arith.constant 0 : i32
    %c0_i32_1 = arith.constant 0 : i32
    return %c0_i32, %c0_i32_0 : i32, i32
  }
  func.func @transform_3(%arg0: i32) -> (i32, i32, i32, i32) {
    %c0_i32 = arith.constant 0 : i32
    %c0_i32_0 = arith.constant 0 : i32
    %c0_i32_1 = arith.constant 0 : i32
    %c0_i32_2 = arith.constant 0 : i32
    return %arg0, %c0_i32, %c0_i32_0, %c0_i32_1 : i32, i32, i32, i32
  }
}

module attributes {stable_mosaic.version = 11 : i64} {
  func.func @_conv_kernel(%arg0: i32, %arg1: memref<1x16x16x4xf32, #tpu.memory_space<vmem>>, %arg2: memref<36x128xf32, #tpu.memory_space<vmem>>, %arg3: memref<1x128xf32, #tpu.memory_space<vmem>>, %arg4: memref<1x16x16x128xf32, #tpu.memory_space<vmem>>, %arg5: memref<1x1x128xf32, #tpu.memory_space<vmem>>, %arg6: memref<1x1x128xf32, #tpu.memory_space<vmem>>, %arg7: memref<18x18x4xf32, #tpu.memory_space<vmem>>) attributes {dimension_semantics = [#tpu.dimension_semantics<parallel>], iteration_bounds = array<i64: 2>, scalar_prefetch = 0 : i64, scratch_operands = 1 : i64, tpu.core_type = #tpu.core_type<tc>, window_params = [{transform_indices = @transform_0, window_bounds = array<i64: 1, 16, 16, 4>}, {pipeline_mode = #tpu.pipeline_mode<synchronous>, transform_indices = @transform_1, window_bounds = array<i64: 36, 128>}, {pipeline_mode = #tpu.pipeline_mode<synchronous>, transform_indices = @transform_2, window_bounds = array<i64: 1, 128>}, {transform_indices = @transform_3, window_bounds = array<i64: 1, 16, 16, 128>}, {transform_indices = @transform_4, window_bounds = array<i64: 1, 1, 128>}, {transform_indices = @transform_5, window_bounds = array<i64: 1, 1, 128>}]} {
    %c0 = arith.constant 0 : index
    %c0_0 = arith.constant 0 : index
    %c0_1 = arith.constant 0 : index
    %c0_2 = arith.constant 0 : index
    %0 = vector.load %arg1[%c0, %c0_0, %c0_1, %c0_2] : memref<1x16x16x4xf32, #tpu.memory_space<vmem>>, vector<1x16x16x4xf32>
    %1 = vector.shape_cast %0 : vector<1x16x16x4xf32> to vector<16x16x4xf32>
    %cst = arith.constant 0.000000e+00 : f32
    %2 = vector.broadcast %cst : f32 to vector<18x18x4xf32>
    %c0_3 = arith.constant 0 : index
    %c0_4 = arith.constant 0 : index
    %c0_5 = arith.constant 0 : index
    %3 = vector.load %arg7[%c0_3, %c0_4, %c0_5] : memref<18x18x4xf32, #tpu.memory_space<vmem>>, vector<18x18x4xf32>
    tpu.vector_store %arg7[%c0_3, %c0_4, %c0_5], %2 {strides = array<i32>} : memref<18x18x4xf32, #tpu.memory_space<vmem>>, vector<18x18x4xf32>,
    %c1 = arith.constant 1 : index
    %c1_6 = arith.constant 1 : index
    %c0_7 = arith.constant 0 : index
    %4 = vector.load %arg7[%c1, %c1_6, %c0_7] : memref<18x18x4xf32, #tpu.memory_space<vmem>>, vector<16x16x4xf32>
    tpu.vector_store %arg7[%c1, %c1_6, %c0_7], %1 {strides = array<i32>} : memref<18x18x4xf32, #tpu.memory_space<vmem>>, vector<16x16x4xf32>,
    %c0_8 = arith.constant 0 : index
    %c0_9 = arith.constant 0 : index
    %c0_10 = arith.constant 0 : index
    %5 = vector.load %arg7[%c0_8, %c0_9, %c0_10] : memref<18x18x4xf32, #tpu.memory_space<vmem>>, vector<16x16x4xf32>
    %6 = vector.shape_cast %5 : vector<16x16x4xf32> to vector<256x4xf32>
    %c0_11 = arith.constant 0 : index
    %c1_12 = arith.constant 1 : index
    %c0_13 = arith.constant 0 : index
    %7 = vector.load %arg7[%c0_11, %c1_12, %c0_13] : memref<18x18x4xf32, #tpu.memory_space<vmem>>, vector<16x16x4xf32>
    %8 = vector.shape_cast %7 : vector<16x16x4xf32> to vector<256x4xf32>
    %c0_14 = arith.constant 0 : index
    %c2 = arith.constant 2 : index
    %c0_15 = arith.constant 0 : index
    %9 = vector.load %arg7[%c0_14, %c2, %c0_15] : memref<18x18x4xf32, #tpu.memory_space<vmem>>, vector<16x16x4xf32>
    %10 = vector.shape_cast %9 : vector<16x16x4xf32> to vector<256x4xf32>
    %c1_16 = arith.constant 1 : index
    %c0_17 = arith.constant 0 : index
    %c0_18 = arith.constant 0 : index
    %11 = vector.load %arg7[%c1_16, %c0_17, %c0_18] : memref<18x18x4xf32, #tpu.memory_space<vmem>>, vector<16x16x4xf32>
    %12 = vector.shape_cast %11 : vector<16x16x4xf32> to vector<256x4xf32>
    %c1_19 = arith.constant 1 : index
    %c1_20 = arith.constant 1 : index
    %c0_21 = arith.constant 0 : index
    %13 = vector.load %arg7[%c1_19, %c1_20, %c0_21] : memref<18x18x4xf32, #tpu.memory_space<vmem>>, vector<16x16x4xf32>
    %14 = vector.shape_cast %13 : vector<16x16x4xf32> to vector<256x4xf32>
    %c1_22 = arith.constant 1 : index
    %c2_23 = arith.constant 2 : index
    %c0_24 = arith.constant 0 : index
    %15 = vector.load %arg7[%c1_22, %c2_23, %c0_24] : memref<18x18x4xf32, #tpu.memory_space<vmem>>, vector<16x16x4xf32>
    %16 = vector.shape_cast %15 : vector<16x16x4xf32> to vector<256x4xf32>
    %c2_25 = arith.constant 2 : index
    %c0_26 = arith.constant 0 : index
    %c0_27 = arith.constant 0 : index
    %17 = vector.load %arg7[%c2_25, %c0_26, %c0_27] : memref<18x18x4xf32, #tpu.memory_space<vmem>>, vector<16x16x4xf32>
    %18 = vector.shape_cast %17 : vector<16x16x4xf32> to vector<256x4xf32>
    %c2_28 = arith.constant 2 : index
    %c1_29 = arith.constant 1 : index
    %c0_30 = arith.constant 0 : index
    %19 = vector.load %arg7[%c2_28, %c1_29, %c0_30] : memref<18x18x4xf32, #tpu.memory_space<vmem>>, vector<16x16x4xf32>
    %20 = vector.shape_cast %19 : vector<16x16x4xf32> to vector<256x4xf32>
    %c2_31 = arith.constant 2 : index
    %c2_32 = arith.constant 2 : index
    %c0_33 = arith.constant 0 : index
    %21 = vector.load %arg7[%c2_31, %c2_32, %c0_33] : memref<18x18x4xf32, #tpu.memory_space<vmem>>, vector<16x16x4xf32>
    %22 = vector.shape_cast %21 : vector<16x16x4xf32> to vector<256x4xf32>
    %cst_34 = arith.constant 0.000000e+00 : f32
    %23 = vector.broadcast %cst_34 : f32 to vector<256x128xf32>
    %c0_35 = arith.constant 0 : index
    %c0_36 = arith.constant 0 : index
    %24 = vector.load %arg2[%c0_35, %c0_36] : memref<36x128xf32, #tpu.memory_space<vmem>>, vector<4x128xf32>
    %cst_37 = arith.constant dense<0.000000e+00> : vector<256x128xf32>
    %25 = tpu.matmul %6, %24, %cst_37 {dimension_numbers = #tpu.dot_dimension_numbers<[1], [0], [0], [1], [0, 0, 1, 1], [], []>} : vector<256x4xf32>, vector<4x128xf32>, vector<256x128xf32> -> vector<256x128xf32>
    %26 = arith.addf %23, %25 : vector<256x128xf32>
    %c4 = arith.constant 4 : index
    %c0_38 = arith.constant 0 : index
    %27 = vector.load %arg2[%c4, %c0_38] : memref<36x128xf32, #tpu.memory_space<vmem>>, vector<4x128xf32>
    %cst_39 = arith.constant dense<0.000000e+00> : vector<256x128xf32>
    %28 = tpu.matmul %8, %27, %cst_39 {dimension_numbers = #tpu.dot_dimension_numbers<[1], [0], [0], [1], [0, 0, 1, 1], [], []>} : vector<256x4xf32>, vector<4x128xf32>, vector<256x128xf32> -> vector<256x128xf32>
    %29 = arith.addf %26, %28 : vector<256x128xf32>
    %c8 = arith.constant 8 : index
    %c0_40 = arith.constant 0 : index
    %30 = vector.load %arg2[%c8, %c0_40] : memref<36x128xf32, #tpu.memory_space<vmem>>, vector<4x128xf32>
    %cst_41 = arith.constant dense<0.000000e+00> : vector<256x128xf32>
    %31 = tpu.matmul %10, %30, %cst_41 {dimension_numbers = #tpu.dot_dimension_numbers<[1], [0], [0], [1], [0, 0, 1, 1], [], []>} : vector<256x4xf32>, vector<4x128xf32>, vector<256x128xf32> -> vector<256x128xf32>
    %32 = arith.addf %29, %31 : vector<256x128xf32>
    %c12 = arith.constant 12 : index
    %c0_42 = arith.constant 0 : index
    %33 = vector.load %arg2[%c12, %c0_42] : memref<36x128xf32, #tpu.memory_space<vmem>>, vector<4x128xf32>
    %cst_43 = arith.constant dense<0.000000e+00> : vector<256x128xf32>
    %34 = tpu.matmul %12, %33, %cst_43 {dimension_numbers = #tpu.dot_dimension_numbers<[1], [0], [0], [1], [0, 0, 1, 1], [], []>} : vector<256x4xf32>, vector<4x128xf32>, vector<256x128xf32> -> vector<256x128xf32>
    %35 = arith.addf %32, %34 : vector<256x128xf32>
    %c16 = arith.constant 16 : index
    %c0_44 = arith.constant 0 : index
    %36 = vector.load %arg2[%c16, %c0_44] : memref<36x128xf32, #tpu.memory_space<vmem>>, vector<4x128xf32>
    %cst_45 = arith.constant dense<0.000000e+00> : vector<256x128xf32>
    %37 = tpu.matmul %14, %36, %cst_45 {dimension_numbers = #tpu.dot_dimension_numbers<[1], [0], [0], [1], [0, 0, 1, 1], [], []>} : vector<256x4xf32>, vector<4x128xf32>, vector<256x128xf32> -> vector<256x128xf32>
    %38 = arith.addf %35, %37 : vector<256x128xf32>
    %c20 = arith.constant 20 : index
    %c0_46 = arith.constant 0 : index
    %39 = vector.load %arg2[%c20, %c0_46] : memref<36x128xf32, #tpu.memory_space<vmem>>, vector<4x128xf32>
    %cst_47 = arith.constant dense<0.000000e+00> : vector<256x128xf32>
    %40 = tpu.matmul %16, %39, %cst_47 {dimension_numbers = #tpu.dot_dimension_numbers<[1], [0], [0], [1], [0, 0, 1, 1], [], []>} : vector<256x4xf32>, vector<4x128xf32>, vector<256x128xf32> -> vector<256x128xf32>
    %41 = arith.addf %38, %40 : vector<256x128xf32>
    %c24 = arith.constant 24 : index
    %c0_48 = arith.constant 0 : index
    %42 = vector.load %arg2[%c24, %c0_48] : memref<36x128xf32, #tpu.memory_space<vmem>>, vector<4x128xf32>
    %cst_49 = arith.constant dense<0.000000e+00> : vector<256x128xf32>
    %43 = tpu.matmul %18, %42, %cst_49 {dimension_numbers = #tpu.dot_dimension_numbers<[1], [0], [0], [1], [0, 0, 1, 1], [], []>} : vector<256x4xf32>, vector<4x128xf32>, vector<256x128xf32> -> vector<256x128xf32>
    %44 = arith.addf %41, %43 : vector<256x128xf32>
    %c28 = arith.constant 28 : index
    %c0_50 = arith.constant 0 : index
    %45 = vector.load %arg2[%c28, %c0_50] : memref<36x128xf32, #tpu.memory_space<vmem>>, vector<4x128xf32>
    %cst_51 = arith.constant dense<0.000000e+00> : vector<256x128xf32>
    %46 = tpu.matmul %20, %45, %cst_51 {dimension_numbers = #tpu.dot_dimension_numbers<[1], [0], [0], [1], [0, 0, 1, 1], [], []>} : vector<256x4xf32>, vector<4x128xf32>, vector<256x128xf32> -> vector<256x128xf32>
    %47 = arith.addf %44, %46 : vector<256x128xf32>
    %c32 = arith.constant 32 : index
    %c0_52 = arith.constant 0 : index
    %48 = vector.load %arg2[%c32, %c0_52] : memref<36x128xf32, #tpu.memory_space<vmem>>, vector<4x128xf32>
    %cst_53 = arith.constant dense<0.000000e+00> : vector<256x128xf32>
    %49 = tpu.matmul %22, %48, %cst_53 {dimension_numbers = #tpu.dot_dimension_numbers<[1], [0], [0], [1], [0, 0, 1, 1], [], []>} : vector<256x4xf32>, vector<4x128xf32>, vector<256x128xf32> -> vector<256x128xf32>
    %50 = arith.addf %47, %49 : vector<256x128xf32>
    %c0_54 = arith.constant 0 : index
    %c0_55 = arith.constant 0 : index
    %51 = vector.load %arg3[%c0_54, %c0_55] : memref<1x128xf32, #tpu.memory_space<vmem>>, vector<1x128xf32>
    %52 = vector.broadcast %51 : vector<1x128xf32> to vector<256x128xf32>
    %53 = arith.addf %50, %52 : vector<256x128xf32>
    %54 = vector.shape_cast %53 : vector<256x128xf32> to vector<16x16x128xf32>
    %c0_56 = arith.constant 0 : index
    %c0_57 = arith.constant 0 : index
    %c0_58 = arith.constant 0 : index
    %c0_59 = arith.constant 0 : index
    %55 = vector.load %arg4[%c0_56, %c0_57, %c0_58, %c0_59] : memref<1x16x16x128xf32, #tpu.memory_space<vmem>>, vector<1x16x16x128xf32>
    %56 = vector.shape_cast %55 : vector<1x16x16x128xf32> to vector<16x16x128xf32>
    %57 = vector.shape_cast %54 : vector<16x16x128xf32> to vector<1x16x16x128xf32>
    tpu.vector_store %arg4[%c0_56, %c0_57, %c0_58, %c0_59], %57 {strides = array<i32>} : memref<1x16x16x128xf32, #tpu.memory_space<vmem>>, vector<1x16x16x128xf32>,
    %cst_60 = arith.constant dense<0.000000e+00> : vector<128xf32>
    %58 = vector.multi_reduction <add>, %53, %cst_60 [0] : vector<256x128xf32> to vector<128xf32>
    %59 = vector.shape_cast %58 : vector<128xf32> to vector<1x128xf32>
    %c0_61 = arith.constant 0 : index
    %c0_62 = arith.constant 0 : index
    %c0_63 = arith.constant 0 : index
    %60 = vector.load %arg5[%c0_61, %c0_62, %c0_63] : memref<1x1x128xf32, #tpu.memory_space<vmem>>, vector<1x1x128xf32>
    %61 = vector.shape_cast %60 : vector<1x1x128xf32> to vector<1x128xf32>
    %62 = vector.shape_cast %59 : vector<1x128xf32> to vector<1x1x128xf32>
    tpu.vector_store %arg5[%c0_61, %c0_62, %c0_63], %62 {strides = array<i32>} : memref<1x1x128xf32, #tpu.memory_space<vmem>>, vector<1x1x128xf32>,
    %63 = arith.mulf %53, %53 : vector<256x128xf32>
    %cst_64 = arith.constant dense<0.000000e+00> : vector<128xf32>
    %64 = vector.multi_reduction <add>, %63, %cst_64 [0] : vector<256x128xf32> to vector<128xf32>
    %65 = vector.shape_cast %64 : vector<128xf32> to vector<1x128xf32>
    %c0_65 = arith.constant 0 : index
    %c0_66 = arith.constant 0 : index
    %c0_67 = arith.constant 0 : index
    %66 = vector.load %arg6[%c0_65, %c0_66, %c0_67] : memref<1x1x128xf32, #tpu.memory_space<vmem>>, vector<1x1x128xf32>
    %67 = vector.shape_cast %66 : vector<1x1x128xf32> to vector<1x128xf32>
    %68 = vector.shape_cast %65 : vector<1x128xf32> to vector<1x1x128xf32>
    tpu.vector_store %arg6[%c0_65, %c0_66, %c0_67], %68 {strides = array<i32>} : memref<1x1x128xf32, #tpu.memory_space<vmem>>, vector<1x1x128xf32>,
    return
  }
  func.func @transform_0(%arg0: i32) -> (i32, i32, i32, i32) {
    %c0_i32 = arith.constant 0 : i32
    %c0_i32_0 = arith.constant 0 : i32
    %c0_i32_1 = arith.constant 0 : i32
    %c0_i32_2 = arith.constant 0 : i32
    return %arg0, %c0_i32, %c0_i32_0, %c0_i32_1 : i32, i32, i32, i32
  }
  func.func @transform_1(%arg0: i32) -> (i32, i32) {
    %c0_i32 = arith.constant 0 : i32
    %c0_i32_0 = arith.constant 0 : i32
    %c0_i32_1 = arith.constant 0 : i32
    return %c0_i32, %c0_i32_0 : i32, i32
  }
  func.func @transform_2(%arg0: i32) -> (i32, i32) {
    %c0_i32 = arith.constant 0 : i32
    %c0_i32_0 = arith.constant 0 : i32
    %c0_i32_1 = arith.constant 0 : i32
    return %c0_i32, %c0_i32_0 : i32, i32
  }
  func.func @transform_3(%arg0: i32) -> (i32, i32, i32, i32) {
    %c0_i32 = arith.constant 0 : i32
    %c0_i32_0 = arith.constant 0 : i32
    %c0_i32_1 = arith.constant 0 : i32
    %c0_i32_2 = arith.constant 0 : i32
    return %arg0, %c0_i32, %c0_i32_0, %c0_i32_1 : i32, i32, i32, i32
  }
  func.func @transform_4(%arg0: i32) -> (i32, i32, i32) {
    %c0_i32 = arith.constant 0 : i32
    %c0_i32_0 = arith.constant 0 : i32
    %c0_i32_1 = arith.constant 0 : i32
    return %arg0, %c0_i32, %c0_i32_0 : i32, i32, i32
  }
  func.func @transform_5(%arg0: i32) -> (i32, i32, i32) {
    %c0_i32 = arith.constant 0 : i32
    %c0_i32_0 = arith.constant 0 : i32
    %c0_i32_1 = arith.constant 0 : i32
    return %arg0, %c0_i32, %c0_i32_0 : i32, i32, i32
  }
}

module attributes {stable_mosaic.version = 11 : i64} {
  func.func @_conv_kernel(%arg0: i32, %arg1: memref<1x16x16x128xf32, #tpu.memory_space<vmem>>, %arg2: memref<1x128xf32, #tpu.memory_space<vmem>>, %arg3: memref<1x128xf32, #tpu.memory_space<vmem>>, %arg4: memref<1152x128xf32, #tpu.memory_space<vmem>>, %arg5: memref<1x128xf32, #tpu.memory_space<vmem>>, %arg6: memref<1x16x16x128xf32, #tpu.memory_space<vmem>>, %arg7: memref<1x1x128xf32, #tpu.memory_space<vmem>>, %arg8: memref<1x1x128xf32, #tpu.memory_space<vmem>>, %arg9: memref<18x18x128xf32, #tpu.memory_space<vmem>>) attributes {dimension_semantics = [#tpu.dimension_semantics<parallel>], iteration_bounds = array<i64: 2>, scalar_prefetch = 0 : i64, scratch_operands = 1 : i64, tpu.core_type = #tpu.core_type<tc>, window_params = [{transform_indices = @transform_0, window_bounds = array<i64: 1, 16, 16, 128>}, {pipeline_mode = #tpu.pipeline_mode<synchronous>, transform_indices = @transform_1, window_bounds = array<i64: 1, 128>}, {pipeline_mode = #tpu.pipeline_mode<synchronous>, transform_indices = @transform_2, window_bounds = array<i64: 1, 128>}, {pipeline_mode = #tpu.pipeline_mode<synchronous>, transform_indices = @transform_3, window_bounds = array<i64: 1152, 128>}, {pipeline_mode = #tpu.pipeline_mode<synchronous>, transform_indices = @transform_4, window_bounds = array<i64: 1, 128>}, {transform_indices = @transform_5, window_bounds = array<i64: 1, 16, 16, 128>}, {transform_indices = @transform_6, window_bounds = array<i64: 1, 1, 128>}, {transform_indices = @transform_7, window_bounds = array<i64: 1, 1, 128>}]} {
    %c0 = arith.constant 0 : index
    %c0_0 = arith.constant 0 : index
    %c0_1 = arith.constant 0 : index
    %c0_2 = arith.constant 0 : index
    %0 = vector.load %arg1[%c0, %c0_0, %c0_1, %c0_2] : memref<1x16x16x128xf32, #tpu.memory_space<vmem>>, vector<1x16x16x128xf32>
    %1 = vector.shape_cast %0 : vector<1x16x16x128xf32> to vector<16x16x128xf32>
    %c0_3 = arith.constant 0 : index
    %c0_4 = arith.constant 0 : index
    %2 = vector.load %arg2[%c0_3, %c0_4] : memref<1x128xf32, #tpu.memory_space<vmem>>, vector<1x128xf32>
    %3 = vector.shape_cast %2 : vector<1x128xf32> to vector<1x1x128xf32>
    %c0_5 = arith.constant 0 : index
    %c0_6 = arith.constant 0 : index
    %4 = vector.load %arg3[%c0_5, %c0_6] : memref<1x128xf32, #tpu.memory_space<vmem>>, vector<1x128xf32>
    %5 = vector.shape_cast %4 : vector<1x128xf32> to vector<1x1x128xf32>
    %6 = vector.broadcast %3 : vector<1x1x128xf32> to vector<16x16x128xf32>
    %7 = arith.mulf %1, %6 : vector<16x16x128xf32>
    %8 = vector.broadcast %5 : vector<1x1x128xf32> to vector<16x16x128xf32>
    %9 = arith.addf %7, %8 : vector<16x16x128xf32>
    %cst = arith.constant 0.000000e+00 : f32
    %10 = vector.broadcast %cst : f32 to vector<16x16x128xf32>
    %11 = arith.maximumf %9, %10 : vector<16x16x128xf32>
    %cst_7 = arith.constant 0.000000e+00 : f32
    %12 = vector.broadcast %cst_7 : f32 to vector<18x18x128xf32>
    %c0_8 = arith.constant 0 : index
    %c0_9 = arith.constant 0 : index
    %c0_10 = arith.constant 0 : index
    %13 = vector.load %arg9[%c0_8, %c0_9, %c0_10] : memref<18x18x128xf32, #tpu.memory_space<vmem>>, vector<18x18x128xf32>
    tpu.vector_store %arg9[%c0_8, %c0_9, %c0_10], %12 {strides = array<i32>} : memref<18x18x128xf32, #tpu.memory_space<vmem>>, vector<18x18x128xf32>,
    %c1 = arith.constant 1 : index
    %c1_11 = arith.constant 1 : index
    %c0_12 = arith.constant 0 : index
    %14 = vector.load %arg9[%c1, %c1_11, %c0_12] : memref<18x18x128xf32, #tpu.memory_space<vmem>>, vector<16x16x128xf32>
    tpu.vector_store %arg9[%c1, %c1_11, %c0_12], %11 {strides = array<i32>} : memref<18x18x128xf32, #tpu.memory_space<vmem>>, vector<16x16x128xf32>,
    %c0_13 = arith.constant 0 : index
    %c0_14 = arith.constant 0 : index
    %c0_15 = arith.constant 0 : index
    %15 = vector.load %arg9[%c0_13, %c0_14, %c0_15] : memref<18x18x128xf32, #tpu.memory_space<vmem>>, vector<16x16x128xf32>
    %16 = vector.shape_cast %15 : vector<16x16x128xf32> to vector<256x128xf32>
    %c0_16 = arith.constant 0 : index
    %c1_17 = arith.constant 1 : index
    %c0_18 = arith.constant 0 : index
    %17 = vector.load %arg9[%c0_16, %c1_17, %c0_18] : memref<18x18x128xf32, #tpu.memory_space<vmem>>, vector<16x16x128xf32>
    %18 = vector.shape_cast %17 : vector<16x16x128xf32> to vector<256x128xf32>
    %c0_19 = arith.constant 0 : index
    %c2 = arith.constant 2 : index
    %c0_20 = arith.constant 0 : index
    %19 = vector.load %arg9[%c0_19, %c2, %c0_20] : memref<18x18x128xf32, #tpu.memory_space<vmem>>, vector<16x16x128xf32>
    %20 = vector.shape_cast %19 : vector<16x16x128xf32> to vector<256x128xf32>
    %c1_21 = arith.constant 1 : index
    %c0_22 = arith.constant 0 : index
    %c0_23 = arith.constant 0 : index
    %21 = vector.load %arg9[%c1_21, %c0_22, %c0_23] : memref<18x18x128xf32, #tpu.memory_space<vmem>>, vector<16x16x128xf32>
    %22 = vector.shape_cast %21 : vector<16x16x128xf32> to vector<256x128xf32>
    %c1_24 = arith.constant 1 : index
    %c1_25 = arith.constant 1 : index
    %c0_26 = arith.constant 0 : index
    %23 = vector.load %arg9[%c1_24, %c1_25, %c0_26] : memref<18x18x128xf32, #tpu.memory_space<vmem>>, vector<16x16x128xf32>
    %24 = vector.shape_cast %23 : vector<16x16x128xf32> to vector<256x128xf32>
    %c1_27 = arith.constant 1 : index
    %c2_28 = arith.constant 2 : index
    %c0_29 = arith.constant 0 : index
    %25 = vector.load %arg9[%c1_27, %c2_28, %c0_29] : memref<18x18x128xf32, #tpu.memory_space<vmem>>, vector<16x16x128xf32>
    %26 = vector.shape_cast %25 : vector<16x16x128xf32> to vector<256x128xf32>
    %c2_30 = arith.constant 2 : index
    %c0_31 = arith.constant 0 : index
    %c0_32 = arith.constant 0 : index
    %27 = vector.load %arg9[%c2_30, %c0_31, %c0_32] : memref<18x18x128xf32, #tpu.memory_space<vmem>>, vector<16x16x128xf32>
    %28 = vector.shape_cast %27 : vector<16x16x128xf32> to vector<256x128xf32>
    %c2_33 = arith.constant 2 : index
    %c1_34 = arith.constant 1 : index
    %c0_35 = arith.constant 0 : index
    %29 = vector.load %arg9[%c2_33, %c1_34, %c0_35] : memref<18x18x128xf32, #tpu.memory_space<vmem>>, vector<16x16x128xf32>
    %30 = vector.shape_cast %29 : vector<16x16x128xf32> to vector<256x128xf32>
    %c2_36 = arith.constant 2 : index
    %c2_37 = arith.constant 2 : index
    %c0_38 = arith.constant 0 : index
    %31 = vector.load %arg9[%c2_36, %c2_37, %c0_38] : memref<18x18x128xf32, #tpu.memory_space<vmem>>, vector<16x16x128xf32>
    %32 = vector.shape_cast %31 : vector<16x16x128xf32> to vector<256x128xf32>
    %33 = tpu.concatenate %16, %18, %20, %22, %24, %26, %28, %30, %32 in 1 : vector<256x128xf32>, vector<256x128xf32>, vector<256x128xf32>, vector<256x128xf32>, vector<256x128xf32>, vector<256x128xf32>, vector<256x128xf32>, vector<256x128xf32>, vector<256x128xf32> -> vector<256x1152xf32>
    %c0_39 = arith.constant 0 : index
    %c0_40 = arith.constant 0 : index
    %34 = vector.load %arg4[%c0_39, %c0_40] : memref<1152x128xf32, #tpu.memory_space<vmem>>, vector<1152x128xf32>
    %cst_41 = arith.constant dense<0.000000e+00> : vector<256x128xf32>
    %35 = tpu.matmul %33, %34, %cst_41 {dimension_numbers = #tpu.dot_dimension_numbers<[1], [0], [0], [1], [0, 0, 1, 1], [], []>} : vector<256x1152xf32>, vector<1152x128xf32>, vector<256x128xf32> -> vector<256x128xf32>
    %c0_42 = arith.constant 0 : index
    %c0_43 = arith.constant 0 : index
    %36 = vector.load %arg5[%c0_42, %c0_43] : memref<1x128xf32, #tpu.memory_space<vmem>>, vector<1x128xf32>
    %37 = vector.broadcast %36 : vector<1x128xf32> to vector<256x128xf32>
    %38 = arith.addf %35, %37 : vector<256x128xf32>
    %39 = vector.shape_cast %38 : vector<256x128xf32> to vector<16x16x128xf32>
    %c0_44 = arith.constant 0 : index
    %c0_45 = arith.constant 0 : index
    %c0_46 = arith.constant 0 : index
    %c0_47 = arith.constant 0 : index
    %40 = vector.load %arg6[%c0_44, %c0_45, %c0_46, %c0_47] : memref<1x16x16x128xf32, #tpu.memory_space<vmem>>, vector<1x16x16x128xf32>
    %41 = vector.shape_cast %40 : vector<1x16x16x128xf32> to vector<16x16x128xf32>
    %42 = vector.shape_cast %39 : vector<16x16x128xf32> to vector<1x16x16x128xf32>
    tpu.vector_store %arg6[%c0_44, %c0_45, %c0_46, %c0_47], %42 {strides = array<i32>} : memref<1x16x16x128xf32, #tpu.memory_space<vmem>>, vector<1x16x16x128xf32>,
    %cst_48 = arith.constant dense<0.000000e+00> : vector<128xf32>
    %43 = vector.multi_reduction <add>, %38, %cst_48 [0] : vector<256x128xf32> to vector<128xf32>
    %44 = vector.shape_cast %43 : vector<128xf32> to vector<1x128xf32>
    %c0_49 = arith.constant 0 : index
    %c0_50 = arith.constant 0 : index
    %c0_51 = arith.constant 0 : index
    %45 = vector.load %arg7[%c0_49, %c0_50, %c0_51] : memref<1x1x128xf32, #tpu.memory_space<vmem>>, vector<1x1x128xf32>
    %46 = vector.shape_cast %45 : vector<1x1x128xf32> to vector<1x128xf32>
    %47 = vector.shape_cast %44 : vector<1x128xf32> to vector<1x1x128xf32>
    tpu.vector_store %arg7[%c0_49, %c0_50, %c0_51], %47 {strides = array<i32>} : memref<1x1x128xf32, #tpu.memory_space<vmem>>, vector<1x1x128xf32>,
    %48 = arith.mulf %38, %38 : vector<256x128xf32>
    %cst_52 = arith.constant dense<0.000000e+00> : vector<128xf32>
    %49 = vector.multi_reduction <add>, %48, %cst_52 [0] : vector<256x128xf32> to vector<128xf32>
    %50 = vector.shape_cast %49 : vector<128xf32> to vector<1x128xf32>
    %c0_53 = arith.constant 0 : index
    %c0_54 = arith.constant 0 : index
    %c0_55 = arith.constant 0 : index
    %51 = vector.load %arg8[%c0_53, %c0_54, %c0_55] : memref<1x1x128xf32, #tpu.memory_space<vmem>>, vector<1x1x128xf32>
    %52 = vector.shape_cast %51 : vector<1x1x128xf32> to vector<1x128xf32>
    %53 = vector.shape_cast %50 : vector<1x128xf32> to vector<1x1x128xf32>
    tpu.vector_store %arg8[%c0_53, %c0_54, %c0_55], %53 {strides = array<i32>} : memref<1x1x128xf32, #tpu.memory_space<vmem>>, vector<1x1x128xf32>,
    return
  }
  func.func @transform_0(%arg0: i32) -> (i32, i32, i32, i32) {
    %c0_i32 = arith.constant 0 : i32
    %c0_i32_0 = arith.constant 0 : i32
    %c0_i32_1 = arith.constant 0 : i32
    %c0_i32_2 = arith.constant 0 : i32
    return %arg0, %c0_i32, %c0_i32_0, %c0_i32_1 : i32, i32, i32, i32
  }
  func.func @transform_1(%arg0: i32) -> (i32, i32) {
    %c0_i32 = arith.constant 0 : i32
    %c0_i32_0 = arith.constant 0 : i32
    %c0_i32_1 = arith.constant 0 : i32
    return %c0_i32, %c0_i32_0 : i32, i32
  }
  func.func @transform_2(%arg0: i32) -> (i32, i32) {
    %c0_i32 = arith.constant 0 : i32
    %c0_i32_0 = arith.constant 0 : i32
    %c0_i32_1 = arith.constant 0 : i32
    return %c0_i32, %c0_i32_0 : i32, i32
  }
  func.func @transform_3(%arg0: i32) -> (i32, i32) {
    %c0_i32 = arith.constant 0 : i32
    %c0_i32_0 = arith.constant 0 : i32
    %c0_i32_1 = arith.constant 0 : i32
    return %c0_i32, %c0_i32_0 : i32, i32
  }
  func.func @transform_4(%arg0: i32) -> (i32, i32) {
    %c0_i32 = arith.constant 0 : i32
    %c0_i32_0 = arith.constant 0 : i32
    %c0_i32_1 = arith.constant 0 : i32
    return %c0_i32, %c0_i32_0 : i32, i32
  }
  func.func @transform_5(%arg0: i32) -> (i32, i32, i32, i32) {
    %c0_i32 = arith.constant 0 : i32
    %c0_i32_0 = arith.constant 0 : i32
    %c0_i32_1 = arith.constant 0 : i32
    %c0_i32_2 = arith.constant 0 : i32
    return %arg0, %c0_i32, %c0_i32_0, %c0_i32_1 : i32, i32, i32, i32
  }
  func.func @transform_6(%arg0: i32) -> (i32, i32, i32) {
    %c0_i32 = arith.constant 0 : i32
    %c0_i32_0 = arith.constant 0 : i32
    %c0_i32_1 = arith.constant 0 : i32
    return %arg0, %c0_i32, %c0_i32_0 : i32, i32, i32
  }
  func.func @transform_7(%arg0: i32) -> (i32, i32, i32) {
    %c0_i32 = arith.constant 0 : i32
    %c0_i32_0 = arith.constant 0 : i32
    %c0_i32_1 = arith.constant 0 : i32
    return %arg0, %c0_i32, %c0_i32_0 : i32, i32, i32
  }
}

</mosaic_0001>

<llo_original>
// kernel: double_conv_forward.5
$region0: #{double_conv_forward.5}
  #allocation0 [shape = 'u32[]', space=smem, size = 0x4, offset = 0x4, fixed_abs, tag = 'smem constant byte address 0x4 - core index']
  #allocation1 [shape = 'u32[144,128]{1,0:T(1,128)}', space=vmem, size = 0x12000, scoped, tag = 'internal scratch']
  %s0 = inlined_call_operand.vmem [shape: f32[2,16,16,128], index: 0, kind: input, shape index: {}]
  %s1 = inlined_call_operand.vmem [shape: f32[1,128], index: 1, kind: input, shape index: {}]
  %s2 = inlined_call_operand.vmem [shape: f32[1,128], index: 2, kind: input, shape index: {}]
  %s3 = inlined_call_operand.vmem [shape: f32[2,16,16,128], index: 3, kind: output, shape index: {}]
  %s4 = sld [smem:[#allocation0]]
  $region45: #{double_conv_forward.5} parent=0
    _
  %s6 = ssub.s32 1, %s4
  %s7 = scalar_select 0, %s6, %s4
  loop: start=0, step=1, limit=4
  $region2: #{double_conv_forward.5} parent=0 // loop_pre_header
    _
  $region3: #{double_conv_forward.5} parent=0 // loop_header
    %s9 = sphi 0, %s13
    %p10 = scmp.ge.s32.totalorder %s9, 4
    %s19 = sphi 0, %s21
    %s22 = sphi 0, %s19
    %s23 = sphi 0, %s22
    %s39 = sphi 0, %s23
    %s43 = sphi 0, %s43
    %s45 = sphi 0, %s43
    %s46 = sphi 0, %s45
    %s60 = sphi 0, %s46
    %s64 = sphi 0, %s64
    %s66 = sphi 0, %s64
    %s67 = sphi 0, %s66
    %s81 = sphi 0, %s67
    %s87 = sphi 0, %s89
    %s90 = sphi 0, %s87
    %s91 = sphi 0, %s90
    %s107 = sphi 0, %s91
  $region4: #{double_conv_forward.5} parent=0 // loop_header_branch
    %12 = sbr.rel (%p10) target = $region8
  $region5: #{double_conv_forward.5} parent=0 // loop_body
    %s14 = ssub.s32 %s9, 1
    %s15 = ssub.s32 %s9, 2
    %s16 = sadd.s32 %s9, 1
    %s17 = ssub.s32 %s9, %s16
    %p18 = scmp.eq.s32.totalorder %s17, 0
    %s20 = sadd.s32 %s19, 1
    %s21 = scalar_select %p18, %s19, %s20
    %p24 = pneg %p18
    %p25 = scmp.eq.s32.totalorder %s9, 1
    %p26 = por %p24, %p25
    %p27 = scmp.ne.s32.totalorder %s19, %s22
    %p28 = scmp.eq.s32.totalorder %s9, 0
    %p29 = por %p27, %p28
    %p30 = scmp.ne.s32.totalorder %s19, %s22
    %p31 = scmp.eq.s32.totalorder %s14, 1
    %p32 = por %p30, %p31
    %p33 = scmp.ne.s32.totalorder %s22, %s23
    %p34 = scmp.eq.s32.totalorder %s14, 0
    %p35 = por %p33, %p34
    %p36 = scmp.ne.s32.totalorder %s22, %s23
    %p37 = scmp.eq.s32.totalorder %s15, 1
    %p38 = por %p36, %p37
    %p40 = scmp.ne.s32.totalorder %s23, %s39
    %p41 = scmp.eq.s32.totalorder %s15, 0
    %p42 = por %p40, %p41
    %s44 = sadd.s32 %s43, 1
    %p47 = scmp.eq.s32.totalorder %s9, 1
    %p48 = scmp.ne.s32.totalorder %s43, %s45
    %p49 = scmp.eq.s32.totalorder %s9, 0
    %p50 = por %p48, %p49
    %p51 = scmp.ne.s32.totalorder %s43, %s45
    %p52 = scmp.eq.s32.totalorder %s14, 1
    %p53 = por %p51, %p52
    %p54 = scmp.ne.s32.totalorder %s45, %s46
    %p55 = scmp.eq.s32.totalorder %s14, 0
    %p56 = por %p54, %p55
    %p57 = scmp.ne.s32.totalorder %s45, %s46
    %p58 = scmp.eq.s32.totalorder %s15, 1
    %p59 = por %p57, %p58
    %p61 = scmp.ne.s32.totalorder %s46, %s60
    %p62 = scmp.eq.s32.totalorder %s15, 0
    %p63 = por %p61, %p62
    %s65 = sadd.s32 %s64, 1
    %p68 = scmp.eq.s32.totalorder %s9, 1
    %p69 = scmp.ne.s32.totalorder %s64, %s66
    %p70 = scmp.eq.s32.totalorder %s9, 0
    %p71 = por %p69, %p70
    %p72 = scmp.ne.s32.totalorder %s64, %s66
    %p73 = scmp.eq.s32.totalorder %s14, 1
    %p74 = por %p72, %p73
    %p75 = scmp.ne.s32.totalorder %s66, %s67
    %p76 = scmp.eq.s32.totalorder %s14, 0
    %p77 = por %p75, %p76
    %p78 = scmp.ne.s32.totalorder %s66, %s67
    %p79 = scmp.eq.s32.totalorder %s15, 1
    %p80 = por %p78, %p79
    %p82 = scmp.ne.s32.totalorder %s67, %s81
    %p83 = scmp.eq.s32.totalorder %s15, 0
    %p84 = por %p82, %p83
    %s85 = ssub.s32 %s9, %s16
    %p86 = scmp.eq.s32.totalorder %s85, 0
    %s88 = sadd.s32 %s87, 1
    %s89 = scalar_select %p86, %s87, %s88
    %p92 = pneg %p86
    %p93 = scmp.eq.s32.totalorder %s9, 1
    %p94 = por %p92, %p93
    %p95 = scmp.ne.s32.totalorder %s87, %s90
    %p96 = scmp.eq.s32.totalorder %s9, 0
    %p97 = por %p95, %p96
    %p98 = scmp.ne.s32.totalorder %s87, %s90
    %p99 = scmp.eq.s32.totalorder %s14, 1
    %p100 = por %p98, %p99
    %p101 = scmp.ne.s32.totalorder %s90, %s91
    %p102 = scmp.eq.s32.totalorder %s14, 0
    %p103 = por %p101, %p102
    %p104 = scmp.ne.s32.totalorder %s90, %s91
    %p105 = scmp.eq.s32.totalorder %s15, 1
    %p106 = por %p104, %p105
    %p108 = scmp.ne.s32.totalorder %s91, %s107
    %p109 = scmp.eq.s32.totalorder %s15, 0
    %p110 = por %p108, %p109
    %p111 = scmp.le.s32.totalorder 1, %s9
    %p112 = scmp.lt.s32.totalorder %s9, 3
    %p113 = pnand %p111, %p112
    %p114 = pneg %p113
    // Predicated region
    $region9: #{double_conv_forward.5} parent=5 // pred_check
      _
    $region10: #{double_conv_forward.5} parent=5 // pred_check_branch
      %116 = sbr.rel (%p113) target = $region12
    $region11: #{double_conv_forward.5} parent=5 // pred_region
      %s117 = ssub.s32 %s9, 1
      // Predicated region
      $region13: #{double_conv_forward.5} parent=11 // pred_check
        %p118 = pneg %p56
      $region14: #{double_conv_forward.5} parent=11 // pred_check_branch
        %120 = sbr.rel (%p118) target = $region16
      $region15: #{double_conv_forward.5} parent=11 // pred_region
        _
      $region16: #{double_conv_forward.5} parent=11 // pred_fallthru
        _
      // Predicated region
      $region17: #{double_conv_forward.5} parent=11 // pred_check
        %p121 = pneg %p77
      $region18: #{double_conv_forward.5} parent=11 // pred_check_branch
        %123 = sbr.rel (%p121) target = $region20
      $region19: #{double_conv_forward.5} parent=11 // pred_region
        _
      $region20: #{double_conv_forward.5} parent=11 // pred_fallthru
        _
    $region12: #{double_conv_forward.5} parent=5 // pred_fallthru
      _
    %p124 = scmp.lt.s32.totalorder %s9, 2
    // Predicated region
    $region21: #{double_conv_forward.5} parent=5 // pred_check
      %p125 = pneg %p124
    $region22: #{double_conv_forward.5} parent=5 // pred_check_branch
      %127 = sbr.rel (%p125) target = $region24
    $region23: #{double_conv_forward.5} parent=5 // pred_region
      // Predicated region
      $region25: #{double_conv_forward.5} parent=23 // pred_check
        %p128 = pneg %p29
      $region26: #{double_conv_forward.5} parent=23 // pred_check_branch
        %130 = sbr.rel (%p128) target = $region28
      $region27: #{double_conv_forward.5} parent=23 // pred_region
        %p131 = scmp.lt.s32.totalorder %s9, 1
        %s132 = scalar_select %p131, %s9, 1
        %s133 = smul.addr %s132, 32
        %s134 = smul.addr %s133, 8
        %s135 = scalar_lea.vmem %s0, %s134
      $region28: #{double_conv_forward.5} parent=23 // pred_fallthru
        _
    $region24: #{double_conv_forward.5} parent=5 // pred_fallthru
      _
    %p136 = scmp.le.s32.totalorder 1, %s9
    %p137 = scmp.lt.s32.totalorder %s9, 3
    %p138 = pnand %p136, %p137
    %p139 = pneg %p138
    // Predicated region
    $region29: #{double_conv_forward.5} parent=5 // pred_check
      _
    $region30: #{double_conv_forward.5} parent=5 // pred_check_branch
      %141 = sbr.rel (%p138) target = $region32
    $region31: #{double_conv_forward.5} parent=5 // pred_region
      %s142 = ssub.s32 %s9, 1
      %p143 = scmp.lt.s32.totalorder %s14, 1
      %s144 = scalar_select %p143, %s14, 1
      %s145 = smul.addr %s144, 32
      %s146 = smul.addr %s145, 8
      %s147 = scalar_lea.vmem %s0, %s146
      %p148 = pneg %p35
      %p149 = pneg %p32
      %p150 = pneg %p56
      %p151 = pneg %p53
      %p152 = pneg %p77
      %p153 = pneg %p74
      %p154 = pneg %p103
      %p155 = pneg %p100
      %p156 = scmp.lt.s32.totalorder %s14, 1
      %s157 = scalar_select %p156, %s14, 1
      %s158 = smul.addr %s157, 32
      %s159 = smul.addr %s158, 8
      %s160 = scalar_lea.vmem %s3, %s159
      %p161 = scmp.lt.s32.totalorder %s14, 1
      %s162 = scalar_select %p161, %s14, 1
      %s163 = smul.addr %s162, 32
      %s164 = smul.addr %s163, 8
      %s165 = scalar_lea.vmem %s0, %s164
      %p166 = scmp.lt.s32.totalorder %s14, 1
      %s167 = scalar_select %p166, %s14, 1
      %s168 = smul.addr %s167, 32
      %s169 = smul.addr %s168, 8
      %s170 = scalar_lea.vmem %s3, %s169
      %v171 = vld [vmem:[%s1] sm:$0x1]
      %v172 = vld [vmem:[%s2] sm:$0x1]
      %v173 = vld [vmem:[%s165] sm:$0xff]
      %v174 = vld [vmem:[%s165 + $0x8] sm:$0xff]
      %v175 = vld [vmem:[%s165 + $0x10] sm:$0xff]
      %v176 = vld [vmem:[%s165 + $0x18] sm:$0xff]
      %v177 = vld [vmem:[%s165 + $0x20] sm:$0xff]
      %v178 = vld [vmem:[%s165 + $0x28] sm:$0xff]
      %v179 = vld [vmem:[%s165 + $0x30] sm:$0xff]
      %v180 = vld [vmem:[%s165 + $0x38] sm:$0xff]
      %v181 = vld [vmem:[%s165 + $0x40] sm:$0xff]
      %v182 = vld [vmem:[%s165 + $0x48] sm:$0xff]
      %v183 = vld [vmem:[%s165 + $0x50] sm:$0xff]
      %v184 = vld [vmem:[%s165 + $0x58] sm:$0xff]
      %v185 = vld [vmem:[%s165 + $0x60] sm:$0xff]
      %v186 = vld [vmem:[%s165 + $0x68] sm:$0xff]
      %v187 = vld [vmem:[%s165 + $0x70] sm:$0xff]
      %v188 = vld [vmem:[%s165 + $0x78] sm:$0xff]
      %v189 = vld [vmem:[%s165 + $0x80] sm:$0xff]
      %v190 = vld [vmem:[%s165 + $0x88] sm:$0xff]
      %v191 = vld [vmem:[%s165 + $0x90] sm:$0xff]
      %v192 = vld [vmem:[%s165 + $0x98] sm:$0xff]
      %v193 = vld [vmem:[%s165 + $0xa0] sm:$0xff]
      %v194 = vld [vmem:[%s165 + $0xa8] sm:$0xff]
      %v195 = vld [vmem:[%s165 + $0xb0] sm:$0xff]
      %v196 = vld [vmem:[%s165 + $0xb8] sm:$0xff]
      %v197 = vld [vmem:[%s165 + $0xc0] sm:$0xff]
      %v198 = vld [vmem:[%s165 + $0xc8] sm:$0xff]
      %v199 = vld [vmem:[%s165 + $0xd0] sm:$0xff]
      %v200 = vld [vmem:[%s165 + $0xd8] sm:$0xff]
      %v201 = vld [vmem:[%s165 + $0xe0] sm:$0xff]
      %v202 = vld [vmem:[%s165 + $0xe8] sm:$0xff]
      %v203 = vld [vmem:[%s165 + $0xf0] sm:$0xff]
      %v204 = vld [vmem:[%s165 + $0xf8] sm:$0xff]
      %v206 = vlaneseq
      %v207 = vshrl.u32 %v206, 7
      %v208 = vsub.s32 0, %v207
      %v209 = vrot.slane %v171, %v208
      %v211 = vmul.f32 %v173, %v209
      %v212 = vmul.f32 %v174, %v209
      %v213 = vmul.f32 %v175, %v209
      %v214 = vmul.f32 %v176, %v209
      %v215 = vmul.f32 %v177, %v209
      %v216 = vmul.f32 %v178, %v209
      %v217 = vmul.f32 %v179, %v209
      %v218 = vmul.f32 %v180, %v209
      %v219 = vmul.f32 %v181, %v209
      %v220 = vmul.f32 %v182, %v209
      %v221 = vmul.f32 %v183, %v209
      %v222 = vmul.f32 %v184, %v209
      %v223 = vmul.f32 %v185, %v209
      %v224 = vmul.f32 %v186, %v209
      %v225 = vmul.f32 %v187, %v209
      %v226 = vmul.f32 %v188, %v209
      %v227 = vmul.f32 %v189, %v209
      %v228 = vmul.f32 %v190, %v209
      %v229 = vmul.f32 %v191, %v209
      %v230 = vmul.f32 %v192, %v209
      %v231 = vmul.f32 %v193, %v209
      %v232 = vmul.f32 %v194, %v209
      %v233 = vmul.f32 %v195, %v209
      %v234 = vmul.f32 %v196, %v209
      %v235 = vmul.f32 %v197, %v209
      %v236 = vmul.f32 %v198, %v209
      %v237 = vmul.f32 %v199, %v209
      %v238 = vmul.f32 %v200, %v209
      %v239 = vmul.f32 %v201, %v209
      %v240 = vmul.f32 %v202, %v209
      %v241 = vmul.f32 %v203, %v209
      %v242 = vmul.f32 %v204, %v209
      %v244 = vlaneseq
      %v245 = vshrl.u32 %v244, 7
      %v246 = vsub.s32 0, %v245
      %v247 = vrot.slane %v172, %v246
      %v249 = vadd.f32 %v211, %v247
      %v250 = vadd.f32 %v212, %v247
      %v251 = vadd.f32 %v213, %v247
      %v252 = vadd.f32 %v214, %v247
      %v253 = vadd.f32 %v215, %v247
      %v254 = vadd.f32 %v216, %v247
      %v255 = vadd.f32 %v217, %v247
      %v256 = vadd.f32 %v218, %v247
      %v257 = vadd.f32 %v219, %v247
      %v258 = vadd.f32 %v220, %v247
      %v259 = vadd.f32 %v221, %v247
      %v260 = vadd.f32 %v222, %v247
      %v261 = vadd.f32 %v223, %v247
      %v262 = vadd.f32 %v224, %v247
      %v263 = vadd.f32 %v225, %v247
      %v264 = vadd.f32 %v226, %v247
      %v265 = vadd.f32 %v227, %v247
      %v266 = vadd.f32 %v228, %v247
      %v267 = vadd.f32 %v229, %v247
      %v268 = vadd.f32 %v230, %v247
      %v269 = vadd.f32 %v231, %v247
      %v270 = vadd.f32 %v232, %v247
      %v271 = vadd.f32 %v233, %v247
      %v272 = vadd.f32 %v234, %v247
      %v273 = vadd.f32 %v235, %v247
      %v274 = vadd.f32 %v236, %v247
      %v275 = vadd.f32 %v237, %v247
      %v276 = vadd.f32 %v238, %v247
      %v277 = vadd.f32 %v239, %v247
      %v278 = vadd.f32 %v240, %v247
      %v279 = vadd.f32 %v241, %v247
      %v280 = vadd.f32 %v242, %v247
      %v281 = vmax.f32 %v249, 0.0
      %v282 = vmax.f32 %v250, 0.0
      %v283 = vmax.f32 %v251, 0.0
      %v284 = vmax.f32 %v252, 0.0
      %v285 = vmax.f32 %v253, 0.0
      %v286 = vmax.f32 %v254, 0.0
      %v287 = vmax.f32 %v255, 0.0
      %v288 = vmax.f32 %v256, 0.0
      %v289 = vmax.f32 %v257, 0.0
      %v290 = vmax.f32 %v258, 0.0
      %v291 = vmax.f32 %v259, 0.0
      %v292 = vmax.f32 %v260, 0.0
      %v293 = vmax.f32 %v261, 0.0
      %v294 = vmax.f32 %v262, 0.0
      %v295 = vmax.f32 %v263, 0.0
      %v296 = vmax.f32 %v264, 0.0
      %v297 = vmax.f32 %v265, 0.0
      %v298 = vmax.f32 %v266, 0.0
      %v299 = vmax.f32 %v267, 0.0
      %v300 = vmax.f32 %v268, 0.0
      %v301 = vmax.f32 %v269, 0.0
      %v302 = vmax.f32 %v270, 0.0
      %v303 = vmax.f32 %v271, 0.0
      %v304 = vmax.f32 %v272, 0.0
      %v305 = vmax.f32 %v273, 0.0
      %v306 = vmax.f32 %v274, 0.0
      %v307 = vmax.f32 %v275, 0.0
      %v308 = vmax.f32 %v276, 0.0
      %v309 = vmax.f32 %v277, 0.0
      %v310 = vmax.f32 %v278, 0.0
      %v311 = vmax.f32 %v279, 0.0
      %v312 = vmax.f32 %v280, 0.0
      %313 = vst [vmem:[%s170] sm:$0xff] %v281
      %314 = vst [vmem:[%s170 + $0x8] sm:$0xff] %v282
      %315 = vst [vmem:[%s170 + $0x10] sm:$0xff] %v283
      %316 = vst [vmem:[%s170 + $0x18] sm:$0xff] %v284
      %317 = vst [vmem:[%s170 + $0x20] sm:$0xff] %v285
      %318 = vst [vmem:[%s170 + $0x28] sm:$0xff] %v286
      %319 = vst [vmem:[%s170 + $0x30] sm:$0xff] %v287
      %320 = vst [vmem:[%s170 + $0x38] sm:$0xff] %v288
      %321 = vst [vmem:[%s170 + $0x40] sm:$0xff] %v289
      %322 = vst [vmem:[%s170 + $0x48] sm:$0xff] %v290
      %323 = vst [vmem:[%s170 + $0x50] sm:$0xff] %v291
      %324 = vst [vmem:[%s170 + $0x58] sm:$0xff] %v292
      %325 = vst [vmem:[%s170 + $0x60] sm:$0xff] %v293
      %326 = vst [vmem:[%s170 + $0x68] sm:$0xff] %v294
      %327 = vst [vmem:[%s170 + $0x70] sm:$0xff] %v295
      %328 = vst [vmem:[%s170 + $0x78] sm:$0xff] %v296
      %329 = vst [vmem:[%s170 + $0x80] sm:$0xff] %v297
      %330 = vst [vmem:[%s170 + $0x88] sm:$0xff] %v298
      %331 = vst [vmem:[%s170 + $0x90] sm:$0xff] %v299
      %332 = vst [vmem:[%s170 + $0x98] sm:$0xff] %v300
      %333 = vst [vmem:[%s170 + $0xa0] sm:$0xff] %v301
      %334 = vst [vmem:[%s170 + $0xa8] sm:$0xff] %v302
      %335 = vst [vmem:[%s170 + $0xb0] sm:$0xff] %v303
      %336 = vst [vmem:[%s170 + $0xb8] sm:$0xff] %v304
      %337 = vst [vmem:[%s170 + $0xc0] sm:$0xff] %v305
      %338 = vst [vmem:[%s170 + $0xc8] sm:$0xff] %v306
      %339 = vst [vmem:[%s170 + $0xd0] sm:$0xff] %v307
      %340 = vst [vmem:[%s170 + $0xd8] sm:$0xff] %v308
      %341 = vst [vmem:[%s170 + $0xe0] sm:$0xff] %v309
      %342 = vst [vmem:[%s170 + $0xe8] sm:$0xff] %v310
      %343 = vst [vmem:[%s170 + $0xf0] sm:$0xff] %v311
      %344 = vst [vmem:[%s170 + $0xf8] sm:$0xff] %v312
      %p345 = scmp.lt.s32.totalorder %s14, 1
      %s346 = scalar_select %p345, %s14, 1
      %s347 = smul.addr %s346, 32
      %s348 = smul.addr %s347, 8
      %s349 = scalar_lea.vmem %s3, %s348
      // Predicated region
      $region33: #{double_conv_forward.5} parent=31 // pred_check
        %p350 = pneg %p100
      $region34: #{double_conv_forward.5} parent=31 // pred_check_branch
        %352 = sbr.rel (%p350) target = $region36
      $region35: #{double_conv_forward.5} parent=31 // pred_region
        _
      $region36: #{double_conv_forward.5} parent=31 // pred_fallthru
        _
    $region32: #{double_conv_forward.5} parent=5 // pred_fallthru
      _
    %p353 = scmp.le.s32.totalorder 2, %s9
    // Predicated region
    $region37: #{double_conv_forward.5} parent=5 // pred_check
      %p354 = pneg %p353
    $region38: #{double_conv_forward.5} parent=5 // pred_check_branch
      %356 = sbr.rel (%p354) target = $region40
    $region39: #{double_conv_forward.5} parent=5 // pred_region
      %s357 = ssub.s32 %s9, 2
      // Predicated region
      $region41: #{double_conv_forward.5} parent=39 // pred_check
        %p358 = pneg %p106
      $region42: #{double_conv_forward.5} parent=39 // pred_check_branch
        %360 = sbr.rel (%p358) target = $region44
      $region43: #{double_conv_forward.5} parent=39 // pred_region
        %p361 = scmp.lt.s32.totalorder %s15, 1
        %s362 = scalar_select %p361, %s15, 1
        %s363 = smul.addr %s362, 32
        %s364 = smul.addr %s363, 8
        %s365 = scalar_lea.vmem %s3, %s364
      $region44: #{double_conv_forward.5} parent=39 // pred_fallthru
        _
    $region40: #{double_conv_forward.5} parent=5 // pred_fallthru
      _
  $region6: #{double_conv_forward.5} parent=0 // loop_footer
    %s13 = sadd.s32 1, %s9
  $region7: #{double_conv_forward.5} parent=0 // loop_footer_branch
    %8 = sbr.rel target = $region3
  $region8: #{double_conv_forward.5} parent=0 // loop_exit
    _

// kernel: double_conv_forward.4
$region0: #{double_conv_forward.4}
  #allocation0 [shape = 'u32[]', space=smem, size = 0x4, offset = 0x4, fixed_abs, tag = 'smem constant byte address 0x4 - core index']
  #allocation1 [shape = 'u32[144,128]{1,0:T(1,128)}', space=vmem, size = 0x12000, scoped, tag = 'internal scratch']
  #allocation2 [shape = 'f32[18,18,128]{2,1,0:T(8,128)}', space=vmem, size = 0x36000, scoped, tag = 'scratch operand']
  %s0 = inlined_call_operand.vmem [shape: f32[2,16,16,128], index: 0, kind: input, shape index: {}]
  %s1 = inlined_call_operand.vmem [shape: f32[1,128], index: 1, kind: input, shape index: {}]
  %s2 = inlined_call_operand.vmem [shape: f32[1,128], index: 2, kind: input, shape index: {}]
  %s3 = inlined_call_operand.vmem [shape: f32[1152,128], index: 3, kind: input, shape index: {}]
  %s4 = inlined_call_operand.vmem [shape: f32[1,128], index: 4, kind: input, shape index: {}]
  %s5 = inlined_call_operand.vmem [shape: f32[2,16,16,128], index: 5, kind: output, shape index: {0}]
  %s6 = inlined_call_operand.vmem [shape: f32[2,1,128], index: 6, kind: output, shape index: {1}]
  %s7 = inlined_call_operand.vmem [shape: f32[2,1,128], index: 7, kind: output, shape index: {2}]
  %8 = xla_tuple %s5, %s6, %s7
  %s9 = sld [smem:[#allocation0]]
  $region69: #{double_conv_forward.4} parent=0
    _
  %s11 = ssub.s32 1, %s9
  %s12 = scalar_select 0, %s11, %s9
  loop: start=0, step=1, limit=4
  $region2: #{double_conv_forward.4} parent=0 // loop_pre_header
    _
  $region3: #{double_conv_forward.4} parent=0 // loop_header
    %s14 = sphi 0, %s18
    %p15 = scmp.ge.s32.totalorder %s14, 4
    %s24 = sphi 0, %s26
    %s27 = sphi 0, %s24
    %s28 = sphi 0, %s27
    %s44 = sphi 0, %s28
    %s48 = sphi 0, %s48
    %s50 = sphi 0, %s48
    %s51 = sphi 0, %s50
    %s65 = sphi 0, %s51
    %s69 = sphi 0, %s69
    %s71 = sphi 0, %s69
    %s72 = sphi 0, %s71
    %s86 = sphi 0, %s72
    %s90 = sphi 0, %s90
    %s92 = sphi 0, %s90
    %s93 = sphi 0, %s92
    %s107 = sphi 0, %s93
    %s111 = sphi 0, %s111
    %s113 = sphi 0, %s111
    %s114 = sphi 0, %s113
    %s128 = sphi 0, %s114
    %s134 = sphi 0, %s136
    %s137 = sphi 0, %s134
    %s138 = sphi 0, %s137
    %s154 = sphi 0, %s138
    %s160 = sphi 0, %s162
    %s163 = sphi 0, %s160
    %s164 = sphi 0, %s163
    %s180 = sphi 0, %s164
    %s186 = sphi 0, %s188
    %s189 = sphi 0, %s186
    %s190 = sphi 0, %s189
    %s206 = sphi 0, %s190
  $region4: #{double_conv_forward.4} parent=0 // loop_header_branch
    %17 = sbr.rel (%p15) target = $region8
  $region5: #{double_conv_forward.4} parent=0 // loop_body
    %s19 = ssub.s32 %s14, 1
    %s20 = ssub.s32 %s14, 2
    %s21 = sadd.s32 %s14, 1
    %s22 = ssub.s32 %s14, %s21
    %p23 = scmp.eq.s32.totalorder %s22, 0
    %s25 = sadd.s32 %s24, 1
    %s26 = scalar_select %p23, %s24, %s25
    %p29 = pneg %p23
    %p30 = scmp.eq.s32.totalorder %s14, 1
    %p31 = por %p29, %p30
    %p32 = scmp.ne.s32.totalorder %s24, %s27
    %p33 = scmp.eq.s32.totalorder %s14, 0
    %p34 = por %p32, %p33
    %p35 = scmp.ne.s32.totalorder %s24, %s27
    %p36 = scmp.eq.s32.totalorder %s19, 1
    %p37 = por %p35, %p36
    %p38 = scmp.ne.s32.totalorder %s27, %s28
    %p39 = scmp.eq.s32.totalorder %s19, 0
    %p40 = por %p38, %p39
    %p41 = scmp.ne.s32.totalorder %s27, %s28
    %p42 = scmp.eq.s32.totalorder %s20, 1
    %p43 = por %p41, %p42
    %p45 = scmp.ne.s32.totalorder %s28, %s44
    %p46 = scmp.eq.s32.totalorder %s20, 0
    %p47 = por %p45, %p46
    %s49 = sadd.s32 %s48, 1
    %p52 = scmp.eq.s32.totalorder %s14, 1
    %p53 = scmp.ne.s32.totalorder %s48, %s50
    %p54 = scmp.eq.s32.totalorder %s14, 0
    %p55 = por %p53, %p54
    %p56 = scmp.ne.s32.totalorder %s48, %s50
    %p57 = scmp.eq.s32.totalorder %s19, 1
    %p58 = por %p56, %p57
    %p59 = scmp.ne.s32.totalorder %s50, %s51
    %p60 = scmp.eq.s32.totalorder %s19, 0
    %p61 = por %p59, %p60
    %p62 = scmp.ne.s32.totalorder %s50, %s51
    %p63 = scmp.eq.s32.totalorder %s20, 1
    %p64 = por %p62, %p63
    %p66 = scmp.ne.s32.totalorder %s51, %s65
    %p67 = scmp.eq.s32.totalorder %s20, 0
    %p68 = por %p66, %p67
    %s70 = sadd.s32 %s69, 1
    %p73 = scmp.eq.s32.totalorder %s14, 1
    %p74 = scmp.ne.s32.totalorder %s69, %s71
    %p75 = scmp.eq.s32.totalorder %s14, 0
    %p76 = por %p74, %p75
    %p77 = scmp.ne.s32.totalorder %s69, %s71
    %p78 = scmp.eq.s32.totalorder %s19, 1
    %p79 = por %p77, %p78
    %p80 = scmp.ne.s32.totalorder %s71, %s72
    %p81 = scmp.eq.s32.totalorder %s19, 0
    %p82 = por %p80, %p81
    %p83 = scmp.ne.s32.totalorder %s71, %s72
    %p84 = scmp.eq.s32.totalorder %s20, 1
    %p85 = por %p83, %p84
    %p87 = scmp.ne.s32.totalorder %s72, %s86
    %p88 = scmp.eq.s32.totalorder %s20, 0
    %p89 = por %p87, %p88
    %s91 = sadd.s32 %s90, 1
    %p94 = scmp.eq.s32.totalorder %s14, 1
    %p95 = scmp.ne.s32.totalorder %s90, %s92
    %p96 = scmp.eq.s32.totalorder %s14, 0
    %p97 = por %p95, %p96
    %p98 = scmp.ne.s32.totalorder %s90, %s92
    %p99 = scmp.eq.s32.totalorder %s19, 1
    %p100 = por %p98, %p99
    %p101 = scmp.ne.s32.totalorder %s92, %s93
    %p102 = scmp.eq.s32.totalorder %s19, 0
    %p103 = por %p101, %p102
    %p104 = scmp.ne.s32.totalorder %s92, %s93
    %p105 = scmp.eq.s32.totalorder %s20, 1
    %p106 = por %p104, %p105
    %p108 = scmp.ne.s32.totalorder %s93, %s107
    %p109 = scmp.eq.s32.totalorder %s20, 0
    %p110 = por %p108, %p109
    %s112 = sadd.s32 %s111, 1
    %p115 = scmp.eq.s32.totalorder %s14, 1
    %p116 = scmp.ne.s32.totalorder %s111, %s113
    %p117 = scmp.eq.s32.totalorder %s14, 0
    %p118 = por %p116, %p117
    %p119 = scmp.ne.s32.totalorder %s111, %s113
    %p120 = scmp.eq.s32.totalorder %s19, 1
    %p121 = por %p119, %p120
    %p122 = scmp.ne.s32.totalorder %s113, %s114
    %p123 = scmp.eq.s32.totalorder %s19, 0
    %p124 = por %p122, %p123
    %p125 = scmp.ne.s32.totalorder %s113, %s114
    %p126 = scmp.eq.s32.totalorder %s20, 1
    %p127 = por %p125, %p126
    %p129 = scmp.ne.s32.totalorder %s114, %s128
    %p130 = scmp.eq.s32.totalorder %s20, 0
    %p131 = por %p129, %p130
    %s132 = ssub.s32 %s14, %s21
    %p133 = scmp.eq.s32.totalorder %s132, 0
    %s135 = sadd.s32 %s134, 1
    %s136 = scalar_select %p133, %s134, %s135
    %p139 = pneg %p133
    %p140 = scmp.eq.s32.totalorder %s14, 1
    %p141 = por %p139, %p140
    %p142 = scmp.ne.s32.totalorder %s134, %s137
    %p143 = scmp.eq.s32.totalorder %s14, 0
    %p144 = por %p142, %p143
    %p145 = scmp.ne.s32.totalorder %s134, %s137
    %p146 = scmp.eq.s32.totalorder %s19, 1
    %p147 = por %p145, %p146
    %p148 = scmp.ne.s32.totalorder %s137, %s138
    %p149 = scmp.eq.s32.totalorder %s19, 0
    %p150 = por %p148, %p149
    %p151 = scmp.ne.s32.totalorder %s137, %s138
    %p152 = scmp.eq.s32.totalorder %s20, 1
    %p153 = por %p151, %p152
    %p155 = scmp.ne.s32.totalorder %s138, %s154
    %p156 = scmp.eq.s32.totalorder %s20, 0
    %p157 = por %p155, %p156
    %s158 = ssub.s32 %s14, %s21
    %p159 = scmp.eq.s32.totalorder %s158, 0
    %s161 = sadd.s32 %s160, 1
    %s162 = scalar_select %p159, %s160, %s161
    %p165 = pneg %p159
    %p166 = scmp.eq.s32.totalorder %s14, 1
    %p167 = por %p165, %p166
    %p168 = scmp.ne.s32.totalorder %s160, %s163
    %p169 = scmp.eq.s32.totalorder %s14, 0
    %p170 = por %p168, %p169
    %p171 = scmp.ne.s32.totalorder %s160, %s163
    %p172 = scmp.eq.s32.totalorder %s19, 1
    %p173 = por %p171, %p172
    %p174 = scmp.ne.s32.totalorder %s163, %s164
    %p175 = scmp.eq.s32.totalorder %s19, 0
    %p176 = por %p174, %p175
    %p177 = scmp.ne.s32.totalorder %s163, %s164
    %p178 = scmp.eq.s32.totalorder %s20, 1
    %p179 = por %p177, %p178
    %p181 = scmp.ne.s32.totalorder %s164, %s180
    %p182 = scmp.eq.s32.totalorder %s20, 0
    %p183 = por %p181, %p182
    %s184 = ssub.s32 %s14, %s21
    %p185 = scmp.eq.s32.totalorder %s184, 0
    %s187 = sadd.s32 %s186, 1
    %s188 = scalar_select %p185, %s186, %s187
    %p191 = pneg %p185
    %p192 = scmp.eq.s32.totalorder %s14, 1
    %p193 = por %p191, %p192
    %p194 = scmp.ne.s32.totalorder %s186, %s189
    %p195 = scmp.eq.s32.totalorder %s14, 0
    %p196 = por %p194, %p195
    %p197 = scmp.ne.s32.totalorder %s186, %s189
    %p198 = scmp.eq.s32.totalorder %s19, 1
    %p199 = por %p197, %p198
    %p200 = scmp.ne.s32.totalorder %s189, %s190
    %p201 = scmp.eq.s32.totalorder %s19, 0
    %p202 = por %p200, %p201
    %p203 = scmp.ne.s32.totalorder %s189, %s190
    %p204 = scmp.eq.s32.totalorder %s20, 1
    %p205 = por %p203, %p204
    %p207 = scmp.ne.s32.totalorder %s190, %s206
    %p208 = scmp.eq.s32.totalorder %s20, 0
    %p209 = por %p207, %p208
    %p210 = scmp.le.s32.totalorder 1, %s14
    %p211 = scmp.lt.s32.totalorder %s14, 3
    %p212 = pnand %p210, %p211
    %p213 = pneg %p212
    // Predicated region
    $region9: #{double_conv_forward.4} parent=5 // pred_check
      _
    $region10: #{double_conv_forward.4} parent=5 // pred_check_branch
      %215 = sbr.rel (%p212) target = $region12
    $region11: #{double_conv_forward.4} parent=5 // pred_region
      %s216 = ssub.s32 %s14, 1
      // Predicated region
      $region13: #{double_conv_forward.4} parent=11 // pred_check
        %p217 = pneg %p61
      $region14: #{double_conv_forward.4} parent=11 // pred_check_branch
        %219 = sbr.rel (%p217) target = $region16
      $region15: #{double_conv_forward.4} parent=11 // pred_region
        _
      $region16: #{double_conv_forward.4} parent=11 // pred_fallthru
        _
      // Predicated region
      $region17: #{double_conv_forward.4} parent=11 // pred_check
        %p220 = pneg %p82
      $region18: #{double_conv_forward.4} parent=11 // pred_check_branch
        %222 = sbr.rel (%p220) target = $region20
      $region19: #{double_conv_forward.4} parent=11 // pred_region
        _
      $region20: #{double_conv_forward.4} parent=11 // pred_fallthru
        _
      // Predicated region
      $region21: #{double_conv_forward.4} parent=11 // pred_check
        %p223 = pneg %p103
      $region22: #{double_conv_forward.4} parent=11 // pred_check_branch
        %225 = sbr.rel (%p223) target = $region24
      $region23: #{double_conv_forward.4} parent=11 // pred_region
        _
      $region24: #{double_conv_forward.4} parent=11 // pred_fallthru
        _
      // Predicated region
      $region25: #{double_conv_forward.4} parent=11 // pred_check
        %p226 = pneg %p124
      $region26: #{double_conv_forward.4} parent=11 // pred_check_branch
        %228 = sbr.rel (%p226) target = $region28
      $region27: #{double_conv_forward.4} parent=11 // pred_region
        _
      $region28: #{double_conv_forward.4} parent=11 // pred_fallthru
        _
    $region12: #{double_conv_forward.4} parent=5 // pred_fallthru
      _
    %p229 = scmp.lt.s32.totalorder %s14, 2
    // Predicated region
    $region29: #{double_conv_forward.4} parent=5 // pred_check
      %p230 = pneg %p229
    $region30: #{double_conv_forward.4} parent=5 // pred_check_branch
      %232 = sbr.rel (%p230) target = $region32
    $region31: #{double_conv_forward.4} parent=5 // pred_region
      // Predicated region
      $region33: #{double_conv_forward.4} parent=31 // pred_check
        %p233 = pneg %p34
      $region34: #{double_conv_forward.4} parent=31 // pred_check_branch
        %235 = sbr.rel (%p233) target = $region36
      $region35: #{double_conv_forward.4} parent=31 // pred_region
        %p236 = scmp.lt.s32.totalorder %s14, 1
        %s237 = scalar_select %p236, %s14, 1
        %s238 = smul.addr %s237, 32
        %s239 = smul.addr %s238, 8
        %s240 = scalar_lea.vmem %s0, %s239
      $region36: #{double_conv_forward.4} parent=31 // pred_fallthru
        _
    $region32: #{double_conv_forward.4} parent=5 // pred_fallthru
      _
    %p241 = scmp.le.s32.totalorder 1, %s14
    %p242 = scmp.lt.s32.totalorder %s14, 3
    %p243 = pnand %p241, %p242
    %p244 = pneg %p243
    // Predicated region
    $region37: #{double_conv_forward.4} parent=5 // pred_check
      _
    $region38: #{double_conv_forward.4} parent=5 // pred_check_branch
      %246 = sbr.rel (%p243) target = $region40
    $region39: #{double_conv_forward.4} parent=5 // pred_region
      %s247 = ssub.s32 %s14, 1
      %p248 = scmp.lt.s32.totalorder %s19, 1
      %s249 = scalar_select %p248, %s19, 1
      %s250 = smul.addr %s249, 32
      %s251 = smul.addr %s250, 8
      %s252 = scalar_lea.vmem %s0, %s251
      %p253 = pneg %p40
      %p254 = pneg %p37
      %p255 = pneg %p61
      %p256 = pneg %p58
      %p257 = pneg %p82
      %p258 = pneg %p79
      %p259 = pneg %p103
      %p260 = pneg %p100
      %p261 = pneg %p124
      %p262 = pneg %p121
      %p263 = pneg %p150
      %p264 = pneg %p147
      %p265 = scmp.lt.s32.totalorder %s19, 1
      %s266 = scalar_select %p265, %s19, 1
      %s267 = smul.addr %s266, 32
      %s268 = smul.addr %s267, 8
      %s269 = scalar_lea.vmem %s5, %s268
      %p270 = pneg %p176
      %p271 = pneg %p173
      %p272 = scmp.lt.s32.totalorder %s19, 1
      %s273 = scalar_select %p272, %s19, 1
      %s274 = scalar_lea.vmem %s6, %s273
      %p275 = pneg %p202
      %p276 = pneg %p199
      %p277 = scmp.lt.s32.totalorder %s19, 1
      %s278 = scalar_select %p277, %s19, 1
      %s279 = scalar_lea.vmem %s7, %s278
      %p280 = scmp.lt.s32.totalorder %s19, 1
      %s281 = scalar_select %p280, %s19, 1
      %s282 = smul.addr %s281, 32
      %s283 = smul.addr %s282, 8
      %s284 = scalar_lea.vmem %s0, %s283
      %p285 = scmp.lt.s32.totalorder %s19, 1
      %s286 = scalar_select %p285, %s19, 1
      %s287 = smul.addr %s286, 32
      %s288 = smul.addr %s287, 8
      %s289 = scalar_lea.vmem %s5, %s288
      %p290 = scmp.lt.s32.totalorder %s19, 1
      %s291 = scalar_select %p290, %s19, 1
      %s292 = scalar_lea.vmem %s6, %s291
      %p293 = scmp.lt.s32.totalorder %s19, 1
      %s294 = scalar_select %p293, %s19, 1
      %s295 = scalar_lea.vmem %s7, %s294
      %v296 = vld [vmem:[%s284] sm:$0xff]
      %v297 = vld [vmem:[%s284 + $0x8] sm:$0xff]
      %v298 = vld [vmem:[%s284 + $0x10] sm:$0xff]
      %v299 = vld [vmem:[%s284 + $0x18] sm:$0xff]
      %v300 = vld [vmem:[%s284 + $0x20] sm:$0xff]
      %v301 = vld [vmem:[%s284 + $0x28] sm:$0xff]
      %v302 = vld [vmem:[%s284 + $0x30] sm:$0xff]
      %v303 = vld [vmem:[%s284 + $0x38] sm:$0xff]
      %v304 = vld [vmem:[%s284 + $0x40] sm:$0xff]
      %v305 = vld [vmem:[%s284 + $0x48] sm:$0xff]
      %v306 = vld [vmem:[%s284 + $0x50] sm:$0xff]
      %v307 = vld [vmem:[%s284 + $0x58] sm:$0xff]
      %v308 = vld [vmem:[%s284 + $0x60] sm:$0xff]
      %v309 = vld [vmem:[%s284 + $0x68] sm:$0xff]
      %v310 = vld [vmem:[%s284 + $0x70] sm:$0xff]
      %v311 = vld [vmem:[%s284 + $0x78] sm:$0xff]
      %v312 = vld [vmem:[%s284 + $0x80] sm:$0xff]
      %v313 = vld [vmem:[%s284 + $0x88] sm:$0xff]
      %v314 = vld [vmem:[%s284 + $0x90] sm:$0xff]
      %v315 = vld [vmem:[%s284 + $0x98] sm:$0xff]
      %v316 = vld [vmem:[%s284 + $0xa0] sm:$0xff]
      %v317 = vld [vmem:[%s284 + $0xa8] sm:$0xff]
      %v318 = vld [vmem:[%s284 + $0xb0] sm:$0xff]
      %v319 = vld [vmem:[%s284 + $0xb8] sm:$0xff]
      %v320 = vld [vmem:[%s284 + $0xc0] sm:$0xff]
      %v321 = vld [vmem:[%s284 + $0xc8] sm:$0xff]
      %v322 = vld [vmem:[%s284 + $0xd0] sm:$0xff]
      %v323 = vld [vmem:[%s284 + $0xd8] sm:$0xff]
      %v324 = vld [vmem:[%s284 + $0xe0] sm:$0xff]
      %v325 = vld [vmem:[%s284 + $0xe8] sm:$0xff]
      %v326 = vld [vmem:[%s284 + $0xf0] sm:$0xff]
      %v327 = vld [vmem:[%s284 + $0xf8] sm:$0xff]
      %v328 = vld [vmem:[%s1] sm:$0x1]
      %v329 = vld [vmem:[%s2] sm:$0x1]
      %v331 = vlaneseq
      %v332 = vshrl.u32 %v331, 7
      %v333 = vsub.s32 0, %v332
      %v334 = vrot.slane %v328, %v333
      %v336 = vmul.f32 %v296, %v334
      %v337 = vmul.f32 %v297, %v334
      %v338 = vmul.f32 %v298, %v334
      %v339 = vmul.f32 %v299, %v334
      %v340 = vmul.f32 %v300, %v334
      %v341 = vmul.f32 %v301, %v334
      %v342 = vmul.f32 %v302, %v334
      %v343 = vmul.f32 %v303, %v334
      %v344 = vmul.f32 %v304, %v334
      %v345 = vmul.f32 %v305, %v334
      %v346 = vmul.f32 %v306, %v334
      %v347 = vmul.f32 %v307, %v334
      %v348 = vmul.f32 %v308, %v334
      %v349 = vmul.f32 %v309, %v334
      %v350 = vmul.f32 %v310, %v334
      %v351 = vmul.f32 %v311, %v334
      %v352 = vmul.f32 %v312, %v334
      %v353 = vmul.f32 %v313, %v334
      %v354 = vmul.f32 %v314, %v334
      %v355 = vmul.f32 %v315, %v334
      %v356 = vmul.f32 %v316, %v334
      %v357 = vmul.f32 %v317, %v334
      %v358 = vmul.f32 %v318, %v334
      %v359 = vmul.f32 %v319, %v334
      %v360 = vmul.f32 %v320, %v334
      %v361 = vmul.f32 %v321, %v334
      %v362 = vmul.f32 %v322, %v334
      %v363 = vmul.f32 %v323, %v334
      %v364 = vmul.f32 %v324, %v334
      %v365 = vmul.f32 %v325, %v334
      %v366 = vmul.f32 %v326, %v334
      %v367 = vmul.f32 %v327, %v334
      %v369 = vlaneseq
      %v370 = vshrl.u32 %v369, 7
      %v371 = vsub.s32 0, %v370
      %v372 = vrot.slane %v329, %v371
      %v374 = vadd.f32 %v336, %v372
      %v375 = vadd.f32 %v337, %v372
      %v376 = vadd.f32 %v338, %v372
      %v377 = vadd.f32 %v339, %v372
      %v378 = vadd.f32 %v340, %v372
      %v379 = vadd.f32 %v341, %v372
      %v380 = vadd.f32 %v342, %v372
      %v381 = vadd.f32 %v343, %v372
      %v382 = vadd.f32 %v344, %v372
      %v383 = vadd.f32 %v345, %v372
      %v384 = vadd.f32 %v346, %v372
      %v385 = vadd.f32 %v347, %v372
      %v386 = vadd.f32 %v348, %v372
      %v387 = vadd.f32 %v349, %v372
      %v388 = vadd.f32 %v350, %v372
      %v389 = vadd.f32 %v351, %v372
      %v390 = vadd.f32 %v352, %v372
      %v391 = vadd.f32 %v353, %v372
      %v392 = vadd.f32 %v354, %v372
      %v393 = vadd.f32 %v355, %v372
      %v394 = vadd.f32 %v356, %v372
      %v395 = vadd.f32 %v357, %v372
      %v396 = vadd.f32 %v358, %v372
      %v397 = vadd.f32 %v359, %v372
      %v398 = vadd.f32 %v360, %v372
      %v399 = vadd.f32 %v361, %v372
      %v400 = vadd.f32 %v362, %v372
      %v401 = vadd.f32 %v363, %v372
      %v402 = vadd.f32 %v364, %v372
      %v403 = vadd.f32 %v365, %v372
      %v404 = vadd.f32 %v366, %v372
      %v405 = vadd.f32 %v367, %v372
      %v406 = vmax.f32 %v374, 0.0
      %v407 = vmax.f32 %v375, 0.0
      %v408 = vmax.f32 %v376, 0.0
      %v409 = vmax.f32 %v377, 0.0
      %v410 = vmax.f32 %v378, 0.0
      %v411 = vmax.f32 %v379, 0.0
      %v412 = vmax.f32 %v380, 0.0
      %v413 = vmax.f32 %v381, 0.0
      %v414 = vmax.f32 %v382, 0.0
      %v415 = vmax.f32 %v383, 0.0
      %v416 = vmax.f32 %v384, 0.0
      %v417 = vmax.f32 %v385, 0.0
      %v418 = vmax.f32 %v386, 0.0
      %v419 = vmax.f32 %v387, 0.0
      %v420 = vmax.f32 %v388, 0.0
      %v421 = vmax.f32 %v389, 0.0
      %v422 = vmax.f32 %v390, 0.0
      %v423 = vmax.f32 %v391, 0.0
      %v424 = vmax.f32 %v392, 0.0
      %v425 = vmax.f32 %v393, 0.0
      %v426 = vmax.f32 %v394, 0.0
      %v427 = vmax.f32 %v395, 0.0
      %v428 = vmax.f32 %v396, 0.0
      %v429 = vmax.f32 %v397, 0.0
      %v430 = vmax.f32 %v398, 0.0
      %v431 = vmax.f32 %v399, 0.0
      %v432 = vmax.f32 %v400, 0.0
      %v433 = vmax.f32 %v401, 0.0
      %v434 = vmax.f32 %v402, 0.0
      %v435 = vmax.f32 %v403, 0.0
      %v436 = vmax.f32 %v404, 0.0
      %v437 = vmax.f32 %v405, 0.0
      %438 = vst [vmem:[#allocation2] sm:$0xff] 0.0
      %439 = vst [vmem:[#allocation2 + $0x8] sm:$0xff] 0.0
      %440 = vst [vmem:[#allocation2 + $0x10] sm:$0x3] 0.0
      %441 = vst [vmem:[#allocation2 + $0x18] sm:$0xff] 0.0
      %442 = vst [vmem:[#allocation2 + $0x20] sm:$0xff] 0.0
      %443 = vst [vmem:[#allocation2 + $0x28] sm:$0x3] 0.0
      %444 = vst [vmem:[#allocation2 + $0x30] sm:$0xff] 0.0
      %445 = vst [vmem:[#allocation2 + $0x38] sm:$0xff] 0.0
      %446 = vst [vmem:[#allocation2 + $0x40] sm:$0x3] 0.0
      %447 = vst [vmem:[#allocation2 + $0x48] sm:$0xff] 0.0
      %448 = vst [vmem:[#allocation2 + $0x50] sm:$0xff] 0.0
      %449 = vst [vmem:[#allocation2 + $0x58] sm:$0x3] 0.0
      %450 = vst [vmem:[#allocation2 + $0x60] sm:$0xff] 0.0
      %451 = vst [vmem:[#allocation2 + $0x68] sm:$0xff] 0.0
      %452 = vst [vmem:[#allocation2 + $0x70] sm:$0x3] 0.0
      %453 = vst [vmem:[#allocation2 + $0x78] sm:$0xff] 0.0
      %454 = vst [vmem:[#allocation2 + $0x80] sm:$0xff] 0.0
      %455 = vst [vmem:[#allocation2 + $0x88] sm:$0x3] 0.0
      %456 = vst [vmem:[#allocation2 + $0x90] sm:$0xff] 0.0
      %457 = vst [vmem:[#allocation2 + $0x98] sm:$0xff] 0.0
      %458 = vst [vmem:[#allocation2 + $0xa0] sm:$0x3] 0.0
      %459 = vst [vmem:[#allocation2 + $0xa8] sm:$0xff] 0.0
      %460 = vst [vmem:[#allocation2 + $0xb0] sm:$0xff] 0.0
      %461 = vst [vmem:[#allocation2 + $0xb8] sm:$0x3] 0.0
      %462 = vst [vmem:[#allocation2 + $0xc0] sm:$0xff] 0.0
      %463 = vst [vmem:[#allocation2 + $0xc8] sm:$0xff] 0.0
      %464 = vst [vmem:[#allocation2 + $0xd0] sm:$0x3] 0.0
      %465 = vst [vmem:[#allocation2 + $0xd8] sm:$0xff] 0.0
      %466 = vst [vmem:[#allocation2 + $0xe0] sm:$0xff] 0.0
      %467 = vst [vmem:[#allocation2 + $0xe8] sm:$0x3] 0.0
      %468 = vst [vmem:[#allocation2 + $0xf0] sm:$0xff] 0.0
      %469 = vst [vmem:[#allocation2 + $0xf8] sm:$0xff] 0.0
      %470 = vst [vmem:[#allocation2 + $0x100] sm:$0x3] 0.0
      %471 = vst [vmem:[#allocation2 + $0x108] sm:$0xff] 0.0
      %472 = vst [vmem:[#allocation2 + $0x110] sm:$0xff] 0.0
      %473 = vst [vmem:[#allocation2 + $0x118] sm:$0x3] 0.0
      %474 = vst [vmem:[#allocation2 + $0x120] sm:$0xff] 0.0
      %475 = vst [vmem:[#allocation2 + $0x128] sm:$0xff] 0.0
      %476 = vst [vmem:[#allocation2 + $0x130] sm:$0x3] 0.0
      %477 = vst [vmem:[#allocation2 + $0x138] sm:$0xff] 0.0
      %478 = vst [vmem:[#allocation2 + $0x140] sm:$0xff] 0.0
      %479 = vst [vmem:[#allocation2 + $0x148] sm:$0x3] 0.0
      %480 = vst [vmem:[#allocation2 + $0x150] sm:$0xff] 0.0
      %481 = vst [vmem:[#allocation2 + $0x158] sm:$0xff] 0.0
      %482 = vst [vmem:[#allocation2 + $0x160] sm:$0x3] 0.0
      %483 = vst [vmem:[#allocation2 + $0x168] sm:$0xff] 0.0
      %484 = vst [vmem:[#allocation2 + $0x170] sm:$0xff] 0.0
      %485 = vst [vmem:[#allocation2 + $0x178] sm:$0x3] 0.0
      %486 = vst [vmem:[#allocation2 + $0x180] sm:$0xff] 0.0
      %487 = vst [vmem:[#allocation2 + $0x188] sm:$0xff] 0.0
      %488 = vst [vmem:[#allocation2 + $0x190] sm:$0x3] 0.0
      %489 = vst [vmem:[#allocation2 + $0x198] sm:$0xff] 0.0
      %490 = vst [vmem:[#allocation2 + $0x1a0] sm:$0xff] 0.0
      %491 = vst [vmem:[#allocation2 + $0x1a8] sm:$0x3] 0.0
      %s492 = scalar_lea.vmem [#allocation2], 24
      %493 = vst [vmem:[%s492 + $0x1] sm:$0xff] %v406
      %494 = vst [vmem:[%s492 + $0x9] sm:$0xff] %v407
      %495 = vst [vmem:[%s492 + $0x19] sm:$0xff] %v408
      %496 = vst [vmem:[%s492 + $0x21] sm:$0xff] %v409
      %497 = vst [vmem:[%s492 + $0x31] sm:$0xff] %v410
      %498 = vst [vmem:[%s492 + $0x39] sm:$0xff] %v411
      %499 = vst [vmem:[%s492 + $0x49] sm:$0xff] %v412
      %500 = vst [vmem:[%s492 + $0x51] sm:$0xff] %v413
      %501 = vst [vmem:[%s492 + $0x61] sm:$0xff] %v414
      %502 = vst [vmem:[%s492 + $0x69] sm:$0xff] %v415
      %503 = vst [vmem:[%s492 + $0x79] sm:$0xff] %v416
      %504 = vst [vmem:[%s492 + $0x81] sm:$0xff] %v417
      %505 = vst [vmem:[%s492 + $0x91] sm:$0xff] %v418
      %506 = vst [vmem:[%s492 + $0x99] sm:$0xff] %v419
      %507 = vst [vmem:[%s492 + $0xa9] sm:$0xff] %v420
      %508 = vst [vmem:[%s492 + $0xb1] sm:$0xff] %v421
      %509 = vst [vmem:[%s492 + $0xc1] sm:$0xff] %v422
      %510 = vst [vmem:[%s492 + $0xc9] sm:$0xff] %v423
      %511 = vst [vmem:[%s492 + $0xd9] sm:$0xff] %v424
      %512 = vst [vmem:[%s492 + $0xe1] sm:$0xff] %v425
      %513 = vst [vmem:[%s492 + $0xf1] sm:$0xff] %v426
      %514 = vst [vmem:[%s492 + $0xf9] sm:$0xff] %v427
      %515 = vst [vmem:[%s492 + $0x109] sm:$0xff] %v428
      %516 = vst [vmem:[%s492 + $0x111] sm:$0xff] %v429
      %517 = vst [vmem:[%s492 + $0x121] sm:$0xff] %v430
      %518 = vst [vmem:[%s492 + $0x129] sm:$0xff] %v431
      %519 = vst [vmem:[%s492 + $0x139] sm:$0xff] %v432
      %520 = vst [vmem:[%s492 + $0x141] sm:$0xff] %v433
      %521 = vst [vmem:[%s492 + $0x151] sm:$0xff] %v434
      %522 = vst [vmem:[%s492 + $0x159] sm:$0xff] %v435
      %523 = vst [vmem:[%s492 + $0x169] sm:$0xff] %v436
      %524 = vst [vmem:[%s492 + $0x171] sm:$0xff] %v437
      %v525 = vld [vmem:[#allocation2] sm:$0xff]
      %v526 = vld [vmem:[#allocation2 + $0x8] sm:$0xff]
      %v527 = vld [vmem:[#allocation2 + $0x18] sm:$0xff]
      %v528 = vld [vmem:[#allocation2 + $0x20] sm:$0xff]
      %v529 = vld [vmem:[#allocation2 + $0x30] sm:$0xff]
      %v530 = vld [vmem:[#allocation2 + $0x38] sm:$0xff]
      %v531 = vld [vmem:[#allocation2 + $0x48] sm:$0xff]
      %v532 = vld [vmem:[#allocation2 + $0x50] sm:$0xff]
      %v533 = vld [vmem:[#allocation2 + $0x60] sm:$0xff]
      %v534 = vld [vmem:[#allocation2 + $0x68] sm:$0xff]
      %v535 = vld [vmem:[#allocation2 + $0x78] sm:$0xff]
      %v536 = vld [vmem:[#allocation2 + $0x80] sm:$0xff]
      %v537 = vld [vmem:[#allocation2 + $0x90] sm:$0xff]
      %v538 = vld [vmem:[#allocation2 + $0x98] sm:$0xff]
      %v539 = vld [vmem:[#allocation2 + $0xa8] sm:$0xff]
      %v540 = vld [vmem:[#allocation2 + $0xb0] sm:$0xff]
      %v541 = vld [vmem:[#allocation2 + $0xc0] sm:$0xff]
      %v542 = vld [vmem:[#allocation2 + $0xc8] sm:$0xff]
      %v543 = vld [vmem:[#allocation2 + $0xd8] sm:$0xff]
      %v544 = vld [vmem:[#allocation2 + $0xe0] sm:$0xff]
      %v545 = vld [vmem:[#allocation2 + $0xf0] sm:$0xff]
      %v546 = vld [vmem:[#allocation2 + $0xf8] sm:$0xff]
      %v547 = vld [vmem:[#allocation2 + $0x108] sm:$0xff]
      %v548 = vld [vmem:[#allocation2 + $0x110] sm:$0xff]
      %v549 = vld [vmem:[#allocation2 + $0x120] sm:$0xff]
      %v550 = vld [vmem:[#allocation2 + $0x128] sm:$0xff]
      %v551 = vld [vmem:[#allocation2 + $0x138] sm:$0xff]
      %v552 = vld [vmem:[#allocation2 + $0x140] sm:$0xff]
      %v553 = vld [vmem:[#allocation2 + $0x150] sm:$0xff]
      %v554 = vld [vmem:[#allocation2 + $0x158] sm:$0xff]
      %v555 = vld [vmem:[#allocation2 + $0x168] sm:$0xff]
      %v556 = vld [vmem:[#allocation2 + $0x170] sm:$0xff]
      %v557 = vld [vmem:[#allocation2 + $0x1] sm:$0xff]
      %v558 = vld [vmem:[#allocation2 + $0x9] sm:$0xff]
      %v559 = vld [vmem:[#allocation2 + $0x19] sm:$0xff]
      %v560 = vld [vmem:[#allocation2 + $0x21] sm:$0xff]
      %v561 = vld [vmem:[#allocation2 + $0x31] sm:$0xff]
      %v562 = vld [vmem:[#allocation2 + $0x39] sm:$0xff]
      %v563 = vld [vmem:[#allocation2 + $0x49] sm:$0xff]
      %v564 = vld [vmem:[#allocation2 + $0x51] sm:$0xff]
      %v565 = vld [vmem:[#allocation2 + $0x61] sm:$0xff]
      %v566 = vld [vmem:[#allocation2 + $0x69] sm:$0xff]
      %v567 = vld [vmem:[#allocation2 + $0x79] sm:$0xff]
      %v568 = vld [vmem:[#allocation2 + $0x81] sm:$0xff]
      %v569 = vld [vmem:[#allocation2 + $0x91] sm:$0xff]
      %v570 = vld [vmem:[#allocation2 + $0x99] sm:$0xff]
      %v571 = vld [vmem:[#allocation2 + $0xa9] sm:$0xff]
      %v572 = vld [vmem:[#allocation2 + $0xb1] sm:$0xff]
      %v573 = vld [vmem:[#allocation2 + $0xc1] sm:$0xff]
      %v574 = vld [vmem:[#allocation2 + $0xc9] sm:$0xff]
      %v575 = vld [vmem:[#allocation2 + $0xd9] sm:$0xff]
      %v576 = vld [vmem:[#allocation2 + $0xe1] sm:$0xff]
      %v577 = vld [vmem:[#allocation2 + $0xf1] sm:$0xff]
      %v578 = vld [vmem:[#allocation2 + $0xf9] sm:$0xff]
      %v579 = vld [vmem:[#allocation2 + $0x109] sm:$0xff]
      %v580 = vld [vmem:[#allocation2 + $0x111] sm:$0xff]
      %v581 = vld [vmem:[#allocation2 + $0x121] sm:$0xff]
      %v582 = vld [vmem:[#allocation2 + $0x129] sm:$0xff]
      %v583 = vld [vmem:[#allocation2 + $0x139] sm:$0xff]
      %v584 = vld [vmem:[#allocation2 + $0x141] sm:$0xff]
      %v585 = vld [vmem:[#allocation2 + $0x151] sm:$0xff]
      %v586 = vld [vmem:[#allocation2 + $0x159] sm:$0xff]
      %v587 = vld [vmem:[#allocation2 + $0x169] sm:$0xff]
      %v588 = vld [vmem:[#allocation2 + $0x171] sm:$0xff]
      %v589 = vld [vmem:[#allocation2 + $0x2] sm:$0xff]
      %v590 = vld [vmem:[#allocation2 + $0xa] sm:$0xff]
      %v591 = vld [vmem:[#allocation2 + $0x1a] sm:$0xff]
      %v592 = vld [vmem:[#allocation2 + $0x22] sm:$0xff]
      %v593 = vld [vmem:[#allocation2 + $0x32] sm:$0xff]
      %v594 = vld [vmem:[#allocation2 + $0x3a] sm:$0xff]
      %v595 = vld [vmem:[#allocation2 + $0x4a] sm:$0xff]
      %v596 = vld [vmem:[#allocation2 + $0x52] sm:$0xff]
      %v597 = vld [vmem:[#allocation2 + $0x62] sm:$0xff]
      %v598 = vld [vmem:[#allocation2 + $0x6a] sm:$0xff]
      %v599 = vld [vmem:[#allocation2 + $0x7a] sm:$0xff]
      %v600 = vld [vmem:[#allocation2 + $0x82] sm:$0xff]
      %v601 = vld [vmem:[#allocation2 + $0x92] sm:$0xff]
      %v602 = vld [vmem:[#allocation2 + $0x9a] sm:$0xff]
      %v603 = vld [vmem:[#allocation2 + $0xaa] sm:$0xff]
      %v604 = vld [vmem:[#allocation2 + $0xb2] sm:$0xff]
      %v605 = vld [vmem:[#allocation2 + $0xc2] sm:$0xff]
      %v606 = vld [vmem:[#allocation2 + $0xca] sm:$0xff]
      %v607 = vld [vmem:[#allocation2 + $0xda] sm:$0xff]
      %v608 = vld [vmem:[#allocation2 + $0xe2] sm:$0xff]
      %v609 = vld [vmem:[#allocation2 + $0xf2] sm:$0xff]
      %v610 = vld [vmem:[#allocation2 + $0xfa] sm:$0xff]
      %v611 = vld [vmem:[#allocation2 + $0x10a] sm:$0xff]
      %v612 = vld [vmem:[#allocation2 + $0x112] sm:$0xff]
      %v613 = vld [vmem:[#allocation2 + $0x122] sm:$0xff]
      %v614 = vld [vmem:[#allocation2 + $0x12a] sm:$0xff]
      %v615 = vld [vmem:[#allocation2 + $0x13a] sm:$0xff]
      %v616 = vld [vmem:[#allocation2 + $0x142] sm:$0xff]
      %v617 = vld [vmem:[#allocation2 + $0x152] sm:$0xff]
      %v618 = vld [vmem:[#allocation2 + $0x15a] sm:$0xff]
      %v619 = vld [vmem:[#allocation2 + $0x16a] sm:$0xff]
      %v620 = vld [vmem:[#allocation2 + $0x172] sm:$0xff]
      %v621 = vld [vmem:[%s492] sm:$0xff]
      %v622 = vld [vmem:[%s492 + $0x8] sm:$0xff]
      %v623 = vld [vmem:[%s492 + $0x18] sm:$0xff]
      %v624 = vld [vmem:[%s492 + $0x20] sm:$0xff]
      %v625 = vld [vmem:[%s492 + $0x30] sm:$0xff]
      %v626 = vld [vmem:[%s492 + $0x38] sm:$0xff]
      %v627 = vld [vmem:[%s492 + $0x48] sm:$0xff]
      %v628 = vld [vmem:[%s492 + $0x50] sm:$0xff]
      %v629 = vld [vmem:[%s492 + $0x60] sm:$0xff]
      %v630 = vld [vmem:[%s492 + $0x68] sm:$0xff]
      %v631 = vld [vmem:[%s492 + $0x78] sm:$0xff]
      %v632 = vld [vmem:[%s492 + $0x80] sm:$0xff]
      %v633 = vld [vmem:[%s492 + $0x90] sm:$0xff]
      %v634 = vld [vmem:[%s492 + $0x98] sm:$0xff]
      %v635 = vld [vmem:[%s492 + $0xa8] sm:$0xff]
      %v636 = vld [vmem:[%s492 + $0xb0] sm:$0xff]
      %v637 = vld [vmem:[%s492 + $0xc0] sm:$0xff]
      %v638 = vld [vmem:[%s492 + $0xc8] sm:$0xff]
      %v639 = vld [vmem:[%s492 + $0xd8] sm:$0xff]
      %v640 = vld [vmem:[%s492 + $0xe0] sm:$0xff]
      %v641 = vld [vmem:[%s492 + $0xf0] sm:$0xff]
      %v642 = vld [vmem:[%s492 + $0xf8] sm:$0xff]
      %v643 = vld [vmem:[%s492 + $0x108] sm:$0xff]
      %v644 = vld [vmem:[%s492 + $0x110] sm:$0xff]
      %v645 = vld [vmem:[%s492 + $0x120] sm:$0xff]
      %v646 = vld [vmem:[%s492 + $0x128] sm:$0xff]
      %v647 = vld [vmem:[%s492 + $0x138] sm:$0xff]
      %v648 = vld [vmem:[%s492 + $0x140] sm:$0xff]
      %v649 = vld [vmem:[%s492 + $0x150] sm:$0xff]
      %v650 = vld [vmem:[%s492 + $0x158] sm:$0xff]
      %v651 = vld [vmem:[%s492 + $0x168] sm:$0xff]
      %v652 = vld [vmem:[%s492 + $0x170] sm:$0xff]
      %v653 = vld [vmem:[%s492 + $0x1] sm:$0xff]
      %v654 = vld [vmem:[%s492 + $0x9] sm:$0xff]
      %v655 = vld [vmem:[%s492 + $0x19] sm:$0xff]
      %v656 = vld [vmem:[%s492 + $0x21] sm:$0xff]
      %v657 = vld [vmem:[%s492 + $0x31] sm:$0xff]
      %v658 = vld [vmem:[%s492 + $0x39] sm:$0xff]
      %v659 = vld [vmem:[%s492 + $0x49] sm:$0xff]
      %v660 = vld [vmem:[%s492 + $0x51] sm:$0xff]
      %v661 = vld [vmem:[%s492 + $0x61] sm:$0xff]
      %v662 = vld [vmem:[%s492 + $0x69] sm:$0xff]
      %v663 = vld [vmem:[%s492 + $0x79] sm:$0xff]
      %v664 = vld [vmem:[%s492 + $0x81] sm:$0xff]
      %v665 = vld [vmem:[%s492 + $0x91] sm:$0xff]
      %v666 = vld [vmem:[%s492 + $0x99] sm:$0xff]
      %v667 = vld [vmem:[%s492 + $0xa9] sm:$0xff]
      %v668 = vld [vmem:[%s492 + $0xb1] sm:$0xff]
      %v669 = vld [vmem:[%s492 + $0xc1] sm:$0xff]
      %v670 = vld [vmem:[%s492 + $0xc9] sm:$0xff]
      %v671 = vld [vmem:[%s492 + $0xd9] sm:$0xff]
      %v672 = vld [vmem:[%s492 + $0xe1] sm:$0xff]
      %v673 = vld [vmem:[%s492 + $0xf1] sm:$0xff]
      %v674 = vld [vmem:[%s492 + $0xf9] sm:$0xff]
      %v675 = vld [vmem:[%s492 + $0x109] sm:$0xff]
      %v676 = vld [vmem:[%s492 + $0x111] sm:$0xff]
      %v677 = vld [vmem:[%s492 + $0x121] sm:$0xff]
      %v678 = vld [vmem:[%s492 + $0x129] sm:$0xff]
      %v679 = vld [vmem:[%s492 + $0x139] sm:$0xff]
      %v680 = vld [vmem:[%s492 + $0x141] sm:$0xff]
      %v681 = vld [vmem:[%s492 + $0x151] sm:$0xff]
      %v682 = vld [vmem:[%s492 + $0x159] sm:$0xff]
      %v683 = vld [vmem:[%s492 + $0x169] sm:$0xff]
      %v684 = vld [vmem:[%s492 + $0x171] sm:$0xff]
      %v685 = vld [vmem:[%s492 + $0x2] sm:$0xff]
      %v686 = vld [vmem:[%s492 + $0xa] sm:$0xff]
      %v687 = vld [vmem:[%s492 + $0x1a] sm:$0xff]
      %v688 = vld [vmem:[%s492 + $0x22] sm:$0xff]
      %v689 = vld [vmem:[%s492 + $0x32] sm:$0xff]
      %v690 = vld [vmem:[%s492 + $0x3a] sm:$0xff]
      %v691 = vld [vmem:[%s492 + $0x4a] sm:$0xff]
      %v692 = vld [vmem:[%s492 + $0x52] sm:$0xff]
      %v693 = vld [vmem:[%s492 + $0x62] sm:$0xff]
      %v694 = vld [vmem:[%s492 + $0x6a] sm:$0xff]
      %v695 = vld [vmem:[%s492 + $0x7a] sm:$0xff]
      %v696 = vld [vmem:[%s492 + $0x82] sm:$0xff]
      %v697 = vld [vmem:[%s492 + $0x92] sm:$0xff]
      %v698 = vld [vmem:[%s492 + $0x9a] sm:$0xff]
      %v699 = vld [vmem:[%s492 + $0xaa] sm:$0xff]
      %v700 = vld [vmem:[%s492 + $0xb2] sm:$0xff]
      %v701 = vld [vmem:[%s492 + $0xc2] sm:$0xff]
      %v702 = vld [vmem:[%s492 + $0xca] sm:$0xff]
      %v703 = vld [vmem:[%s492 + $0xda] sm:$0xff]
      %v704 = vld [vmem:[%s492 + $0xe2] sm:$0xff]
      %v705 = vld [vmem:[%s492 + $0xf2] sm:$0xff]
      %v706 = vld [vmem:[%s492 + $0xfa] sm:$0xff]
      %v707 = vld [vmem:[%s492 + $0x10a] sm:$0xff]
      %v708 = vld [vmem:[%s492 + $0x112] sm:$0xff]
      %v709 = vld [vmem:[%s492 + $0x122] sm:$0xff]
      %v710 = vld [vmem:[%s492 + $0x12a] sm:$0xff]
      %v711 = vld [vmem:[%s492 + $0x13a] sm:$0xff]
      %v712 = vld [vmem:[%s492 + $0x142] sm:$0xff]
      %v713 = vld [vmem:[%s492 + $0x152] sm:$0xff]
      %v714 = vld [vmem:[%s492 + $0x15a] sm:$0xff]
      %v715 = vld [vmem:[%s492 + $0x16a] sm:$0xff]
      %v716 = vld [vmem:[%s492 + $0x172] sm:$0xff]
      %s717 = scalar_lea.vmem [#allocation2], 48
      %v718 = vld [vmem:[%s717] sm:$0xff]
      %v719 = vld [vmem:[%s717 + $0x8] sm:$0xff]
      %v720 = vld [vmem:[%s717 + $0x18] sm:$0xff]
      %v721 = vld [vmem:[%s717 + $0x20] sm:$0xff]
      %v722 = vld [vmem:[%s717 + $0x30] sm:$0xff]
      %v723 = vld [vmem:[%s717 + $0x38] sm:$0xff]
      %v724 = vld [vmem:[%s717 + $0x48] sm:$0xff]
      %v725 = vld [vmem:[%s717 + $0x50] sm:$0xff]
      %v726 = vld [vmem:[%s717 + $0x60] sm:$0xff]
      %v727 = vld [vmem:[%s717 + $0x68] sm:$0xff]
      %v728 = vld [vmem:[%s717 + $0x78] sm:$0xff]
      %v729 = vld [vmem:[%s717 + $0x80] sm:$0xff]
      %v730 = vld [vmem:[%s717 + $0x90] sm:$0xff]
      %v731 = vld [vmem:[%s717 + $0x98] sm:$0xff]
      %v732 = vld [vmem:[%s717 + $0xa8] sm:$0xff]
      %v733 = vld [vmem:[%s717 + $0xb0] sm:$0xff]
      %v734 = vld [vmem:[%s717 + $0xc0] sm:$0xff]
      %v735 = vld [vmem:[%s717 + $0xc8] sm:$0xff]
      %v736 = vld [vmem:[%s717 + $0xd8] sm:$0xff]
      %v737 = vld [vmem:[%s717 + $0xe0] sm:$0xff]
      %v738 = vld [vmem:[%s717 + $0xf0] sm:$0xff]
      %v739 = vld [vmem:[%s717 + $0xf8] sm:$0xff]
      %v740 = vld [vmem:[%s717 + $0x108] sm:$0xff]
      %v741 = vld [vmem:[%s717 + $0x110] sm:$0xff]
      %v742 = vld [vmem:[%s717 + $0x120] sm:$0xff]
      %v743 = vld [vmem:[%s717 + $0x128] sm:$0xff]
      %v744 = vld [vmem:[%s717 + $0x138] sm:$0xff]
      %v745 = vld [vmem:[%s717 + $0x140] sm:$0xff]
      %v746 = vld [vmem:[%s717 + $0x150] sm:$0xff]
      %v747 = vld [vmem:[%s717 + $0x158] sm:$0xff]
      %v748 = vld [vmem:[%s717 + $0x168] sm:$0xff]
      %v749 = vld [vmem:[%s717 + $0x170] sm:$0xff]
      %v750 = vld [vmem:[%s717 + $0x1] sm:$0xff]
      %v751 = vld [vmem:[%s717 + $0x9] sm:$0xff]
      %v752 = vld [vmem:[%s717 + $0x19] sm:$0xff]
      %v753 = vld [vmem:[%s717 + $0x21] sm:$0xff]
      %v754 = vld [vmem:[%s717 + $0x31] sm:$0xff]
      %v755 = vld [vmem:[%s717 + $0x39] sm:$0xff]
      %v756 = vld [vmem:[%s717 + $0x49] sm:$0xff]
      %v757 = vld [vmem:[%s717 + $0x51] sm:$0xff]
      %v758 = vld [vmem:[%s717 + $0x61] sm:$0xff]
      %v759 = vld [vmem:[%s717 + $0x69] sm:$0xff]
      %v760 = vld [vmem:[%s717 + $0x79] sm:$0xff]
      %v761 = vld [vmem:[%s717 + $0x81] sm:$0xff]
      %v762 = vld [vmem:[%s717 + $0x91] sm:$0xff]
      %v763 = vld [vmem:[%s717 + $0x99] sm:$0xff]
      %v764 = vld [vmem:[%s717 + $0xa9] sm:$0xff]
      %v765 = vld [vmem:[%s717 + $0xb1] sm:$0xff]
      %v766 = vld [vmem:[%s717 + $0xc1] sm:$0xff]
      %v767 = vld [vmem:[%s717 + $0xc9] sm:$0xff]
      %v768 = vld [vmem:[%s717 + $0xd9] sm:$0xff]
      %v769 = vld [vmem:[%s717 + $0xe1] sm:$0xff]
      %v770 = vld [vmem:[%s717 + $0xf1] sm:$0xff]
      %v771 = vld [vmem:[%s717 + $0xf9] sm:$0xff]
      %v772 = vld [vmem:[%s717 + $0x109] sm:$0xff]
      %v773 = vld [vmem:[%s717 + $0x111] sm:$0xff]
      %v774 = vld [vmem:[%s717 + $0x121] sm:$0xff]
      %v775 = vld [vmem:[%s717 + $0x129] sm:$0xff]
      %v776 = vld [vmem:[%s717 + $0x139] sm:$0xff]
      %v777 = vld [vmem:[%s717 + $0x141] sm:$0xff]
      %v778 = vld [vmem:[%s717 + $0x151] sm:$0xff]
      %v779 = vld [vmem:[%s717 + $0x159] sm:$0xff]
      %v780 = vld [vmem:[%s717 + $0x169] sm:$0xff]
      %v781 = vld [vmem:[%s717 + $0x171] sm:$0xff]
      %v782 = vld [vmem:[%s717 + $0x2] sm:$0xff]
      %v783 = vld [vmem:[%s717 + $0xa] sm:$0xff]
      %v784 = vld [vmem:[%s717 + $0x1a] sm:$0xff]
      %v785 = vld [vmem:[%s717 + $0x22] sm:$0xff]
      %v786 = vld [vmem:[%s717 + $0x32] sm:$0xff]
      %v787 = vld [vmem:[%s717 + $0x3a] sm:$0xff]
      %v788 = vld [vmem:[%s717 + $0x4a] sm:$0xff]
      %v789 = vld [vmem:[%s717 + $0x52] sm:$0xff]
      %v790 = vld [vmem:[%s717 + $0x62] sm:$0xff]
      %v791 = vld [vmem:[%s717 + $0x6a] sm:$0xff]
      %v792 = vld [vmem:[%s717 + $0x7a] sm:$0xff]
      %v793 = vld [vmem:[%s717 + $0x82] sm:$0xff]
      %v794 = vld [vmem:[%s717 + $0x92] sm:$0xff]
      %v795 = vld [vmem:[%s717 + $0x9a] sm:$0xff]
      %v796 = vld [vmem:[%s717 + $0xaa] sm:$0xff]
      %v797 = vld [vmem:[%s717 + $0xb2] sm:$0xff]
      %v798 = vld [vmem:[%s717 + $0xc2] sm:$0xff]
      %v799 = vld [vmem:[%s717 + $0xca] sm:$0xff]
      %v800 = vld [vmem:[%s717 + $0xda] sm:$0xff]
      %v801 = vld [vmem:[%s717 + $0xe2] sm:$0xff]
      %v802 = vld [vmem:[%s717 + $0xf2] sm:$0xff]
      %v803 = vld [vmem:[%s717 + $0xfa] sm:$0xff]
      %v804 = vld [vmem:[%s717 + $0x10a] sm:$0xff]
      %v805 = vld [vmem:[%s717 + $0x112] sm:$0xff]
      %v806 = vld [vmem:[%s717 + $0x122] sm:$0xff]
      %v807 = vld [vmem:[%s717 + $0x12a] sm:$0xff]
      %v808 = vld [vmem:[%s717 + $0x13a] sm:$0xff]
      %v809 = vld [vmem:[%s717 + $0x142] sm:$0xff]
      %v810 = vld [vmem:[%s717 + $0x152] sm:$0xff]
      %v811 = vld [vmem:[%s717 + $0x15a] sm:$0xff]
      %v812 = vld [vmem:[%s717 + $0x16a] sm:$0xff]
      %v813 = vld [vmem:[%s717 + $0x172] sm:$0xff]
      %v814 = vld [vmem:[%s3] sm:$0xff]
      %v815 = vld [vmem:[%s3 + $0x8] sm:$0xff]
      %v816 = vld [vmem:[%s3 + $0x10] sm:$0xff]
      %v817 = vld [vmem:[%s3 + $0x18] sm:$0xff]
      %v818 = vld [vmem:[%s3 + $0x20] sm:$0xff]
      %v819 = vld [vmem:[%s3 + $0x28] sm:$0xff]
      %v820 = vld [vmem:[%s3 + $0x30] sm:$0xff]
      %v821 = vld [vmem:[%s3 + $0x38] sm:$0xff]
      %v822 = vld [vmem:[%s3 + $0x40] sm:$0xff]
      %v823 = vld [vmem:[%s3 + $0x48] sm:$0xff]
      %v824 = vld [vmem:[%s3 + $0x50] sm:$0xff]
      %v825 = vld [vmem:[%s3 + $0x58] sm:$0xff]
      %v826 = vld [vmem:[%s3 + $0x60] sm:$0xff]
      %v827 = vld [vmem:[%s3 + $0x68] sm:$0xff]
      %v828 = vld [vmem:[%s3 + $0x70] sm:$0xff]
      %v829 = vld [vmem:[%s3 + $0x78] sm:$0xff]
      %v830 = vld [vmem:[%s3 + $0x80] sm:$0xff]
      %v831 = vld [vmem:[%s3 + $0x88] sm:$0xff]
      %v832 = vld [vmem:[%s3 + $0x90] sm:$0xff]
      %v833 = vld [vmem:[%s3 + $0x98] sm:$0xff]
      %v834 = vld [vmem:[%s3 + $0xa0] sm:$0xff]
      %v835 = vld [vmem:[%s3 + $0xa8] sm:$0xff]
      %v836 = vld [vmem:[%s3 + $0xb0] sm:$0xff]
      %v837 = vld [vmem:[%s3 + $0xb8] sm:$0xff]
      %v838 = vld [vmem:[%s3 + $0xc0] sm:$0xff]
      %v839 = vld [vmem:[%s3 + $0xc8] sm:$0xff]
      %v840 = vld [vmem:[%s3 + $0xd0] sm:$0xff]
      %v841 = vld [vmem:[%s3 + $0xd8] sm:$0xff]
      %v842 = vld [vmem:[%s3 + $0xe0] sm:$0xff]
      %v843 = vld [vmem:[%s3 + $0xe8] sm:$0xff]
      %v844 = vld [vmem:[%s3 + $0xf0] sm:$0xff]
      %v845 = vld [vmem:[%s3 + $0xf8] sm:$0xff]
      %v846 = vld [vmem:[%s3 + $0x100] sm:$0xff]
      %v847 = vld [vmem:[%s3 + $0x108] sm:$0xff]
      %v848 = vld [vmem:[%s3 + $0x110] sm:$0xff]
      %v849 = vld [vmem:[%s3 + $0x118] sm:$0xff]
      %v850 = vld [vmem:[%s3 + $0x120] sm:$0xff]
      %v851 = vld [vmem:[%s3 + $0x128] sm:$0xff]
      %v852 = vld [vmem:[%s3 + $0x130] sm:$0xff]
      %v853 = vld [vmem:[%s3 + $0x138] sm:$0xff]
      %v854 = vld [vmem:[%s3 + $0x140] sm:$0xff]
      %v855 = vld [vmem:[%s3 + $0x148] sm:$0xff]
      %v856 = vld [vmem:[%s3 + $0x150] sm:$0xff]
      %v857 = vld [vmem:[%s3 + $0x158] sm:$0xff]
      %v858 = vld [vmem:[%s3 + $0x160] sm:$0xff]
      %v859 = vld [vmem:[%s3 + $0x168] sm:$0xff]
      %v860 = vld [vmem:[%s3 + $0x170] sm:$0xff]
      %v861 = vld [vmem:[%s3 + $0x178] sm:$0xff]
      %v862 = vld [vmem:[%s3 + $0x180] sm:$0xff]
      %v863 = vld [vmem:[%s3 + $0x188] sm:$0xff]
      %v864 = vld [vmem:[%s3 + $0x190] sm:$0xff]
      %v865 = vld [vmem:[%s3 + $0x198] sm:$0xff]
      %v866 = vld [vmem:[%s3 + $0x1a0] sm:$0xff]
      %v867 = vld [vmem:[%s3 + $0x1a8] sm:$0xff]
      %v868 = vld [vmem:[%s3 + $0x1b0] sm:$0xff]
      %v869 = vld [vmem:[%s3 + $0x1b8] sm:$0xff]
      %v870 = vld [vmem:[%s3 + $0x1c0] sm:$0xff]
      %v871 = vld [vmem:[%s3 + $0x1c8] sm:$0xff]
      %v872 = vld [vmem:[%s3 + $0x1d0] sm:$0xff]
      %v873 = vld [vmem:[%s3 + $0x1d8] sm:$0xff]
      %v874 = vld [vmem:[%s3 + $0x1e0] sm:$0xff]
      %v875 = vld [vmem:[%s3 + $0x1e8] sm:$0xff]
      %v876 = vld [vmem:[%s3 + $0x1f0] sm:$0xff]
      %v877 = vld [vmem:[%s3 + $0x1f8] sm:$0xff]
      %v878 = vld [vmem:[%s3 + $0x200] sm:$0xff]
      %v879 = vld [vmem:[%s3 + $0x208] sm:$0xff]
      %v880 = vld [vmem:[%s3 + $0x210] sm:$0xff]
      %v881 = vld [vmem:[%s3 + $0x218] sm:$0xff]
      %v882 = vld [vmem:[%s3 + $0x220] sm:$0xff]
      %v883 = vld [vmem:[%s3 + $0x228] sm:$0xff]
      %v884 = vld [vmem:[%s3 + $0x230] sm:$0xff]
      %v885 = vld [vmem:[%s3 + $0x238] sm:$0xff]
      %v886 = vld [vmem:[%s3 + $0x240] sm:$0xff]
      %v887 = vld [vmem:[%s3 + $0x248] sm:$0xff]
      %v888 = vld [vmem:[%s3 + $0x250] sm:$0xff]
      %v889 = vld [vmem:[%s3 + $0x258] sm:$0xff]
      %v890 = vld [vmem:[%s3 + $0x260] sm:$0xff]
      %v891 = vld [vmem:[%s3 + $0x268] sm:$0xff]
      %v892 = vld [vmem:[%s3 + $0x270] sm:$0xff]
      %v893 = vld [vmem:[%s3 + $0x278] sm:$0xff]
      %v894 = vld [vmem:[%s3 + $0x280] sm:$0xff]
      %v895 = vld [vmem:[%s3 + $0x288] sm:$0xff]
      %v896 = vld [vmem:[%s3 + $0x290] sm:$0xff]
      %v897 = vld [vmem:[%s3 + $0x298] sm:$0xff]
      %v898 = vld [vmem:[%s3 + $0x2a0] sm:$0xff]
      %v899 = vld [vmem:[%s3 + $0x2a8] sm:$0xff]
      %v900 = vld [vmem:[%s3 + $0x2b0] sm:$0xff]
      %v901 = vld [vmem:[%s3 + $0x2b8] sm:$0xff]
      %v902 = vld [vmem:[%s3 + $0x2c0] sm:$0xff]
      %v903 = vld [vmem:[%s3 + $0x2c8] sm:$0xff]
      %v904 = vld [vmem:[%s3 + $0x2d0] sm:$0xff]
      %v905 = vld [vmem:[%s3 + $0x2d8] sm:$0xff]
      %v906 = vld [vmem:[%s3 + $0x2e0] sm:$0xff]
      %v907 = vld [vmem:[%s3 + $0x2e8] sm:$0xff]
      %v908 = vld [vmem:[%s3 + $0x2f0] sm:$0xff]
      %v909 = vld [vmem:[%s3 + $0x2f8] sm:$0xff]
      %v910 = vld [vmem:[%s3 + $0x300] sm:$0xff]
      %v911 = vld [vmem:[%s3 + $0x308] sm:$0xff]
      %v912 = vld [vmem:[%s3 + $0x310] sm:$0xff]
      %v913 = vld [vmem:[%s3 + $0x318] sm:$0xff]
      %v914 = vld [vmem:[%s3 + $0x320] sm:$0xff]
      %v915 = vld [vmem:[%s3 + $0x328] sm:$0xff]
      %v916 = vld [vmem:[%s3 + $0x330] sm:$0xff]
      %v917 = vld [vmem:[%s3 + $0x338] sm:$0xff]
      %v918 = vld [vmem:[%s3 + $0x340] sm:$0xff]
      %v919 = vld [vmem:[%s3 + $0x348] sm:$0xff]
      %v920 = vld [vmem:[%s3 + $0x350] sm:$0xff]
      %v921 = vld [vmem:[%s3 + $0x358] sm:$0xff]
      %v922 = vld [vmem:[%s3 + $0x360] sm:$0xff]
      %v923 = vld [vmem:[%s3 + $0x368] sm:$0xff]
      %v924 = vld [vmem:[%s3 + $0x370] sm:$0xff]
      %v925 = vld [vmem:[%s3 + $0x378] sm:$0xff]
      %v926 = vld [vmem:[%s3 + $0x380] sm:$0xff]
      %v927 = vld [vmem:[%s3 + $0x388] sm:$0xff]
      %v928 = vld [vmem:[%s3 + $0x390] sm:$0xff]
      %v929 = vld [vmem:[%s3 + $0x398] sm:$0xff]
      %v930 = vld [vmem:[%s3 + $0x3a0] sm:$0xff]
      %v931 = vld [vmem:[%s3 + $0x3a8] sm:$0xff]
      %v932 = vld [vmem:[%s3 + $0x3b0] sm:$0xff]
      %v933 = vld [vmem:[%s3 + $0x3b8] sm:$0xff]
      %v934 = vld [vmem:[%s3 + $0x3c0] sm:$0xff]
      %v935 = vld [vmem:[%s3 + $0x3c8] sm:$0xff]
      %v936 = vld [vmem:[%s3 + $0x3d0] sm:$0xff]
      %v937 = vld [vmem:[%s3 + $0x3d8] sm:$0xff]
      %v938 = vld [vmem:[%s3 + $0x3e0] sm:$0xff]
      %v939 = vld [vmem:[%s3 + $0x3e8] sm:$0xff]
      %v940 = vld [vmem:[%s3 + $0x3f0] sm:$0xff]
      %v941 = vld [vmem:[%s3 + $0x3f8] sm:$0xff]
      %v942 = vld [vmem:[%s3 + $0x400] sm:$0xff]
      %v943 = vld [vmem:[%s3 + $0x408] sm:$0xff]
      %v944 = vld [vmem:[%s3 + $0x410] sm:$0xff]
      %v945 = vld [vmem:[%s3 + $0x418] sm:$0xff]
      %v946 = vld [vmem:[%s3 + $0x420] sm:$0xff]
      %v947 = vld [vmem:[%s3 + $0x428] sm:$0xff]
      %v948 = vld [vmem:[%s3 + $0x430] sm:$0xff]
      %v949 = vld [vmem:[%s3 + $0x438] sm:$0xff]
      %v950 = vld [vmem:[%s3 + $0x440] sm:$0xff]
      %v951 = vld [vmem:[%s3 + $0x448] sm:$0xff]
      %v952 = vld [vmem:[%s3 + $0x450] sm:$0xff]
      %v953 = vld [vmem:[%s3 + $0x458] sm:$0xff]
      %v954 = vld [vmem:[%s3 + $0x460] sm:$0xff]
      %v955 = vld [vmem:[%s3 + $0x468] sm:$0xff]
      %v956 = vld [vmem:[%s3 + $0x470] sm:$0xff]
      %v957 = vld [vmem:[%s3 + $0x478] sm:$0xff]
      %v958 = vld [vmem:[%s4] sm:$0x1]
      %v960 = vlaneseq
      %v961 = vshrl.u32 %v960, 7
      %v962 = vsub.s32 0, %v961
      %v963 = vrot.slane %v958, %v962
      %965 = vmatprep.subr.mxu0 0.0
      %966 = vmatpush1.msra.mxu0 %v829
      %967 = vmatprep.subr.mxu0 0.0
      %968 = vmatpush1.msra.mxu0 %v828
      %969 = vmatprep.subr.mxu0 0.0
      %970 = vmatpush1.msra.mxu0 %v827
      %971 = vmatprep.subr.mxu0 0.0
      %972 = vmatpush1.msra.mxu0 %v826
      %973 = vmatprep.subr.mxu0 0.0
      %974 = vmatpush1.msra.mxu0 %v825
      %975 = vmatprep.subr.mxu0 0.0
      %976 = vmatpush1.msra.mxu0 %v824
      %977 = vmatprep.subr.mxu0 0.0
      %978 = vmatpush1.msra.mxu0 %v823
      %979 = vmatprep.subr.mxu0 0.0
      %980 = vmatpush1.msra.mxu0 %v822
      %981 = vmatprep.subr.mxu0 0.0
      %982 = vmatpush1.msra.mxu0 %v821
      %983 = vmatprep.subr.mxu0 0.0
      %984 = vmatpush1.msra.mxu0 %v820
      %985 = vmatprep.subr.mxu0 0.0
      %986 = vmatpush1.msra.mxu0 %v819
      %987 = vmatprep.subr.mxu0 0.0
      %988 = vmatpush1.msra.mxu0 %v818
      %989 = vmatprep.subr.mxu0 0.0
      %990 = vmatpush1.msra.mxu0 %v817
      %991 = vmatprep.subr.mxu0 0.0
      %992 = vmatpush1.msra.mxu0 %v816
      %993 = vmatprep.subr.mxu0 0.0
      %994 = vmatpush1.msra.mxu0 %v815
      %995 = vmatprep.subr.mxu0 0.0
      %996 = vmatpush1.msra.mxu0 %v814
      %997 = vmatprep.subr.mxu0 0.0
      %998 = vmatpush2.msra.mxu0 %v845
      %999 = vmatprep.subr.mxu0 0.0
      %1000 = vmatpush2.msra.mxu0 %v844
      %1001 = vmatprep.subr.mxu0 0.0
      %1002 = vmatpush2.msra.mxu0 %v843
      %1003 = vmatprep.subr.mxu0 0.0
      %1004 = vmatpush2.msra.mxu0 %v842
      %1005 = vmatprep.subr.mxu0 0.0
      %1006 = vmatpush2.msra.mxu0 %v841
      %1007 = vmatprep.subr.mxu0 0.0
      %1008 = vmatpush2.msra.mxu0 %v840
      %1009 = vmatprep.subr.mxu0 0.0
      %1010 = vmatpush2.msra.mxu0 %v839
      %1011 = vmatprep.subr.mxu0 0.0
      %1012 = vmatpush2.msra.mxu0 %v838
      %1013 = vmatprep.subr.mxu0 0.0
      %1014 = vmatpush2.msra.mxu0 %v837
      %1015 = vmatprep.subr.mxu0 0.0
      %1016 = vmatpush2.msra.mxu0 %v836
      %1017 = vmatprep.subr.mxu0 0.0
      %1018 = vmatpush2.msra.mxu0 %v835
      %1019 = vmatprep.subr.mxu0 0.0
      %1020 = vmatpush2.msra.mxu0 %v834
      %1021 = vmatprep.subr.mxu0 0.0
      %1022 = vmatpush2.msra.mxu0 %v833
      %1023 = vmatprep.subr.mxu0 0.0
      %1024 = vmatpush2.msra.mxu0 %v832
      %1025 = vmatprep.subr.mxu0 0.0
      %1026 = vmatpush2.msra.mxu0 %v831
      %1027 = vmatprep.subr.mxu0 0.0
      %1028 = vmatpush2.msra.mxu0 %v830
      %1029 = vmatprep.mubr.f32.mxu0 %v557
      %1030 = vmatmul.mubr.f32.gmra.mxu0 %v525
      %v1031 = vpop.f32.mrf.mxu0
      %v1032 = vadd.f32 %v963, %v1031
      %v1033 = vpop.f32.mrf.mxu0
      %1034 = vmatprep.mubr.f32.mxu0 %v558
      %1035 = vmatmul.mubr.f32.gmra.mxu0 %v526
      %v1036 = vpop.f32.mrf.mxu0
      %v1037 = vadd.f32 %v963, %v1036
      %v1038 = vpop.f32.mrf.mxu0
      %1039 = vmatprep.mubr.f32.mxu0 %v559
      %1040 = vmatmul.mubr.f32.gmra.mxu0 %v527
      %v1041 = vpop.f32.mrf.mxu0
      %v1042 = vadd.f32 %v963, %v1041
      %v1043 = vpop.f32.mrf.mxu0
      %1044 = vmatprep.mubr.f32.mxu0 %v560
      %1045 = vmatmul.mubr.f32.gmra.mxu0 %v528
      %v1046 = vpop.f32.mrf.mxu0
      %v1047 = vadd.f32 %v963, %v1046
      %v1048 = vpop.f32.mrf.mxu0
      %1049 = vmatprep.mubr.f32.mxu0 %v561
      %1050 = vmatmul.mubr.f32.gmra.mxu0 %v529
      %v1051 = vpop.f32.mrf.mxu0
      %v1052 = vadd.f32 %v963, %v1051
      %v1053 = vpop.f32.mrf.mxu0
      %1054 = vmatprep.mubr.f32.mxu0 %v562
      %1055 = vmatmul.mubr.f32.gmra.mxu0 %v530
      %v1056 = vpop.f32.mrf.mxu0
      %v1057 = vadd.f32 %v963, %v1056
      %v1058 = vpop.f32.mrf.mxu0
      %1059 = vmatprep.mubr.f32.mxu0 %v563
      %1060 = vmatmul.mubr.f32.gmra.mxu0 %v531
      %v1061 = vpop.f32.mrf.mxu0
      %v1062 = vadd.f32 %v963, %v1061
      %v1063 = vpop.f32.mrf.mxu0
      %1064 = vmatprep.mubr.f32.mxu0 %v564
      %1065 = vmatmul.mubr.f32.gmra.mxu0 %v532
      %v1066 = vpop.f32.mrf.mxu0
      %v1067 = vadd.f32 %v963, %v1066
      %v1068 = vpop.f32.mrf.mxu0
      %1069 = vmatprep.mubr.f32.mxu0 %v565
      %1070 = vmatmul.mubr.f32.gmra.mxu0 %v533
      %v1071 = vpop.f32.mrf.mxu0
      %v1072 = vadd.f32 %v963, %v1071
      %v1073 = vpop.f32.mrf.mxu0
      %1074 = vmatprep.mubr.f32.mxu0 %v566
      %1075 = vmatmul.mubr.f32.gmra.mxu0 %v534
      %v1076 = vpop.f32.mrf.mxu0
      %v1077 = vadd.f32 %v963, %v1076
      %v1078 = vpop.f32.mrf.mxu0
      %1079 = vmatprep.mubr.f32.mxu0 %v567
      %1080 = vmatmul.mubr.f32.gmra.mxu0 %v535
      %v1081 = vpop.f32.mrf.mxu0
      %v1082 = vadd.f32 %v963, %v1081
      %v1083 = vpop.f32.mrf.mxu0
      %1084 = vmatprep.mubr.f32.mxu0 %v568
      %1085 = vmatmul.mubr.f32.gmra.mxu0 %v536
      %v1086 = vpop.f32.mrf.mxu0
      %v1087 = vadd.f32 %v963, %v1086
      %v1088 = vpop.f32.mrf.mxu0
      %1089 = vmatprep.mubr.f32.mxu0 %v569
      %1090 = vmatmul.mubr.f32.gmra.mxu0 %v537
      %v1091 = vpop.f32.mrf.mxu0
      %v1092 = vadd.f32 %v963, %v1091
      %v1093 = vpop.f32.mrf.mxu0
      %1094 = vmatprep.mubr.f32.mxu0 %v570
      %1095 = vmatmul.mubr.f32.gmra.mxu0 %v538
      %v1096 = vpop.f32.mrf.mxu0
      %v1097 = vadd.f32 %v963, %v1096
      %v1098 = vpop.f32.mrf.mxu0
      %1099 = vmatprep.mubr.f32.mxu0 %v571
      %1100 = vmatmul.mubr.f32.gmra.mxu0 %v539
      %v1101 = vpop.f32.mrf.mxu0
      %v1102 = vadd.f32 %v963, %v1101
      %v1103 = vpop.f32.mrf.mxu0
      %1104 = vmatprep.mubr.f32.mxu0 %v572
      %1105 = vmatmul.mubr.f32.gmra.mxu0 %v540
      %v1106 = vpop.f32.mrf.mxu0
      %v1107 = vadd.f32 %v963, %v1106
      %v1108 = vpop.f32.mrf.mxu0
      %1109 = vmatprep.mubr.f32.mxu0 %v573
      %1110 = vmatmul.mubr.f32.gmra.mxu0 %v541
      %v1111 = vpop.f32.mrf.mxu0
      %v1112 = vadd.f32 %v963, %v1111
      %v1113 = vpop.f32.mrf.mxu0
      %1114 = vmatprep.mubr.f32.mxu0 %v574
      %1115 = vmatmul.mubr.f32.gmra.mxu0 %v542
      %v1116 = vpop.f32.mrf.mxu0
      %v1117 = vadd.f32 %v963, %v1116
      %v1118 = vpop.f32.mrf.mxu0
      %1119 = vmatprep.mubr.f32.mxu0 %v575
      %1120 = vmatmul.mubr.f32.gmra.mxu0 %v543
      %v1121 = vpop.f32.mrf.mxu0
      %v1122 = vadd.f32 %v963, %v1121
      %v1123 = vpop.f32.mrf.mxu0
      %1124 = vmatprep.mubr.f32.mxu0 %v576
      %1125 = vmatmul.mubr.f32.gmra.mxu0 %v544
      %v1126 = vpop.f32.mrf.mxu0
      %v1127 = vadd.f32 %v963, %v1126
      %v1128 = vpop.f32.mrf.mxu0
      %1129 = vmatprep.mubr.f32.mxu0 %v577
      %1130 = vmatmul.mubr.f32.gmra.mxu0 %v545
      %v1131 = vpop.f32.mrf.mxu0
      %v1132 = vadd.f32 %v963, %v1131
      %v1133 = vpop.f32.mrf.mxu0
      %1134 = vmatprep.mubr.f32.mxu0 %v578
      %1135 = vmatmul.mubr.f32.gmra.mxu0 %v546
      %v1136 = vpop.f32.mrf.mxu0
      %v1137 = vadd.f32 %v963, %v1136
      %v1138 = vpop.f32.mrf.mxu0
      %1139 = vmatprep.mubr.f32.mxu0 %v579
      %1140 = vmatmul.mubr.f32.gmra.mxu0 %v547
      %v1141 = vpop.f32.mrf.mxu0
      %v1142 = vadd.f32 %v963, %v1141
      %v1143 = vpop.f32.mrf.mxu0
      %1144 = vmatprep.mubr.f32.mxu0 %v580
      %1145 = vmatmul.mubr.f32.gmra.mxu0 %v548
      %v1146 = vpop.f32.mrf.mxu0
      %v1147 = vadd.f32 %v963, %v1146
      %v1148 = vpop.f32.mrf.mxu0
      %1149 = vmatprep.mubr.f32.mxu0 %v581
      %1150 = vmatmul.mubr.f32.gmra.mxu0 %v549
      %v1151 = vpop.f32.mrf.mxu0
      %v1152 = vadd.f32 %v963, %v1151
      %v1153 = vpop.f32.mrf.mxu0
      %1154 = vmatprep.mubr.f32.mxu0 %v582
      %1155 = vmatmul.mubr.f32.gmra.mxu0 %v550
      %v1156 = vpop.f32.mrf.mxu0
      %v1157 = vadd.f32 %v963, %v1156
      %v1158 = vpop.f32.mrf.mxu0
      %1159 = vmatprep.mubr.f32.mxu0 %v583
      %1160 = vmatmul.mubr.f32.gmra.mxu0 %v551
      %v1161 = vpop.f32.mrf.mxu0
      %v1162 = vadd.f32 %v963, %v1161
      %v1163 = vpop.f32.mrf.mxu0
      %1164 = vmatprep.mubr.f32.mxu0 %v584
      %1165 = vmatmul.mubr.f32.gmra.mxu0 %v552
      %v1166 = vpop.f32.mrf.mxu0
      %v1167 = vadd.f32 %v963, %v1166
      %v1168 = vpop.f32.mrf.mxu0
      %1169 = vmatprep.mubr.f32.mxu0 %v585
      %1170 = vmatmul.mubr.f32.gmra.mxu0 %v553
      %v1171 = vpop.f32.mrf.mxu0
      %v1172 = vadd.f32 %v963, %v1171
      %v1173 = vpop.f32.mrf.mxu0
      %1174 = vmatprep.mubr.f32.mxu0 %v586
      %1175 = vmatmul.mubr.f32.gmra.mxu0 %v554
      %v1176 = vpop.f32.mrf.mxu0
      %v1177 = vadd.f32 %v963, %v1176
      %v1178 = vpop.f32.mrf.mxu0
      %1179 = vmatprep.mubr.f32.mxu0 %v587
      %1180 = vmatmul.mubr.f32.gmra.mxu0 %v555
      %v1181 = vpop.f32.mrf.mxu0
      %v1182 = vadd.f32 %v963, %v1181
      %v1183 = vpop.f32.mrf.mxu0
      %1184 = vmatprep.mubr.f32.mxu0 %v588
      %1185 = vmatmul.mubr.f32.gmra.mxu0 %v556
      %v1186 = vpop.f32.mrf.mxu0
      %v1187 = vadd.f32 %v963, %v1186
      %v1188 = vpop.f32.mrf.mxu0
      %1189 = vdwg.mxu0
      %1190 = vmatprep.subr.mxu0 0.0
      %1191 = vmatpush1.msra.mxu0 %v861
      %1192 = vmatprep.subr.mxu0 0.0
      %1193 = vmatpush1.msra.mxu0 %v860
      %1194 = vmatprep.subr.mxu0 0.0
      %1195 = vmatpush1.msra.mxu0 %v859
      %1196 = vmatprep.subr.mxu0 0.0
      %1197 = vmatpush1.msra.mxu0 %v858
      %1198 = vmatprep.subr.mxu0 0.0
      %1199 = vmatpush1.msra.mxu0 %v857
      %1200 = vmatprep.subr.mxu0 0.0
      %1201 = vmatpush1.msra.mxu0 %v856
      %1202 = vmatprep.subr.mxu0 0.0
      %1203 = vmatpush1.msra.mxu0 %v855
      %1204 = vmatprep.subr.mxu0 0.0
      %1205 = vmatpush1.msra.mxu0 %v854
      %1206 = vmatprep.subr.mxu0 0.0
      %1207 = vmatpush1.msra.mxu0 %v853
      %1208 = vmatprep.subr.mxu0 0.0
      %1209 = vmatpush1.msra.mxu0 %v852
      %1210 = vmatprep.subr.mxu0 0.0
      %1211 = vmatpush1.msra.mxu0 %v851
      %1212 = vmatprep.subr.mxu0 0.0
      %1213 = vmatpush1.msra.mxu0 %v850
      %1214 = vmatprep.subr.mxu0 0.0
      %1215 = vmatpush1.msra.mxu0 %v849
      %1216 = vmatprep.subr.mxu0 0.0
      %1217 = vmatpush1.msra.mxu0 %v848
      %1218 = vmatprep.subr.mxu0 0.0
      %1219 = vmatpush1.msra.mxu0 %v847
      %1220 = vmatprep.subr.mxu0 0.0
      %1221 = vmatpush1.msra.mxu0 %v846
      %1222 = vmatprep.subr.mxu0 0.0
      %1223 = vmatpush2.msra.mxu0 %v877
      %1224 = vmatprep.subr.mxu0 0.0
      %1225 = vmatpush2.msra.mxu0 %v876
      %1226 = vmatprep.subr.mxu0 0.0
      %1227 = vmatpush2.msra.mxu0 %v875
      %1228 = vmatprep.subr.mxu0 0.0
      %1229 = vmatpush2.msra.mxu0 %v874
      %1230 = vmatprep.subr.mxu0 0.0
      %1231 = vmatpush2.msra.mxu0 %v873
      %1232 = vmatprep.subr.mxu0 0.0
      %1233 = vmatpush2.msra.mxu0 %v872
      %1234 = vmatprep.subr.mxu0 0.0
      %1235 = vmatpush2.msra.mxu0 %v871
      %1236 = vmatprep.subr.mxu0 0.0
      %1237 = vmatpush2.msra.mxu0 %v870
      %1238 = vmatprep.subr.mxu0 0.0
      %1239 = vmatpush2.msra.mxu0 %v869
      %1240 = vmatprep.subr.mxu0 0.0
      %1241 = vmatpush2.msra.mxu0 %v868
      %1242 = vmatprep.subr.mxu0 0.0
      %1243 = vmatpush2.msra.mxu0 %v867
      %1244 = vmatprep.subr.mxu0 0.0
      %1245 = vmatpush2.msra.mxu0 %v866
      %1246 = vmatprep.subr.mxu0 0.0
      %1247 = vmatpush2.msra.mxu0 %v865
      %1248 = vmatprep.subr.mxu0 0.0
      %1249 = vmatpush2.msra.mxu0 %v864
      %1250 = vmatprep.subr.mxu0 0.0
      %1251 = vmatpush2.msra.mxu0 %v863
      %1252 = vmatprep.subr.mxu0 0.0
      %1253 = vmatpush2.msra.mxu0 %v862
      %1254 = vmatprep.mubr.f32.mxu0 %v621
      %1255 = vmatmul.mubr.f32.gmra.mxu0 %v589
      %v1256 = vpop.f32.mrf.mxu0
      %v1257 = vadd.f32 %v1032, %v1256
      %v1258 = vpop.f32.mrf.mxu0
      %1259 = vmatprep.mubr.f32.mxu0 %v622
      %1260 = vmatmul.mubr.f32.gmra.mxu0 %v590
      %v1261 = vpop.f32.mrf.mxu0
      %v1262 = vadd.f32 %v1037, %v1261
      %v1263 = vpop.f32.mrf.mxu0
      %1264 = vmatprep.mubr.f32.mxu0 %v623
      %1265 = vmatmul.mubr.f32.gmra.mxu0 %v591
      %v1266 = vpop.f32.mrf.mxu0
      %v1267 = vadd.f32 %v1042, %v1266
      %v1268 = vpop.f32.mrf.mxu0
      %1269 = vmatprep.mubr.f32.mxu0 %v624
      %1270 = vmatmul.mubr.f32.gmra.mxu0 %v592
      %v1271 = vpop.f32.mrf.mxu0
      %v1272 = vadd.f32 %v1047, %v1271
      %v1273 = vpop.f32.mrf.mxu0
      %1274 = vmatprep.mubr.f32.mxu0 %v625
      %1275 = vmatmul.mubr.f32.gmra.mxu0 %v593
      %v1276 = vpop.f32.mrf.mxu0
      %v1277 = vadd.f32 %v1052, %v1276
      %v1278 = vpop.f32.mrf.mxu0
      %1279 = vmatprep.mubr.f32.mxu0 %v626
      %1280 = vmatmul.mubr.f32.gmra.mxu0 %v594
      %v1281 = vpop.f32.mrf.mxu0
      %v1282 = vadd.f32 %v1057, %v1281
      %v1283 = vpop.f32.mrf.mxu0
      %1284 = vmatprep.mubr.f32.mxu0 %v627
      %1285 = vmatmul.mubr.f32.gmra.mxu0 %v595
      %v1286 = vpop.f32.mrf.mxu0
      %v1287 = vadd.f32 %v1062, %v1286
      %v1288 = vpop.f32.mrf.mxu0
      %1289 = vmatprep.mubr.f32.mxu0 %v628
      %1290 = vmatmul.mubr.f32.gmra.mxu0 %v596
      %v1291 = vpop.f32.mrf.mxu0
      %v1292 = vadd.f32 %v1067, %v1291
      %v1293 = vpop.f32.mrf.mxu0
      %1294 = vmatprep.mubr.f32.mxu0 %v629
      %1295 = vmatmul.mubr.f32.gmra.mxu0 %v597
      %v1296 = vpop.f32.mrf.mxu0
      %v1297 = vadd.f32 %v1072, %v1296
      %v1298 = vpop.f32.mrf.mxu0
      %1299 = vmatprep.mubr.f32.mxu0 %v630
      %1300 = vmatmul.mubr.f32.gmra.mxu0 %v598
      %v1301 = vpop.f32.mrf.mxu0
      %v1302 = vadd.f32 %v1077, %v1301
      %v1303 = vpop.f32.mrf.mxu0
      %1304 = vmatprep.mubr.f32.mxu0 %v631
      %1305 = vmatmul.mubr.f32.gmra.mxu0 %v599
      %v1306 = vpop.f32.mrf.mxu0
      %v1307 = vadd.f32 %v1082, %v1306
      %v1308 = vpop.f32.mrf.mxu0
      %1309 = vmatprep.mubr.f32.mxu0 %v632
      %1310 = vmatmul.mubr.f32.gmra.mxu0 %v600
      %v1311 = vpop.f32.mrf.mxu0
      %v1312 = vadd.f32 %v1087, %v1311
      %v1313 = vpop.f32.mrf.mxu0
      %1314 = vmatprep.mubr.f32.mxu0 %v633
      %1315 = vmatmul.mubr.f32.gmra.mxu0 %v601
      %v1316 = vpop.f32.mrf.mxu0
      %v1317 = vadd.f32 %v1092, %v1316
      %v1318 = vpop.f32.mrf.mxu0
      %1319 = vmatprep.mubr.f32.mxu0 %v634
      %1320 = vmatmul.mubr.f32.gmra.mxu0 %v602
      %v1321 = vpop.f32.mrf.mxu0
      %v1322 = vadd.f32 %v1097, %v1321
      %v1323 = vpop.f32.mrf.mxu0
      %1324 = vmatprep.mubr.f32.mxu0 %v635
      %1325 = vmatmul.mubr.f32.gmra.mxu0 %v603
      %v1326 = vpop.f32.mrf.mxu0
      %v1327 = vadd.f32 %v1102, %v1326
      %v1328 = vpop.f32.mrf.mxu0
      %1329 = vmatprep.mubr.f32.mxu0 %v636
      %1330 = vmatmul.mubr.f32.gmra.mxu0 %v604
      %v1331 = vpop.f32.mrf.mxu0
      %v1332 = vadd.f32 %v1107, %v1331
      %v1333 = vpop.f32.mrf.mxu0
      %1334 = vmatprep.mubr.f32.mxu0 %v637
      %1335 = vmatmul.mubr.f32.gmra.mxu0 %v605
      %v1336 = vpop.f32.mrf.mxu0
      %v1337 = vadd.f32 %v1112, %v1336
      %v1338 = vpop.f32.mrf.mxu0
      %1339 = vmatprep.mubr.f32.mxu0 %v638
      %1340 = vmatmul.mubr.f32.gmra.mxu0 %v606
      %v1341 = vpop.f32.mrf.mxu0
      %v1342 = vadd.f32 %v1117, %v1341
      %v1343 = vpop.f32.mrf.mxu0
      %1344 = vmatprep.mubr.f32.mxu0 %v639
      %1345 = vmatmul.mubr.f32.gmra.mxu0 %v607
      %v1346 = vpop.f32.mrf.mxu0
      %v1347 = vadd.f32 %v1122, %v1346
      %v1348 = vpop.f32.mrf.mxu0
      %1349 = vmatprep.mubr.f32.mxu0 %v640
      %1350 = vmatmul.mubr.f32.gmra.mxu0 %v608
      %v1351 = vpop.f32.mrf.mxu0
      %v1352 = vadd.f32 %v1127, %v1351
      %v1353 = vpop.f32.mrf.mxu0
      %1354 = vmatprep.mubr.f32.mxu0 %v641
      %1355 = vmatmul.mubr.f32.gmra.mxu0 %v609
      %v1356 = vpop.f32.mrf.mxu0
      %v1357 = vadd.f32 %v1132, %v1356
      %v1358 = vpop.f32.mrf.mxu0
      %1359 = vmatprep.mubr.f32.mxu0 %v642
      %1360 = vmatmul.mubr.f32.gmra.mxu0 %v610
      %v1361 = vpop.f32.mrf.mxu0
      %v1362 = vadd.f32 %v1137, %v1361
      %v1363 = vpop.f32.mrf.mxu0
      %1364 = vmatprep.mubr.f32.mxu0 %v643
      %1365 = vmatmul.mubr.f32.gmra.mxu0 %v611
      %v1366 = vpop.f32.mrf.mxu0
      %v1367 = vadd.f32 %v1142, %v1366
      %v1368 = vpop.f32.mrf.mxu0
      %1369 = vmatprep.mubr.f32.mxu0 %v644
      %1370 = vmatmul.mubr.f32.gmra.mxu0 %v612
      %v1371 = vpop.f32.mrf.mxu0
      %v1372 = vadd.f32 %v1147, %v1371
      %v1373 = vpop.f32.mrf.mxu0
      %1374 = vmatprep.mubr.f32.mxu0 %v645
      %1375 = vmatmul.mubr.f32.gmra.mxu0 %v613
      %v1376 = vpop.f32.mrf.mxu0
      %v1377 = vadd.f32 %v1152, %v1376
      %v1378 = vpop.f32.mrf.mxu0
      %1379 = vmatprep.mubr.f32.mxu0 %v646
      %1380 = vmatmul.mubr.f32.gmra.mxu0 %v614
      %v1381 = vpop.f32.mrf.mxu0
      %v1382 = vadd.f32 %v1157, %v1381
      %v1383 = vpop.f32.mrf.mxu0
      %1384 = vmatprep.mubr.f32.mxu0 %v647
      %1385 = vmatmul.mubr.f32.gmra.mxu0 %v615
      %v1386 = vpop.f32.mrf.mxu0
      %v1387 = vadd.f32 %v1162, %v1386
      %v1388 = vpop.f32.mrf.mxu0
      %1389 = vmatprep.mubr.f32.mxu0 %v648
      %1390 = vmatmul.mubr.f32.gmra.mxu0 %v616
      %v1391 = vpop.f32.mrf.mxu0
      %v1392 = vadd.f32 %v1167, %v1391
      %v1393 = vpop.f32.mrf.mxu0
      %1394 = vmatprep.mubr.f32.mxu0 %v649
      %1395 = vmatmul.mubr.f32.gmra.mxu0 %v617
      %v1396 = vpop.f32.mrf.mxu0
      %v1397 = vadd.f32 %v1172, %v1396
      %v1398 = vpop.f32.mrf.mxu0
      %1399 = vmatprep.mubr.f32.mxu0 %v650
      %1400 = vmatmul.mubr.f32.gmra.mxu0 %v618
      %v1401 = vpop.f32.mrf.mxu0
      %v1402 = vadd.f32 %v1177, %v1401
      %v1403 = vpop.f32.mrf.mxu0
      %1404 = vmatprep.mubr.f32.mxu0 %v651
      %1405 = vmatmul.mubr.f32.gmra.mxu0 %v619
      %v1406 = vpop.f32.mrf.mxu0
      %v1407 = vadd.f32 %v1182, %v1406
      %v1408 = vpop.f32.mrf.mxu0
      %1409 = vmatprep.mubr.f32.mxu0 %v652
      %1410 = vmatmul.mubr.f32.gmra.mxu0 %v620
      %v1411 = vpop.f32.mrf.mxu0
      %v1412 = vadd.f32 %v1187, %v1411
      %v1413 = vpop.f32.mrf.mxu0
      %1414 = vdwg.mxu0
      %1415 = vmatprep.subr.mxu0 0.0
      %1416 = vmatpush1.msra.mxu0 %v893
      %1417 = vmatprep.subr.mxu0 0.0
      %1418 = vmatpush1.msra.mxu0 %v892
      %1419 = vmatprep.subr.mxu0 0.0
      %1420 = vmatpush1.msra.mxu0 %v891
      %1421 = vmatprep.subr.mxu0 0.0
      %1422 = vmatpush1.msra.mxu0 %v890
      %1423 = vmatprep.subr.mxu0 0.0
      %1424 = vmatpush1.msra.mxu0 %v889
      %1425 = vmatprep.subr.mxu0 0.0
      %1426 = vmatpush1.msra.mxu0 %v888
      %1427 = vmatprep.subr.mxu0 0.0
      %1428 = vmatpush1.msra.mxu0 %v887
      %1429 = vmatprep.subr.mxu0 0.0
      %1430 = vmatpush1.msra.mxu0 %v886
      %1431 = vmatprep.subr.mxu0 0.0
      %1432 = vmatpush1.msra.mxu0 %v885
      %1433 = vmatprep.subr.mxu0 0.0
      %1434 = vmatpush1.msra.mxu0 %v884
      %1435 = vmatprep.subr.mxu0 0.0
      %1436 = vmatpush1.msra.mxu0 %v883
      %1437 = vmatprep.subr.mxu0 0.0
      %1438 = vmatpush1.msra.mxu0 %v882
      %1439 = vmatprep.subr.mxu0 0.0
      %1440 = vmatpush1.msra.mxu0 %v881
      %1441 = vmatprep.subr.mxu0 0.0
      %1442 = vmatpush1.msra.mxu0 %v880
      %1443 = vmatprep.subr.mxu0 0.0
      %1444 = vmatpush1.msra.mxu0 %v879
      %1445 = vmatprep.subr.mxu0 0.0
      %1446 = vmatpush1.msra.mxu0 %v878
      %1447 = vmatprep.subr.mxu0 0.0
      %1448 = vmatpush2.msra.mxu0 %v909
      %1449 = vmatprep.subr.mxu0 0.0
      %1450 = vmatpush2.msra.mxu0 %v908
      %1451 = vmatprep.subr.mxu0 0.0
      %1452 = vmatpush2.msra.mxu0 %v907
      %1453 = vmatprep.subr.mxu0 0.0
      %1454 = vmatpush2.msra.mxu0 %v906
      %1455 = vmatprep.subr.mxu0 0.0
      %1456 = vmatpush2.msra.mxu0 %v905
      %1457 = vmatprep.subr.mxu0 0.0
      %1458 = vmatpush2.msra.mxu0 %v904
      %1459 = vmatprep.subr.mxu0 0.0
      %1460 = vmatpush2.msra.mxu0 %v903
      %1461 = vmatprep.subr.mxu0 0.0
      %1462 = vmatpush2.msra.mxu0 %v902
      %1463 = vmatprep.subr.mxu0 0.0
      %1464 = vmatpush2.msra.mxu0 %v901
      %1465 = vmatprep.subr.mxu0 0.0
      %1466 = vmatpush2.msra.mxu0 %v900
      %1467 = vmatprep.subr.mxu0 0.0
      %1468 = vmatpush2.msra.mxu0 %v899
      %1469 = vmatprep.subr.mxu0 0.0
      %1470 = vmatpush2.msra.mxu0 %v898
      %1471 = vmatprep.subr.mxu0 0.0
      %1472 = vmatpush2.msra.mxu0 %v897
      %1473 = vmatprep.subr.mxu0 0.0
      %1474 = vmatpush2.msra.mxu0 %v896
      %1475 = vmatprep.subr.mxu0 0.0
      %1476 = vmatpush2.msra.mxu0 %v895
      %1477 = vmatprep.subr.mxu0 0.0
      %1478 = vmatpush2.msra.mxu0 %v894
      %1479 = vmatprep.mubr.f32.mxu0 %v685
      %1480 = vmatmul.mubr.f32.gmra.mxu0 %v653
      %v1481 = vpop.f32.mrf.mxu0
      %v1482 = vadd.f32 %v1257, %v1481
      %v1483 = vpop.f32.mrf.mxu0
      %1484 = vmatprep.mubr.f32.mxu0 %v686
      %1485 = vmatmul.mubr.f32.gmra.mxu0 %v654
      %v1486 = vpop.f32.mrf.mxu0
      %v1487 = vadd.f32 %v1262, %v1486
      %v1488 = vpop.f32.mrf.mxu0
      %1489 = vmatprep.mubr.f32.mxu0 %v687
      %1490 = vmatmul.mubr.f32.gmra.mxu0 %v655
      %v1491 = vpop.f32.mrf.mxu0
      %v1492 = vadd.f32 %v1267, %v1491
      %v1493 = vpop.f32.mrf.mxu0
      %1494 = vmatprep.mubr.f32.mxu0 %v688
      %1495 = vmatmul.mubr.f32.gmra.mxu0 %v656
      %v1496 = vpop.f32.mrf.mxu0
      %v1497 = vadd.f32 %v1272, %v1496
      %v1498 = vpop.f32.mrf.mxu0
      %1499 = vmatprep.mubr.f32.mxu0 %v689
      %1500 = vmatmul.mubr.f32.gmra.mxu0 %v657
      %v1501 = vpop.f32.mrf.mxu0
      %v1502 = vadd.f32 %v1277, %v1501
      %v1503 = vpop.f32.mrf.mxu0
      %1504 = vmatprep.mubr.f32.mxu0 %v690
      %1505 = vmatmul.mubr.f32.gmra.mxu0 %v658
      %v1506 = vpop.f32.mrf.mxu0
      %v1507 = vadd.f32 %v1282, %v1506
      %v1508 = vpop.f32.mrf.mxu0
      %1509 = vmatprep.mubr.f32.mxu0 %v691
      %1510 = vmatmul.mubr.f32.gmra.mxu0 %v659
      %v1511 = vpop.f32.mrf.mxu0
      %v1512 = vadd.f32 %v1287, %v1511
      %v1513 = vpop.f32.mrf.mxu0
      %1514 = vmatprep.mubr.f32.mxu0 %v692
      %1515 = vmatmul.mubr.f32.gmra.mxu0 %v660
      %v1516 = vpop.f32.mrf.mxu0
      %v1517 = vadd.f32 %v1292, %v1516
      %v1518 = vpop.f32.mrf.mxu0
      %1519 = vmatprep.mubr.f32.mxu0 %v693
      %1520 = vmatmul.mubr.f32.gmra.mxu0 %v661
      %v1521 = vpop.f32.mrf.mxu0
      %v1522 = vadd.f32 %v1297, %v1521
      %v1523 = vpop.f32.mrf.mxu0
      %1524 = vmatprep.mubr.f32.mxu0 %v694
      %1525 = vmatmul.mubr.f32.gmra.mxu0 %v662
      %v1526 = vpop.f32.mrf.mxu0
      %v1527 = vadd.f32 %v1302, %v1526
      %v1528 = vpop.f32.mrf.mxu0
      %1529 = vmatprep.mubr.f32.mxu0 %v695
      %1530 = vmatmul.mubr.f32.gmra.mxu0 %v663
      %v1531 = vpop.f32.mrf.mxu0
      %v1532 = vadd.f32 %v1307, %v1531
      %v1533 = vpop.f32.mrf.mxu0
      %1534 = vmatprep.mubr.f32.mxu0 %v696
      %1535 = vmatmul.mubr.f32.gmra.mxu0 %v664
      %v1536 = vpop.f32.mrf.mxu0
      %v1537 = vadd.f32 %v1312, %v1536
      %v1538 = vpop.f32.mrf.mxu0
      %1539 = vmatprep.mubr.f32.mxu0 %v697
      %1540 = vmatmul.mubr.f32.gmra.mxu0 %v665
      %v1541 = vpop.f32.mrf.mxu0
      %v1542 = vadd.f32 %v1317, %v1541
      %v1543 = vpop.f32.mrf.mxu0
      %1544 = vmatprep.mubr.f32.mxu0 %v698
      %1545 = vmatmul.mubr.f32.gmra.mxu0 %v666
      %v1546 = vpop.f32.mrf.mxu0
      %v1547 = vadd.f32 %v1322, %v1546
      %v1548 = vpop.f32.mrf.mxu0
      %1549 = vmatprep.mubr.f32.mxu0 %v699
      %1550 = vmatmul.mubr.f32.gmra.mxu0 %v667
      %v1551 = vpop.f32.mrf.mxu0
      %v1552 = vadd.f32 %v1327, %v1551
      %v1553 = vpop.f32.mrf.mxu0
      %1554 = vmatprep.mubr.f32.mxu0 %v700
      %1555 = vmatmul.mubr.f32.gmra.mxu0 %v668
      %v1556 = vpop.f32.mrf.mxu0
      %v1557 = vadd.f32 %v1332, %v1556
      %v1558 = vpop.f32.mrf.mxu0
      %1559 = vmatprep.mubr.f32.mxu0 %v701
      %1560 = vmatmul.mubr.f32.gmra.mxu0 %v669
      %v1561 = vpop.f32.mrf.mxu0
      %v1562 = vadd.f32 %v1337, %v1561
      %v1563 = vpop.f32.mrf.mxu0
      %1564 = vmatprep.mubr.f32.mxu0 %v702
      %1565 = vmatmul.mubr.f32.gmra.mxu0 %v670
      %v1566 = vpop.f32.mrf.mxu0
      %v1567 = vadd.f32 %v1342, %v1566
      %v1568 = vpop.f32.mrf.mxu0
      %1569 = vmatprep.mubr.f32.mxu0 %v703
      %1570 = vmatmul.mubr.f32.gmra.mxu0 %v671
      %v1571 = vpop.f32.mrf.mxu0
      %v1572 = vadd.f32 %v1347, %v1571
      %v1573 = vpop.f32.mrf.mxu0
      %1574 = vmatprep.mubr.f32.mxu0 %v704
      %1575 = vmatmul.mubr.f32.gmra.mxu0 %v672
      %v1576 = vpop.f32.mrf.mxu0
      %v1577 = vadd.f32 %v1352, %v1576
      %v1578 = vpop.f32.mrf.mxu0
      %1579 = vmatprep.mubr.f32.mxu0 %v705
      %1580 = vmatmul.mubr.f32.gmra.mxu0 %v673
      %v1581 = vpop.f32.mrf.mxu0
      %v1582 = vadd.f32 %v1357, %v1581
      %v1583 = vpop.f32.mrf.mxu0
      %1584 = vmatprep.mubr.f32.mxu0 %v706
      %1585 = vmatmul.mubr.f32.gmra.mxu0 %v674
      %v1586 = vpop.f32.mrf.mxu0
      %v1587 = vadd.f32 %v1362, %v1586
      %v1588 = vpop.f32.mrf.mxu0
      %1589 = vmatprep.mubr.f32.mxu0 %v707
      %1590 = vmatmul.mubr.f32.gmra.mxu0 %v675
      %v1591 = vpop.f32.mrf.mxu0
      %v1592 = vadd.f32 %v1367, %v1591
      %v1593 = vpop.f32.mrf.mxu0
      %1594 = vmatprep.mubr.f32.mxu0 %v708
      %1595 = vmatmul.mubr.f32.gmra.mxu0 %v676
      %v1596 = vpop.f32.mrf.mxu0
      %v1597 = vadd.f32 %v1372, %v1596
      %v1598 = vpop.f32.mrf.mxu0
      %1599 = vmatprep.mubr.f32.mxu0 %v709
      %1600 = vmatmul.mubr.f32.gmra.mxu0 %v677
      %v1601 = vpop.f32.mrf.mxu0
      %v1602 = vadd.f32 %v1377, %v1601
      %v1603 = vpop.f32.mrf.mxu0
      %1604 = vmatprep.mubr.f32.mxu0 %v710
      %1605 = vmatmul.mubr.f32.gmra.mxu0 %v678
      %v1606 = vpop.f32.mrf.mxu0
      %v1607 = vadd.f32 %v1382, %v1606
      %v1608 = vpop.f32.mrf.mxu0
      %1609 = vmatprep.mubr.f32.mxu0 %v711
      %1610 = vmatmul.mubr.f32.gmra.mxu0 %v679
      %v1611 = vpop.f32.mrf.mxu0
      %v1612 = vadd.f32 %v1387, %v1611
      %v1613 = vpop.f32.mrf.mxu0
      %1614 = vmatprep.mubr.f32.mxu0 %v712
      %1615 = vmatmul.mubr.f32.gmra.mxu0 %v680
      %v1616 = vpop.f32.mrf.mxu0
      %v1617 = vadd.f32 %v1392, %v1616
      %v1618 = vpop.f32.mrf.mxu0
      %1619 = vmatprep.mubr.f32.mxu0 %v713
      %1620 = vmatmul.mubr.f32.gmra.mxu0 %v681
      %v1621 = vpop.f32.mrf.mxu0
      %v1622 = vadd.f32 %v1397, %v1621
      %v1623 = vpop.f32.mrf.mxu0
      %1624 = vmatprep.mubr.f32.mxu0 %v714
      %1625 = vmatmul.mubr.f32.gmra.mxu0 %v682
      %v1626 = vpop.f32.mrf.mxu0
      %v1627 = vadd.f32 %v1402, %v1626
      %v1628 = vpop.f32.mrf.mxu0
      %1629 = vmatprep.mubr.f32.mxu0 %v715
      %1630 = vmatmul.mubr.f32.gmra.mxu0 %v683
      %v1631 = vpop.f32.mrf.mxu0
      %v1632 = vadd.f32 %v1407, %v1631
      %v1633 = vpop.f32.mrf.mxu0
      %1634 = vmatprep.mubr.f32.mxu0 %v716
      %1635 = vmatmul.mubr.f32.gmra.mxu0 %v684
      %v1636 = vpop.f32.mrf.mxu0
      %v1637 = vadd.f32 %v1412, %v1636
      %v1638 = vpop.f32.mrf.mxu0
      %1639 = vdwg.mxu0
      %1640 = vmatprep.subr.mxu0 0.0
      %1641 = vmatpush1.msra.mxu0 %v925
      %1642 = vmatprep.subr.mxu0 0.0
      %1643 = vmatpush1.msra.mxu0 %v924
      %1644 = vmatprep.subr.mxu0 0.0
      %1645 = vmatpush1.msra.mxu0 %v923
      %1646 = vmatprep.subr.mxu0 0.0
      %1647 = vmatpush1.msra.mxu0 %v922
      %1648 = vmatprep.subr.mxu0 0.0
      %1649 = vmatpush1.msra.mxu0 %v921
      %1650 = vmatprep.subr.mxu0 0.0
      %1651 = vmatpush1.msra.mxu0 %v920
      %1652 = vmatprep.subr.mxu0 0.0
      %1653 = vmatpush1.msra.mxu0 %v919
      %1654 = vmatprep.subr.mxu0 0.0
      %1655 = vmatpush1.msra.mxu0 %v918
      %1656 = vmatprep.subr.mxu0 0.0
      %1657 = vmatpush1.msra.mxu0 %v917
      %1658 = vmatprep.subr.mxu0 0.0
      %1659 = vmatpush1.msra.mxu0 %v916
      %1660 = vmatprep.subr.mxu0 0.0
      %1661 = vmatpush1.msra.mxu0 %v915
      %1662 = vmatprep.subr.mxu0 0.0
      %1663 = vmatpush1.msra.mxu0 %v914
      %1664 = vmatprep.subr.mxu0 0.0
      %1665 = vmatpush1.msra.mxu0 %v913
      %1666 = vmatprep.subr.mxu0 0.0
      %1667 = vmatpush1.msra.mxu0 %v912
      %1668 = vmatprep.subr.mxu0 0.0
      %1669 = vmatpush1.msra.mxu0 %v911
      %1670 = vmatprep.subr.mxu0 0.0
      %1671 = vmatpush1.msra.mxu0 %v910
      %1672 = vmatprep.subr.mxu0 0.0
      %1673 = vmatpush2.msra.mxu0 %v941
      %1674 = vmatprep.subr.mxu0 0.0
      %1675 = vmatpush2.msra.mxu0 %v940
      %1676 = vmatprep.subr.mxu0 0.0
      %1677 = vmatpush2.msra.mxu0 %v939
      %1678 = vmatprep.subr.mxu0 0.0
      %1679 = vmatpush2.msra.mxu0 %v938
      %1680 = vmatprep.subr.mxu0 0.0
      %1681 = vmatpush2.msra.mxu0 %v937
      %1682 = vmatprep.subr.mxu0 0.0
      %1683 = vmatpush2.msra.mxu0 %v936
      %1684 = vmatprep.subr.mxu0 0.0
      %1685 = vmatpush2.msra.mxu0 %v935
      %1686 = vmatprep.subr.mxu0 0.0
      %1687 = vmatpush2.msra.mxu0 %v934
      %1688 = vmatprep.subr.mxu0 0.0
      %1689 = vmatpush2.msra.mxu0 %v933
      %1690 = vmatprep.subr.mxu0 0.0
      %1691 = vmatpush2.msra.mxu0 %v932
      %1692 = vmatprep.subr.mxu0 0.0
      %1693 = vmatpush2.msra.mxu0 %v931
      %1694 = vmatprep.subr.mxu0 0.0
      %1695 = vmatpush2.msra.mxu0 %v930
      %1696 = vmatprep.subr.mxu0 0.0
      %1697 = vmatpush2.msra.mxu0 %v929
      %1698 = vmatprep.subr.mxu0 0.0
      %1699 = vmatpush2.msra.mxu0 %v928
      %1700 = vmatprep.subr.mxu0 0.0
      %1701 = vmatpush2.msra.mxu0 %v927
      %1702 = vmatprep.subr.mxu0 0.0
      %1703 = vmatpush2.msra.mxu0 %v926
      %1704 = vmatprep.mubr.f32.mxu0 %v750
      %1705 = vmatmul.mubr.f32.gmra.mxu0 %v718
      %v1706 = vpop.f32.mrf.mxu0
      %v1707 = vadd.f32 %v1482, %v1706
      %v1708 = vpop.f32.mrf.mxu0
      %1709 = vmatprep.mubr.f32.mxu0 %v751
      %1710 = vmatmul.mubr.f32.gmra.mxu0 %v719
      %v1711 = vpop.f32.mrf.mxu0
      %v1712 = vadd.f32 %v1487, %v1711
      %v1713 = vpop.f32.mrf.mxu0
      %1714 = vmatprep.mubr.f32.mxu0 %v752
      %1715 = vmatmul.mubr.f32.gmra.mxu0 %v720
      %v1716 = vpop.f32.mrf.mxu0
      %v1717 = vadd.f32 %v1492, %v1716
      %v1718 = vpop.f32.mrf.mxu0
      %1719 = vmatprep.mubr.f32.mxu0 %v753
      %1720 = vmatmul.mubr.f32.gmra.mxu0 %v721
      %v1721 = vpop.f32.mrf.mxu0
      %v1722 = vadd.f32 %v1497, %v1721
      %v1723 = vpop.f32.mrf.mxu0
      %1724 = vmatprep.mubr.f32.mxu0 %v754
      %1725 = vmatmul.mubr.f32.gmra.mxu0 %v722
      %v1726 = vpop.f32.mrf.mxu0
      %v1727 = vadd.f32 %v1502, %v1726
      %v1728 = vpop.f32.mrf.mxu0
      %1729 = vmatprep.mubr.f32.mxu0 %v755
      %1730 = vmatmul.mubr.f32.gmra.mxu0 %v723
      %v1731 = vpop.f32.mrf.mxu0
      %v1732 = vadd.f32 %v1507, %v1731
      %v1733 = vpop.f32.mrf.mxu0
      %1734 = vmatprep.mubr.f32.mxu0 %v756
      %1735 = vmatmul.mubr.f32.gmra.mxu0 %v724
      %v1736 = vpop.f32.mrf.mxu0
      %v1737 = vadd.f32 %v1512, %v1736
      %v1738 = vpop.f32.mrf.mxu0
      %1739 = vmatprep.mubr.f32.mxu0 %v757
      %1740 = vmatmul.mubr.f32.gmra.mxu0 %v725
      %v1741 = vpop.f32.mrf.mxu0
      %v1742 = vadd.f32 %v1517, %v1741
      %v1743 = vpop.f32.mrf.mxu0
      %1744 = vmatprep.mubr.f32.mxu0 %v758
      %1745 = vmatmul.mubr.f32.gmra.mxu0 %v726
      %v1746 = vpop.f32.mrf.mxu0
      %v1747 = vadd.f32 %v1522, %v1746
      %v1748 = vpop.f32.mrf.mxu0
      %1749 = vmatprep.mubr.f32.mxu0 %v759
      %1750 = vmatmul.mubr.f32.gmra.mxu0 %v727
      %v1751 = vpop.f32.mrf.mxu0
      %v1752 = vadd.f32 %v1527, %v1751
      %v1753 = vpop.f32.mrf.mxu0
      %1754 = vmatprep.mubr.f32.mxu0 %v760
      %1755 = vmatmul.mubr.f32.gmra.mxu0 %v728
      %v1756 = vpop.f32.mrf.mxu0
      %v1757 = vadd.f32 %v1532, %v1756
      %v1758 = vpop.f32.mrf.mxu0
      %1759 = vmatprep.mubr.f32.mxu0 %v761
      %1760 = vmatmul.mubr.f32.gmra.mxu0 %v729
      %v1761 = vpop.f32.mrf.mxu0
      %v1762 = vadd.f32 %v1537, %v1761
      %v1763 = vpop.f32.mrf.mxu0
      %1764 = vmatprep.mubr.f32.mxu0 %v762
      %1765 = vmatmul.mubr.f32.gmra.mxu0 %v730
      %v1766 = vpop.f32.mrf.mxu0
      %v1767 = vadd.f32 %v1542, %v1766
      %v1768 = vpop.f32.mrf.mxu0
      %1769 = vmatprep.mubr.f32.mxu0 %v763
      %1770 = vmatmul.mubr.f32.gmra.mxu0 %v731
      %v1771 = vpop.f32.mrf.mxu0
      %v1772 = vadd.f32 %v1547, %v1771
      %v1773 = vpop.f32.mrf.mxu0
      %1774 = vmatprep.mubr.f32.mxu0 %v764
      %1775 = vmatmul.mubr.f32.gmra.mxu0 %v732
      %v1776 = vpop.f32.mrf.mxu0
      %v1777 = vadd.f32 %v1552, %v1776
      %v1778 = vpop.f32.mrf.mxu0
      %1779 = vmatprep.mubr.f32.mxu0 %v765
      %1780 = vmatmul.mubr.f32.gmra.mxu0 %v733
      %v1781 = vpop.f32.mrf.mxu0
      %v1782 = vadd.f32 %v1557, %v1781
      %v1783 = vpop.f32.mrf.mxu0
      %1784 = vmatprep.mubr.f32.mxu0 %v766
      %1785 = vmatmul.mubr.f32.gmra.mxu0 %v734
      %v1786 = vpop.f32.mrf.mxu0
      %v1787 = vadd.f32 %v1562, %v1786
      %v1788 = vpop.f32.mrf.mxu0
      %1789 = vmatprep.mubr.f32.mxu0 %v767
      %1790 = vmatmul.mubr.f32.gmra.mxu0 %v735
      %v1791 = vpop.f32.mrf.mxu0
      %v1792 = vadd.f32 %v1567, %v1791
      %v1793 = vpop.f32.mrf.mxu0
      %1794 = vmatprep.mubr.f32.mxu0 %v768
      %1795 = vmatmul.mubr.f32.gmra.mxu0 %v736
      %v1796 = vpop.f32.mrf.mxu0
      %v1797 = vadd.f32 %v1572, %v1796
      %v1798 = vpop.f32.mrf.mxu0
      %1799 = vmatprep.mubr.f32.mxu0 %v769
      %1800 = vmatmul.mubr.f32.gmra.mxu0 %v737
      %v1801 = vpop.f32.mrf.mxu0
      %v1802 = vadd.f32 %v1577, %v1801
      %v1803 = vpop.f32.mrf.mxu0
      %1804 = vmatprep.mubr.f32.mxu0 %v770
      %1805 = vmatmul.mubr.f32.gmra.mxu0 %v738
      %v1806 = vpop.f32.mrf.mxu0
      %v1807 = vadd.f32 %v1582, %v1806
      %v1808 = vpop.f32.mrf.mxu0
      %1809 = vmatprep.mubr.f32.mxu0 %v771
      %1810 = vmatmul.mubr.f32.gmra.mxu0 %v739
      %v1811 = vpop.f32.mrf.mxu0
      %v1812 = vadd.f32 %v1587, %v1811
      %v1813 = vpop.f32.mrf.mxu0
      %1814 = vmatprep.mubr.f32.mxu0 %v772
      %1815 = vmatmul.mubr.f32.gmra.mxu0 %v740
      %v1816 = vpop.f32.mrf.mxu0
      %v1817 = vadd.f32 %v1592, %v1816
      %v1818 = vpop.f32.mrf.mxu0
      %1819 = vmatprep.mubr.f32.mxu0 %v773
      %1820 = vmatmul.mubr.f32.gmra.mxu0 %v741
      %v1821 = vpop.f32.mrf.mxu0
      %v1822 = vadd.f32 %v1597, %v1821
      %v1823 = vpop.f32.mrf.mxu0
      %1824 = vmatprep.mubr.f32.mxu0 %v774
      %1825 = vmatmul.mubr.f32.gmra.mxu0 %v742
      %v1826 = vpop.f32.mrf.mxu0
      %v1827 = vadd.f32 %v1602, %v1826
      %v1828 = vpop.f32.mrf.mxu0
      %1829 = vmatprep.mubr.f32.mxu0 %v775
      %1830 = vmatmul.mubr.f32.gmra.mxu0 %v743
      %v1831 = vpop.f32.mrf.mxu0
      %v1832 = vadd.f32 %v1607, %v1831
      %v1833 = vpop.f32.mrf.mxu0
      %1834 = vmatprep.mubr.f32.mxu0 %v776
      %1835 = vmatmul.mubr.f32.gmra.mxu0 %v744
      %v1836 = vpop.f32.mrf.mxu0
      %v1837 = vadd.f32 %v1612, %v1836
      %v1838 = vpop.f32.mrf.mxu0
      %1839 = vmatprep.mubr.f32.mxu0 %v777
      %1840 = vmatmul.mubr.f32.gmra.mxu0 %v745
      %v1841 = vpop.f32.mrf.mxu0
      %v1842 = vadd.f32 %v1617, %v1841
      %v1843 = vpop.f32.mrf.mxu0
      %1844 = vmatprep.mubr.f32.mxu0 %v778
      %1845 = vmatmul.mubr.f32.gmra.mxu0 %v746
      %v1846 = vpop.f32.mrf.mxu0
      %v1847 = vadd.f32 %v1622, %v1846
      %v1848 = vpop.f32.mrf.mxu0
      %1849 = vmatprep.mubr.f32.mxu0 %v779
      %1850 = vmatmul.mubr.f32.gmra.mxu0 %v747
      %v1851 = vpop.f32.mrf.mxu0
      %v1852 = vadd.f32 %v1627, %v1851
      %v1853 = vpop.f32.mrf.mxu0
      %1854 = vmatprep.mubr.f32.mxu0 %v780
      %1855 = vmatmul.mubr.f32.gmra.mxu0 %v748
      %v1856 = vpop.f32.mrf.mxu0
      %v1857 = vadd.f32 %v1632, %v1856
      %v1858 = vpop.f32.mrf.mxu0
      %1859 = vmatprep.mubr.f32.mxu0 %v781
      %1860 = vmatmul.mubr.f32.gmra.mxu0 %v749
      %v1861 = vpop.f32.mrf.mxu0
      %v1862 = vadd.f32 %v1637, %v1861
      %v1863 = vpop.f32.mrf.mxu0
      %1864 = vdwg.mxu0
      %1865 = vmatprep.subr.mxu0 0.0
      %1866 = vmatpush1.msra.mxu0 %v957
      %1867 = vmatprep.subr.mxu0 0.0
      %1868 = vmatpush1.msra.mxu0 %v956
      %1869 = vmatprep.subr.mxu0 0.0
      %1870 = vmatpush1.msra.mxu0 %v955
      %1871 = vmatprep.subr.mxu0 0.0
      %1872 = vmatpush1.msra.mxu0 %v954
      %1873 = vmatprep.subr.mxu0 0.0
      %1874 = vmatpush1.msra.mxu0 %v953
      %1875 = vmatprep.subr.mxu0 0.0
      %1876 = vmatpush1.msra.mxu0 %v952
      %1877 = vmatprep.subr.mxu0 0.0
      %1878 = vmatpush1.msra.mxu0 %v951
      %1879 = vmatprep.subr.mxu0 0.0
      %1880 = vmatpush1.msra.mxu0 %v950
      %1881 = vmatprep.subr.mxu0 0.0
      %1882 = vmatpush1.msra.mxu0 %v949
      %1883 = vmatprep.subr.mxu0 0.0
      %1884 = vmatpush1.msra.mxu0 %v948
      %1885 = vmatprep.subr.mxu0 0.0
      %1886 = vmatpush1.msra.mxu0 %v947
      %1887 = vmatprep.subr.mxu0 0.0
      %1888 = vmatpush1.msra.mxu0 %v946
      %1889 = vmatprep.subr.mxu0 0.0
      %1890 = vmatpush1.msra.mxu0 %v945
      %1891 = vmatprep.subr.mxu0 0.0
      %1892 = vmatpush1.msra.mxu0 %v944
      %1893 = vmatprep.subr.mxu0 0.0
      %1894 = vmatpush1.msra.mxu0 %v943
      %1895 = vmatprep.subr.mxu0 0.0
      %1896 = vmatpush1.msra.mxu0 %v942
      %1897 = vmatprep.subr.mxu0 0.0
      %1898 = vmatpush2.msra.mxu0 0.0
      %1899 = vmatprep.subr.mxu0 0.0
      %1900 = vmatpush2.msra.mxu0 0.0
      %1901 = vmatprep.subr.mxu0 0.0
      %1902 = vmatpush2.msra.mxu0 0.0
      %1903 = vmatprep.subr.mxu0 0.0
      %1904 = vmatpush2.msra.mxu0 0.0
      %1905 = vmatprep.subr.mxu0 0.0
      %1906 = vmatpush2.msra.mxu0 0.0
      %1907 = vmatprep.subr.mxu0 0.0
      %1908 = vmatpush2.msra.mxu0 0.0
      %1909 = vmatprep.subr.mxu0 0.0
      %1910 = vmatpush2.msra.mxu0 0.0
      %1911 = vmatprep.subr.mxu0 0.0
      %1912 = vmatpush2.msra.mxu0 0.0
      %1913 = vmatprep.subr.mxu0 0.0
      %1914 = vmatpush2.msra.mxu0 0.0
      %1915 = vmatprep.subr.mxu0 0.0
      %1916 = vmatpush2.msra.mxu0 0.0
      %1917 = vmatprep.subr.mxu0 0.0
      %1918 = vmatpush2.msra.mxu0 0.0
      %1919 = vmatprep.subr.mxu0 0.0
      %1920 = vmatpush2.msra.mxu0 0.0
      %1921 = vmatprep.subr.mxu0 0.0
      %1922 = vmatpush2.msra.mxu0 0.0
      %1923 = vmatprep.subr.mxu0 0.0
      %1924 = vmatpush2.msra.mxu0 0.0
      %1925 = vmatprep.subr.mxu0 0.0
      %1926 = vmatpush2.msra.mxu0 0.0
      %1927 = vmatprep.subr.mxu0 0.0
      %1928 = vmatpush2.msra.mxu0 0.0
      %1929 = vmatprep.mubr.f32.mxu0 0.0
      %1930 = vmatmul.mubr.f32.gmra.mxu0 %v782
      %v1931 = vpop.f32.mrf.mxu0
      %v1932 = vadd.f32 %v1707, %v1931
      %v1933 = vpop.f32.mrf.mxu0
      %1934 = vmatprep.mubr.f32.mxu0 0.0
      %1935 = vmatmul.mubr.f32.gmra.mxu0 %v783
      %v1936 = vpop.f32.mrf.mxu0
      %v1937 = vadd.f32 %v1712, %v1936
      %v1938 = vpop.f32.mrf.mxu0
      %1939 = vmatprep.mubr.f32.mxu0 0.0
      %1940 = vmatmul.mubr.f32.gmra.mxu0 %v784
      %v1941 = vpop.f32.mrf.mxu0
      %v1942 = vadd.f32 %v1717, %v1941
      %v1943 = vpop.f32.mrf.mxu0
      %1944 = vmatprep.mubr.f32.mxu0 0.0
      %1945 = vmatmul.mubr.f32.gmra.mxu0 %v785
      %v1946 = vpop.f32.mrf.mxu0
      %v1947 = vadd.f32 %v1722, %v1946
      %v1948 = vpop.f32.mrf.mxu0
      %1949 = vmatprep.mubr.f32.mxu0 0.0
      %1950 = vmatmul.mubr.f32.gmra.mxu0 %v786
      %v1951 = vpop.f32.mrf.mxu0
      %v1952 = vadd.f32 %v1727, %v1951
      %v1953 = vpop.f32.mrf.mxu0
      %1954 = vmatprep.mubr.f32.mxu0 0.0
      %1955 = vmatmul.mubr.f32.gmra.mxu0 %v787
      %v1956 = vpop.f32.mrf.mxu0
      %v1957 = vadd.f32 %v1732, %v1956
      %v1958 = vpop.f32.mrf.mxu0
      %1959 = vmatprep.mubr.f32.mxu0 0.0
      %1960 = vmatmul.mubr.f32.gmra.mxu0 %v788
      %v1961 = vpop.f32.mrf.mxu0
      %v1962 = vadd.f32 %v1737, %v1961
      %v1963 = vpop.f32.mrf.mxu0
      %1964 = vmatprep.mubr.f32.mxu0 0.0
      %1965 = vmatmul.mubr.f32.gmra.mxu0 %v789
      %v1966 = vpop.f32.mrf.mxu0
      %v1967 = vadd.f32 %v1742, %v1966
      %v1968 = vpop.f32.mrf.mxu0
      %1969 = vmatprep.mubr.f32.mxu0 0.0
      %1970 = vmatmul.mubr.f32.gmra.mxu0 %v790
      %v1971 = vpop.f32.mrf.mxu0
      %v1972 = vadd.f32 %v1747, %v1971
      %v1973 = vpop.f32.mrf.mxu0
      %1974 = vmatprep.mubr.f32.mxu0 0.0
      %1975 = vmatmul.mubr.f32.gmra.mxu0 %v791
      %v1976 = vpop.f32.mrf.mxu0
      %v1977 = vadd.f32 %v1752, %v1976
      %v1978 = vpop.f32.mrf.mxu0
      %1979 = vmatprep.mubr.f32.mxu0 0.0
      %1980 = vmatmul.mubr.f32.gmra.mxu0 %v792
      %v1981 = vpop.f32.mrf.mxu0
      %v1982 = vadd.f32 %v1757, %v1981
      %v1983 = vpop.f32.mrf.mxu0
      %1984 = vmatprep.mubr.f32.mxu0 0.0
      %1985 = vmatmul.mubr.f32.gmra.mxu0 %v793
      %v1986 = vpop.f32.mrf.mxu0
      %v1987 = vadd.f32 %v1762, %v1986
      %v1988 = vpop.f32.mrf.mxu0
      %1989 = vmatprep.mubr.f32.mxu0 0.0
      %1990 = vmatmul.mubr.f32.gmra.mxu0 %v794
      %v1991 = vpop.f32.mrf.mxu0
      %v1992 = vadd.f32 %v1767, %v1991
      %v1993 = vpop.f32.mrf.mxu0
      %1994 = vmatprep.mubr.f32.mxu0 0.0
      %1995 = vmatmul.mubr.f32.gmra.mxu0 %v795
      %v1996 = vpop.f32.mrf.mxu0
      %v1997 = vadd.f32 %v1772, %v1996
      %v1998 = vpop.f32.mrf.mxu0
      %1999 = vmatprep.mubr.f32.mxu0 0.0
      %2000 = vmatmul.mubr.f32.gmra.mxu0 %v796
      %v2001 = vpop.f32.mrf.mxu0
      %v2002 = vadd.f32 %v1777, %v2001
      %v2003 = vpop.f32.mrf.mxu0
      %2004 = vmatprep.mubr.f32.mxu0 0.0
      %2005 = vmatmul.mubr.f32.gmra.mxu0 %v797
      %v2006 = vpop.f32.mrf.mxu0
      %v2007 = vadd.f32 %v1782, %v2006
      %v2008 = vpop.f32.mrf.mxu0
      %2009 = vmatprep.mubr.f32.mxu0 0.0
      %2010 = vmatmul.mubr.f32.gmra.mxu0 %v798
      %v2011 = vpop.f32.mrf.mxu0
      %v2012 = vadd.f32 %v1787, %v2011
      %v2013 = vpop.f32.mrf.mxu0
      %2014 = vmatprep.mubr.f32.mxu0 0.0
      %2015 = vmatmul.mubr.f32.gmra.mxu0 %v799
      %v2016 = vpop.f32.mrf.mxu0
      %v2017 = vadd.f32 %v1792, %v2016
      %v2018 = vpop.f32.mrf.mxu0
      %2019 = vmatprep.mubr.f32.mxu0 0.0
      %2020 = vmatmul.mubr.f32.gmra.mxu0 %v800
      %v2021 = vpop.f32.mrf.mxu0
      %v2022 = vadd.f32 %v1797, %v2021
      %v2023 = vpop.f32.mrf.mxu0
      %2024 = vmatprep.mubr.f32.mxu0 0.0
      %2025 = vmatmul.mubr.f32.gmra.mxu0 %v801
      %v2026 = vpop.f32.mrf.mxu0
      %v2027 = vadd.f32 %v1802, %v2026
      %v2028 = vpop.f32.mrf.mxu0
      %2029 = vmatprep.mubr.f32.mxu0 0.0
      %2030 = vmatmul.mubr.f32.gmra.mxu0 %v802
      %v2031 = vpop.f32.mrf.mxu0
      %v2032 = vadd.f32 %v1807, %v2031
      %v2033 = vpop.f32.mrf.mxu0
      %2034 = vmatprep.mubr.f32.mxu0 0.0
      %2035 = vmatmul.mubr.f32.gmra.mxu0 %v803
      %v2036 = vpop.f32.mrf.mxu0
      %v2037 = vadd.f32 %v1812, %v2036
      %v2038 = vpop.f32.mrf.mxu0
      %2039 = vmatprep.mubr.f32.mxu0 0.0
      %2040 = vmatmul.mubr.f32.gmra.mxu0 %v804
      %v2041 = vpop.f32.mrf.mxu0
      %v2042 = vadd.f32 %v1817, %v2041
      %v2043 = vpop.f32.mrf.mxu0
      %2044 = vmatprep.mubr.f32.mxu0 0.0
      %2045 = vmatmul.mubr.f32.gmra.mxu0 %v805
      %v2046 = vpop.f32.mrf.mxu0
      %v2047 = vadd.f32 %v1822, %v2046
      %v2048 = vpop.f32.mrf.mxu0
      %2049 = vmatprep.mubr.f32.mxu0 0.0
      %2050 = vmatmul.mubr.f32.gmra.mxu0 %v806
      %v2051 = vpop.f32.mrf.mxu0
      %v2052 = vadd.f32 %v1827, %v2051
      %v2053 = vpop.f32.mrf.mxu0
      %2054 = vmatprep.mubr.f32.mxu0 0.0
      %2055 = vmatmul.mubr.f32.gmra.mxu0 %v807
      %v2056 = vpop.f32.mrf.mxu0
      %v2057 = vadd.f32 %v1832, %v2056
      %v2058 = vpop.f32.mrf.mxu0
      %2059 = vmatprep.mubr.f32.mxu0 0.0
      %2060 = vmatmul.mubr.f32.gmra.mxu0 %v808
      %v2061 = vpop.f32.mrf.mxu0
      %v2062 = vadd.f32 %v1837, %v2061
      %v2063 = vpop.f32.mrf.mxu0
      %2064 = vmatprep.mubr.f32.mxu0 0.0
      %2065 = vmatmul.mubr.f32.gmra.mxu0 %v809
      %v2066 = vpop.f32.mrf.mxu0
      %v2067 = vadd.f32 %v1842, %v2066
      %v2068 = vpop.f32.mrf.mxu0
      %2069 = vmatprep.mubr.f32.mxu0 0.0
      %2070 = vmatmul.mubr.f32.gmra.mxu0 %v810
      %v2071 = vpop.f32.mrf.mxu0
      %v2072 = vadd.f32 %v1847, %v2071
      %v2073 = vpop.f32.mrf.mxu0
      %2074 = vmatprep.mubr.f32.mxu0 0.0
      %2075 = vmatmul.mubr.f32.gmra.mxu0 %v811
      %v2076 = vpop.f32.mrf.mxu0
      %v2077 = vadd.f32 %v1852, %v2076
      %v2078 = vpop.f32.mrf.mxu0
      %2079 = vmatprep.mubr.f32.mxu0 0.0
      %2080 = vmatmul.mubr.f32.gmra.mxu0 %v812
      %v2081 = vpop.f32.mrf.mxu0
      %v2082 = vadd.f32 %v1857, %v2081
      %v2083 = vpop.f32.mrf.mxu0
      %2084 = vmatprep.mubr.f32.mxu0 0.0
      %2085 = vmatmul.mubr.f32.gmra.mxu0 %v813
      %v2086 = vpop.f32.mrf.mxu0
      %v2087 = vadd.f32 %v1862, %v2086
      %v2088 = vpop.f32.mrf.mxu0
      %2089 = vdwg.mxu0
      %2090 = vst [vmem:[%s289] sm:$0xff] %v1932
      %2091 = vst [vmem:[%s289 + $0x8] sm:$0xff] %v1937
      %2092 = vst [vmem:[%s289 + $0x10] sm:$0xff] %v1942
      %2093 = vst [vmem:[%s289 + $0x18] sm:$0xff] %v1947
      %2094 = vst [vmem:[%s289 + $0x20] sm:$0xff] %v1952
      %2095 = vst [vmem:[%s289 + $0x28] sm:$0xff] %v1957
      %2096 = vst [vmem:[%s289 + $0x30] sm:$0xff] %v1962
      %2097 = vst [vmem:[%s289 + $0x38] sm:$0xff] %v1967
      %2098 = vst [vmem:[%s289 + $0x40] sm:$0xff] %v1972
      %2099 = vst [vmem:[%s289 + $0x48] sm:$0xff] %v1977
      %2100 = vst [vmem:[%s289 + $0x50] sm:$0xff] %v1982
      %2101 = vst [vmem:[%s289 + $0x58] sm:$0xff] %v1987
      %2102 = vst [vmem:[%s289 + $0x60] sm:$0xff] %v1992
      %2103 = vst [vmem:[%s289 + $0x68] sm:$0xff] %v1997
      %2104 = vst [vmem:[%s289 + $0x70] sm:$0xff] %v2002
      %2105 = vst [vmem:[%s289 + $0x78] sm:$0xff] %v2007
      %2106 = vst [vmem:[%s289 + $0x80] sm:$0xff] %v2012
      %2107 = vst [vmem:[%s289 + $0x88] sm:$0xff] %v2017
      %2108 = vst [vmem:[%s289 + $0x90] sm:$0xff] %v2022
      %2109 = vst [vmem:[%s289 + $0x98] sm:$0xff] %v2027
      %2110 = vst [vmem:[%s289 + $0xa0] sm:$0xff] %v2032
      %2111 = vst [vmem:[%s289 + $0xa8] sm:$0xff] %v2037
      %2112 = vst [vmem:[%s289 + $0xb0] sm:$0xff] %v2042
      %2113 = vst [vmem:[%s289 + $0xb8] sm:$0xff] %v2047
      %2114 = vst [vmem:[%s289 + $0xc0] sm:$0xff] %v2052
      %2115 = vst [vmem:[%s289 + $0xc8] sm:$0xff] %v2057
      %2116 = vst [vmem:[%s289 + $0xd0] sm:$0xff] %v2062
      %2117 = vst [vmem:[%s289 + $0xd8] sm:$0xff] %v2067
      %2118 = vst [vmem:[%s289 + $0xe0] sm:$0xff] %v2072
      %2119 = vst [vmem:[%s289 + $0xe8] sm:$0xff] %v2077
      %2120 = vst [vmem:[%s289 + $0xf0] sm:$0xff] %v2082
      %2121 = vst [vmem:[%s289 + $0xf8] sm:$0xff] %v2087
      %v2122 = vadd.f32 %v1932, %v1937
      %v2123 = vadd.f32 %v2122, %v1942
      %v2124 = vadd.f32 %v2123, %v1947
      %v2125 = vadd.f32 %v2124, %v1952
      %v2126 = vadd.f32 %v2125, %v1957
      %v2127 = vadd.f32 %v2126, %v1962
      %v2128 = vadd.f32 %v2127, %v1967
      %v2129 = vadd.f32 %v2128, %v1972
      %v2130 = vadd.f32 %v2129, %v1977
      %v2131 = vadd.f32 %v2130, %v1982
      %v2132 = vadd.f32 %v2131, %v1987
      %v2133 = vadd.f32 %v2132, %v1992
      %v2134 = vadd.f32 %v2133, %v1997
      %v2135 = vadd.f32 %v2134, %v2002
      %v2136 = vadd.f32 %v2135, %v2007
      %v2137 = vadd.f32 %v2136, %v2012
      %v2138 = vadd.f32 %v2137, %v2017
      %v2139 = vadd.f32 %v2138, %v2022
      %v2140 = vadd.f32 %v2139, %v2027
      %v2141 = vadd.f32 %v2140, %v2032
      %v2142 = vadd.f32 %v2141, %v2037
      %v2143 = vadd.f32 %v2142, %v2042
      %v2144 = vadd.f32 %v2143, %v2047
      %v2145 = vadd.f32 %v2144, %v2052
      %v2146 = vadd.f32 %v2145, %v2057
      %v2147 = vadd.f32 %v2146, %v2062
      %v2148 = vadd.f32 %v2147, %v2067
      %v2149 = vadd.f32 %v2148, %v2072
      %v2150 = vadd.f32 %v2149, %v2077
      %v2151 = vadd.f32 %v2150, %v2082
      %v2152 = vadd.f32 %v2151, %v2087
      %v2153 = vrot.slane %v2152, 4
      %v2154 = vadd.f32 %v2152, %v2153
      %v2155 = vrot.slane %v2154, 2
      %v2156 = vadd.f32 %v2154, %v2155
      %v2157 = vrot.slane %v2156, 1
      %v2158 = vadd.f32 %v2156, %v2157
      %2159 = vst [vmem:[%s292] sm:$0x1] %v2158
      %v2160 = vmul.f32 %v1932, %v1932
      %v2161 = vmul.f32 %v1937, %v1937
      %v2162 = vmul.f32 %v1942, %v1942
      %v2163 = vmul.f32 %v1947, %v1947
      %v2164 = vmul.f32 %v1952, %v1952
      %v2165 = vmul.f32 %v1957, %v1957
      %v2166 = vmul.f32 %v1962, %v1962
      %v2167 = vmul.f32 %v1967, %v1967
      %v2168 = vmul.f32 %v1972, %v1972
      %v2169 = vmul.f32 %v1977, %v1977
      %v2170 = vmul.f32 %v1982, %v1982
      %v2171 = vmul.f32 %v1987, %v1987
      %v2172 = vmul.f32 %v1992, %v1992
      %v2173 = vmul.f32 %v1997, %v1997
      %v2174 = vmul.f32 %v2002, %v2002
      %v2175 = vmul.f32 %v2007, %v2007
      %v2176 = vmul.f32 %v2012, %v2012
      %v2177 = vmul.f32 %v2017, %v2017
      %v2178 = vmul.f32 %v2022, %v2022
      %v2179 = vmul.f32 %v2027, %v2027
      %v2180 = vmul.f32 %v2032, %v2032
      %v2181 = vmul.f32 %v2037, %v2037
      %v2182 = vmul.f32 %v2042, %v2042
      %v2183 = vmul.f32 %v2047, %v2047
      %v2184 = vmul.f32 %v2052, %v2052
      %v2185 = vmul.f32 %v2057, %v2057
      %v2186 = vmul.f32 %v2062, %v2062
      %v2187 = vmul.f32 %v2067, %v2067
      %v2188 = vmul.f32 %v2072, %v2072
      %v2189 = vmul.f32 %v2077, %v2077
      %v2190 = vmul.f32 %v2082, %v2082
      %v2191 = vmul.f32 %v2087, %v2087
      %v2192 = vadd.f32 %v2160, %v2161
      %v2193 = vadd.f32 %v2192, %v2162
      %v2194 = vadd.f32 %v2193, %v2163
      %v2195 = vadd.f32 %v2194, %v2164
      %v2196 = vadd.f32 %v2195, %v2165
      %v2197 = vadd.f32 %v2196, %v2166
      %v2198 = vadd.f32 %v2197, %v2167
      %v2199 = vadd.f32 %v2198, %v2168
      %v2200 = vadd.f32 %v2199, %v2169
      %v2201 = vadd.f32 %v2200, %v2170
      %v2202 = vadd.f32 %v2201, %v2171
      %v2203 = vadd.f32 %v2202, %v2172
      %v2204 = vadd.f32 %v2203, %v2173
      %v2205 = vadd.f32 %v2204, %v2174
      %v2206 = vadd.f32 %v2205, %v2175
      %v2207 = vadd.f32 %v2206, %v2176
      %v2208 = vadd.f32 %v2207, %v2177
      %v2209 = vadd.f32 %v2208, %v2178
      %v2210 = vadd.f32 %v2209, %v2179
      %v2211 = vadd.f32 %v2210, %v2180
      %v2212 = vadd.f32 %v2211, %v2181
      %v2213 = vadd.f32 %v2212, %v2182
      %v2214 = vadd.f32 %v2213, %v2183
      %v2215 = vadd.f32 %v2214, %v2184
      %v2216 = vadd.f32 %v2215, %v2185
      %v2217 = vadd.f32 %v2216, %v2186
      %v2218 = vadd.f32 %v2217, %v2187
      %v2219 = vadd.f32 %v2218, %v2188
      %v2220 = vadd.f32 %v2219, %v2189
      %v2221 = vadd.f32 %v2220, %v2190
      %v2222 = vadd.f32 %v2221, %v2191
      %v2223 = vrot.slane %v2222, 4
      %v2224 = vadd.f32 %v2222, %v2223
      %v2225 = vrot.slane %v2224, 2
      %v2226 = vadd.f32 %v2224, %v2225
      %v2227 = vrot.slane %v2226, 1
      %v2228 = vadd.f32 %v2226, %v2227
      %2229 = vst [vmem:[%s295] sm:$0x1] %v2228
      %p2230 = scmp.lt.s32.totalorder %s19, 1
      %s2231 = scalar_select %p2230, %s19, 1
      %s2232 = smul.addr %s2231, 32
      %s2233 = smul.addr %s2232, 8
      %s2234 = scalar_lea.vmem %s5, %s2233
      %p2235 = scmp.lt.s32.totalorder %s19, 1
      %s2236 = scalar_select %p2235, %s19, 1
      %s2237 = scalar_lea.vmem %s6, %s2236
      %p2238 = scmp.lt.s32.totalorder %s19, 1
      %s2239 = scalar_select %p2238, %s19, 1
      %s2240 = scalar_lea.vmem %s7, %s2239
      // Predicated region
      $region41: #{double_conv_forward.4} parent=39 // pred_check
        %p2241 = pneg %p147
      $region42: #{double_conv_forward.4} parent=39 // pred_check_branch
        %2243 = sbr.rel (%p2241) target = $region44
      $region43: #{double_conv_forward.4} parent=39 // pred_region
        _
      $region44: #{double_conv_forward.4} parent=39 // pred_fallthru
        _
      // Predicated region
      $region45: #{double_conv_forward.4} parent=39 // pred_check
        %p2244 = pneg %p173
      $region46: #{double_conv_forward.4} parent=39 // pred_check_branch
        %2246 = sbr.rel (%p2244) target = $region48
      $region47: #{double_conv_forward.4} parent=39 // pred_region
        _
      $region48: #{double_conv_forward.4} parent=39 // pred_fallthru
        _
      // Predicated region
      $region49: #{double_conv_forward.4} parent=39 // pred_check
        %p2247 = pneg %p199
      $region50: #{double_conv_forward.4} parent=39 // pred_check_branch
        %2249 = sbr.rel (%p2247) target = $region52
      $region51: #{double_conv_forward.4} parent=39 // pred_region
        _
      $region52: #{double_conv_forward.4} parent=39 // pred_fallthru
        _
    $region40: #{double_conv_forward.4} parent=5 // pred_fallthru
      _
    %p2250 = scmp.le.s32.totalorder 2, %s14
    // Predicated region
    $region53: #{double_conv_forward.4} parent=5 // pred_check
      %p2251 = pneg %p2250
    $region54: #{double_conv_forward.4} parent=5 // pred_check_branch
      %2253 = sbr.rel (%p2251) target = $region56
    $region55: #{double_conv_forward.4} parent=5 // pred_region
      %s2254 = ssub.s32 %s14, 2
      // Predicated region
      $region57: #{double_conv_forward.4} parent=55 // pred_check
        %p2255 = pneg %p153
      $region58: #{double_conv_forward.4} parent=55 // pred_check_branch
        %2257 = sbr.rel (%p2255) target = $region60
      $region59: #{double_conv_forward.4} parent=55 // pred_region
        %p2258 = scmp.lt.s32.totalorder %s20, 1
        %s2259 = scalar_select %p2258, %s20, 1
        %s2260 = smul.addr %s2259, 32
        %s2261 = smul.addr %s2260, 8
        %s2262 = scalar_lea.vmem %s5, %s2261
      $region60: #{double_conv_forward.4} parent=55 // pred_fallthru
        _
      // Predicated region
      $region61: #{double_conv_forward.4} parent=55 // pred_check
        %p2263 = pneg %p179
      $region62: #{double_conv_forward.4} parent=55 // pred_check_branch
        %2265 = sbr.rel (%p2263) target = $region64
      $region63: #{double_conv_forward.4} parent=55 // pred_region
        %p2266 = scmp.lt.s32.totalorder %s20, 1
        %s2267 = scalar_select %p2266, %s20, 1
        %s2268 = scalar_lea.vmem %s6, %s2267
      $region64: #{double_conv_forward.4} parent=55 // pred_fallthru
        _
      // Predicated region
      $region65: #{double_conv_forward.4} parent=55 // pred_check
        %p2269 = pneg %p205
      $region66: #{double_conv_forward.4} parent=55 // pred_check_branch
        %2271 = sbr.rel (%p2269) target = $region68
      $region67: #{double_conv_forward.4} parent=55 // pred_region
        %p2272 = scmp.lt.s32.totalorder %s20, 1
        %s2273 = scalar_select %p2272, %s20, 1
        %s2274 = scalar_lea.vmem %s7, %s2273
      $region68: #{double_conv_forward.4} parent=55 // pred_fallthru
        _
    $region56: #{double_conv_forward.4} parent=5 // pred_fallthru
      _
  $region6: #{double_conv_forward.4} parent=0 // loop_footer
    %s18 = sadd.s32 1, %s14
  $region7: #{double_conv_forward.4} parent=0 // loop_footer_branch
    %13 = sbr.rel target = $region3
  $region8: #{double_conv_forward.4} parent=0 // loop_exit
    _

// kernel: double_conv_forward.3
$region0: #{double_conv_forward.3}
  #allocation0 [shape = 'u32[]', space=smem, size = 0x4, offset = 0x4, fixed_abs, tag = 'smem constant byte address 0x4 - core index']
  #allocation1 [shape = 'u32[144,128]{1,0:T(1,128)}', space=vmem, size = 0x12000, scoped, tag = 'internal scratch']
  #allocation2 [shape = 'f32[18,18,4]{2,1,0:T(8,128)}', space=vmem, size = 0x36000, scoped, tag = 'scratch operand']
  %s0 = inlined_call_operand.vmem [shape: f32[2,16,16,4], index: 0, kind: input, shape index: {}]
  %s1 = inlined_call_operand.vmem [shape: f32[36,128], index: 1, kind: input, shape index: {}]
  %s2 = inlined_call_operand.vmem [shape: f32[1,128], index: 2, kind: input, shape index: {}]
  %s3 = inlined_call_operand.vmem [shape: f32[2,16,16,128], index: 3, kind: output, shape index: {0}]
  %s4 = inlined_call_operand.vmem [shape: f32[2,1,128], index: 4, kind: output, shape index: {1}]
  %s5 = inlined_call_operand.vmem [shape: f32[2,1,128], index: 5, kind: output, shape index: {2}]
  %6 = xla_tuple %s3, %s4, %s5
  %s7 = sld [smem:[#allocation0]]
  $region61: #{double_conv_forward.3} parent=0
    _
  %s9 = ssub.s32 1, %s7
  %s10 = scalar_select 0, %s9, %s7
  loop: start=0, step=1, limit=4
  $region2: #{double_conv_forward.3} parent=0 // loop_pre_header
    _
  $region3: #{double_conv_forward.3} parent=0 // loop_header
    %s12 = sphi 0, %s16
    %p13 = scmp.ge.s32.totalorder %s12, 4
    %s22 = sphi 0, %s24
    %s25 = sphi 0, %s22
    %s26 = sphi 0, %s25
    %s42 = sphi 0, %s26
    %s46 = sphi 0, %s46
    %s48 = sphi 0, %s46
    %s49 = sphi 0, %s48
    %s63 = sphi 0, %s49
    %s67 = sphi 0, %s67
    %s69 = sphi 0, %s67
    %s70 = sphi 0, %s69
    %s84 = sphi 0, %s70
    %s90 = sphi 0, %s92
    %s93 = sphi 0, %s90
    %s94 = sphi 0, %s93
    %s110 = sphi 0, %s94
    %s116 = sphi 0, %s118
    %s119 = sphi 0, %s116
    %s120 = sphi 0, %s119
    %s136 = sphi 0, %s120
    %s142 = sphi 0, %s144
    %s145 = sphi 0, %s142
    %s146 = sphi 0, %s145
    %s162 = sphi 0, %s146
  $region4: #{double_conv_forward.3} parent=0 // loop_header_branch
    %15 = sbr.rel (%p13) target = $region8
  $region5: #{double_conv_forward.3} parent=0 // loop_body
    %s17 = ssub.s32 %s12, 1
    %s18 = ssub.s32 %s12, 2
    %s19 = sadd.s32 %s12, 1
    %s20 = ssub.s32 %s12, %s19
    %p21 = scmp.eq.s32.totalorder %s20, 0
    %s23 = sadd.s32 %s22, 1
    %s24 = scalar_select %p21, %s22, %s23
    %p27 = pneg %p21
    %p28 = scmp.eq.s32.totalorder %s12, 1
    %p29 = por %p27, %p28
    %p30 = scmp.ne.s32.totalorder %s22, %s25
    %p31 = scmp.eq.s32.totalorder %s12, 0
    %p32 = por %p30, %p31
    %p33 = scmp.ne.s32.totalorder %s22, %s25
    %p34 = scmp.eq.s32.totalorder %s17, 1
    %p35 = por %p33, %p34
    %p36 = scmp.ne.s32.totalorder %s25, %s26
    %p37 = scmp.eq.s32.totalorder %s17, 0
    %p38 = por %p36, %p37
    %p39 = scmp.ne.s32.totalorder %s25, %s26
    %p40 = scmp.eq.s32.totalorder %s18, 1
    %p41 = por %p39, %p40
    %p43 = scmp.ne.s32.totalorder %s26, %s42
    %p44 = scmp.eq.s32.totalorder %s18, 0
    %p45 = por %p43, %p44
    %s47 = sadd.s32 %s46, 1
    %p50 = scmp.eq.s32.totalorder %s12, 1
    %p51 = scmp.ne.s32.totalorder %s46, %s48
    %p52 = scmp.eq.s32.totalorder %s12, 0
    %p53 = por %p51, %p52
    %p54 = scmp.ne.s32.totalorder %s46, %s48
    %p55 = scmp.eq.s32.totalorder %s17, 1
    %p56 = por %p54, %p55
    %p57 = scmp.ne.s32.totalorder %s48, %s49
    %p58 = scmp.eq.s32.totalorder %s17, 0
    %p59 = por %p57, %p58
    %p60 = scmp.ne.s32.totalorder %s48, %s49
    %p61 = scmp.eq.s32.totalorder %s18, 1
    %p62 = por %p60, %p61
    %p64 = scmp.ne.s32.totalorder %s49, %s63
    %p65 = scmp.eq.s32.totalorder %s18, 0
    %p66 = por %p64, %p65
    %s68 = sadd.s32 %s67, 1
    %p71 = scmp.eq.s32.totalorder %s12, 1
    %p72 = scmp.ne.s32.totalorder %s67, %s69
    %p73 = scmp.eq.s32.totalorder %s12, 0
    %p74 = por %p72, %p73
    %p75 = scmp.ne.s32.totalorder %s67, %s69
    %p76 = scmp.eq.s32.totalorder %s17, 1
    %p77 = por %p75, %p76
    %p78 = scmp.ne.s32.totalorder %s69, %s70
    %p79 = scmp.eq.s32.totalorder %s17, 0
    %p80 = por %p78, %p79
    %p81 = scmp.ne.s32.totalorder %s69, %s70
    %p82 = scmp.eq.s32.totalorder %s18, 1
    %p83 = por %p81, %p82
    %p85 = scmp.ne.s32.totalorder %s70, %s84
    %p86 = scmp.eq.s32.totalorder %s18, 0
    %p87 = por %p85, %p86
    %s88 = ssub.s32 %s12, %s19
    %p89 = scmp.eq.s32.totalorder %s88, 0
    %s91 = sadd.s32 %s90, 1
    %s92 = scalar_select %p89, %s90, %s91
    %p95 = pneg %p89
    %p96 = scmp.eq.s32.totalorder %s12, 1
    %p97 = por %p95, %p96
    %p98 = scmp.ne.s32.totalorder %s90, %s93
    %p99 = scmp.eq.s32.totalorder %s12, 0
    %p100 = por %p98, %p99
    %p101 = scmp.ne.s32.totalorder %s90, %s93
    %p102 = scmp.eq.s32.totalorder %s17, 1
    %p103 = por %p101, %p102
    %p104 = scmp.ne.s32.totalorder %s93, %s94
    %p105 = scmp.eq.s32.totalorder %s17, 0
    %p106 = por %p104, %p105
    %p107 = scmp.ne.s32.totalorder %s93, %s94
    %p108 = scmp.eq.s32.totalorder %s18, 1
    %p109 = por %p107, %p108
    %p111 = scmp.ne.s32.totalorder %s94, %s110
    %p112 = scmp.eq.s32.totalorder %s18, 0
    %p113 = por %p111, %p112
    %s114 = ssub.s32 %s12, %s19
    %p115 = scmp.eq.s32.totalorder %s114, 0
    %s117 = sadd.s32 %s116, 1
    %s118 = scalar_select %p115, %s116, %s117
    %p121 = pneg %p115
    %p122 = scmp.eq.s32.totalorder %s12, 1
    %p123 = por %p121, %p122
    %p124 = scmp.ne.s32.totalorder %s116, %s119
    %p125 = scmp.eq.s32.totalorder %s12, 0
    %p126 = por %p124, %p125
    %p127 = scmp.ne.s32.totalorder %s116, %s119
    %p128 = scmp.eq.s32.totalorder %s17, 1
    %p129 = por %p127, %p128
    %p130 = scmp.ne.s32.totalorder %s119, %s120
    %p131 = scmp.eq.s32.totalorder %s17, 0
    %p132 = por %p130, %p131
    %p133 = scmp.ne.s32.totalorder %s119, %s120
    %p134 = scmp.eq.s32.totalorder %s18, 1
    %p135 = por %p133, %p134
    %p137 = scmp.ne.s32.totalorder %s120, %s136
    %p138 = scmp.eq.s32.totalorder %s18, 0
    %p139 = por %p137, %p138
    %s140 = ssub.s32 %s12, %s19
    %p141 = scmp.eq.s32.totalorder %s140, 0
    %s143 = sadd.s32 %s142, 1
    %s144 = scalar_select %p141, %s142, %s143
    %p147 = pneg %p141
    %p148 = scmp.eq.s32.totalorder %s12, 1
    %p149 = por %p147, %p148
    %p150 = scmp.ne.s32.totalorder %s142, %s145
    %p151 = scmp.eq.s32.totalorder %s12, 0
    %p152 = por %p150, %p151
    %p153 = scmp.ne.s32.totalorder %s142, %s145
    %p154 = scmp.eq.s32.totalorder %s17, 1
    %p155 = por %p153, %p154
    %p156 = scmp.ne.s32.totalorder %s145, %s146
    %p157 = scmp.eq.s32.totalorder %s17, 0
    %p158 = por %p156, %p157
    %p159 = scmp.ne.s32.totalorder %s145, %s146
    %p160 = scmp.eq.s32.totalorder %s18, 1
    %p161 = por %p159, %p160
    %p163 = scmp.ne.s32.totalorder %s146, %s162
    %p164 = scmp.eq.s32.totalorder %s18, 0
    %p165 = por %p163, %p164
    %p166 = scmp.le.s32.totalorder 1, %s12
    %p167 = scmp.lt.s32.totalorder %s12, 3
    %p168 = pnand %p166, %p167
    %p169 = pneg %p168
    // Predicated region
    $region9: #{double_conv_forward.3} parent=5 // pred_check
      _
    $region10: #{double_conv_forward.3} parent=5 // pred_check_branch
      %171 = sbr.rel (%p168) target = $region12
    $region11: #{double_conv_forward.3} parent=5 // pred_region
      %s172 = ssub.s32 %s12, 1
      // Predicated region
      $region13: #{double_conv_forward.3} parent=11 // pred_check
        %p173 = pneg %p59
      $region14: #{double_conv_forward.3} parent=11 // pred_check_branch
        %175 = sbr.rel (%p173) target = $region16
      $region15: #{double_conv_forward.3} parent=11 // pred_region
        _
      $region16: #{double_conv_forward.3} parent=11 // pred_fallthru
        _
      // Predicated region
      $region17: #{double_conv_forward.3} parent=11 // pred_check
        %p176 = pneg %p80
      $region18: #{double_conv_forward.3} parent=11 // pred_check_branch
        %178 = sbr.rel (%p176) target = $region20
      $region19: #{double_conv_forward.3} parent=11 // pred_region
        _
      $region20: #{double_conv_forward.3} parent=11 // pred_fallthru
        _
    $region12: #{double_conv_forward.3} parent=5 // pred_fallthru
      _
    %p179 = scmp.lt.s32.totalorder %s12, 2
    // Predicated region
    $region21: #{double_conv_forward.3} parent=5 // pred_check
      %p180 = pneg %p179
    $region22: #{double_conv_forward.3} parent=5 // pred_check_branch
      %182 = sbr.rel (%p180) target = $region24
    $region23: #{double_conv_forward.3} parent=5 // pred_region
      // Predicated region
      $region25: #{double_conv_forward.3} parent=23 // pred_check
        %p183 = pneg %p32
      $region26: #{double_conv_forward.3} parent=23 // pred_check_branch
        %185 = sbr.rel (%p183) target = $region28
      $region27: #{double_conv_forward.3} parent=23 // pred_region
        %p186 = scmp.lt.s32.totalorder %s12, 1
        %s187 = scalar_select %p186, %s12, 1
        %s188 = smul.addr %s187, 32
        %s189 = smul.addr %s188, 8
        %s190 = scalar_lea.vmem %s0, %s189
      $region28: #{double_conv_forward.3} parent=23 // pred_fallthru
        _
    $region24: #{double_conv_forward.3} parent=5 // pred_fallthru
      _
    %p191 = scmp.le.s32.totalorder 1, %s12
    %p192 = scmp.lt.s32.totalorder %s12, 3
    %p193 = pnand %p191, %p192
    %p194 = pneg %p193
    // Predicated region
    $region29: #{double_conv_forward.3} parent=5 // pred_check
      _
    $region30: #{double_conv_forward.3} parent=5 // pred_check_branch
      %196 = sbr.rel (%p193) target = $region32
    $region31: #{double_conv_forward.3} parent=5 // pred_region
      %s197 = ssub.s32 %s12, 1
      %p198 = scmp.lt.s32.totalorder %s17, 1
      %s199 = scalar_select %p198, %s17, 1
      %s200 = smul.addr %s199, 32
      %s201 = smul.addr %s200, 8
      %s202 = scalar_lea.vmem %s0, %s201
      %p203 = pneg %p38
      %p204 = pneg %p35
      %p205 = pneg %p59
      %p206 = pneg %p56
      %p207 = pneg %p80
      %p208 = pneg %p77
      %p209 = pneg %p106
      %p210 = pneg %p103
      %p211 = scmp.lt.s32.totalorder %s17, 1
      %s212 = scalar_select %p211, %s17, 1
      %s213 = smul.addr %s212, 32
      %s214 = smul.addr %s213, 8
      %s215 = scalar_lea.vmem %s3, %s214
      %p216 = pneg %p132
      %p217 = pneg %p129
      %p218 = scmp.lt.s32.totalorder %s17, 1
      %s219 = scalar_select %p218, %s17, 1
      %s220 = scalar_lea.vmem %s4, %s219
      %p221 = pneg %p158
      %p222 = pneg %p155
      %p223 = scmp.lt.s32.totalorder %s17, 1
      %s224 = scalar_select %p223, %s17, 1
      %s225 = scalar_lea.vmem %s5, %s224
      %p226 = scmp.lt.s32.totalorder %s17, 1
      %s227 = scalar_select %p226, %s17, 1
      %s228 = smul.addr %s227, 32
      %s229 = smul.addr %s228, 8
      %s230 = scalar_lea.vmem %s0, %s229
      %p231 = scmp.lt.s32.totalorder %s17, 1
      %s232 = scalar_select %p231, %s17, 1
      %s233 = smul.addr %s232, 32
      %s234 = smul.addr %s233, 8
      %s235 = scalar_lea.vmem %s3, %s234
      %p236 = scmp.lt.s32.totalorder %s17, 1
      %s237 = scalar_select %p236, %s17, 1
      %s238 = scalar_lea.vmem %s4, %s237
      %p239 = scmp.lt.s32.totalorder %s17, 1
      %s240 = scalar_select %p239, %s17, 1
      %s241 = scalar_lea.vmem %s5, %s240
      %v242 = vld [vmem:[%s230] sm:$0xff]
      %v243 = vld [vmem:[%s230 + $0x8] sm:$0xff]
      %v244 = vld [vmem:[%s230 + $0x10] sm:$0xff]
      %v245 = vld [vmem:[%s230 + $0x18] sm:$0xff]
      %v246 = vld [vmem:[%s230 + $0x20] sm:$0xff]
      %v247 = vld [vmem:[%s230 + $0x28] sm:$0xff]
      %v248 = vld [vmem:[%s230 + $0x30] sm:$0xff]
      %v249 = vld [vmem:[%s230 + $0x38] sm:$0xff]
      %v250 = vld [vmem:[%s230 + $0x40] sm:$0xff]
      %v251 = vld [vmem:[%s230 + $0x48] sm:$0xff]
      %v252 = vld [vmem:[%s230 + $0x50] sm:$0xff]
      %v253 = vld [vmem:[%s230 + $0x58] sm:$0xff]
      %v254 = vld [vmem:[%s230 + $0x60] sm:$0xff]
      %v255 = vld [vmem:[%s230 + $0x68] sm:$0xff]
      %v256 = vld [vmem:[%s230 + $0x70] sm:$0xff]
      %v257 = vld [vmem:[%s230 + $0x78] sm:$0xff]
      %v258 = vld [vmem:[%s230 + $0x80] sm:$0xff]
      %v259 = vld [vmem:[%s230 + $0x88] sm:$0xff]
      %v260 = vld [vmem:[%s230 + $0x90] sm:$0xff]
      %v261 = vld [vmem:[%s230 + $0x98] sm:$0xff]
      %v262 = vld [vmem:[%s230 + $0xa0] sm:$0xff]
      %v263 = vld [vmem:[%s230 + $0xa8] sm:$0xff]
      %v264 = vld [vmem:[%s230 + $0xb0] sm:$0xff]
      %v265 = vld [vmem:[%s230 + $0xb8] sm:$0xff]
      %v266 = vld [vmem:[%s230 + $0xc0] sm:$0xff]
      %v267 = vld [vmem:[%s230 + $0xc8] sm:$0xff]
      %v268 = vld [vmem:[%s230 + $0xd0] sm:$0xff]
      %v269 = vld [vmem:[%s230 + $0xd8] sm:$0xff]
      %v270 = vld [vmem:[%s230 + $0xe0] sm:$0xff]
      %v271 = vld [vmem:[%s230 + $0xe8] sm:$0xff]
      %v272 = vld [vmem:[%s230 + $0xf0] sm:$0xff]
      %v273 = vld [vmem:[%s230 + $0xf8] sm:$0xff]
      %vm274 = vcmask 31744
      %275 = vst.msk [vmem:[#allocation2] sm:$0xff] %vm274, 0.0
      %276 = vst.msk [vmem:[#allocation2 + $0x8] sm:$0xff] %vm274, 0.0
      %vm277 = vcmask 25600
      %278 = vst.msk [vmem:[#allocation2 + $0x10] sm:$0x3] %vm277, 0.0
      %279 = vst.msk [vmem:[#allocation2 + $0x18] sm:$0xff] %vm274, 0.0
      %280 = vst.msk [vmem:[#allocation2 + $0x20] sm:$0xff] %vm274, 0.0
      %281 = vst.msk [vmem:[#allocation2 + $0x28] sm:$0x3] %vm277, 0.0
      %282 = vst.msk [vmem:[#allocation2 + $0x30] sm:$0xff] %vm274, 0.0
      %283 = vst.msk [vmem:[#allocation2 + $0x38] sm:$0xff] %vm274, 0.0
      %284 = vst.msk [vmem:[#allocation2 + $0x40] sm:$0x3] %vm277, 0.0
      %285 = vst.msk [vmem:[#allocation2 + $0x48] sm:$0xff] %vm274, 0.0
      %286 = vst.msk [vmem:[#allocation2 + $0x50] sm:$0xff] %vm274, 0.0
      %287 = vst.msk [vmem:[#allocation2 + $0x58] sm:$0x3] %vm277, 0.0
      %288 = vst.msk [vmem:[#allocation2 + $0x60] sm:$0xff] %vm274, 0.0
      %289 = vst.msk [vmem:[#allocation2 + $0x68] sm:$0xff] %vm274, 0.0
      %290 = vst.msk [vmem:[#allocation2 + $0x70] sm:$0x3] %vm277, 0.0
      %291 = vst.msk [vmem:[#allocation2 + $0x78] sm:$0xff] %vm274, 0.0
      %292 = vst.msk [vmem:[#allocation2 + $0x80] sm:$0xff] %vm274, 0.0
      %293 = vst.msk [vmem:[#allocation2 + $0x88] sm:$0x3] %vm277, 0.0
      %294 = vst.msk [vmem:[#allocation2 + $0x90] sm:$0xff] %vm274, 0.0
      %295 = vst.msk [vmem:[#allocation2 + $0x98] sm:$0xff] %vm274, 0.0
      %296 = vst.msk [vmem:[#allocation2 + $0xa0] sm:$0x3] %vm277, 0.0
      %297 = vst.msk [vmem:[#allocation2 + $0xa8] sm:$0xff] %vm274, 0.0
      %298 = vst.msk [vmem:[#allocation2 + $0xb0] sm:$0xff] %vm274, 0.0
      %299 = vst.msk [vmem:[#allocation2 + $0xb8] sm:$0x3] %vm277, 0.0
      %300 = vst.msk [vmem:[#allocation2 + $0xc0] sm:$0xff] %vm274, 0.0
      %301 = vst.msk [vmem:[#allocation2 + $0xc8] sm:$0xff] %vm274, 0.0
      %302 = vst.msk [vmem:[#allocation2 + $0xd0] sm:$0x3] %vm277, 0.0
      %303 = vst.msk [vmem:[#allocation2 + $0xd8] sm:$0xff] %vm274, 0.0
      %304 = vst.msk [vmem:[#allocation2 + $0xe0] sm:$0xff] %vm274, 0.0
      %305 = vst.msk [vmem:[#allocation2 + $0xe8] sm:$0x3] %vm277, 0.0
      %306 = vst.msk [vmem:[#allocation2 + $0xf0] sm:$0xff] %vm274, 0.0
      %307 = vst.msk [vmem:[#allocation2 + $0xf8] sm:$0xff] %vm274, 0.0
      %308 = vst.msk [vmem:[#allocation2 + $0x100] sm:$0x3] %vm277, 0.0
      %309 = vst.msk [vmem:[#allocation2 + $0x108] sm:$0xff] %vm274, 0.0
      %310 = vst.msk [vmem:[#allocation2 + $0x110] sm:$0xff] %vm274, 0.0
      %311 = vst.msk [vmem:[#allocation2 + $0x118] sm:$0x3] %vm277, 0.0
      %312 = vst.msk [vmem:[#allocation2 + $0x120] sm:$0xff] %vm274, 0.0
      %313 = vst.msk [vmem:[#allocation2 + $0x128] sm:$0xff] %vm274, 0.0
      %314 = vst.msk [vmem:[#allocation2 + $0x130] sm:$0x3] %vm277, 0.0
      %315 = vst.msk [vmem:[#allocation2 + $0x138] sm:$0xff] %vm274, 0.0
      %316 = vst.msk [vmem:[#allocation2 + $0x140] sm:$0xff] %vm274, 0.0
      %317 = vst.msk [vmem:[#allocation2 + $0x148] sm:$0x3] %vm277, 0.0
      %318 = vst.msk [vmem:[#allocation2 + $0x150] sm:$0xff] %vm274, 0.0
      %319 = vst.msk [vmem:[#allocation2 + $0x158] sm:$0xff] %vm274, 0.0
      %320 = vst.msk [vmem:[#allocation2 + $0x160] sm:$0x3] %vm277, 0.0
      %321 = vst.msk [vmem:[#allocation2 + $0x168] sm:$0xff] %vm274, 0.0
      %322 = vst.msk [vmem:[#allocation2 + $0x170] sm:$0xff] %vm274, 0.0
      %323 = vst.msk [vmem:[#allocation2 + $0x178] sm:$0x3] %vm277, 0.0
      %324 = vst.msk [vmem:[#allocation2 + $0x180] sm:$0xff] %vm274, 0.0
      %325 = vst.msk [vmem:[#allocation2 + $0x188] sm:$0xff] %vm274, 0.0
      %326 = vst.msk [vmem:[#allocation2 + $0x190] sm:$0x3] %vm277, 0.0
      %327 = vst.msk [vmem:[#allocation2 + $0x198] sm:$0xff] %vm274, 0.0
      %328 = vst.msk [vmem:[#allocation2 + $0x1a0] sm:$0xff] %vm274, 0.0
      %329 = vst.msk [vmem:[#allocation2 + $0x1a8] sm:$0x3] %vm277, 0.0
      %s330 = scalar_lea.vmem [#allocation2], 24
      %331 = vst.msk [vmem:[%s330 + $0x1] sm:$0xff] %vm274, %v242
      %332 = vst.msk [vmem:[%s330 + $0x9] sm:$0xff] %vm274, %v243
      %333 = vst.msk [vmem:[%s330 + $0x19] sm:$0xff] %vm274, %v244
      %334 = vst.msk [vmem:[%s330 + $0x21] sm:$0xff] %vm274, %v245
      %335 = vst.msk [vmem:[%s330 + $0x31] sm:$0xff] %vm274, %v246
      %336 = vst.msk [vmem:[%s330 + $0x39] sm:$0xff] %vm274, %v247
      %337 = vst.msk [vmem:[%s330 + $0x49] sm:$0xff] %vm274, %v248
      %338 = vst.msk [vmem:[%s330 + $0x51] sm:$0xff] %vm274, %v249
      %339 = vst.msk [vmem:[%s330 + $0x61] sm:$0xff] %vm274, %v250
      %340 = vst.msk [vmem:[%s330 + $0x69] sm:$0xff] %vm274, %v251
      %341 = vst.msk [vmem:[%s330 + $0x79] sm:$0xff] %vm274, %v252
      %342 = vst.msk [vmem:[%s330 + $0x81] sm:$0xff] %vm274, %v253
      %343 = vst.msk [vmem:[%s330 + $0x91] sm:$0xff] %vm274, %v254
      %344 = vst.msk [vmem:[%s330 + $0x99] sm:$0xff] %vm274, %v255
      %345 = vst.msk [vmem:[%s330 + $0xa9] sm:$0xff] %vm274, %v256
      %346 = vst.msk [vmem:[%s330 + $0xb1] sm:$0xff] %vm274, %v257
      %347 = vst.msk [vmem:[%s330 + $0xc1] sm:$0xff] %vm274, %v258
      %348 = vst.msk [vmem:[%s330 + $0xc9] sm:$0xff] %vm274, %v259
      %349 = vst.msk [vmem:[%s330 + $0xd9] sm:$0xff] %vm274, %v260
      %350 = vst.msk [vmem:[%s330 + $0xe1] sm:$0xff] %vm274, %v261
      %351 = vst.msk [vmem:[%s330 + $0xf1] sm:$0xff] %vm274, %v262
      %352 = vst.msk [vmem:[%s330 + $0xf9] sm:$0xff] %vm274, %v263
      %353 = vst.msk [vmem:[%s330 + $0x109] sm:$0xff] %vm274, %v264
      %354 = vst.msk [vmem:[%s330 + $0x111] sm:$0xff] %vm274, %v265
      %355 = vst.msk [vmem:[%s330 + $0x121] sm:$0xff] %vm274, %v266
      %356 = vst.msk [vmem:[%s330 + $0x129] sm:$0xff] %vm274, %v267
      %357 = vst.msk [vmem:[%s330 + $0x139] sm:$0xff] %vm274, %v268
      %358 = vst.msk [vmem:[%s330 + $0x141] sm:$0xff] %vm274, %v269
      %359 = vst.msk [vmem:[%s330 + $0x151] sm:$0xff] %vm274, %v270
      %360 = vst.msk [vmem:[%s330 + $0x159] sm:$0xff] %vm274, %v271
      %361 = vst.msk [vmem:[%s330 + $0x169] sm:$0xff] %vm274, %v272
      %362 = vst.msk [vmem:[%s330 + $0x171] sm:$0xff] %vm274, %v273
      %v363 = vld [vmem:[#allocation2] sm:$0xff]
      %v364 = vld [vmem:[#allocation2 + $0x8] sm:$0xff]
      %v365 = vld [vmem:[#allocation2 + $0x18] sm:$0xff]
      %v366 = vld [vmem:[#allocation2 + $0x20] sm:$0xff]
      %v367 = vld [vmem:[#allocation2 + $0x30] sm:$0xff]
      %v368 = vld [vmem:[#allocation2 + $0x38] sm:$0xff]
      %v369 = vld [vmem:[#allocation2 + $0x48] sm:$0xff]
      %v370 = vld [vmem:[#allocation2 + $0x50] sm:$0xff]
      %v371 = vld [vmem:[#allocation2 + $0x60] sm:$0xff]
      %v372 = vld [vmem:[#allocation2 + $0x68] sm:$0xff]
      %v373 = vld [vmem:[#allocation2 + $0x78] sm:$0xff]
      %v374 = vld [vmem:[#allocation2 + $0x80] sm:$0xff]
      %v375 = vld [vmem:[#allocation2 + $0x90] sm:$0xff]
      %v376 = vld [vmem:[#allocation2 + $0x98] sm:$0xff]
      %v377 = vld [vmem:[#allocation2 + $0xa8] sm:$0xff]
      %v378 = vld [vmem:[#allocation2 + $0xb0] sm:$0xff]
      %v379 = vld [vmem:[#allocation2 + $0xc0] sm:$0xff]
      %v380 = vld [vmem:[#allocation2 + $0xc8] sm:$0xff]
      %v381 = vld [vmem:[#allocation2 + $0xd8] sm:$0xff]
      %v382 = vld [vmem:[#allocation2 + $0xe0] sm:$0xff]
      %v383 = vld [vmem:[#allocation2 + $0xf0] sm:$0xff]
      %v384 = vld [vmem:[#allocation2 + $0xf8] sm:$0xff]
      %v385 = vld [vmem:[#allocation2 + $0x108] sm:$0xff]
      %v386 = vld [vmem:[#allocation2 + $0x110] sm:$0xff]
      %v387 = vld [vmem:[#allocation2 + $0x120] sm:$0xff]
      %v388 = vld [vmem:[#allocation2 + $0x128] sm:$0xff]
      %v389 = vld [vmem:[#allocation2 + $0x138] sm:$0xff]
      %v390 = vld [vmem:[#allocation2 + $0x140] sm:$0xff]
      %v391 = vld [vmem:[#allocation2 + $0x150] sm:$0xff]
      %v392 = vld [vmem:[#allocation2 + $0x158] sm:$0xff]
      %v393 = vld [vmem:[#allocation2 + $0x168] sm:$0xff]
      %v394 = vld [vmem:[#allocation2 + $0x170] sm:$0xff]
      %v395 = vld [vmem:[#allocation2 + $0x1] sm:$0xff]
      %v396 = vld [vmem:[#allocation2 + $0x9] sm:$0xff]
      %v397 = vld [vmem:[#allocation2 + $0x19] sm:$0xff]
      %v398 = vld [vmem:[#allocation2 + $0x21] sm:$0xff]
      %v399 = vld [vmem:[#allocation2 + $0x31] sm:$0xff]
      %v400 = vld [vmem:[#allocation2 + $0x39] sm:$0xff]
      %v401 = vld [vmem:[#allocation2 + $0x49] sm:$0xff]
      %v402 = vld [vmem:[#allocation2 + $0x51] sm:$0xff]
      %v403 = vld [vmem:[#allocation2 + $0x61] sm:$0xff]
      %v404 = vld [vmem:[#allocation2 + $0x69] sm:$0xff]
      %v405 = vld [vmem:[#allocation2 + $0x79] sm:$0xff]
      %v406 = vld [vmem:[#allocation2 + $0x81] sm:$0xff]
      %v407 = vld [vmem:[#allocation2 + $0x91] sm:$0xff]
      %v408 = vld [vmem:[#allocation2 + $0x99] sm:$0xff]
      %v409 = vld [vmem:[#allocation2 + $0xa9] sm:$0xff]
      %v410 = vld [vmem:[#allocation2 + $0xb1] sm:$0xff]
      %v411 = vld [vmem:[#allocation2 + $0xc1] sm:$0xff]
      %v412 = vld [vmem:[#allocation2 + $0xc9] sm:$0xff]
      %v413 = vld [vmem:[#allocation2 + $0xd9] sm:$0xff]
      %v414 = vld [vmem:[#allocation2 + $0xe1] sm:$0xff]
      %v415 = vld [vmem:[#allocation2 + $0xf1] sm:$0xff]
      %v416 = vld [vmem:[#allocation2 + $0xf9] sm:$0xff]
      %v417 = vld [vmem:[#allocation2 + $0x109] sm:$0xff]
      %v418 = vld [vmem:[#allocation2 + $0x111] sm:$0xff]
      %v419 = vld [vmem:[#allocation2 + $0x121] sm:$0xff]
      %v420 = vld [vmem:[#allocation2 + $0x129] sm:$0xff]
      %v421 = vld [vmem:[#allocation2 + $0x139] sm:$0xff]
      %v422 = vld [vmem:[#allocation2 + $0x141] sm:$0xff]
      %v423 = vld [vmem:[#allocation2 + $0x151] sm:$0xff]
      %v424 = vld [vmem:[#allocation2 + $0x159] sm:$0xff]
      %v425 = vld [vmem:[#allocation2 + $0x169] sm:$0xff]
      %v426 = vld [vmem:[#allocation2 + $0x171] sm:$0xff]
      %v427 = vld [vmem:[#allocation2 + $0x2] sm:$0xff]
      %v428 = vld [vmem:[#allocation2 + $0xa] sm:$0xff]
      %v429 = vld [vmem:[#allocation2 + $0x1a] sm:$0xff]
      %v430 = vld [vmem:[#allocation2 + $0x22] sm:$0xff]
      %v431 = vld [vmem:[#allocation2 + $0x32] sm:$0xff]
      %v432 = vld [vmem:[#allocation2 + $0x3a] sm:$0xff]
      %v433 = vld [vmem:[#allocation2 + $0x4a] sm:$0xff]
      %v434 = vld [vmem:[#allocation2 + $0x52] sm:$0xff]
      %v435 = vld [vmem:[#allocation2 + $0x62] sm:$0xff]
      %v436 = vld [vmem:[#allocation2 + $0x6a] sm:$0xff]
      %v437 = vld [vmem:[#allocation2 + $0x7a] sm:$0xff]
      %v438 = vld [vmem:[#allocation2 + $0x82] sm:$0xff]
      %v439 = vld [vmem:[#allocation2 + $0x92] sm:$0xff]
      %v440 = vld [vmem:[#allocation2 + $0x9a] sm:$0xff]
      %v441 = vld [vmem:[#allocation2 + $0xaa] sm:$0xff]
      %v442 = vld [vmem:[#allocation2 + $0xb2] sm:$0xff]
      %v443 = vld [vmem:[#allocation2 + $0xc2] sm:$0xff]
      %v444 = vld [vmem:[#allocation2 + $0xca] sm:$0xff]
      %v445 = vld [vmem:[#allocation2 + $0xda] sm:$0xff]
      %v446 = vld [vmem:[#allocation2 + $0xe2] sm:$0xff]
      %v447 = vld [vmem:[#allocation2 + $0xf2] sm:$0xff]
      %v448 = vld [vmem:[#allocation2 + $0xfa] sm:$0xff]
      %v449 = vld [vmem:[#allocation2 + $0x10a] sm:$0xff]
      %v450 = vld [vmem:[#allocation2 + $0x112] sm:$0xff]
      %v451 = vld [vmem:[#allocation2 + $0x122] sm:$0xff]
      %v452 = vld [vmem:[#allocation2 + $0x12a] sm:$0xff]
      %v453 = vld [vmem:[#allocation2 + $0x13a] sm:$0xff]
      %v454 = vld [vmem:[#allocation2 + $0x142] sm:$0xff]
      %v455 = vld [vmem:[#allocation2 + $0x152] sm:$0xff]
      %v456 = vld [vmem:[#allocation2 + $0x15a] sm:$0xff]
      %v457 = vld [vmem:[#allocation2 + $0x16a] sm:$0xff]
      %v458 = vld [vmem:[#allocation2 + $0x172] sm:$0xff]
      %v459 = vld [vmem:[%s330] sm:$0xff]
      %v460 = vld [vmem:[%s330 + $0x8] sm:$0xff]
      %v461 = vld [vmem:[%s330 + $0x18] sm:$0xff]
      %v462 = vld [vmem:[%s330 + $0x20] sm:$0xff]
      %v463 = vld [vmem:[%s330 + $0x30] sm:$0xff]
      %v464 = vld [vmem:[%s330 + $0x38] sm:$0xff]
      %v465 = vld [vmem:[%s330 + $0x48] sm:$0xff]
      %v466 = vld [vmem:[%s330 + $0x50] sm:$0xff]
      %v467 = vld [vmem:[%s330 + $0x60] sm:$0xff]
      %v468 = vld [vmem:[%s330 + $0x68] sm:$0xff]
      %v469 = vld [vmem:[%s330 + $0x78] sm:$0xff]
      %v470 = vld [vmem:[%s330 + $0x80] sm:$0xff]
      %v471 = vld [vmem:[%s330 + $0x90] sm:$0xff]
      %v472 = vld [vmem:[%s330 + $0x98] sm:$0xff]
      %v473 = vld [vmem:[%s330 + $0xa8] sm:$0xff]
      %v474 = vld [vmem:[%s330 + $0xb0] sm:$0xff]
      %v475 = vld [vmem:[%s330 + $0xc0] sm:$0xff]
      %v476 = vld [vmem:[%s330 + $0xc8] sm:$0xff]
      %v477 = vld [vmem:[%s330 + $0xd8] sm:$0xff]
      %v478 = vld [vmem:[%s330 + $0xe0] sm:$0xff]
      %v479 = vld [vmem:[%s330 + $0xf0] sm:$0xff]
      %v480 = vld [vmem:[%s330 + $0xf8] sm:$0xff]
      %v481 = vld [vmem:[%s330 + $0x108] sm:$0xff]
      %v482 = vld [vmem:[%s330 + $0x110] sm:$0xff]
      %v483 = vld [vmem:[%s330 + $0x120] sm:$0xff]
      %v484 = vld [vmem:[%s330 + $0x128] sm:$0xff]
      %v485 = vld [vmem:[%s330 + $0x138] sm:$0xff]
      %v486 = vld [vmem:[%s330 + $0x140] sm:$0xff]
      %v487 = vld [vmem:[%s330 + $0x150] sm:$0xff]
      %v488 = vld [vmem:[%s330 + $0x158] sm:$0xff]
      %v489 = vld [vmem:[%s330 + $0x168] sm:$0xff]
      %v490 = vld [vmem:[%s330 + $0x170] sm:$0xff]
      %v491 = vld [vmem:[%s330 + $0x1] sm:$0xff]
      %v492 = vld [vmem:[%s330 + $0x9] sm:$0xff]
      %v493 = vld [vmem:[%s330 + $0x19] sm:$0xff]
      %v494 = vld [vmem:[%s330 + $0x21] sm:$0xff]
      %v495 = vld [vmem:[%s330 + $0x31] sm:$0xff]
      %v496 = vld [vmem:[%s330 + $0x39] sm:$0xff]
      %v497 = vld [vmem:[%s330 + $0x49] sm:$0xff]
      %v498 = vld [vmem:[%s330 + $0x51] sm:$0xff]
      %v499 = vld [vmem:[%s330 + $0x61] sm:$0xff]
      %v500 = vld [vmem:[%s330 + $0x69] sm:$0xff]
      %v501 = vld [vmem:[%s330 + $0x79] sm:$0xff]
      %v502 = vld [vmem:[%s330 + $0x81] sm:$0xff]
      %v503 = vld [vmem:[%s330 + $0x91] sm:$0xff]
      %v504 = vld [vmem:[%s330 + $0x99] sm:$0xff]
      %v505 = vld [vmem:[%s330 + $0xa9] sm:$0xff]
      %v506 = vld [vmem:[%s330 + $0xb1] sm:$0xff]
      %v507 = vld [vmem:[%s330 + $0xc1] sm:$0xff]
      %v508 = vld [vmem:[%s330 + $0xc9] sm:$0xff]
      %v509 = vld [vmem:[%s330 + $0xd9] sm:$0xff]
      %v510 = vld [vmem:[%s330 + $0xe1] sm:$0xff]
      %v511 = vld [vmem:[%s330 + $0xf1] sm:$0xff]
      %v512 = vld [vmem:[%s330 + $0xf9] sm:$0xff]
      %v513 = vld [vmem:[%s330 + $0x109] sm:$0xff]
      %v514 = vld [vmem:[%s330 + $0x111] sm:$0xff]
      %v515 = vld [vmem:[%s330 + $0x121] sm:$0xff]
      %v516 = vld [vmem:[%s330 + $0x129] sm:$0xff]
      %v517 = vld [vmem:[%s330 + $0x139] sm:$0xff]
      %v518 = vld [vmem:[%s330 + $0x141] sm:$0xff]
      %v519 = vld [vmem:[%s330 + $0x151] sm:$0xff]
      %v520 = vld [vmem:[%s330 + $0x159] sm:$0xff]
      %v521 = vld [vmem:[%s330 + $0x169] sm:$0xff]
      %v522 = vld [vmem:[%s330 + $0x171] sm:$0xff]
      %v523 = vld [vmem:[%s330 + $0x2] sm:$0xff]
      %v524 = vld [vmem:[%s330 + $0xa] sm:$0xff]
      %v525 = vld [vmem:[%s330 + $0x1a] sm:$0xff]
      %v526 = vld [vmem:[%s330 + $0x22] sm:$0xff]
      %v527 = vld [vmem:[%s330 + $0x32] sm:$0xff]
      %v528 = vld [vmem:[%s330 + $0x3a] sm:$0xff]
      %v529 = vld [vmem:[%s330 + $0x4a] sm:$0xff]
      %v530 = vld [vmem:[%s330 + $0x52] sm:$0xff]
      %v531 = vld [vmem:[%s330 + $0x62] sm:$0xff]
      %v532 = vld [vmem:[%s330 + $0x6a] sm:$0xff]
      %v533 = vld [vmem:[%s330 + $0x7a] sm:$0xff]
      %v534 = vld [vmem:[%s330 + $0x82] sm:$0xff]
      %v535 = vld [vmem:[%s330 + $0x92] sm:$0xff]
      %v536 = vld [vmem:[%s330 + $0x9a] sm:$0xff]
      %v537 = vld [vmem:[%s330 + $0xaa] sm:$0xff]
      %v538 = vld [vmem:[%s330 + $0xb2] sm:$0xff]
      %v539 = vld [vmem:[%s330 + $0xc2] sm:$0xff]
      %v540 = vld [vmem:[%s330 + $0xca] sm:$0xff]
      %v541 = vld [vmem:[%s330 + $0xda] sm:$0xff]
      %v542 = vld [vmem:[%s330 + $0xe2] sm:$0xff]
      %v543 = vld [vmem:[%s330 + $0xf2] sm:$0xff]
      %v544 = vld [vmem:[%s330 + $0xfa] sm:$0xff]
      %v545 = vld [vmem:[%s330 + $0x10a] sm:$0xff]
      %v546 = vld [vmem:[%s330 + $0x112] sm:$0xff]
      %v547 = vld [vmem:[%s330 + $0x122] sm:$0xff]
      %v548 = vld [vmem:[%s330 + $0x12a] sm:$0xff]
      %v549 = vld [vmem:[%s330 + $0x13a] sm:$0xff]
      %v550 = vld [vmem:[%s330 + $0x142] sm:$0xff]
      %v551 = vld [vmem:[%s330 + $0x152] sm:$0xff]
      %v552 = vld [vmem:[%s330 + $0x15a] sm:$0xff]
      %v553 = vld [vmem:[%s330 + $0x16a] sm:$0xff]
      %v554 = vld [vmem:[%s330 + $0x172] sm:$0xff]
      %s555 = scalar_lea.vmem [#allocation2], 48
      %v556 = vld [vmem:[%s555] sm:$0xff]
      %v557 = vld [vmem:[%s555 + $0x8] sm:$0xff]
      %v558 = vld [vmem:[%s555 + $0x18] sm:$0xff]
      %v559 = vld [vmem:[%s555 + $0x20] sm:$0xff]
      %v560 = vld [vmem:[%s555 + $0x30] sm:$0xff]
      %v561 = vld [vmem:[%s555 + $0x38] sm:$0xff]
      %v562 = vld [vmem:[%s555 + $0x48] sm:$0xff]
      %v563 = vld [vmem:[%s555 + $0x50] sm:$0xff]
      %v564 = vld [vmem:[%s555 + $0x60] sm:$0xff]
      %v565 = vld [vmem:[%s555 + $0x68] sm:$0xff]
      %v566 = vld [vmem:[%s555 + $0x78] sm:$0xff]
      %v567 = vld [vmem:[%s555 + $0x80] sm:$0xff]
      %v568 = vld [vmem:[%s555 + $0x90] sm:$0xff]
      %v569 = vld [vmem:[%s555 + $0x98] sm:$0xff]
      %v570 = vld [vmem:[%s555 + $0xa8] sm:$0xff]
      %v571 = vld [vmem:[%s555 + $0xb0] sm:$0xff]
      %v572 = vld [vmem:[%s555 + $0xc0] sm:$0xff]
      %v573 = vld [vmem:[%s555 + $0xc8] sm:$0xff]
      %v574 = vld [vmem:[%s555 + $0xd8] sm:$0xff]
      %v575 = vld [vmem:[%s555 + $0xe0] sm:$0xff]
      %v576 = vld [vmem:[%s555 + $0xf0] sm:$0xff]
      %v577 = vld [vmem:[%s555 + $0xf8] sm:$0xff]
      %v578 = vld [vmem:[%s555 + $0x108] sm:$0xff]
      %v579 = vld [vmem:[%s555 + $0x110] sm:$0xff]
      %v580 = vld [vmem:[%s555 + $0x120] sm:$0xff]
      %v581 = vld [vmem:[%s555 + $0x128] sm:$0xff]
      %v582 = vld [vmem:[%s555 + $0x138] sm:$0xff]
      %v583 = vld [vmem:[%s555 + $0x140] sm:$0xff]
      %v584 = vld [vmem:[%s555 + $0x150] sm:$0xff]
      %v585 = vld [vmem:[%s555 + $0x158] sm:$0xff]
      %v586 = vld [vmem:[%s555 + $0x168] sm:$0xff]
      %v587 = vld [vmem:[%s555 + $0x170] sm:$0xff]
      %v588 = vld [vmem:[%s555 + $0x1] sm:$0xff]
      %v589 = vld [vmem:[%s555 + $0x9] sm:$0xff]
      %v590 = vld [vmem:[%s555 + $0x19] sm:$0xff]
      %v591 = vld [vmem:[%s555 + $0x21] sm:$0xff]
      %v592 = vld [vmem:[%s555 + $0x31] sm:$0xff]
      %v593 = vld [vmem:[%s555 + $0x39] sm:$0xff]
      %v594 = vld [vmem:[%s555 + $0x49] sm:$0xff]
      %v595 = vld [vmem:[%s555 + $0x51] sm:$0xff]
      %v596 = vld [vmem:[%s555 + $0x61] sm:$0xff]
      %v597 = vld [vmem:[%s555 + $0x69] sm:$0xff]
      %v598 = vld [vmem:[%s555 + $0x79] sm:$0xff]
      %v599 = vld [vmem:[%s555 + $0x81] sm:$0xff]
      %v600 = vld [vmem:[%s555 + $0x91] sm:$0xff]
      %v601 = vld [vmem:[%s555 + $0x99] sm:$0xff]
      %v602 = vld [vmem:[%s555 + $0xa9] sm:$0xff]
      %v603 = vld [vmem:[%s555 + $0xb1] sm:$0xff]
      %v604 = vld [vmem:[%s555 + $0xc1] sm:$0xff]
      %v605 = vld [vmem:[%s555 + $0xc9] sm:$0xff]
      %v606 = vld [vmem:[%s555 + $0xd9] sm:$0xff]
      %v607 = vld [vmem:[%s555 + $0xe1] sm:$0xff]
      %v608 = vld [vmem:[%s555 + $0xf1] sm:$0xff]
      %v609 = vld [vmem:[%s555 + $0xf9] sm:$0xff]
      %v610 = vld [vmem:[%s555 + $0x109] sm:$0xff]
      %v611 = vld [vmem:[%s555 + $0x111] sm:$0xff]
      %v612 = vld [vmem:[%s555 + $0x121] sm:$0xff]
      %v613 = vld [vmem:[%s555 + $0x129] sm:$0xff]
      %v614 = vld [vmem:[%s555 + $0x139] sm:$0xff]
      %v615 = vld [vmem:[%s555 + $0x141] sm:$0xff]
      %v616 = vld [vmem:[%s555 + $0x151] sm:$0xff]
      %v617 = vld [vmem:[%s555 + $0x159] sm:$0xff]
      %v618 = vld [vmem:[%s555 + $0x169] sm:$0xff]
      %v619 = vld [vmem:[%s555 + $0x171] sm:$0xff]
      %v620 = vld [vmem:[%s555 + $0x2] sm:$0xff]
      %v621 = vld [vmem:[%s555 + $0xa] sm:$0xff]
      %v622 = vld [vmem:[%s555 + $0x1a] sm:$0xff]
      %v623 = vld [vmem:[%s555 + $0x22] sm:$0xff]
      %v624 = vld [vmem:[%s555 + $0x32] sm:$0xff]
      %v625 = vld [vmem:[%s555 + $0x3a] sm:$0xff]
      %v626 = vld [vmem:[%s555 + $0x4a] sm:$0xff]
      %v627 = vld [vmem:[%s555 + $0x52] sm:$0xff]
      %v628 = vld [vmem:[%s555 + $0x62] sm:$0xff]
      %v629 = vld [vmem:[%s555 + $0x6a] sm:$0xff]
      %v630 = vld [vmem:[%s555 + $0x7a] sm:$0xff]
      %v631 = vld [vmem:[%s555 + $0x82] sm:$0xff]
      %v632 = vld [vmem:[%s555 + $0x92] sm:$0xff]
      %v633 = vld [vmem:[%s555 + $0x9a] sm:$0xff]
      %v634 = vld [vmem:[%s555 + $0xaa] sm:$0xff]
      %v635 = vld [vmem:[%s555 + $0xb2] sm:$0xff]
      %v636 = vld [vmem:[%s555 + $0xc2] sm:$0xff]
      %v637 = vld [vmem:[%s555 + $0xca] sm:$0xff]
      %v638 = vld [vmem:[%s555 + $0xda] sm:$0xff]
      %v639 = vld [vmem:[%s555 + $0xe2] sm:$0xff]
      %v640 = vld [vmem:[%s555 + $0xf2] sm:$0xff]
      %v641 = vld [vmem:[%s555 + $0xfa] sm:$0xff]
      %v642 = vld [vmem:[%s555 + $0x10a] sm:$0xff]
      %v643 = vld [vmem:[%s555 + $0x112] sm:$0xff]
      %v644 = vld [vmem:[%s555 + $0x122] sm:$0xff]
      %v645 = vld [vmem:[%s555 + $0x12a] sm:$0xff]
      %v646 = vld [vmem:[%s555 + $0x13a] sm:$0xff]
      %v647 = vld [vmem:[%s555 + $0x142] sm:$0xff]
      %v648 = vld [vmem:[%s555 + $0x152] sm:$0xff]
      %v649 = vld [vmem:[%s555 + $0x15a] sm:$0xff]
      %v650 = vld [vmem:[%s555 + $0x16a] sm:$0xff]
      %v651 = vld [vmem:[%s555 + $0x172] sm:$0xff]
      %v652 = vld [vmem:[%s1] sm:$0xf]
      %v653 = vld [vmem:[%s1 + $0x4] sm:$0xf]
      %v655 = vsel %vm274, %v395, 0
      %v658 = vsel %vm274, %v396, 0
      %v661 = vsel %vm274, %v397, 0
      %v664 = vsel %vm274, %v398, 0
      %v667 = vsel %vm274, %v399, 0
      %v670 = vsel %vm274, %v400, 0
      %v673 = vsel %vm274, %v401, 0
      %v676 = vsel %vm274, %v402, 0
      %v679 = vsel %vm274, %v403, 0
      %v682 = vsel %vm274, %v404, 0
      %v685 = vsel %vm274, %v405, 0
      %v688 = vsel %vm274, %v406, 0
      %v691 = vsel %vm274, %v407, 0
      %v694 = vsel %vm274, %v408, 0
      %v697 = vsel %vm274, %v409, 0
      %v700 = vsel %vm274, %v410, 0
      %v703 = vsel %vm274, %v411, 0
      %v706 = vsel %vm274, %v412, 0
      %v709 = vsel %vm274, %v413, 0
      %v712 = vsel %vm274, %v414, 0
      %v715 = vsel %vm274, %v415, 0
      %v718 = vsel %vm274, %v416, 0
      %v721 = vsel %vm274, %v417, 0
      %v724 = vsel %vm274, %v418, 0
      %v727 = vsel %vm274, %v419, 0
      %v730 = vsel %vm274, %v420, 0
      %v733 = vsel %vm274, %v421, 0
      %v736 = vsel %vm274, %v422, 0
      %v739 = vsel %vm274, %v423, 0
      %v742 = vsel %vm274, %v424, 0
      %v745 = vsel %vm274, %v425, 0
      %v748 = vsel %vm274, %v426, 0
      %vm750 = vcmask 1043456
      %v752 = vsel %vm750, %v653, 0
      %754 = vmatprep.subr.mxu0 0.0
      %755 = vmatpush1.msra.mxu0 0.0
      %756 = vmatprep.subr.mxu0 0.0
      %757 = vmatpush1.msra.mxu0 0.0
      %758 = vmatprep.subr.mxu0 0.0
      %759 = vmatpush1.msra.mxu0 0.0
      %760 = vmatprep.subr.mxu0 0.0
      %761 = vmatpush1.msra.mxu0 0.0
      %762 = vmatprep.subr.mxu0 0.0
      %763 = vmatpush1.msra.mxu0 0.0
      %764 = vmatprep.subr.mxu0 0.0
      %765 = vmatpush1.msra.mxu0 0.0
      %766 = vmatprep.subr.mxu0 0.0
      %767 = vmatpush1.msra.mxu0 0.0
      %768 = vmatprep.subr.mxu0 0.0
      %769 = vmatpush1.msra.mxu0 0.0
      %770 = vmatprep.subr.mxu0 0.0
      %771 = vmatpush1.msra.mxu0 0.0
      %772 = vmatprep.subr.mxu0 0.0
      %773 = vmatpush1.msra.mxu0 0.0
      %774 = vmatprep.subr.mxu0 0.0
      %775 = vmatpush1.msra.mxu0 0.0
      %776 = vmatprep.subr.mxu0 0.0
      %777 = vmatpush1.msra.mxu0 0.0
      %778 = vmatprep.subr.mxu0 0.0
      %779 = vmatpush1.msra.mxu0 0.0
      %780 = vmatprep.subr.mxu0 0.0
      %781 = vmatpush1.msra.mxu0 0.0
      %782 = vmatprep.subr.mxu0 0.0
      %783 = vmatpush1.msra.mxu0 0.0
      %784 = vmatprep.subr.mxu0 0.0
      %785 = vmatpush1.msra.mxu0 %v752
      %786 = vmatprep.subr.mxu0 0.0
      %787 = vmatpush2.msra.mxu0 0.0
      %788 = vmatprep.subr.mxu0 0.0
      %789 = vmatpush2.msra.mxu0 0.0
      %790 = vmatprep.subr.mxu0 0.0
      %791 = vmatpush2.msra.mxu0 0.0
      %792 = vmatprep.subr.mxu0 0.0
      %793 = vmatpush2.msra.mxu0 0.0
      %794 = vmatprep.subr.mxu0 0.0
      %795 = vmatpush2.msra.mxu0 0.0
      %796 = vmatprep.subr.mxu0 0.0
      %797 = vmatpush2.msra.mxu0 0.0
      %798 = vmatprep.subr.mxu0 0.0
      %799 = vmatpush2.msra.mxu0 0.0
      %800 = vmatprep.subr.mxu0 0.0
      %801 = vmatpush2.msra.mxu0 0.0
      %802 = vmatprep.subr.mxu0 0.0
      %803 = vmatpush2.msra.mxu0 0.0
      %804 = vmatprep.subr.mxu0 0.0
      %805 = vmatpush2.msra.mxu0 0.0
      %806 = vmatprep.subr.mxu0 0.0
      %807 = vmatpush2.msra.mxu0 0.0
      %808 = vmatprep.subr.mxu0 0.0
      %809 = vmatpush2.msra.mxu0 0.0
      %810 = vmatprep.subr.mxu0 0.0
      %811 = vmatpush2.msra.mxu0 0.0
      %812 = vmatprep.subr.mxu0 0.0
      %813 = vmatpush2.msra.mxu0 0.0
      %814 = vmatprep.subr.mxu0 0.0
      %815 = vmatpush2.msra.mxu0 0.0
      %816 = vmatprep.subr.mxu0 0.0
      %817 = vmatpush2.msra.mxu0 0.0
      %818 = vmatprep.mubr.f32.mxu0 0.0
      %819 = vmatmul.mubr.f32.gmra.mxu0 %v655
      %v820 = vpop.f32.mrf.mxu0
      %v821 = vadd.f32 0.0, %v820
      %v822 = vpop.f32.mrf.mxu0
      %823 = vmatprep.mubr.f32.mxu0 0.0
      %824 = vmatmul.mubr.f32.gmra.mxu0 %v658
      %v825 = vpop.f32.mrf.mxu0
      %v826 = vadd.f32 0.0, %v825
      %v827 = vpop.f32.mrf.mxu0
      %828 = vmatprep.mubr.f32.mxu0 0.0
      %829 = vmatmul.mubr.f32.gmra.mxu0 %v661
      %v830 = vpop.f32.mrf.mxu0
      %v831 = vadd.f32 0.0, %v830
      %v832 = vpop.f32.mrf.mxu0
      %833 = vmatprep.mubr.f32.mxu0 0.0
      %834 = vmatmul.mubr.f32.gmra.mxu0 %v664
      %v835 = vpop.f32.mrf.mxu0
      %v836 = vadd.f32 0.0, %v835
      %v837 = vpop.f32.mrf.mxu0
      %838 = vmatprep.mubr.f32.mxu0 0.0
      %839 = vmatmul.mubr.f32.gmra.mxu0 %v667
      %v840 = vpop.f32.mrf.mxu0
      %v841 = vadd.f32 0.0, %v840
      %v842 = vpop.f32.mrf.mxu0
      %843 = vmatprep.mubr.f32.mxu0 0.0
      %844 = vmatmul.mubr.f32.gmra.mxu0 %v670
      %v845 = vpop.f32.mrf.mxu0
      %v846 = vadd.f32 0.0, %v845
      %v847 = vpop.f32.mrf.mxu0
      %848 = vmatprep.mubr.f32.mxu0 0.0
      %849 = vmatmul.mubr.f32.gmra.mxu0 %v673
      %v850 = vpop.f32.mrf.mxu0
      %v851 = vadd.f32 0.0, %v850
      %v852 = vpop.f32.mrf.mxu0
      %853 = vmatprep.mubr.f32.mxu0 0.0
      %854 = vmatmul.mubr.f32.gmra.mxu0 %v676
      %v855 = vpop.f32.mrf.mxu0
      %v856 = vadd.f32 0.0, %v855
      %v857 = vpop.f32.mrf.mxu0
      %858 = vmatprep.mubr.f32.mxu0 0.0
      %859 = vmatmul.mubr.f32.gmra.mxu0 %v679
      %v860 = vpop.f32.mrf.mxu0
      %v861 = vadd.f32 0.0, %v860
      %v862 = vpop.f32.mrf.mxu0
      %863 = vmatprep.mubr.f32.mxu0 0.0
      %864 = vmatmul.mubr.f32.gmra.mxu0 %v682
      %v865 = vpop.f32.mrf.mxu0
      %v866 = vadd.f32 0.0, %v865
      %v867 = vpop.f32.mrf.mxu0
      %868 = vmatprep.mubr.f32.mxu0 0.0
      %869 = vmatmul.mubr.f32.gmra.mxu0 %v685
      %v870 = vpop.f32.mrf.mxu0
      %v871 = vadd.f32 0.0, %v870
      %v872 = vpop.f32.mrf.mxu0
      %873 = vmatprep.mubr.f32.mxu0 0.0
      %874 = vmatmul.mubr.f32.gmra.mxu0 %v688
      %v875 = vpop.f32.mrf.mxu0
      %v876 = vadd.f32 0.0, %v875
      %v877 = vpop.f32.mrf.mxu0
      %878 = vmatprep.mubr.f32.mxu0 0.0
      %879 = vmatmul.mubr.f32.gmra.mxu0 %v691
      %v880 = vpop.f32.mrf.mxu0
      %v881 = vadd.f32 0.0, %v880
      %v882 = vpop.f32.mrf.mxu0
      %883 = vmatprep.mubr.f32.mxu0 0.0
      %884 = vmatmul.mubr.f32.gmra.mxu0 %v694
      %v885 = vpop.f32.mrf.mxu0
      %v886 = vadd.f32 0.0, %v885
      %v887 = vpop.f32.mrf.mxu0
      %888 = vmatprep.mubr.f32.mxu0 0.0
      %889 = vmatmul.mubr.f32.gmra.mxu0 %v697
      %v890 = vpop.f32.mrf.mxu0
      %v891 = vadd.f32 0.0, %v890
      %v892 = vpop.f32.mrf.mxu0
      %893 = vmatprep.mubr.f32.mxu0 0.0
      %894 = vmatmul.mubr.f32.gmra.mxu0 %v700
      %v895 = vpop.f32.mrf.mxu0
      %v896 = vadd.f32 0.0, %v895
      %v897 = vpop.f32.mrf.mxu0
      %898 = vmatprep.mubr.f32.mxu0 0.0
      %899 = vmatmul.mubr.f32.gmra.mxu0 %v703
      %v900 = vpop.f32.mrf.mxu0
      %v901 = vadd.f32 0.0, %v900
      %v902 = vpop.f32.mrf.mxu0
      %903 = vmatprep.mubr.f32.mxu0 0.0
      %904 = vmatmul.mubr.f32.gmra.mxu0 %v706
      %v905 = vpop.f32.mrf.mxu0
      %v906 = vadd.f32 0.0, %v905
      %v907 = vpop.f32.mrf.mxu0
      %908 = vmatprep.mubr.f32.mxu0 0.0
      %909 = vmatmul.mubr.f32.gmra.mxu0 %v709
      %v910 = vpop.f32.mrf.mxu0
      %v911 = vadd.f32 0.0, %v910
      %v912 = vpop.f32.mrf.mxu0
      %913 = vmatprep.mubr.f32.mxu0 0.0
      %914 = vmatmul.mubr.f32.gmra.mxu0 %v712
      %v915 = vpop.f32.mrf.mxu0
      %v916 = vadd.f32 0.0, %v915
      %v917 = vpop.f32.mrf.mxu0
      %918 = vmatprep.mubr.f32.mxu0 0.0
      %919 = vmatmul.mubr.f32.gmra.mxu0 %v715
      %v920 = vpop.f32.mrf.mxu0
      %v921 = vadd.f32 0.0, %v920
      %v922 = vpop.f32.mrf.mxu0
      %923 = vmatprep.mubr.f32.mxu0 0.0
      %924 = vmatmul.mubr.f32.gmra.mxu0 %v718
      %v925 = vpop.f32.mrf.mxu0
      %v926 = vadd.f32 0.0, %v925
      %v927 = vpop.f32.mrf.mxu0
      %928 = vmatprep.mubr.f32.mxu0 0.0
      %929 = vmatmul.mubr.f32.gmra.mxu0 %v721
      %v930 = vpop.f32.mrf.mxu0
      %v931 = vadd.f32 0.0, %v930
      %v932 = vpop.f32.mrf.mxu0
      %933 = vmatprep.mubr.f32.mxu0 0.0
      %934 = vmatmul.mubr.f32.gmra.mxu0 %v724
      %v935 = vpop.f32.mrf.mxu0
      %v936 = vadd.f32 0.0, %v935
      %v937 = vpop.f32.mrf.mxu0
      %938 = vmatprep.mubr.f32.mxu0 0.0
      %939 = vmatmul.mubr.f32.gmra.mxu0 %v727
      %v940 = vpop.f32.mrf.mxu0
      %v941 = vadd.f32 0.0, %v940
      %v942 = vpop.f32.mrf.mxu0
      %943 = vmatprep.mubr.f32.mxu0 0.0
      %944 = vmatmul.mubr.f32.gmra.mxu0 %v730
      %v945 = vpop.f32.mrf.mxu0
      %v946 = vadd.f32 0.0, %v945
      %v947 = vpop.f32.mrf.mxu0
      %948 = vmatprep.mubr.f32.mxu0 0.0
      %949 = vmatmul.mubr.f32.gmra.mxu0 %v733
      %v950 = vpop.f32.mrf.mxu0
      %v951 = vadd.f32 0.0, %v950
      %v952 = vpop.f32.mrf.mxu0
      %953 = vmatprep.mubr.f32.mxu0 0.0
      %954 = vmatmul.mubr.f32.gmra.mxu0 %v736
      %v955 = vpop.f32.mrf.mxu0
      %v956 = vadd.f32 0.0, %v955
      %v957 = vpop.f32.mrf.mxu0
      %958 = vmatprep.mubr.f32.mxu0 0.0
      %959 = vmatmul.mubr.f32.gmra.mxu0 %v739
      %v960 = vpop.f32.mrf.mxu0
      %v961 = vadd.f32 0.0, %v960
      %v962 = vpop.f32.mrf.mxu0
      %963 = vmatprep.mubr.f32.mxu0 0.0
      %964 = vmatmul.mubr.f32.gmra.mxu0 %v742
      %v965 = vpop.f32.mrf.mxu0
      %v966 = vadd.f32 0.0, %v965
      %v967 = vpop.f32.mrf.mxu0
      %968 = vmatprep.mubr.f32.mxu0 0.0
      %969 = vmatmul.mubr.f32.gmra.mxu0 %v745
      %v970 = vpop.f32.mrf.mxu0
      %v971 = vadd.f32 0.0, %v970
      %v972 = vpop.f32.mrf.mxu0
      %973 = vmatprep.mubr.f32.mxu0 0.0
      %974 = vmatmul.mubr.f32.gmra.mxu0 %v748
      %v975 = vpop.f32.mrf.mxu0
      %v976 = vadd.f32 0.0, %v975
      %v977 = vpop.f32.mrf.mxu0
      %978 = vdwg.mxu0
      %v980 = vsel %vm274, %v363, 0
      %v983 = vsel %vm274, %v364, 0
      %v986 = vsel %vm274, %v365, 0
      %v989 = vsel %vm274, %v366, 0
      %v992 = vsel %vm274, %v367, 0
      %v995 = vsel %vm274, %v368, 0
      %v998 = vsel %vm274, %v369, 0
      %v1001 = vsel %vm274, %v370, 0
      %v1004 = vsel %vm274, %v371, 0
      %v1007 = vsel %vm274, %v372, 0
      %v1010 = vsel %vm274, %v373, 0
      %v1013 = vsel %vm274, %v374, 0
      %v1016 = vsel %vm274, %v375, 0
      %v1019 = vsel %vm274, %v376, 0
      %v1022 = vsel %vm274, %v377, 0
      %v1025 = vsel %vm274, %v378, 0
      %v1028 = vsel %vm274, %v379, 0
      %v1031 = vsel %vm274, %v380, 0
      %v1034 = vsel %vm274, %v381, 0
      %v1037 = vsel %vm274, %v382, 0
      %v1040 = vsel %vm274, %v383, 0
      %v1043 = vsel %vm274, %v384, 0
      %v1046 = vsel %vm274, %v385, 0
      %v1049 = vsel %vm274, %v386, 0
      %v1052 = vsel %vm274, %v387, 0
      %v1055 = vsel %vm274, %v388, 0
      %v1058 = vsel %vm274, %v389, 0
      %v1061 = vsel %vm274, %v390, 0
      %v1064 = vsel %vm274, %v391, 0
      %v1067 = vsel %vm274, %v392, 0
      %v1070 = vsel %vm274, %v393, 0
      %v1073 = vsel %vm274, %v394, 0
      %v1076 = vsel %vm750, %v652, 0
      %1078 = vmatprep.subr.mxu0 0.0
      %1079 = vmatpush1.msra.mxu0 0.0
      %1080 = vmatprep.subr.mxu0 0.0
      %1081 = vmatpush1.msra.mxu0 0.0
      %1082 = vmatprep.subr.mxu0 0.0
      %1083 = vmatpush1.msra.mxu0 0.0
      %1084 = vmatprep.subr.mxu0 0.0
      %1085 = vmatpush1.msra.mxu0 0.0
      %1086 = vmatprep.subr.mxu0 0.0
      %1087 = vmatpush1.msra.mxu0 0.0
      %1088 = vmatprep.subr.mxu0 0.0
      %1089 = vmatpush1.msra.mxu0 0.0
      %1090 = vmatprep.subr.mxu0 0.0
      %1091 = vmatpush1.msra.mxu0 0.0
      %1092 = vmatprep.subr.mxu0 0.0
      %1093 = vmatpush1.msra.mxu0 0.0
      %1094 = vmatprep.subr.mxu0 0.0
      %1095 = vmatpush1.msra.mxu0 0.0
      %1096 = vmatprep.subr.mxu0 0.0
      %1097 = vmatpush1.msra.mxu0 0.0
      %1098 = vmatprep.subr.mxu0 0.0
      %1099 = vmatpush1.msra.mxu0 0.0
      %1100 = vmatprep.subr.mxu0 0.0
      %1101 = vmatpush1.msra.mxu0 0.0
      %1102 = vmatprep.subr.mxu0 0.0
      %1103 = vmatpush1.msra.mxu0 0.0
      %1104 = vmatprep.subr.mxu0 0.0
      %1105 = vmatpush1.msra.mxu0 0.0
      %1106 = vmatprep.subr.mxu0 0.0
      %1107 = vmatpush1.msra.mxu0 0.0
      %1108 = vmatprep.subr.mxu0 0.0
      %1109 = vmatpush1.msra.mxu0 %v1076
      %1110 = vmatprep.subr.mxu0 0.0
      %1111 = vmatpush2.msra.mxu0 0.0
      %1112 = vmatprep.subr.mxu0 0.0
      %1113 = vmatpush2.msra.mxu0 0.0
      %1114 = vmatprep.subr.mxu0 0.0
      %1115 = vmatpush2.msra.mxu0 0.0
      %1116 = vmatprep.subr.mxu0 0.0
      %1117 = vmatpush2.msra.mxu0 0.0
      %1118 = vmatprep.subr.mxu0 0.0
      %1119 = vmatpush2.msra.mxu0 0.0
      %1120 = vmatprep.subr.mxu0 0.0
      %1121 = vmatpush2.msra.mxu0 0.0
      %1122 = vmatprep.subr.mxu0 0.0
      %1123 = vmatpush2.msra.mxu0 0.0
      %1124 = vmatprep.subr.mxu0 0.0
      %1125 = vmatpush2.msra.mxu0 0.0
      %1126 = vmatprep.subr.mxu0 0.0
      %1127 = vmatpush2.msra.mxu0 0.0
      %1128 = vmatprep.subr.mxu0 0.0
      %1129 = vmatpush2.msra.mxu0 0.0
      %1130 = vmatprep.subr.mxu0 0.0
      %1131 = vmatpush2.msra.mxu0 0.0
      %1132 = vmatprep.subr.mxu0 0.0
      %1133 = vmatpush2.msra.mxu0 0.0
      %1134 = vmatprep.subr.mxu0 0.0
      %1135 = vmatpush2.msra.mxu0 0.0
      %1136 = vmatprep.subr.mxu0 0.0
      %1137 = vmatpush2.msra.mxu0 0.0
      %1138 = vmatprep.subr.mxu0 0.0
      %1139 = vmatpush2.msra.mxu0 0.0
      %1140 = vmatprep.subr.mxu0 0.0
      %1141 = vmatpush2.msra.mxu0 0.0
      %1142 = vmatprep.mubr.f32.mxu0 0.0
      %1143 = vmatmul.mubr.f32.gmra.mxu0 %v980
      %v1144 = vpop.f32.mrf.mxu0
      %v1145 = vadd.f32 %v821, %v1144
      %v1146 = vpop.f32.mrf.mxu0
      %1147 = vmatprep.mubr.f32.mxu0 0.0
      %1148 = vmatmul.mubr.f32.gmra.mxu0 %v983
      %v1149 = vpop.f32.mrf.mxu0
      %v1150 = vadd.f32 %v826, %v1149
      %v1151 = vpop.f32.mrf.mxu0
      %1152 = vmatprep.mubr.f32.mxu0 0.0
      %1153 = vmatmul.mubr.f32.gmra.mxu0 %v986
      %v1154 = vpop.f32.mrf.mxu0
      %v1155 = vadd.f32 %v831, %v1154
      %v1156 = vpop.f32.mrf.mxu0
      %1157 = vmatprep.mubr.f32.mxu0 0.0
      %1158 = vmatmul.mubr.f32.gmra.mxu0 %v989
      %v1159 = vpop.f32.mrf.mxu0
      %v1160 = vadd.f32 %v836, %v1159
      %v1161 = vpop.f32.mrf.mxu0
      %1162 = vmatprep.mubr.f32.mxu0 0.0
      %1163 = vmatmul.mubr.f32.gmra.mxu0 %v992
      %v1164 = vpop.f32.mrf.mxu0
      %v1165 = vadd.f32 %v841, %v1164
      %v1166 = vpop.f32.mrf.mxu0
      %1167 = vmatprep.mubr.f32.mxu0 0.0
      %1168 = vmatmul.mubr.f32.gmra.mxu0 %v995
      %v1169 = vpop.f32.mrf.mxu0
      %v1170 = vadd.f32 %v846, %v1169
      %v1171 = vpop.f32.mrf.mxu0
      %1172 = vmatprep.mubr.f32.mxu0 0.0
      %1173 = vmatmul.mubr.f32.gmra.mxu0 %v998
      %v1174 = vpop.f32.mrf.mxu0
      %v1175 = vadd.f32 %v851, %v1174
      %v1176 = vpop.f32.mrf.mxu0
      %1177 = vmatprep.mubr.f32.mxu0 0.0
      %1178 = vmatmul.mubr.f32.gmra.mxu0 %v1001
      %v1179 = vpop.f32.mrf.mxu0
      %v1180 = vadd.f32 %v856, %v1179
      %v1181 = vpop.f32.mrf.mxu0
      %1182 = vmatprep.mubr.f32.mxu0 0.0
      %1183 = vmatmul.mubr.f32.gmra.mxu0 %v1004
      %v1184 = vpop.f32.mrf.mxu0
      %v1185 = vadd.f32 %v861, %v1184
      %v1186 = vpop.f32.mrf.mxu0
      %1187 = vmatprep.mubr.f32.mxu0 0.0
      %1188 = vmatmul.mubr.f32.gmra.mxu0 %v1007
      %v1189 = vpop.f32.mrf.mxu0
      %v1190 = vadd.f32 %v866, %v1189
      %v1191 = vpop.f32.mrf.mxu0
      %1192 = vmatprep.mubr.f32.mxu0 0.0
      %1193 = vmatmul.mubr.f32.gmra.mxu0 %v1010
      %v1194 = vpop.f32.mrf.mxu0
      %v1195 = vadd.f32 %v871, %v1194
      %v1196 = vpop.f32.mrf.mxu0
      %1197 = vmatprep.mubr.f32.mxu0 0.0
      %1198 = vmatmul.mubr.f32.gmra.mxu0 %v1013
      %v1199 = vpop.f32.mrf.mxu0
      %v1200 = vadd.f32 %v876, %v1199
      %v1201 = vpop.f32.mrf.mxu0
      %1202 = vmatprep.mubr.f32.mxu0 0.0
      %1203 = vmatmul.mubr.f32.gmra.mxu0 %v1016
      %v1204 = vpop.f32.mrf.mxu0
      %v1205 = vadd.f32 %v881, %v1204
      %v1206 = vpop.f32.mrf.mxu0
      %1207 = vmatprep.mubr.f32.mxu0 0.0
      %1208 = vmatmul.mubr.f32.gmra.mxu0 %v1019
      %v1209 = vpop.f32.mrf.mxu0
      %v1210 = vadd.f32 %v886, %v1209
      %v1211 = vpop.f32.mrf.mxu0
      %1212 = vmatprep.mubr.f32.mxu0 0.0
      %1213 = vmatmul.mubr.f32.gmra.mxu0 %v1022
      %v1214 = vpop.f32.mrf.mxu0
      %v1215 = vadd.f32 %v891, %v1214
      %v1216 = vpop.f32.mrf.mxu0
      %1217 = vmatprep.mubr.f32.mxu0 0.0
      %1218 = vmatmul.mubr.f32.gmra.mxu0 %v1025
      %v1219 = vpop.f32.mrf.mxu0
      %v1220 = vadd.f32 %v896, %v1219
      %v1221 = vpop.f32.mrf.mxu0
      %1222 = vmatprep.mubr.f32.mxu0 0.0
      %1223 = vmatmul.mubr.f32.gmra.mxu0 %v1028
      %v1224 = vpop.f32.mrf.mxu0
      %v1225 = vadd.f32 %v901, %v1224
      %v1226 = vpop.f32.mrf.mxu0
      %1227 = vmatprep.mubr.f32.mxu0 0.0
      %1228 = vmatmul.mubr.f32.gmra.mxu0 %v1031
      %v1229 = vpop.f32.mrf.mxu0
      %v1230 = vadd.f32 %v906, %v1229
      %v1231 = vpop.f32.mrf.mxu0
      %1232 = vmatprep.mubr.f32.mxu0 0.0
      %1233 = vmatmul.mubr.f32.gmra.mxu0 %v1034
      %v1234 = vpop.f32.mrf.mxu0
      %v1235 = vadd.f32 %v911, %v1234
      %v1236 = vpop.f32.mrf.mxu0
      %1237 = vmatprep.mubr.f32.mxu0 0.0
      %1238 = vmatmul.mubr.f32.gmra.mxu0 %v1037
      %v1239 = vpop.f32.mrf.mxu0
      %v1240 = vadd.f32 %v916, %v1239
      %v1241 = vpop.f32.mrf.mxu0
      %1242 = vmatprep.mubr.f32.mxu0 0.0
      %1243 = vmatmul.mubr.f32.gmra.mxu0 %v1040
      %v1244 = vpop.f32.mrf.mxu0
      %v1245 = vadd.f32 %v921, %v1244
      %v1246 = vpop.f32.mrf.mxu0
      %1247 = vmatprep.mubr.f32.mxu0 0.0
      %1248 = vmatmul.mubr.f32.gmra.mxu0 %v1043
      %v1249 = vpop.f32.mrf.mxu0
      %v1250 = vadd.f32 %v926, %v1249
      %v1251 = vpop.f32.mrf.mxu0
      %1252 = vmatprep.mubr.f32.mxu0 0.0
      %1253 = vmatmul.mubr.f32.gmra.mxu0 %v1046
      %v1254 = vpop.f32.mrf.mxu0
      %v1255 = vadd.f32 %v931, %v1254
      %v1256 = vpop.f32.mrf.mxu0
      %1257 = vmatprep.mubr.f32.mxu0 0.0
      %1258 = vmatmul.mubr.f32.gmra.mxu0 %v1049
      %v1259 = vpop.f32.mrf.mxu0
      %v1260 = vadd.f32 %v936, %v1259
      %v1261 = vpop.f32.mrf.mxu0
      %1262 = vmatprep.mubr.f32.mxu0 0.0
      %1263 = vmatmul.mubr.f32.gmra.mxu0 %v1052
      %v1264 = vpop.f32.mrf.mxu0
      %v1265 = vadd.f32 %v941, %v1264
      %v1266 = vpop.f32.mrf.mxu0
      %1267 = vmatprep.mubr.f32.mxu0 0.0
      %1268 = vmatmul.mubr.f32.gmra.mxu0 %v1055
      %v1269 = vpop.f32.mrf.mxu0
      %v1270 = vadd.f32 %v946, %v1269
      %v1271 = vpop.f32.mrf.mxu0
      %1272 = vmatprep.mubr.f32.mxu0 0.0
      %1273 = vmatmul.mubr.f32.gmra.mxu0 %v1058
      %v1274 = vpop.f32.mrf.mxu0
      %v1275 = vadd.f32 %v951, %v1274
      %v1276 = vpop.f32.mrf.mxu0
      %1277 = vmatprep.mubr.f32.mxu0 0.0
      %1278 = vmatmul.mubr.f32.gmra.mxu0 %v1061
      %v1279 = vpop.f32.mrf.mxu0
      %v1280 = vadd.f32 %v956, %v1279
      %v1281 = vpop.f32.mrf.mxu0
      %1282 = vmatprep.mubr.f32.mxu0 0.0
      %1283 = vmatmul.mubr.f32.gmra.mxu0 %v1064
      %v1284 = vpop.f32.mrf.mxu0
      %v1285 = vadd.f32 %v961, %v1284
      %v1286 = vpop.f32.mrf.mxu0
      %1287 = vmatprep.mubr.f32.mxu0 0.0
      %1288 = vmatmul.mubr.f32.gmra.mxu0 %v1067
      %v1289 = vpop.f32.mrf.mxu0
      %v1290 = vadd.f32 %v966, %v1289
      %v1291 = vpop.f32.mrf.mxu0
      %1292 = vmatprep.mubr.f32.mxu0 0.0
      %1293 = vmatmul.mubr.f32.gmra.mxu0 %v1070
      %v1294 = vpop.f32.mrf.mxu0
      %v1295 = vadd.f32 %v971, %v1294
      %v1296 = vpop.f32.mrf.mxu0
      %1297 = vmatprep.mubr.f32.mxu0 0.0
      %1298 = vmatmul.mubr.f32.gmra.mxu0 %v1073
      %v1299 = vpop.f32.mrf.mxu0
      %v1300 = vadd.f32 %v976, %v1299
      %v1301 = vpop.f32.mrf.mxu0
      %1302 = vdwg.mxu0
      %v1303 = vld [vmem:[%s1 + $0x8] sm:$0xf]
      %v1305 = vsel %vm274, %v427, 0
      %v1308 = vsel %vm274, %v428, 0
      %v1311 = vsel %vm274, %v429, 0
      %v1314 = vsel %vm274, %v430, 0
      %v1317 = vsel %vm274, %v431, 0
      %v1320 = vsel %vm274, %v432, 0
      %v1323 = vsel %vm274, %v433, 0
      %v1326 = vsel %vm274, %v434, 0
      %v1329 = vsel %vm274, %v435, 0
      %v1332 = vsel %vm274, %v436, 0
      %v1335 = vsel %vm274, %v437, 0
      %v1338 = vsel %vm274, %v438, 0
      %v1341 = vsel %vm274, %v439, 0
      %v1344 = vsel %vm274, %v440, 0
      %v1347 = vsel %vm274, %v441, 0
      %v1350 = vsel %vm274, %v442, 0
      %v1353 = vsel %vm274, %v443, 0
      %v1356 = vsel %vm274, %v444, 0
      %v1359 = vsel %vm274, %v445, 0
      %v1362 = vsel %vm274, %v446, 0
      %v1365 = vsel %vm274, %v447, 0
      %v1368 = vsel %vm274, %v448, 0
      %v1371 = vsel %vm274, %v449, 0
      %v1374 = vsel %vm274, %v450, 0
      %v1377 = vsel %vm274, %v451, 0
      %v1380 = vsel %vm274, %v452, 0
      %v1383 = vsel %vm274, %v453, 0
      %v1386 = vsel %vm274, %v454, 0
      %v1389 = vsel %vm274, %v455, 0
      %v1392 = vsel %vm274, %v456, 0
      %v1395 = vsel %vm274, %v457, 0
      %v1398 = vsel %vm274, %v458, 0
      %v1401 = vsel %vm750, %v1303, 0
      %1403 = vmatprep.subr.mxu0 0.0
      %1404 = vmatpush1.msra.mxu0 0.0
      %1405 = vmatprep.subr.mxu0 0.0
      %1406 = vmatpush1.msra.mxu0 0.0
      %1407 = vmatprep.subr.mxu0 0.0
      %1408 = vmatpush1.msra.mxu0 0.0
      %1409 = vmatprep.subr.mxu0 0.0
      %1410 = vmatpush1.msra.mxu0 0.0
      %1411 = vmatprep.subr.mxu0 0.0
      %1412 = vmatpush1.msra.mxu0 0.0
      %1413 = vmatprep.subr.mxu0 0.0
      %1414 = vmatpush1.msra.mxu0 0.0
      %1415 = vmatprep.subr.mxu0 0.0
      %1416 = vmatpush1.msra.mxu0 0.0
      %1417 = vmatprep.subr.mxu0 0.0
      %1418 = vmatpush1.msra.mxu0 0.0
      %1419 = vmatprep.subr.mxu0 0.0
      %1420 = vmatpush1.msra.mxu0 0.0
      %1421 = vmatprep.subr.mxu0 0.0
      %1422 = vmatpush1.msra.mxu0 0.0
      %1423 = vmatprep.subr.mxu0 0.0
      %1424 = vmatpush1.msra.mxu0 0.0
      %1425 = vmatprep.subr.mxu0 0.0
      %1426 = vmatpush1.msra.mxu0 0.0
      %1427 = vmatprep.subr.mxu0 0.0
      %1428 = vmatpush1.msra.mxu0 0.0
      %1429 = vmatprep.subr.mxu0 0.0
      %1430 = vmatpush1.msra.mxu0 0.0
      %1431 = vmatprep.subr.mxu0 0.0
      %1432 = vmatpush1.msra.mxu0 0.0
      %1433 = vmatprep.subr.mxu0 0.0
      %1434 = vmatpush1.msra.mxu0 %v1401
      %1435 = vmatprep.subr.mxu0 0.0
      %1436 = vmatpush2.msra.mxu0 0.0
      %1437 = vmatprep.subr.mxu0 0.0
      %1438 = vmatpush2.msra.mxu0 0.0
      %1439 = vmatprep.subr.mxu0 0.0
      %1440 = vmatpush2.msra.mxu0 0.0
      %1441 = vmatprep.subr.mxu0 0.0
      %1442 = vmatpush2.msra.mxu0 0.0
      %1443 = vmatprep.subr.mxu0 0.0
      %1444 = vmatpush2.msra.mxu0 0.0
      %1445 = vmatprep.subr.mxu0 0.0
      %1446 = vmatpush2.msra.mxu0 0.0
      %1447 = vmatprep.subr.mxu0 0.0
      %1448 = vmatpush2.msra.mxu0 0.0
      %1449 = vmatprep.subr.mxu0 0.0
      %1450 = vmatpush2.msra.mxu0 0.0
      %1451 = vmatprep.subr.mxu0 0.0
      %1452 = vmatpush2.msra.mxu0 0.0
      %1453 = vmatprep.subr.mxu0 0.0
      %1454 = vmatpush2.msra.mxu0 0.0
      %1455 = vmatprep.subr.mxu0 0.0
      %1456 = vmatpush2.msra.mxu0 0.0
      %1457 = vmatprep.subr.mxu0 0.0
      %1458 = vmatpush2.msra.mxu0 0.0
      %1459 = vmatprep.subr.mxu0 0.0
      %1460 = vmatpush2.msra.mxu0 0.0
      %1461 = vmatprep.subr.mxu0 0.0
      %1462 = vmatpush2.msra.mxu0 0.0
      %1463 = vmatprep.subr.mxu0 0.0
      %1464 = vmatpush2.msra.mxu0 0.0
      %1465 = vmatprep.subr.mxu0 0.0
      %1466 = vmatpush2.msra.mxu0 0.0
      %1467 = vmatprep.mubr.f32.mxu0 0.0
      %1468 = vmatmul.mubr.f32.gmra.mxu0 %v1305
      %v1469 = vpop.f32.mrf.mxu0
      %v1470 = vadd.f32 0.0, %v1469
      %v1471 = vpop.f32.mrf.mxu0
      %1472 = vmatprep.mubr.f32.mxu0 0.0
      %1473 = vmatmul.mubr.f32.gmra.mxu0 %v1308
      %v1474 = vpop.f32.mrf.mxu0
      %v1475 = vadd.f32 0.0, %v1474
      %v1476 = vpop.f32.mrf.mxu0
      %1477 = vmatprep.mubr.f32.mxu0 0.0
      %1478 = vmatmul.mubr.f32.gmra.mxu0 %v1311
      %v1479 = vpop.f32.mrf.mxu0
      %v1480 = vadd.f32 0.0, %v1479
      %v1481 = vpop.f32.mrf.mxu0
      %1482 = vmatprep.mubr.f32.mxu0 0.0
      %1483 = vmatmul.mubr.f32.gmra.mxu0 %v1314
      %v1484 = vpop.f32.mrf.mxu0
      %v1485 = vadd.f32 0.0, %v1484
      %v1486 = vpop.f32.mrf.mxu0
      %1487 = vmatprep.mubr.f32.mxu0 0.0
      %1488 = vmatmul.mubr.f32.gmra.mxu0 %v1317
      %v1489 = vpop.f32.mrf.mxu0
      %v1490 = vadd.f32 0.0, %v1489
      %v1491 = vpop.f32.mrf.mxu0
      %1492 = vmatprep.mubr.f32.mxu0 0.0
      %1493 = vmatmul.mubr.f32.gmra.mxu0 %v1320
      %v1494 = vpop.f32.mrf.mxu0
      %v1495 = vadd.f32 0.0, %v1494
      %v1496 = vpop.f32.mrf.mxu0
      %1497 = vmatprep.mubr.f32.mxu0 0.0
      %1498 = vmatmul.mubr.f32.gmra.mxu0 %v1323
      %v1499 = vpop.f32.mrf.mxu0
      %v1500 = vadd.f32 0.0, %v1499
      %v1501 = vpop.f32.mrf.mxu0
      %1502 = vmatprep.mubr.f32.mxu0 0.0
      %1503 = vmatmul.mubr.f32.gmra.mxu0 %v1326
      %v1504 = vpop.f32.mrf.mxu0
      %v1505 = vadd.f32 0.0, %v1504
      %v1506 = vpop.f32.mrf.mxu0
      %1507 = vmatprep.mubr.f32.mxu0 0.0
      %1508 = vmatmul.mubr.f32.gmra.mxu0 %v1329
      %v1509 = vpop.f32.mrf.mxu0
      %v1510 = vadd.f32 0.0, %v1509
      %v1511 = vpop.f32.mrf.mxu0
      %1512 = vmatprep.mubr.f32.mxu0 0.0
      %1513 = vmatmul.mubr.f32.gmra.mxu0 %v1332
      %v1514 = vpop.f32.mrf.mxu0
      %v1515 = vadd.f32 0.0, %v1514
      %v1516 = vpop.f32.mrf.mxu0
      %1517 = vmatprep.mubr.f32.mxu0 0.0
      %1518 = vmatmul.mubr.f32.gmra.mxu0 %v1335
      %v1519 = vpop.f32.mrf.mxu0
      %v1520 = vadd.f32 0.0, %v1519
      %v1521 = vpop.f32.mrf.mxu0
      %1522 = vmatprep.mubr.f32.mxu0 0.0
      %1523 = vmatmul.mubr.f32.gmra.mxu0 %v1338
      %v1524 = vpop.f32.mrf.mxu0
      %v1525 = vadd.f32 0.0, %v1524
      %v1526 = vpop.f32.mrf.mxu0
      %1527 = vmatprep.mubr.f32.mxu0 0.0
      %1528 = vmatmul.mubr.f32.gmra.mxu0 %v1341
      %v1529 = vpop.f32.mrf.mxu0
      %v1530 = vadd.f32 0.0, %v1529
      %v1531 = vpop.f32.mrf.mxu0
      %1532 = vmatprep.mubr.f32.mxu0 0.0
      %1533 = vmatmul.mubr.f32.gmra.mxu0 %v1344
      %v1534 = vpop.f32.mrf.mxu0
      %v1535 = vadd.f32 0.0, %v1534
      %v1536 = vpop.f32.mrf.mxu0
      %1537 = vmatprep.mubr.f32.mxu0 0.0
      %1538 = vmatmul.mubr.f32.gmra.mxu0 %v1347
      %v1539 = vpop.f32.mrf.mxu0
      %v1540 = vadd.f32 0.0, %v1539
      %v1541 = vpop.f32.mrf.mxu0
      %1542 = vmatprep.mubr.f32.mxu0 0.0
      %1543 = vmatmul.mubr.f32.gmra.mxu0 %v1350
      %v1544 = vpop.f32.mrf.mxu0
      %v1545 = vadd.f32 0.0, %v1544
      %v1546 = vpop.f32.mrf.mxu0
      %1547 = vmatprep.mubr.f32.mxu0 0.0
      %1548 = vmatmul.mubr.f32.gmra.mxu0 %v1353
      %v1549 = vpop.f32.mrf.mxu0
      %v1550 = vadd.f32 0.0, %v1549
      %v1551 = vpop.f32.mrf.mxu0
      %1552 = vmatprep.mubr.f32.mxu0 0.0
      %1553 = vmatmul.mubr.f32.gmra.mxu0 %v1356
      %v1554 = vpop.f32.mrf.mxu0
      %v1555 = vadd.f32 0.0, %v1554
      %v1556 = vpop.f32.mrf.mxu0
      %1557 = vmatprep.mubr.f32.mxu0 0.0
      %1558 = vmatmul.mubr.f32.gmra.mxu0 %v1359
      %v1559 = vpop.f32.mrf.mxu0
      %v1560 = vadd.f32 0.0, %v1559
      %v1561 = vpop.f32.mrf.mxu0
      %1562 = vmatprep.mubr.f32.mxu0 0.0
      %1563 = vmatmul.mubr.f32.gmra.mxu0 %v1362
      %v1564 = vpop.f32.mrf.mxu0
      %v1565 = vadd.f32 0.0, %v1564
      %v1566 = vpop.f32.mrf.mxu0
      %1567 = vmatprep.mubr.f32.mxu0 0.0
      %1568 = vmatmul.mubr.f32.gmra.mxu0 %v1365
      %v1569 = vpop.f32.mrf.mxu0
      %v1570 = vadd.f32 0.0, %v1569
      %v1571 = vpop.f32.mrf.mxu0
      %1572 = vmatprep.mubr.f32.mxu0 0.0
      %1573 = vmatmul.mubr.f32.gmra.mxu0 %v1368
      %v1574 = vpop.f32.mrf.mxu0
      %v1575 = vadd.f32 0.0, %v1574
      %v1576 = vpop.f32.mrf.mxu0
      %1577 = vmatprep.mubr.f32.mxu0 0.0
      %1578 = vmatmul.mubr.f32.gmra.mxu0 %v1371
      %v1579 = vpop.f32.mrf.mxu0
      %v1580 = vadd.f32 0.0, %v1579
      %v1581 = vpop.f32.mrf.mxu0
      %1582 = vmatprep.mubr.f32.mxu0 0.0
      %1583 = vmatmul.mubr.f32.gmra.mxu0 %v1374
      %v1584 = vpop.f32.mrf.mxu0
      %v1585 = vadd.f32 0.0, %v1584
      %v1586 = vpop.f32.mrf.mxu0
      %1587 = vmatprep.mubr.f32.mxu0 0.0
      %1588 = vmatmul.mubr.f32.gmra.mxu0 %v1377
      %v1589 = vpop.f32.mrf.mxu0
      %v1590 = vadd.f32 0.0, %v1589
      %v1591 = vpop.f32.mrf.mxu0
      %1592 = vmatprep.mubr.f32.mxu0 0.0
      %1593 = vmatmul.mubr.f32.gmra.mxu0 %v1380
      %v1594 = vpop.f32.mrf.mxu0
      %v1595 = vadd.f32 0.0, %v1594
      %v1596 = vpop.f32.mrf.mxu0
      %1597 = vmatprep.mubr.f32.mxu0 0.0
      %1598 = vmatmul.mubr.f32.gmra.mxu0 %v1383
      %v1599 = vpop.f32.mrf.mxu0
      %v1600 = vadd.f32 0.0, %v1599
      %v1601 = vpop.f32.mrf.mxu0
      %1602 = vmatprep.mubr.f32.mxu0 0.0
      %1603 = vmatmul.mubr.f32.gmra.mxu0 %v1386
      %v1604 = vpop.f32.mrf.mxu0
      %v1605 = vadd.f32 0.0, %v1604
      %v1606 = vpop.f32.mrf.mxu0
      %1607 = vmatprep.mubr.f32.mxu0 0.0
      %1608 = vmatmul.mubr.f32.gmra.mxu0 %v1389
      %v1609 = vpop.f32.mrf.mxu0
      %v1610 = vadd.f32 0.0, %v1609
      %v1611 = vpop.f32.mrf.mxu0
      %1612 = vmatprep.mubr.f32.mxu0 0.0
      %1613 = vmatmul.mubr.f32.gmra.mxu0 %v1392
      %v1614 = vpop.f32.mrf.mxu0
      %v1615 = vadd.f32 0.0, %v1614
      %v1616 = vpop.f32.mrf.mxu0
      %1617 = vmatprep.mubr.f32.mxu0 0.0
      %1618 = vmatmul.mubr.f32.gmra.mxu0 %v1395
      %v1619 = vpop.f32.mrf.mxu0
      %v1620 = vadd.f32 0.0, %v1619
      %v1621 = vpop.f32.mrf.mxu0
      %1622 = vmatprep.mubr.f32.mxu0 0.0
      %1623 = vmatmul.mubr.f32.gmra.mxu0 %v1398
      %v1624 = vpop.f32.mrf.mxu0
      %v1625 = vadd.f32 0.0, %v1624
      %v1626 = vpop.f32.mrf.mxu0
      %1627 = vdwg.mxu0
      %v1628 = vadd.f32 %v1145, %v1470
      %v1629 = vadd.f32 %v1150, %v1475
      %v1630 = vadd.f32 %v1155, %v1480
      %v1631 = vadd.f32 %v1160, %v1485
      %v1632 = vadd.f32 %v1165, %v1490
      %v1633 = vadd.f32 %v1170, %v1495
      %v1634 = vadd.f32 %v1175, %v1500
      %v1635 = vadd.f32 %v1180, %v1505
      %v1636 = vadd.f32 %v1185, %v1510
      %v1637 = vadd.f32 %v1190, %v1515
      %v1638 = vadd.f32 %v1195, %v1520
      %v1639 = vadd.f32 %v1200, %v1525
      %v1640 = vadd.f32 %v1205, %v1530
      %v1641 = vadd.f32 %v1210, %v1535
      %v1642 = vadd.f32 %v1215, %v1540
      %v1643 = vadd.f32 %v1220, %v1545
      %v1644 = vadd.f32 %v1225, %v1550
      %v1645 = vadd.f32 %v1230, %v1555
      %v1646 = vadd.f32 %v1235, %v1560
      %v1647 = vadd.f32 %v1240, %v1565
      %v1648 = vadd.f32 %v1245, %v1570
      %v1649 = vadd.f32 %v1250, %v1575
      %v1650 = vadd.f32 %v1255, %v1580
      %v1651 = vadd.f32 %v1260, %v1585
      %v1652 = vadd.f32 %v1265, %v1590
      %v1653 = vadd.f32 %v1270, %v1595
      %v1654 = vadd.f32 %v1275, %v1600
      %v1655 = vadd.f32 %v1280, %v1605
      %v1656 = vadd.f32 %v1285, %v1610
      %v1657 = vadd.f32 %v1290, %v1615
      %v1658 = vadd.f32 %v1295, %v1620
      %v1659 = vadd.f32 %v1300, %v1625
      %v1660 = vld [vmem:[%s1 + $0xc] sm:$0xf]
      %v1662 = vsel %vm274, %v459, 0
      %v1665 = vsel %vm274, %v460, 0
      %v1668 = vsel %vm274, %v461, 0
      %v1671 = vsel %vm274, %v462, 0
      %v1674 = vsel %vm274, %v463, 0
      %v1677 = vsel %vm274, %v464, 0
      %v1680 = vsel %vm274, %v465, 0
      %v1683 = vsel %vm274, %v466, 0
      %v1686 = vsel %vm274, %v467, 0
      %v1689 = vsel %vm274, %v468, 0
      %v1692 = vsel %vm274, %v469, 0
      %v1695 = vsel %vm274, %v470, 0
      %v1698 = vsel %vm274, %v471, 0
      %v1701 = vsel %vm274, %v472, 0
      %v1704 = vsel %vm274, %v473, 0
      %v1707 = vsel %vm274, %v474, 0
      %v1710 = vsel %vm274, %v475, 0
      %v1713 = vsel %vm274, %v476, 0
      %v1716 = vsel %vm274, %v477, 0
      %v1719 = vsel %vm274, %v478, 0
      %v1722 = vsel %vm274, %v479, 0
      %v1725 = vsel %vm274, %v480, 0
      %v1728 = vsel %vm274, %v481, 0
      %v1731 = vsel %vm274, %v482, 0
      %v1734 = vsel %vm274, %v483, 0
      %v1737 = vsel %vm274, %v484, 0
      %v1740 = vsel %vm274, %v485, 0
      %v1743 = vsel %vm274, %v486, 0
      %v1746 = vsel %vm274, %v487, 0
      %v1749 = vsel %vm274, %v488, 0
      %v1752 = vsel %vm274, %v489, 0
      %v1755 = vsel %vm274, %v490, 0
      %v1758 = vsel %vm750, %v1660, 0
      %1760 = vmatprep.subr.mxu0 0.0
      %1761 = vmatpush1.msra.mxu0 0.0
      %1762 = vmatprep.subr.mxu0 0.0
      %1763 = vmatpush1.msra.mxu0 0.0
      %1764 = vmatprep.subr.mxu0 0.0
      %1765 = vmatpush1.msra.mxu0 0.0
      %1766 = vmatprep.subr.mxu0 0.0
      %1767 = vmatpush1.msra.mxu0 0.0
      %1768 = vmatprep.subr.mxu0 0.0
      %1769 = vmatpush1.msra.mxu0 0.0
      %1770 = vmatprep.subr.mxu0 0.0
      %1771 = vmatpush1.msra.mxu0 0.0
      %1772 = vmatprep.subr.mxu0 0.0
      %1773 = vmatpush1.msra.mxu0 0.0
      %1774 = vmatprep.subr.mxu0 0.0
      %1775 = vmatpush1.msra.mxu0 0.0
      %1776 = vmatprep.subr.mxu0 0.0
      %1777 = vmatpush1.msra.mxu0 0.0
      %1778 = vmatprep.subr.mxu0 0.0
      %1779 = vmatpush1.msra.mxu0 0.0
      %1780 = vmatprep.subr.mxu0 0.0
      %1781 = vmatpush1.msra.mxu0 0.0
      %1782 = vmatprep.subr.mxu0 0.0
      %1783 = vmatpush1.msra.mxu0 0.0
      %1784 = vmatprep.subr.mxu0 0.0
      %1785 = vmatpush1.msra.mxu0 0.0
      %1786 = vmatprep.subr.mxu0 0.0
      %1787 = vmatpush1.msra.mxu0 0.0
      %1788 = vmatprep.subr.mxu0 0.0
      %1789 = vmatpush1.msra.mxu0 0.0
      %1790 = vmatprep.subr.mxu0 0.0
      %1791 = vmatpush1.msra.mxu0 %v1758
      %1792 = vmatprep.subr.mxu0 0.0
      %1793 = vmatpush2.msra.mxu0 0.0
      %1794 = vmatprep.subr.mxu0 0.0
      %1795 = vmatpush2.msra.mxu0 0.0
      %1796 = vmatprep.subr.mxu0 0.0
      %1797 = vmatpush2.msra.mxu0 0.0
      %1798 = vmatprep.subr.mxu0 0.0
      %1799 = vmatpush2.msra.mxu0 0.0
      %1800 = vmatprep.subr.mxu0 0.0
      %1801 = vmatpush2.msra.mxu0 0.0
      %1802 = vmatprep.subr.mxu0 0.0
      %1803 = vmatpush2.msra.mxu0 0.0
      %1804 = vmatprep.subr.mxu0 0.0
      %1805 = vmatpush2.msra.mxu0 0.0
      %1806 = vmatprep.subr.mxu0 0.0
      %1807 = vmatpush2.msra.mxu0 0.0
      %1808 = vmatprep.subr.mxu0 0.0
      %1809 = vmatpush2.msra.mxu0 0.0
      %1810 = vmatprep.subr.mxu0 0.0
      %1811 = vmatpush2.msra.mxu0 0.0
      %1812 = vmatprep.subr.mxu0 0.0
      %1813 = vmatpush2.msra.mxu0 0.0
      %1814 = vmatprep.subr.mxu0 0.0
      %1815 = vmatpush2.msra.mxu0 0.0
      %1816 = vmatprep.subr.mxu0 0.0
      %1817 = vmatpush2.msra.mxu0 0.0
      %1818 = vmatprep.subr.mxu0 0.0
      %1819 = vmatpush2.msra.mxu0 0.0
      %1820 = vmatprep.subr.mxu0 0.0
      %1821 = vmatpush2.msra.mxu0 0.0
      %1822 = vmatprep.subr.mxu0 0.0
      %1823 = vmatpush2.msra.mxu0 0.0
      %1824 = vmatprep.mubr.f32.mxu0 0.0
      %1825 = vmatmul.mubr.f32.gmra.mxu0 %v1662
      %v1826 = vpop.f32.mrf.mxu0
      %v1827 = vadd.f32 0.0, %v1826
      %v1828 = vpop.f32.mrf.mxu0
      %1829 = vmatprep.mubr.f32.mxu0 0.0
      %1830 = vmatmul.mubr.f32.gmra.mxu0 %v1665
      %v1831 = vpop.f32.mrf.mxu0
      %v1832 = vadd.f32 0.0, %v1831
      %v1833 = vpop.f32.mrf.mxu0
      %1834 = vmatprep.mubr.f32.mxu0 0.0
      %1835 = vmatmul.mubr.f32.gmra.mxu0 %v1668
      %v1836 = vpop.f32.mrf.mxu0
      %v1837 = vadd.f32 0.0, %v1836
      %v1838 = vpop.f32.mrf.mxu0
      %1839 = vmatprep.mubr.f32.mxu0 0.0
      %1840 = vmatmul.mubr.f32.gmra.mxu0 %v1671
      %v1841 = vpop.f32.mrf.mxu0
      %v1842 = vadd.f32 0.0, %v1841
      %v1843 = vpop.f32.mrf.mxu0
      %1844 = vmatprep.mubr.f32.mxu0 0.0
      %1845 = vmatmul.mubr.f32.gmra.mxu0 %v1674
      %v1846 = vpop.f32.mrf.mxu0
      %v1847 = vadd.f32 0.0, %v1846
      %v1848 = vpop.f32.mrf.mxu0
      %1849 = vmatprep.mubr.f32.mxu0 0.0
      %1850 = vmatmul.mubr.f32.gmra.mxu0 %v1677
      %v1851 = vpop.f32.mrf.mxu0
      %v1852 = vadd.f32 0.0, %v1851
      %v1853 = vpop.f32.mrf.mxu0
      %1854 = vmatprep.mubr.f32.mxu0 0.0
      %1855 = vmatmul.mubr.f32.gmra.mxu0 %v1680
      %v1856 = vpop.f32.mrf.mxu0
      %v1857 = vadd.f32 0.0, %v1856
      %v1858 = vpop.f32.mrf.mxu0
      %1859 = vmatprep.mubr.f32.mxu0 0.0
      %1860 = vmatmul.mubr.f32.gmra.mxu0 %v1683
      %v1861 = vpop.f32.mrf.mxu0
      %v1862 = vadd.f32 0.0, %v1861
      %v1863 = vpop.f32.mrf.mxu0
      %1864 = vmatprep.mubr.f32.mxu0 0.0
      %1865 = vmatmul.mubr.f32.gmra.mxu0 %v1686
      %v1866 = vpop.f32.mrf.mxu0
      %v1867 = vadd.f32 0.0, %v1866
      %v1868 = vpop.f32.mrf.mxu0
      %1869 = vmatprep.mubr.f32.mxu0 0.0
      %1870 = vmatmul.mubr.f32.gmra.mxu0 %v1689
      %v1871 = vpop.f32.mrf.mxu0
      %v1872 = vadd.f32 0.0, %v1871
      %v1873 = vpop.f32.mrf.mxu0
      %1874 = vmatprep.mubr.f32.mxu0 0.0
      %1875 = vmatmul.mubr.f32.gmra.mxu0 %v1692
      %v1876 = vpop.f32.mrf.mxu0
      %v1877 = vadd.f32 0.0, %v1876
      %v1878 = vpop.f32.mrf.mxu0
      %1879 = vmatprep.mubr.f32.mxu0 0.0
      %1880 = vmatmul.mubr.f32.gmra.mxu0 %v1695
      %v1881 = vpop.f32.mrf.mxu0
      %v1882 = vadd.f32 0.0, %v1881
      %v1883 = vpop.f32.mrf.mxu0
      %1884 = vmatprep.mubr.f32.mxu0 0.0
      %1885 = vmatmul.mubr.f32.gmra.mxu0 %v1698
      %v1886 = vpop.f32.mrf.mxu0
      %v1887 = vadd.f32 0.0, %v1886
      %v1888 = vpop.f32.mrf.mxu0
      %1889 = vmatprep.mubr.f32.mxu0 0.0
      %1890 = vmatmul.mubr.f32.gmra.mxu0 %v1701
      %v1891 = vpop.f32.mrf.mxu0
      %v1892 = vadd.f32 0.0, %v1891
      %v1893 = vpop.f32.mrf.mxu0
      %1894 = vmatprep.mubr.f32.mxu0 0.0
      %1895 = vmatmul.mubr.f32.gmra.mxu0 %v1704
      %v1896 = vpop.f32.mrf.mxu0
      %v1897 = vadd.f32 0.0, %v1896
      %v1898 = vpop.f32.mrf.mxu0
      %1899 = vmatprep.mubr.f32.mxu0 0.0
      %1900 = vmatmul.mubr.f32.gmra.mxu0 %v1707
      %v1901 = vpop.f32.mrf.mxu0
      %v1902 = vadd.f32 0.0, %v1901
      %v1903 = vpop.f32.mrf.mxu0
      %1904 = vmatprep.mubr.f32.mxu0 0.0
      %1905 = vmatmul.mubr.f32.gmra.mxu0 %v1710
      %v1906 = vpop.f32.mrf.mxu0
      %v1907 = vadd.f32 0.0, %v1906
      %v1908 = vpop.f32.mrf.mxu0
      %1909 = vmatprep.mubr.f32.mxu0 0.0
      %1910 = vmatmul.mubr.f32.gmra.mxu0 %v1713
      %v1911 = vpop.f32.mrf.mxu0
      %v1912 = vadd.f32 0.0, %v1911
      %v1913 = vpop.f32.mrf.mxu0
      %1914 = vmatprep.mubr.f32.mxu0 0.0
      %1915 = vmatmul.mubr.f32.gmra.mxu0 %v1716
      %v1916 = vpop.f32.mrf.mxu0
      %v1917 = vadd.f32 0.0, %v1916
      %v1918 = vpop.f32.mrf.mxu0
      %1919 = vmatprep.mubr.f32.mxu0 0.0
      %1920 = vmatmul.mubr.f32.gmra.mxu0 %v1719
      %v1921 = vpop.f32.mrf.mxu0
      %v1922 = vadd.f32 0.0, %v1921
      %v1923 = vpop.f32.mrf.mxu0
      %1924 = vmatprep.mubr.f32.mxu0 0.0
      %1925 = vmatmul.mubr.f32.gmra.mxu0 %v1722
      %v1926 = vpop.f32.mrf.mxu0
      %v1927 = vadd.f32 0.0, %v1926
      %v1928 = vpop.f32.mrf.mxu0
      %1929 = vmatprep.mubr.f32.mxu0 0.0
      %1930 = vmatmul.mubr.f32.gmra.mxu0 %v1725
      %v1931 = vpop.f32.mrf.mxu0
      %v1932 = vadd.f32 0.0, %v1931
      %v1933 = vpop.f32.mrf.mxu0
      %1934 = vmatprep.mubr.f32.mxu0 0.0
      %1935 = vmatmul.mubr.f32.gmra.mxu0 %v1728
      %v1936 = vpop.f32.mrf.mxu0
      %v1937 = vadd.f32 0.0, %v1936
      %v1938 = vpop.f32.mrf.mxu0
      %1939 = vmatprep.mubr.f32.mxu0 0.0
      %1940 = vmatmul.mubr.f32.gmra.mxu0 %v1731
      %v1941 = vpop.f32.mrf.mxu0
      %v1942 = vadd.f32 0.0, %v1941
      %v1943 = vpop.f32.mrf.mxu0
      %1944 = vmatprep.mubr.f32.mxu0 0.0
      %1945 = vmatmul.mubr.f32.gmra.mxu0 %v1734
      %v1946 = vpop.f32.mrf.mxu0
      %v1947 = vadd.f32 0.0, %v1946
      %v1948 = vpop.f32.mrf.mxu0
      %1949 = vmatprep.mubr.f32.mxu0 0.0
      %1950 = vmatmul.mubr.f32.gmra.mxu0 %v1737
      %v1951 = vpop.f32.mrf.mxu0
      %v1952 = vadd.f32 0.0, %v1951
      %v1953 = vpop.f32.mrf.mxu0
      %1954 = vmatprep.mubr.f32.mxu0 0.0
      %1955 = vmatmul.mubr.f32.gmra.mxu0 %v1740
      %v1956 = vpop.f32.mrf.mxu0
      %v1957 = vadd.f32 0.0, %v1956
      %v1958 = vpop.f32.mrf.mxu0
      %1959 = vmatprep.mubr.f32.mxu0 0.0
      %1960 = vmatmul.mubr.f32.gmra.mxu0 %v1743
      %v1961 = vpop.f32.mrf.mxu0
      %v1962 = vadd.f32 0.0, %v1961
      %v1963 = vpop.f32.mrf.mxu0
      %1964 = vmatprep.mubr.f32.mxu0 0.0
      %1965 = vmatmul.mubr.f32.gmra.mxu0 %v1746
      %v1966 = vpop.f32.mrf.mxu0
      %v1967 = vadd.f32 0.0, %v1966
      %v1968 = vpop.f32.mrf.mxu0
      %1969 = vmatprep.mubr.f32.mxu0 0.0
      %1970 = vmatmul.mubr.f32.gmra.mxu0 %v1749
      %v1971 = vpop.f32.mrf.mxu0
      %v1972 = vadd.f32 0.0, %v1971
      %v1973 = vpop.f32.mrf.mxu0
      %1974 = vmatprep.mubr.f32.mxu0 0.0
      %1975 = vmatmul.mubr.f32.gmra.mxu0 %v1752
      %v1976 = vpop.f32.mrf.mxu0
      %v1977 = vadd.f32 0.0, %v1976
      %v1978 = vpop.f32.mrf.mxu0
      %1979 = vmatprep.mubr.f32.mxu0 0.0
      %1980 = vmatmul.mubr.f32.gmra.mxu0 %v1755
      %v1981 = vpop.f32.mrf.mxu0
      %v1982 = vadd.f32 0.0, %v1981
      %v1983 = vpop.f32.mrf.mxu0
      %1984 = vdwg.mxu0
      %v1985 = vadd.f32 %v1628, %v1827
      %v1986 = vadd.f32 %v1629, %v1832
      %v1987 = vadd.f32 %v1630, %v1837
      %v1988 = vadd.f32 %v1631, %v1842
      %v1989 = vadd.f32 %v1632, %v1847
      %v1990 = vadd.f32 %v1633, %v1852
      %v1991 = vadd.f32 %v1634, %v1857
      %v1992 = vadd.f32 %v1635, %v1862
      %v1993 = vadd.f32 %v1636, %v1867
      %v1994 = vadd.f32 %v1637, %v1872
      %v1995 = vadd.f32 %v1638, %v1877
      %v1996 = vadd.f32 %v1639, %v1882
      %v1997 = vadd.f32 %v1640, %v1887
      %v1998 = vadd.f32 %v1641, %v1892
      %v1999 = vadd.f32 %v1642, %v1897
      %v2000 = vadd.f32 %v1643, %v1902
      %v2001 = vadd.f32 %v1644, %v1907
      %v2002 = vadd.f32 %v1645, %v1912
      %v2003 = vadd.f32 %v1646, %v1917
      %v2004 = vadd.f32 %v1647, %v1922
      %v2005 = vadd.f32 %v1648, %v1927
      %v2006 = vadd.f32 %v1649, %v1932
      %v2007 = vadd.f32 %v1650, %v1937
      %v2008 = vadd.f32 %v1651, %v1942
      %v2009 = vadd.f32 %v1652, %v1947
      %v2010 = vadd.f32 %v1653, %v1952
      %v2011 = vadd.f32 %v1654, %v1957
      %v2012 = vadd.f32 %v1655, %v1962
      %v2013 = vadd.f32 %v1656, %v1967
      %v2014 = vadd.f32 %v1657, %v1972
      %v2015 = vadd.f32 %v1658, %v1977
      %v2016 = vadd.f32 %v1659, %v1982
      %v2017 = vld [vmem:[%s1 + $0x10] sm:$0xf]
      %v2019 = vsel %vm274, %v491, 0
      %v2022 = vsel %vm274, %v492, 0
      %v2025 = vsel %vm274, %v493, 0
      %v2028 = vsel %vm274, %v494, 0
      %v2031 = vsel %vm274, %v495, 0
      %v2034 = vsel %vm274, %v496, 0
      %v2037 = vsel %vm274, %v497, 0
      %v2040 = vsel %vm274, %v498, 0
      %v2043 = vsel %vm274, %v499, 0
      %v2046 = vsel %vm274, %v500, 0
      %v2049 = vsel %vm274, %v501, 0
      %v2052 = vsel %vm274, %v502, 0
      %v2055 = vsel %vm274, %v503, 0
      %v2058 = vsel %vm274, %v504, 0
      %v2061 = vsel %vm274, %v505, 0
      %v2064 = vsel %vm274, %v506, 0
      %v2067 = vsel %vm274, %v507, 0
      %v2070 = vsel %vm274, %v508, 0
      %v2073 = vsel %vm274, %v509, 0
      %v2076 = vsel %vm274, %v510, 0
      %v2079 = vsel %vm274, %v511, 0
      %v2082 = vsel %vm274, %v512, 0
      %v2085 = vsel %vm274, %v513, 0
      %v2088 = vsel %vm274, %v514, 0
      %v2091 = vsel %vm274, %v515, 0
      %v2094 = vsel %vm274, %v516, 0
      %v2097 = vsel %vm274, %v517, 0
      %v2100 = vsel %vm274, %v518, 0
      %v2103 = vsel %vm274, %v519, 0
      %v2106 = vsel %vm274, %v520, 0
      %v2109 = vsel %vm274, %v521, 0
      %v2112 = vsel %vm274, %v522, 0
      %v2115 = vsel %vm750, %v2017, 0
      %2117 = vmatprep.subr.mxu0 0.0
      %2118 = vmatpush1.msra.mxu0 0.0
      %2119 = vmatprep.subr.mxu0 0.0
      %2120 = vmatpush1.msra.mxu0 0.0
      %2121 = vmatprep.subr.mxu0 0.0
      %2122 = vmatpush1.msra.mxu0 0.0
      %2123 = vmatprep.subr.mxu0 0.0
      %2124 = vmatpush1.msra.mxu0 0.0
      %2125 = vmatprep.subr.mxu0 0.0
      %2126 = vmatpush1.msra.mxu0 0.0
      %2127 = vmatprep.subr.mxu0 0.0
      %2128 = vmatpush1.msra.mxu0 0.0
      %2129 = vmatprep.subr.mxu0 0.0
      %2130 = vmatpush1.msra.mxu0 0.0
      %2131 = vmatprep.subr.mxu0 0.0
      %2132 = vmatpush1.msra.mxu0 0.0
      %2133 = vmatprep.subr.mxu0 0.0
      %2134 = vmatpush1.msra.mxu0 0.0
      %2135 = vmatprep.subr.mxu0 0.0
      %2136 = vmatpush1.msra.mxu0 0.0
      %2137 = vmatprep.subr.mxu0 0.0
      %2138 = vmatpush1.msra.mxu0 0.0
      %2139 = vmatprep.subr.mxu0 0.0
      %2140 = vmatpush1.msra.mxu0 0.0
      %2141 = vmatprep.subr.mxu0 0.0
      %2142 = vmatpush1.msra.mxu0 0.0
      %2143 = vmatprep.subr.mxu0 0.0
      %2144 = vmatpush1.msra.mxu0 0.0
      %2145 = vmatprep.subr.mxu0 0.0
      %2146 = vmatpush1.msra.mxu0 0.0
      %2147 = vmatprep.subr.mxu0 0.0
      %2148 = vmatpush1.msra.mxu0 %v2115
      %2149 = vmatprep.subr.mxu0 0.0
      %2150 = vmatpush2.msra.mxu0 0.0
      %2151 = vmatprep.subr.mxu0 0.0
      %2152 = vmatpush2.msra.mxu0 0.0
      %2153 = vmatprep.subr.mxu0 0.0
      %2154 = vmatpush2.msra.mxu0 0.0
      %2155 = vmatprep.subr.mxu0 0.0
      %2156 = vmatpush2.msra.mxu0 0.0
      %2157 = vmatprep.subr.mxu0 0.0
      %2158 = vmatpush2.msra.mxu0 0.0
      %2159 = vmatprep.subr.mxu0 0.0
      %2160 = vmatpush2.msra.mxu0 0.0
      %2161 = vmatprep.subr.mxu0 0.0
      %2162 = vmatpush2.msra.mxu0 0.0
      %2163 = vmatprep.subr.mxu0 0.0
      %2164 = vmatpush2.msra.mxu0 0.0
      %2165 = vmatprep.subr.mxu0 0.0
      %2166 = vmatpush2.msra.mxu0 0.0
      %2167 = vmatprep.subr.mxu0 0.0
      %2168 = vmatpush2.msra.mxu0 0.0
      %2169 = vmatprep.subr.mxu0 0.0
      %2170 = vmatpush2.msra.mxu0 0.0
      %2171 = vmatprep.subr.mxu0 0.0
      %2172 = vmatpush2.msra.mxu0 0.0
      %2173 = vmatprep.subr.mxu0 0.0
      %2174 = vmatpush2.msra.mxu0 0.0
      %2175 = vmatprep.subr.mxu0 0.0
      %2176 = vmatpush2.msra.mxu0 0.0
      %2177 = vmatprep.subr.mxu0 0.0
      %2178 = vmatpush2.msra.mxu0 0.0
      %2179 = vmatprep.subr.mxu0 0.0
      %2180 = vmatpush2.msra.mxu0 0.0
      %2181 = vmatprep.mubr.f32.mxu0 0.0
      %2182 = vmatmul.mubr.f32.gmra.mxu0 %v2019
      %v2183 = vpop.f32.mrf.mxu0
      %v2184 = vadd.f32 0.0, %v2183
      %v2185 = vpop.f32.mrf.mxu0
      %2186 = vmatprep.mubr.f32.mxu0 0.0
      %2187 = vmatmul.mubr.f32.gmra.mxu0 %v2022
      %v2188 = vpop.f32.mrf.mxu0
      %v2189 = vadd.f32 0.0, %v2188
      %v2190 = vpop.f32.mrf.mxu0
      %2191 = vmatprep.mubr.f32.mxu0 0.0
      %2192 = vmatmul.mubr.f32.gmra.mxu0 %v2025
      %v2193 = vpop.f32.mrf.mxu0
      %v2194 = vadd.f32 0.0, %v2193
      %v2195 = vpop.f32.mrf.mxu0
      %2196 = vmatprep.mubr.f32.mxu0 0.0
      %2197 = vmatmul.mubr.f32.gmra.mxu0 %v2028
      %v2198 = vpop.f32.mrf.mxu0
      %v2199 = vadd.f32 0.0, %v2198
      %v2200 = vpop.f32.mrf.mxu0
      %2201 = vmatprep.mubr.f32.mxu0 0.0
      %2202 = vmatmul.mubr.f32.gmra.mxu0 %v2031
      %v2203 = vpop.f32.mrf.mxu0
      %v2204 = vadd.f32 0.0, %v2203
      %v2205 = vpop.f32.mrf.mxu0
      %2206 = vmatprep.mubr.f32.mxu0 0.0
      %2207 = vmatmul.mubr.f32.gmra.mxu0 %v2034
      %v2208 = vpop.f32.mrf.mxu0
      %v2209 = vadd.f32 0.0, %v2208
      %v2210 = vpop.f32.mrf.mxu0
      %2211 = vmatprep.mubr.f32.mxu0 0.0
      %2212 = vmatmul.mubr.f32.gmra.mxu0 %v2037
      %v2213 = vpop.f32.mrf.mxu0
      %v2214 = vadd.f32 0.0, %v2213
      %v2215 = vpop.f32.mrf.mxu0
      %2216 = vmatprep.mubr.f32.mxu0 0.0
      %2217 = vmatmul.mubr.f32.gmra.mxu0 %v2040
      %v2218 = vpop.f32.mrf.mxu0
      %v2219 = vadd.f32 0.0, %v2218
      %v2220 = vpop.f32.mrf.mxu0
      %2221 = vmatprep.mubr.f32.mxu0 0.0
      %2222 = vmatmul.mubr.f32.gmra.mxu0 %v2043
      %v2223 = vpop.f32.mrf.mxu0
      %v2224 = vadd.f32 0.0, %v2223
      %v2225 = vpop.f32.mrf.mxu0
      %2226 = vmatprep.mubr.f32.mxu0 0.0
      %2227 = vmatmul.mubr.f32.gmra.mxu0 %v2046
      %v2228 = vpop.f32.mrf.mxu0
      %v2229 = vadd.f32 0.0, %v2228
      %v2230 = vpop.f32.mrf.mxu0
      %2231 = vmatprep.mubr.f32.mxu0 0.0
      %2232 = vmatmul.mubr.f32.gmra.mxu0 %v2049
      %v2233 = vpop.f32.mrf.mxu0
      %v2234 = vadd.f32 0.0, %v2233
      %v2235 = vpop.f32.mrf.mxu0
      %2236 = vmatprep.mubr.f32.mxu0 0.0
      %2237 = vmatmul.mubr.f32.gmra.mxu0 %v2052
      %v2238 = vpop.f32.mrf.mxu0
      %v2239 = vadd.f32 0.0, %v2238
      %v2240 = vpop.f32.mrf.mxu0
      %2241 = vmatprep.mubr.f32.mxu0 0.0
      %2242 = vmatmul.mubr.f32.gmra.mxu0 %v2055
      %v2243 = vpop.f32.mrf.mxu0
      %v2244 = vadd.f32 0.0, %v2243
      %v2245 = vpop.f32.mrf.mxu0
      %2246 = vmatprep.mubr.f32.mxu0 0.0
      %2247 = vmatmul.mubr.f32.gmra.mxu0 %v2058
      %v2248 = vpop.f32.mrf.mxu0
      %v2249 = vadd.f32 0.0, %v2248
      %v2250 = vpop.f32.mrf.mxu0
      %2251 = vmatprep.mubr.f32.mxu0 0.0
      %2252 = vmatmul.mubr.f32.gmra.mxu0 %v2061
      %v2253 = vpop.f32.mrf.mxu0
      %v2254 = vadd.f32 0.0, %v2253
      %v2255 = vpop.f32.mrf.mxu0
      %2256 = vmatprep.mubr.f32.mxu0 0.0
      %2257 = vmatmul.mubr.f32.gmra.mxu0 %v2064
      %v2258 = vpop.f32.mrf.mxu0
      %v2259 = vadd.f32 0.0, %v2258
      %v2260 = vpop.f32.mrf.mxu0
      %2261 = vmatprep.mubr.f32.mxu0 0.0
      %2262 = vmatmul.mubr.f32.gmra.mxu0 %v2067
      %v2263 = vpop.f32.mrf.mxu0
      %v2264 = vadd.f32 0.0, %v2263
      %v2265 = vpop.f32.mrf.mxu0
      %2266 = vmatprep.mubr.f32.mxu0 0.0
      %2267 = vmatmul.mubr.f32.gmra.mxu0 %v2070
      %v2268 = vpop.f32.mrf.mxu0
      %v2269 = vadd.f32 0.0, %v2268
      %v2270 = vpop.f32.mrf.mxu0
      %2271 = vmatprep.mubr.f32.mxu0 0.0
      %2272 = vmatmul.mubr.f32.gmra.mxu0 %v2073
      %v2273 = vpop.f32.mrf.mxu0
      %v2274 = vadd.f32 0.0, %v2273
      %v2275 = vpop.f32.mrf.mxu0
      %2276 = vmatprep.mubr.f32.mxu0 0.0
      %2277 = vmatmul.mubr.f32.gmra.mxu0 %v2076
      %v2278 = vpop.f32.mrf.mxu0
      %v2279 = vadd.f32 0.0, %v2278
      %v2280 = vpop.f32.mrf.mxu0
      %2281 = vmatprep.mubr.f32.mxu0 0.0
      %2282 = vmatmul.mubr.f32.gmra.mxu0 %v2079
      %v2283 = vpop.f32.mrf.mxu0
      %v2284 = vadd.f32 0.0, %v2283
      %v2285 = vpop.f32.mrf.mxu0
      %2286 = vmatprep.mubr.f32.mxu0 0.0
      %2287 = vmatmul.mubr.f32.gmra.mxu0 %v2082
      %v2288 = vpop.f32.mrf.mxu0
      %v2289 = vadd.f32 0.0, %v2288
      %v2290 = vpop.f32.mrf.mxu0
      %2291 = vmatprep.mubr.f32.mxu0 0.0
      %2292 = vmatmul.mubr.f32.gmra.mxu0 %v2085
      %v2293 = vpop.f32.mrf.mxu0
      %v2294 = vadd.f32 0.0, %v2293
      %v2295 = vpop.f32.mrf.mxu0
      %2296 = vmatprep.mubr.f32.mxu0 0.0
      %2297 = vmatmul.mubr.f32.gmra.mxu0 %v2088
      %v2298 = vpop.f32.mrf.mxu0
      %v2299 = vadd.f32 0.0, %v2298
      %v2300 = vpop.f32.mrf.mxu0
      %2301 = vmatprep.mubr.f32.mxu0 0.0
      %2302 = vmatmul.mubr.f32.gmra.mxu0 %v2091
      %v2303 = vpop.f32.mrf.mxu0
      %v2304 = vadd.f32 0.0, %v2303
      %v2305 = vpop.f32.mrf.mxu0
      %2306 = vmatprep.mubr.f32.mxu0 0.0
      %2307 = vmatmul.mubr.f32.gmra.mxu0 %v2094
      %v2308 = vpop.f32.mrf.mxu0
      %v2309 = vadd.f32 0.0, %v2308
      %v2310 = vpop.f32.mrf.mxu0
      %2311 = vmatprep.mubr.f32.mxu0 0.0
      %2312 = vmatmul.mubr.f32.gmra.mxu0 %v2097
      %v2313 = vpop.f32.mrf.mxu0
      %v2314 = vadd.f32 0.0, %v2313
      %v2315 = vpop.f32.mrf.mxu0
      %2316 = vmatprep.mubr.f32.mxu0 0.0
      %2317 = vmatmul.mubr.f32.gmra.mxu0 %v2100
      %v2318 = vpop.f32.mrf.mxu0
      %v2319 = vadd.f32 0.0, %v2318
      %v2320 = vpop.f32.mrf.mxu0
      %2321 = vmatprep.mubr.f32.mxu0 0.0
      %2322 = vmatmul.mubr.f32.gmra.mxu0 %v2103
      %v2323 = vpop.f32.mrf.mxu0
      %v2324 = vadd.f32 0.0, %v2323
      %v2325 = vpop.f32.mrf.mxu0
      %2326 = vmatprep.mubr.f32.mxu0 0.0
      %2327 = vmatmul.mubr.f32.gmra.mxu0 %v2106
      %v2328 = vpop.f32.mrf.mxu0
      %v2329 = vadd.f32 0.0, %v2328
      %v2330 = vpop.f32.mrf.mxu0
      %2331 = vmatprep.mubr.f32.mxu0 0.0
      %2332 = vmatmul.mubr.f32.gmra.mxu0 %v2109
      %v2333 = vpop.f32.mrf.mxu0
      %v2334 = vadd.f32 0.0, %v2333
      %v2335 = vpop.f32.mrf.mxu0
      %2336 = vmatprep.mubr.f32.mxu0 0.0
      %2337 = vmatmul.mubr.f32.gmra.mxu0 %v2112
      %v2338 = vpop.f32.mrf.mxu0
      %v2339 = vadd.f32 0.0, %v2338
      %v2340 = vpop.f32.mrf.mxu0
      %2341 = vdwg.mxu0
      %v2342 = vadd.f32 %v1985, %v2184
      %v2343 = vadd.f32 %v1986, %v2189
      %v2344 = vadd.f32 %v1987, %v2194
      %v2345 = vadd.f32 %v1988, %v2199
      %v2346 = vadd.f32 %v1989, %v2204
      %v2347 = vadd.f32 %v1990, %v2209
      %v2348 = vadd.f32 %v1991, %v2214
      %v2349 = vadd.f32 %v1992, %v2219
      %v2350 = vadd.f32 %v1993, %v2224
      %v2351 = vadd.f32 %v1994, %v2229
      %v2352 = vadd.f32 %v1995, %v2234
      %v2353 = vadd.f32 %v1996, %v2239
      %v2354 = vadd.f32 %v1997, %v2244
      %v2355 = vadd.f32 %v1998, %v2249
      %v2356 = vadd.f32 %v1999, %v2254
      %v2357 = vadd.f32 %v2000, %v2259
      %v2358 = vadd.f32 %v2001, %v2264
      %v2359 = vadd.f32 %v2002, %v2269
      %v2360 = vadd.f32 %v2003, %v2274
      %v2361 = vadd.f32 %v2004, %v2279
      %v2362 = vadd.f32 %v2005, %v2284
      %v2363 = vadd.f32 %v2006, %v2289
      %v2364 = vadd.f32 %v2007, %v2294
      %v2365 = vadd.f32 %v2008, %v2299
      %v2366 = vadd.f32 %v2009, %v2304
      %v2367 = vadd.f32 %v2010, %v2309
      %v2368 = vadd.f32 %v2011, %v2314
      %v2369 = vadd.f32 %v2012, %v2319
      %v2370 = vadd.f32 %v2013, %v2324
      %v2371 = vadd.f32 %v2014, %v2329
      %v2372 = vadd.f32 %v2015, %v2334
      %v2373 = vadd.f32 %v2016, %v2339
      %v2374 = vld [vmem:[%s1 + $0x14] sm:$0xf]
      %v2376 = vsel %vm274, %v523, 0
      %v2379 = vsel %vm274, %v524, 0
      %v2382 = vsel %vm274, %v525, 0
      %v2385 = vsel %vm274, %v526, 0
      %v2388 = vsel %vm274, %v527, 0
      %v2391 = vsel %vm274, %v528, 0
      %v2394 = vsel %vm274, %v529, 0
      %v2397 = vsel %vm274, %v530, 0
      %v2400 = vsel %vm274, %v531, 0
      %v2403 = vsel %vm274, %v532, 0
      %v2406 = vsel %vm274, %v533, 0
      %v2409 = vsel %vm274, %v534, 0
      %v2412 = vsel %vm274, %v535, 0
      %v2415 = vsel %vm274, %v536, 0
      %v2418 = vsel %vm274, %v537, 0
      %v2421 = vsel %vm274, %v538, 0
      %v2424 = vsel %vm274, %v539, 0
      %v2427 = vsel %vm274, %v540, 0
      %v2430 = vsel %vm274, %v541, 0
      %v2433 = vsel %vm274, %v542, 0
      %v2436 = vsel %vm274, %v543, 0
      %v2439 = vsel %vm274, %v544, 0
      %v2442 = vsel %vm274, %v545, 0
      %v2445 = vsel %vm274, %v546, 0
      %v2448 = vsel %vm274, %v547, 0
      %v2451 = vsel %vm274, %v548, 0
      %v2454 = vsel %vm274, %v549, 0
      %v2457 = vsel %vm274, %v550, 0
      %v2460 = vsel %vm274, %v551, 0
      %v2463 = vsel %vm274, %v552, 0
      %v2466 = vsel %vm274, %v553, 0
      %v2469 = vsel %vm274, %v554, 0
      %v2472 = vsel %vm750, %v2374, 0
      %2474 = vmatprep.subr.mxu0 0.0
      %2475 = vmatpush1.msra.mxu0 0.0
      %2476 = vmatprep.subr.mxu0 0.0
      %2477 = vmatpush1.msra.mxu0 0.0
      %2478 = vmatprep.subr.mxu0 0.0
      %2479 = vmatpush1.msra.mxu0 0.0
      %2480 = vmatprep.subr.mxu0 0.0
      %2481 = vmatpush1.msra.mxu0 0.0
      %2482 = vmatprep.subr.mxu0 0.0
      %2483 = vmatpush1.msra.mxu0 0.0
      %2484 = vmatprep.subr.mxu0 0.0
      %2485 = vmatpush1.msra.mxu0 0.0
      %2486 = vmatprep.subr.mxu0 0.0
      %2487 = vmatpush1.msra.mxu0 0.0
      %2488 = vmatprep.subr.mxu0 0.0
      %2489 = vmatpush1.msra.mxu0 0.0
      %2490 = vmatprep.subr.mxu0 0.0
      %2491 = vmatpush1.msra.mxu0 0.0
      %2492 = vmatprep.subr.mxu0 0.0
      %2493 = vmatpush1.msra.mxu0 0.0
      %2494 = vmatprep.subr.mxu0 0.0
      %2495 = vmatpush1.msra.mxu0 0.0
      %2496 = vmatprep.subr.mxu0 0.0
      %2497 = vmatpush1.msra.mxu0 0.0
      %2498 = vmatprep.subr.mxu0 0.0
      %2499 = vmatpush1.msra.mxu0 0.0
      %2500 = vmatprep.subr.mxu0 0.0
      %2501 = vmatpush1.msra.mxu0 0.0
      %2502 = vmatprep.subr.mxu0 0.0
      %2503 = vmatpush1.msra.mxu0 0.0
      %2504 = vmatprep.subr.mxu0 0.0
      %2505 = vmatpush1.msra.mxu0 %v2472
      %2506 = vmatprep.subr.mxu0 0.0
      %2507 = vmatpush2.msra.mxu0 0.0
      %2508 = vmatprep.subr.mxu0 0.0
      %2509 = vmatpush2.msra.mxu0 0.0
      %2510 = vmatprep.subr.mxu0 0.0
      %2511 = vmatpush2.msra.mxu0 0.0
      %2512 = vmatprep.subr.mxu0 0.0
      %2513 = vmatpush2.msra.mxu0 0.0
      %2514 = vmatprep.subr.mxu0 0.0
      %2515 = vmatpush2.msra.mxu0 0.0
      %2516 = vmatprep.subr.mxu0 0.0
      %2517 = vmatpush2.msra.mxu0 0.0
      %2518 = vmatprep.subr.mxu0 0.0
      %2519 = vmatpush2.msra.mxu0 0.0
      %2520 = vmatprep.subr.mxu0 0.0
      %2521 = vmatpush2.msra.mxu0 0.0
      %2522 = vmatprep.subr.mxu0 0.0
      %2523 = vmatpush2.msra.mxu0 0.0
      %2524 = vmatprep.subr.mxu0 0.0
      %2525 = vmatpush2.msra.mxu0 0.0
      %2526 = vmatprep.subr.mxu0 0.0
      %2527 = vmatpush2.msra.mxu0 0.0
      %2528 = vmatprep.subr.mxu0 0.0
      %2529 = vmatpush2.msra.mxu0 0.0
      %2530 = vmatprep.subr.mxu0 0.0
      %2531 = vmatpush2.msra.mxu0 0.0
      %2532 = vmatprep.subr.mxu0 0.0
      %2533 = vmatpush2.msra.mxu0 0.0
      %2534 = vmatprep.subr.mxu0 0.0
      %2535 = vmatpush2.msra.mxu0 0.0
      %2536 = vmatprep.subr.mxu0 0.0
      %2537 = vmatpush2.msra.mxu0 0.0
      %2538 = vmatprep.mubr.f32.mxu0 0.0
      %2539 = vmatmul.mubr.f32.gmra.mxu0 %v2376
      %v2540 = vpop.f32.mrf.mxu0
      %v2541 = vadd.f32 0.0, %v2540
      %v2542 = vpop.f32.mrf.mxu0
      %2543 = vmatprep.mubr.f32.mxu0 0.0
      %2544 = vmatmul.mubr.f32.gmra.mxu0 %v2379
      %v2545 = vpop.f32.mrf.mxu0
      %v2546 = vadd.f32 0.0, %v2545
      %v2547 = vpop.f32.mrf.mxu0
      %2548 = vmatprep.mubr.f32.mxu0 0.0
      %2549 = vmatmul.mubr.f32.gmra.mxu0 %v2382
      %v2550 = vpop.f32.mrf.mxu0
      %v2551 = vadd.f32 0.0, %v2550
      %v2552 = vpop.f32.mrf.mxu0
      %2553 = vmatprep.mubr.f32.mxu0 0.0
      %2554 = vmatmul.mubr.f32.gmra.mxu0 %v2385
      %v2555 = vpop.f32.mrf.mxu0
      %v2556 = vadd.f32 0.0, %v2555
      %v2557 = vpop.f32.mrf.mxu0
      %2558 = vmatprep.mubr.f32.mxu0 0.0
      %2559 = vmatmul.mubr.f32.gmra.mxu0 %v2388
      %v2560 = vpop.f32.mrf.mxu0
      %v2561 = vadd.f32 0.0, %v2560
      %v2562 = vpop.f32.mrf.mxu0
      %2563 = vmatprep.mubr.f32.mxu0 0.0
      %2564 = vmatmul.mubr.f32.gmra.mxu0 %v2391
      %v2565 = vpop.f32.mrf.mxu0
      %v2566 = vadd.f32 0.0, %v2565
      %v2567 = vpop.f32.mrf.mxu0
      %2568 = vmatprep.mubr.f32.mxu0 0.0
      %2569 = vmatmul.mubr.f32.gmra.mxu0 %v2394
      %v2570 = vpop.f32.mrf.mxu0
      %v2571 = vadd.f32 0.0, %v2570
      %v2572 = vpop.f32.mrf.mxu0
      %2573 = vmatprep.mubr.f32.mxu0 0.0
      %2574 = vmatmul.mubr.f32.gmra.mxu0 %v2397
      %v2575 = vpop.f32.mrf.mxu0
      %v2576 = vadd.f32 0.0, %v2575
      %v2577 = vpop.f32.mrf.mxu0
      %2578 = vmatprep.mubr.f32.mxu0 0.0
      %2579 = vmatmul.mubr.f32.gmra.mxu0 %v2400
      %v2580 = vpop.f32.mrf.mxu0
      %v2581 = vadd.f32 0.0, %v2580
      %v2582 = vpop.f32.mrf.mxu0
      %2583 = vmatprep.mubr.f32.mxu0 0.0
      %2584 = vmatmul.mubr.f32.gmra.mxu0 %v2403
      %v2585 = vpop.f32.mrf.mxu0
      %v2586 = vadd.f32 0.0, %v2585
      %v2587 = vpop.f32.mrf.mxu0
      %2588 = vmatprep.mubr.f32.mxu0 0.0
      %2589 = vmatmul.mubr.f32.gmra.mxu0 %v2406
      %v2590 = vpop.f32.mrf.mxu0
      %v2591 = vadd.f32 0.0, %v2590
      %v2592 = vpop.f32.mrf.mxu0
      %2593 = vmatprep.mubr.f32.mxu0 0.0
      %2594 = vmatmul.mubr.f32.gmra.mxu0 %v2409
      %v2595 = vpop.f32.mrf.mxu0
      %v2596 = vadd.f32 0.0, %v2595
      %v2597 = vpop.f32.mrf.mxu0
      %2598 = vmatprep.mubr.f32.mxu0 0.0
      %2599 = vmatmul.mubr.f32.gmra.mxu0 %v2412
      %v2600 = vpop.f32.mrf.mxu0
      %v2601 = vadd.f32 0.0, %v2600
      %v2602 = vpop.f32.mrf.mxu0
      %2603 = vmatprep.mubr.f32.mxu0 0.0
      %2604 = vmatmul.mubr.f32.gmra.mxu0 %v2415
      %v2605 = vpop.f32.mrf.mxu0
      %v2606 = vadd.f32 0.0, %v2605
      %v2607 = vpop.f32.mrf.mxu0
      %2608 = vmatprep.mubr.f32.mxu0 0.0
      %2609 = vmatmul.mubr.f32.gmra.mxu0 %v2418
      %v2610 = vpop.f32.mrf.mxu0
      %v2611 = vadd.f32 0.0, %v2610
      %v2612 = vpop.f32.mrf.mxu0
      %2613 = vmatprep.mubr.f32.mxu0 0.0
      %2614 = vmatmul.mubr.f32.gmra.mxu0 %v2421
      %v2615 = vpop.f32.mrf.mxu0
      %v2616 = vadd.f32 0.0, %v2615
      %v2617 = vpop.f32.mrf.mxu0
      %2618 = vmatprep.mubr.f32.mxu0 0.0
      %2619 = vmatmul.mubr.f32.gmra.mxu0 %v2424
      %v2620 = vpop.f32.mrf.mxu0
      %v2621 = vadd.f32 0.0, %v2620
      %v2622 = vpop.f32.mrf.mxu0
      %2623 = vmatprep.mubr.f32.mxu0 0.0
      %2624 = vmatmul.mubr.f32.gmra.mxu0 %v2427
      %v2625 = vpop.f32.mrf.mxu0
      %v2626 = vadd.f32 0.0, %v2625
      %v2627 = vpop.f32.mrf.mxu0
      %2628 = vmatprep.mubr.f32.mxu0 0.0
      %2629 = vmatmul.mubr.f32.gmra.mxu0 %v2430
      %v2630 = vpop.f32.mrf.mxu0
      %v2631 = vadd.f32 0.0, %v2630
      %v2632 = vpop.f32.mrf.mxu0
      %2633 = vmatprep.mubr.f32.mxu0 0.0
      %2634 = vmatmul.mubr.f32.gmra.mxu0 %v2433
      %v2635 = vpop.f32.mrf.mxu0
      %v2636 = vadd.f32 0.0, %v2635
      %v2637 = vpop.f32.mrf.mxu0
      %2638 = vmatprep.mubr.f32.mxu0 0.0
      %2639 = vmatmul.mubr.f32.gmra.mxu0 %v2436
      %v2640 = vpop.f32.mrf.mxu0
      %v2641 = vadd.f32 0.0, %v2640
      %v2642 = vpop.f32.mrf.mxu0
      %2643 = vmatprep.mubr.f32.mxu0 0.0
      %2644 = vmatmul.mubr.f32.gmra.mxu0 %v2439
      %v2645 = vpop.f32.mrf.mxu0
      %v2646 = vadd.f32 0.0, %v2645
      %v2647 = vpop.f32.mrf.mxu0
      %2648 = vmatprep.mubr.f32.mxu0 0.0
      %2649 = vmatmul.mubr.f32.gmra.mxu0 %v2442
      %v2650 = vpop.f32.mrf.mxu0
      %v2651 = vadd.f32 0.0, %v2650
      %v2652 = vpop.f32.mrf.mxu0
      %2653 = vmatprep.mubr.f32.mxu0 0.0
      %2654 = vmatmul.mubr.f32.gmra.mxu0 %v2445
      %v2655 = vpop.f32.mrf.mxu0
      %v2656 = vadd.f32 0.0, %v2655
      %v2657 = vpop.f32.mrf.mxu0
      %2658 = vmatprep.mubr.f32.mxu0 0.0
      %2659 = vmatmul.mubr.f32.gmra.mxu0 %v2448
      %v2660 = vpop.f32.mrf.mxu0
      %v2661 = vadd.f32 0.0, %v2660
      %v2662 = vpop.f32.mrf.mxu0
      %2663 = vmatprep.mubr.f32.mxu0 0.0
      %2664 = vmatmul.mubr.f32.gmra.mxu0 %v2451
      %v2665 = vpop.f32.mrf.mxu0
      %v2666 = vadd.f32 0.0, %v2665
      %v2667 = vpop.f32.mrf.mxu0
      %2668 = vmatprep.mubr.f32.mxu0 0.0
      %2669 = vmatmul.mubr.f32.gmra.mxu0 %v2454
      %v2670 = vpop.f32.mrf.mxu0
      %v2671 = vadd.f32 0.0, %v2670
      %v2672 = vpop.f32.mrf.mxu0
      %2673 = vmatprep.mubr.f32.mxu0 0.0
      %2674 = vmatmul.mubr.f32.gmra.mxu0 %v2457
      %v2675 = vpop.f32.mrf.mxu0
      %v2676 = vadd.f32 0.0, %v2675
      %v2677 = vpop.f32.mrf.mxu0
      %2678 = vmatprep.mubr.f32.mxu0 0.0
      %2679 = vmatmul.mubr.f32.gmra.mxu0 %v2460
      %v2680 = vpop.f32.mrf.mxu0
      %v2681 = vadd.f32 0.0, %v2680
      %v2682 = vpop.f32.mrf.mxu0
      %2683 = vmatprep.mubr.f32.mxu0 0.0
      %2684 = vmatmul.mubr.f32.gmra.mxu0 %v2463
      %v2685 = vpop.f32.mrf.mxu0
      %v2686 = vadd.f32 0.0, %v2685
      %v2687 = vpop.f32.mrf.mxu0
      %2688 = vmatprep.mubr.f32.mxu0 0.0
      %2689 = vmatmul.mubr.f32.gmra.mxu0 %v2466
      %v2690 = vpop.f32.mrf.mxu0
      %v2691 = vadd.f32 0.0, %v2690
      %v2692 = vpop.f32.mrf.mxu0
      %2693 = vmatprep.mubr.f32.mxu0 0.0
      %2694 = vmatmul.mubr.f32.gmra.mxu0 %v2469
      %v2695 = vpop.f32.mrf.mxu0
      %v2696 = vadd.f32 0.0, %v2695
      %v2697 = vpop.f32.mrf.mxu0
      %2698 = vdwg.mxu0
      %v2699 = vadd.f32 %v2342, %v2541
      %v2700 = vadd.f32 %v2343, %v2546
      %v2701 = vadd.f32 %v2344, %v2551
      %v2702 = vadd.f32 %v2345, %v2556
      %v2703 = vadd.f32 %v2346, %v2561
      %v2704 = vadd.f32 %v2347, %v2566
      %v2705 = vadd.f32 %v2348, %v2571
      %v2706 = vadd.f32 %v2349, %v2576
      %v2707 = vadd.f32 %v2350, %v2581
      %v2708 = vadd.f32 %v2351, %v2586
      %v2709 = vadd.f32 %v2352, %v2591
      %v2710 = vadd.f32 %v2353, %v2596
      %v2711 = vadd.f32 %v2354, %v2601
      %v2712 = vadd.f32 %v2355, %v2606
      %v2713 = vadd.f32 %v2356, %v2611
      %v2714 = vadd.f32 %v2357, %v2616
      %v2715 = vadd.f32 %v2358, %v2621
      %v2716 = vadd.f32 %v2359, %v2626
      %v2717 = vadd.f32 %v2360, %v2631
      %v2718 = vadd.f32 %v2361, %v2636
      %v2719 = vadd.f32 %v2362, %v2641
      %v2720 = vadd.f32 %v2363, %v2646
      %v2721 = vadd.f32 %v2364, %v2651
      %v2722 = vadd.f32 %v2365, %v2656
      %v2723 = vadd.f32 %v2366, %v2661
      %v2724 = vadd.f32 %v2367, %v2666
      %v2725 = vadd.f32 %v2368, %v2671
      %v2726 = vadd.f32 %v2369, %v2676
      %v2727 = vadd.f32 %v2370, %v2681
      %v2728 = vadd.f32 %v2371, %v2686
      %v2729 = vadd.f32 %v2372, %v2691
      %v2730 = vadd.f32 %v2373, %v2696
      %v2731 = vld [vmem:[%s1 + $0x18] sm:$0xf]
      %v2733 = vsel %vm274, %v556, 0
      %v2736 = vsel %vm274, %v557, 0
      %v2739 = vsel %vm274, %v558, 0
      %v2742 = vsel %vm274, %v559, 0
      %v2745 = vsel %vm274, %v560, 0
      %v2748 = vsel %vm274, %v561, 0
      %v2751 = vsel %vm274, %v562, 0
      %v2754 = vsel %vm274, %v563, 0
      %v2757 = vsel %vm274, %v564, 0
      %v2760 = vsel %vm274, %v565, 0
      %v2763 = vsel %vm274, %v566, 0
      %v2766 = vsel %vm274, %v567, 0
      %v2769 = vsel %vm274, %v568, 0
      %v2772 = vsel %vm274, %v569, 0
      %v2775 = vsel %vm274, %v570, 0
      %v2778 = vsel %vm274, %v571, 0
      %v2781 = vsel %vm274, %v572, 0
      %v2784 = vsel %vm274, %v573, 0
      %v2787 = vsel %vm274, %v574, 0
      %v2790 = vsel %vm274, %v575, 0
      %v2793 = vsel %vm274, %v576, 0
      %v2796 = vsel %vm274, %v577, 0
      %v2799 = vsel %vm274, %v578, 0
      %v2802 = vsel %vm274, %v579, 0
      %v2805 = vsel %vm274, %v580, 0
      %v2808 = vsel %vm274, %v581, 0
      %v2811 = vsel %vm274, %v582, 0
      %v2814 = vsel %vm274, %v583, 0
      %v2817 = vsel %vm274, %v584, 0
      %v2820 = vsel %vm274, %v585, 0
      %v2823 = vsel %vm274, %v586, 0
      %v2826 = vsel %vm274, %v587, 0
      %v2829 = vsel %vm750, %v2731, 0
      %2831 = vmatprep.subr.mxu0 0.0
      %2832 = vmatpush1.msra.mxu0 0.0
      %2833 = vmatprep.subr.mxu0 0.0
      %2834 = vmatpush1.msra.mxu0 0.0
      %2835 = vmatprep.subr.mxu0 0.0
      %2836 = vmatpush1.msra.mxu0 0.0
      %2837 = vmatprep.subr.mxu0 0.0
      %2838 = vmatpush1.msra.mxu0 0.0
      %2839 = vmatprep.subr.mxu0 0.0
      %2840 = vmatpush1.msra.mxu0 0.0
      %2841 = vmatprep.subr.mxu0 0.0
      %2842 = vmatpush1.msra.mxu0 0.0
      %2843 = vmatprep.subr.mxu0 0.0
      %2844 = vmatpush1.msra.mxu0 0.0
      %2845 = vmatprep.subr.mxu0 0.0
      %2846 = vmatpush1.msra.mxu0 0.0
      %2847 = vmatprep.subr.mxu0 0.0
      %2848 = vmatpush1.msra.mxu0 0.0
      %2849 = vmatprep.subr.mxu0 0.0
      %2850 = vmatpush1.msra.mxu0 0.0
      %2851 = vmatprep.subr.mxu0 0.0
      %2852 = vmatpush1.msra.mxu0 0.0
      %2853 = vmatprep.subr.mxu0 0.0
      %2854 = vmatpush1.msra.mxu0 0.0
      %2855 = vmatprep.subr.mxu0 0.0
      %2856 = vmatpush1.msra.mxu0 0.0
      %2857 = vmatprep.subr.mxu0 0.0
      %2858 = vmatpush1.msra.mxu0 0.0
      %2859 = vmatprep.subr.mxu0 0.0
      %2860 = vmatpush1.msra.mxu0 0.0
      %2861 = vmatprep.subr.mxu0 0.0
      %2862 = vmatpush1.msra.mxu0 %v2829
      %2863 = vmatprep.subr.mxu0 0.0
      %2864 = vmatpush2.msra.mxu0 0.0
      %2865 = vmatprep.subr.mxu0 0.0
      %2866 = vmatpush2.msra.mxu0 0.0
      %2867 = vmatprep.subr.mxu0 0.0
      %2868 = vmatpush2.msra.mxu0 0.0
      %2869 = vmatprep.subr.mxu0 0.0
      %2870 = vmatpush2.msra.mxu0 0.0
      %2871 = vmatprep.subr.mxu0 0.0
      %2872 = vmatpush2.msra.mxu0 0.0
      %2873 = vmatprep.subr.mxu0 0.0
      %2874 = vmatpush2.msra.mxu0 0.0
      %2875 = vmatprep.subr.mxu0 0.0
      %2876 = vmatpush2.msra.mxu0 0.0
      %2877 = vmatprep.subr.mxu0 0.0
      %2878 = vmatpush2.msra.mxu0 0.0
      %2879 = vmatprep.subr.mxu0 0.0
      %2880 = vmatpush2.msra.mxu0 0.0
      %2881 = vmatprep.subr.mxu0 0.0
      %2882 = vmatpush2.msra.mxu0 0.0
      %2883 = vmatprep.subr.mxu0 0.0
      %2884 = vmatpush2.msra.mxu0 0.0
      %2885 = vmatprep.subr.mxu0 0.0
      %2886 = vmatpush2.msra.mxu0 0.0
      %2887 = vmatprep.subr.mxu0 0.0
      %2888 = vmatpush2.msra.mxu0 0.0
      %2889 = vmatprep.subr.mxu0 0.0
      %2890 = vmatpush2.msra.mxu0 0.0
      %2891 = vmatprep.subr.mxu0 0.0
      %2892 = vmatpush2.msra.mxu0 0.0
      %2893 = vmatprep.subr.mxu0 0.0
      %2894 = vmatpush2.msra.mxu0 0.0
      %2895 = vmatprep.mubr.f32.mxu0 0.0
      %2896 = vmatmul.mubr.f32.gmra.mxu0 %v2733
      %v2897 = vpop.f32.mrf.mxu0
      %v2898 = vadd.f32 0.0, %v2897
      %v2899 = vpop.f32.mrf.mxu0
      %2900 = vmatprep.mubr.f32.mxu0 0.0
      %2901 = vmatmul.mubr.f32.gmra.mxu0 %v2736
      %v2902 = vpop.f32.mrf.mxu0
      %v2903 = vadd.f32 0.0, %v2902
      %v2904 = vpop.f32.mrf.mxu0
      %2905 = vmatprep.mubr.f32.mxu0 0.0
      %2906 = vmatmul.mubr.f32.gmra.mxu0 %v2739
      %v2907 = vpop.f32.mrf.mxu0
      %v2908 = vadd.f32 0.0, %v2907
      %v2909 = vpop.f32.mrf.mxu0
      %2910 = vmatprep.mubr.f32.mxu0 0.0
      %2911 = vmatmul.mubr.f32.gmra.mxu0 %v2742
      %v2912 = vpop.f32.mrf.mxu0
      %v2913 = vadd.f32 0.0, %v2912
      %v2914 = vpop.f32.mrf.mxu0
      %2915 = vmatprep.mubr.f32.mxu0 0.0
      %2916 = vmatmul.mubr.f32.gmra.mxu0 %v2745
      %v2917 = vpop.f32.mrf.mxu0
      %v2918 = vadd.f32 0.0, %v2917
      %v2919 = vpop.f32.mrf.mxu0
      %2920 = vmatprep.mubr.f32.mxu0 0.0
      %2921 = vmatmul.mubr.f32.gmra.mxu0 %v2748
      %v2922 = vpop.f32.mrf.mxu0
      %v2923 = vadd.f32 0.0, %v2922
      %v2924 = vpop.f32.mrf.mxu0
      %2925 = vmatprep.mubr.f32.mxu0 0.0
      %2926 = vmatmul.mubr.f32.gmra.mxu0 %v2751
      %v2927 = vpop.f32.mrf.mxu0
      %v2928 = vadd.f32 0.0, %v2927
      %v2929 = vpop.f32.mrf.mxu0
      %2930 = vmatprep.mubr.f32.mxu0 0.0
      %2931 = vmatmul.mubr.f32.gmra.mxu0 %v2754
      %v2932 = vpop.f32.mrf.mxu0
      %v2933 = vadd.f32 0.0, %v2932
      %v2934 = vpop.f32.mrf.mxu0
      %2935 = vmatprep.mubr.f32.mxu0 0.0
      %2936 = vmatmul.mubr.f32.gmra.mxu0 %v2757
      %v2937 = vpop.f32.mrf.mxu0
      %v2938 = vadd.f32 0.0, %v2937
      %v2939 = vpop.f32.mrf.mxu0
      %2940 = vmatprep.mubr.f32.mxu0 0.0
      %2941 = vmatmul.mubr.f32.gmra.mxu0 %v2760
      %v2942 = vpop.f32.mrf.mxu0
      %v2943 = vadd.f32 0.0, %v2942
      %v2944 = vpop.f32.mrf.mxu0
      %2945 = vmatprep.mubr.f32.mxu0 0.0
      %2946 = vmatmul.mubr.f32.gmra.mxu0 %v2763
      %v2947 = vpop.f32.mrf.mxu0
      %v2948 = vadd.f32 0.0, %v2947
      %v2949 = vpop.f32.mrf.mxu0
      %2950 = vmatprep.mubr.f32.mxu0 0.0
      %2951 = vmatmul.mubr.f32.gmra.mxu0 %v2766
      %v2952 = vpop.f32.mrf.mxu0
      %v2953 = vadd.f32 0.0, %v2952
      %v2954 = vpop.f32.mrf.mxu0
      %2955 = vmatprep.mubr.f32.mxu0 0.0
      %2956 = vmatmul.mubr.f32.gmra.mxu0 %v2769
      %v2957 = vpop.f32.mrf.mxu0
      %v2958 = vadd.f32 0.0, %v2957
      %v2959 = vpop.f32.mrf.mxu0
      %2960 = vmatprep.mubr.f32.mxu0 0.0
      %2961 = vmatmul.mubr.f32.gmra.mxu0 %v2772
      %v2962 = vpop.f32.mrf.mxu0
      %v2963 = vadd.f32 0.0, %v2962
      %v2964 = vpop.f32.mrf.mxu0
      %2965 = vmatprep.mubr.f32.mxu0 0.0
      %2966 = vmatmul.mubr.f32.gmra.mxu0 %v2775
      %v2967 = vpop.f32.mrf.mxu0
      %v2968 = vadd.f32 0.0, %v2967
      %v2969 = vpop.f32.mrf.mxu0
      %2970 = vmatprep.mubr.f32.mxu0 0.0
      %2971 = vmatmul.mubr.f32.gmra.mxu0 %v2778
      %v2972 = vpop.f32.mrf.mxu0
      %v2973 = vadd.f32 0.0, %v2972
      %v2974 = vpop.f32.mrf.mxu0
      %2975 = vmatprep.mubr.f32.mxu0 0.0
      %2976 = vmatmul.mubr.f32.gmra.mxu0 %v2781
      %v2977 = vpop.f32.mrf.mxu0
      %v2978 = vadd.f32 0.0, %v2977
      %v2979 = vpop.f32.mrf.mxu0
      %2980 = vmatprep.mubr.f32.mxu0 0.0
      %2981 = vmatmul.mubr.f32.gmra.mxu0 %v2784
      %v2982 = vpop.f32.mrf.mxu0
      %v2983 = vadd.f32 0.0, %v2982
      %v2984 = vpop.f32.mrf.mxu0
      %2985 = vmatprep.mubr.f32.mxu0 0.0
      %2986 = vmatmul.mubr.f32.gmra.mxu0 %v2787
      %v2987 = vpop.f32.mrf.mxu0
      %v2988 = vadd.f32 0.0, %v2987
      %v2989 = vpop.f32.mrf.mxu0
      %2990 = vmatprep.mubr.f32.mxu0 0.0
      %2991 = vmatmul.mubr.f32.gmra.mxu0 %v2790
      %v2992 = vpop.f32.mrf.mxu0
      %v2993 = vadd.f32 0.0, %v2992
      %v2994 = vpop.f32.mrf.mxu0
      %2995 = vmatprep.mubr.f32.mxu0 0.0
      %2996 = vmatmul.mubr.f32.gmra.mxu0 %v2793
      %v2997 = vpop.f32.mrf.mxu0
      %v2998 = vadd.f32 0.0, %v2997
      %v2999 = vpop.f32.mrf.mxu0
      %3000 = vmatprep.mubr.f32.mxu0 0.0
      %3001 = vmatmul.mubr.f32.gmra.mxu0 %v2796
      %v3002 = vpop.f32.mrf.mxu0
      %v3003 = vadd.f32 0.0, %v3002
      %v3004 = vpop.f32.mrf.mxu0
      %3005 = vmatprep.mubr.f32.mxu0 0.0
      %3006 = vmatmul.mubr.f32.gmra.mxu0 %v2799
      %v3007 = vpop.f32.mrf.mxu0
      %v3008 = vadd.f32 0.0, %v3007
      %v3009 = vpop.f32.mrf.mxu0
      %3010 = vmatprep.mubr.f32.mxu0 0.0
      %3011 = vmatmul.mubr.f32.gmra.mxu0 %v2802
      %v3012 = vpop.f32.mrf.mxu0
      %v3013 = vadd.f32 0.0, %v3012
      %v3014 = vpop.f32.mrf.mxu0
      %3015 = vmatprep.mubr.f32.mxu0 0.0
      %3016 = vmatmul.mubr.f32.gmra.mxu0 %v2805
      %v3017 = vpop.f32.mrf.mxu0
      %v3018 = vadd.f32 0.0, %v3017
      %v3019 = vpop.f32.mrf.mxu0
      %3020 = vmatprep.mubr.f32.mxu0 0.0
      %3021 = vmatmul.mubr.f32.gmra.mxu0 %v2808
      %v3022 = vpop.f32.mrf.mxu0
      %v3023 = vadd.f32 0.0, %v3022
      %v3024 = vpop.f32.mrf.mxu0
      %3025 = vmatprep.mubr.f32.mxu0 0.0
      %3026 = vmatmul.mubr.f32.gmra.mxu0 %v2811
      %v3027 = vpop.f32.mrf.mxu0
      %v3028 = vadd.f32 0.0, %v3027
      %v3029 = vpop.f32.mrf.mxu0
      %3030 = vmatprep.mubr.f32.mxu0 0.0
      %3031 = vmatmul.mubr.f32.gmra.mxu0 %v2814
      %v3032 = vpop.f32.mrf.mxu0
      %v3033 = vadd.f32 0.0, %v3032
      %v3034 = vpop.f32.mrf.mxu0
      %3035 = vmatprep.mubr.f32.mxu0 0.0
      %3036 = vmatmul.mubr.f32.gmra.mxu0 %v2817
      %v3037 = vpop.f32.mrf.mxu0
      %v3038 = vadd.f32 0.0, %v3037
      %v3039 = vpop.f32.mrf.mxu0
      %3040 = vmatprep.mubr.f32.mxu0 0.0
      %3041 = vmatmul.mubr.f32.gmra.mxu0 %v2820
      %v3042 = vpop.f32.mrf.mxu0
      %v3043 = vadd.f32 0.0, %v3042
      %v3044 = vpop.f32.mrf.mxu0
      %3045 = vmatprep.mubr.f32.mxu0 0.0
      %3046 = vmatmul.mubr.f32.gmra.mxu0 %v2823
      %v3047 = vpop.f32.mrf.mxu0
      %v3048 = vadd.f32 0.0, %v3047
      %v3049 = vpop.f32.mrf.mxu0
      %3050 = vmatprep.mubr.f32.mxu0 0.0
      %3051 = vmatmul.mubr.f32.gmra.mxu0 %v2826
      %v3052 = vpop.f32.mrf.mxu0
      %v3053 = vadd.f32 0.0, %v3052
      %v3054 = vpop.f32.mrf.mxu0
      %3055 = vdwg.mxu0
      %v3056 = vadd.f32 %v2699, %v2898
      %v3057 = vadd.f32 %v2700, %v2903
      %v3058 = vadd.f32 %v2701, %v2908
      %v3059 = vadd.f32 %v2702, %v2913
      %v3060 = vadd.f32 %v2703, %v2918
      %v3061 = vadd.f32 %v2704, %v2923
      %v3062 = vadd.f32 %v2705, %v2928
      %v3063 = vadd.f32 %v2706, %v2933
      %v3064 = vadd.f32 %v2707, %v2938
      %v3065 = vadd.f32 %v2708, %v2943
      %v3066 = vadd.f32 %v2709, %v2948
      %v3067 = vadd.f32 %v2710, %v2953
      %v3068 = vadd.f32 %v2711, %v2958
      %v3069 = vadd.f32 %v2712, %v2963
      %v3070 = vadd.f32 %v2713, %v2968
      %v3071 = vadd.f32 %v2714, %v2973
      %v3072 = vadd.f32 %v2715, %v2978
      %v3073 = vadd.f32 %v2716, %v2983
      %v3074 = vadd.f32 %v2717, %v2988
      %v3075 = vadd.f32 %v2718, %v2993
      %v3076 = vadd.f32 %v2719, %v2998
      %v3077 = vadd.f32 %v2720, %v3003
      %v3078 = vadd.f32 %v2721, %v3008
      %v3079 = vadd.f32 %v2722, %v3013
      %v3080 = vadd.f32 %v2723, %v3018
      %v3081 = vadd.f32 %v2724, %v3023
      %v3082 = vadd.f32 %v2725, %v3028
      %v3083 = vadd.f32 %v2726, %v3033
      %v3084 = vadd.f32 %v2727, %v3038
      %v3085 = vadd.f32 %v2728, %v3043
      %v3086 = vadd.f32 %v2729, %v3048
      %v3087 = vadd.f32 %v2730, %v3053
      %v3088 = vld [vmem:[%s1 + $0x1c] sm:$0xf]
      %v3090 = vsel %vm274, %v588, 0
      %v3093 = vsel %vm274, %v589, 0
      %v3096 = vsel %vm274, %v590, 0
      %v3099 = vsel %vm274, %v591, 0
      %v3102 = vsel %vm274, %v592, 0
      %v3105 = vsel %vm274, %v593, 0
      %v3108 = vsel %vm274, %v594, 0
      %v3111 = vsel %vm274, %v595, 0
      %v3114 = vsel %vm274, %v596, 0
      %v3117 = vsel %vm274, %v597, 0
      %v3120 = vsel %vm274, %v598, 0
      %v3123 = vsel %vm274, %v599, 0
      %v3126 = vsel %vm274, %v600, 0
      %v3129 = vsel %vm274, %v601, 0
      %v3132 = vsel %vm274, %v602, 0
      %v3135 = vsel %vm274, %v603, 0
      %v3138 = vsel %vm274, %v604, 0
      %v3141 = vsel %vm274, %v605, 0
      %v3144 = vsel %vm274, %v606, 0
      %v3147 = vsel %vm274, %v607, 0
      %v3150 = vsel %vm274, %v608, 0
      %v3153 = vsel %vm274, %v609, 0
      %v3156 = vsel %vm274, %v610, 0
      %v3159 = vsel %vm274, %v611, 0
      %v3162 = vsel %vm274, %v612, 0
      %v3165 = vsel %vm274, %v613, 0
      %v3168 = vsel %vm274, %v614, 0
      %v3171 = vsel %vm274, %v615, 0
      %v3174 = vsel %vm274, %v616, 0
      %v3177 = vsel %vm274, %v617, 0
      %v3180 = vsel %vm274, %v618, 0
      %v3183 = vsel %vm274, %v619, 0
      %v3186 = vsel %vm750, %v3088, 0
      %3188 = vmatprep.subr.mxu0 0.0
      %3189 = vmatpush1.msra.mxu0 0.0
      %3190 = vmatprep.subr.mxu0 0.0
      %3191 = vmatpush1.msra.mxu0 0.0
      %3192 = vmatprep.subr.mxu0 0.0
      %3193 = vmatpush1.msra.mxu0 0.0
      %3194 = vmatprep.subr.mxu0 0.0
      %3195 = vmatpush1.msra.mxu0 0.0
      %3196 = vmatprep.subr.mxu0 0.0
      %3197 = vmatpush1.msra.mxu0 0.0
      %3198 = vmatprep.subr.mxu0 0.0
      %3199 = vmatpush1.msra.mxu0 0.0
      %3200 = vmatprep.subr.mxu0 0.0
      %3201 = vmatpush1.msra.mxu0 0.0
      %3202 = vmatprep.subr.mxu0 0.0
      %3203 = vmatpush1.msra.mxu0 0.0
      %3204 = vmatprep.subr.mxu0 0.0
      %3205 = vmatpush1.msra.mxu0 0.0
      %3206 = vmatprep.subr.mxu0 0.0
      %3207 = vmatpush1.msra.mxu0 0.0
      %3208 = vmatprep.subr.mxu0 0.0
      %3209 = vmatpush1.msra.mxu0 0.0
      %3210 = vmatprep.subr.mxu0 0.0
      %3211 = vmatpush1.msra.mxu0 0.0
      %3212 = vmatprep.subr.mxu0 0.0
      %3213 = vmatpush1.msra.mxu0 0.0
      %3214 = vmatprep.subr.mxu0 0.0
      %3215 = vmatpush1.msra.mxu0 0.0
      %3216 = vmatprep.subr.mxu0 0.0
      %3217 = vmatpush1.msra.mxu0 0.0
      %3218 = vmatprep.subr.mxu0 0.0
      %3219 = vmatpush1.msra.mxu0 %v3186
      %3220 = vmatprep.subr.mxu0 0.0
      %3221 = vmatpush2.msra.mxu0 0.0
      %3222 = vmatprep.subr.mxu0 0.0
      %3223 = vmatpush2.msra.mxu0 0.0
      %3224 = vmatprep.subr.mxu0 0.0
      %3225 = vmatpush2.msra.mxu0 0.0
      %3226 = vmatprep.subr.mxu0 0.0
      %3227 = vmatpush2.msra.mxu0 0.0
      %3228 = vmatprep.subr.mxu0 0.0
      %3229 = vmatpush2.msra.mxu0 0.0
      %3230 = vmatprep.subr.mxu0 0.0
      %3231 = vmatpush2.msra.mxu0 0.0
      %3232 = vmatprep.subr.mxu0 0.0
      %3233 = vmatpush2.msra.mxu0 0.0
      %3234 = vmatprep.subr.mxu0 0.0
      %3235 = vmatpush2.msra.mxu0 0.0
      %3236 = vmatprep.subr.mxu0 0.0
      %3237 = vmatpush2.msra.mxu0 0.0
      %3238 = vmatprep.subr.mxu0 0.0
      %3239 = vmatpush2.msra.mxu0 0.0
      %3240 = vmatprep.subr.mxu0 0.0
      %3241 = vmatpush2.msra.mxu0 0.0
      %3242 = vmatprep.subr.mxu0 0.0
      %3243 = vmatpush2.msra.mxu0 0.0
      %3244 = vmatprep.subr.mxu0 0.0
      %3245 = vmatpush2.msra.mxu0 0.0
      %3246 = vmatprep.subr.mxu0 0.0
      %3247 = vmatpush2.msra.mxu0 0.0
      %3248 = vmatprep.subr.mxu0 0.0
      %3249 = vmatpush2.msra.mxu0 0.0
      %3250 = vmatprep.subr.mxu0 0.0
      %3251 = vmatpush2.msra.mxu0 0.0
      %3252 = vmatprep.mubr.f32.mxu0 0.0
      %3253 = vmatmul.mubr.f32.gmra.mxu0 %v3090
      %v3254 = vpop.f32.mrf.mxu0
      %v3255 = vadd.f32 0.0, %v3254
      %v3256 = vpop.f32.mrf.mxu0
      %3257 = vmatprep.mubr.f32.mxu0 0.0
      %3258 = vmatmul.mubr.f32.gmra.mxu0 %v3093
      %v3259 = vpop.f32.mrf.mxu0
      %v3260 = vadd.f32 0.0, %v3259
      %v3261 = vpop.f32.mrf.mxu0
      %3262 = vmatprep.mubr.f32.mxu0 0.0
      %3263 = vmatmul.mubr.f32.gmra.mxu0 %v3096
      %v3264 = vpop.f32.mrf.mxu0
      %v3265 = vadd.f32 0.0, %v3264
      %v3266 = vpop.f32.mrf.mxu0
      %3267 = vmatprep.mubr.f32.mxu0 0.0
      %3268 = vmatmul.mubr.f32.gmra.mxu0 %v3099
      %v3269 = vpop.f32.mrf.mxu0
      %v3270 = vadd.f32 0.0, %v3269
      %v3271 = vpop.f32.mrf.mxu0
      %3272 = vmatprep.mubr.f32.mxu0 0.0
      %3273 = vmatmul.mubr.f32.gmra.mxu0 %v3102
      %v3274 = vpop.f32.mrf.mxu0
      %v3275 = vadd.f32 0.0, %v3274
      %v3276 = vpop.f32.mrf.mxu0
      %3277 = vmatprep.mubr.f32.mxu0 0.0
      %3278 = vmatmul.mubr.f32.gmra.mxu0 %v3105
      %v3279 = vpop.f32.mrf.mxu0
      %v3280 = vadd.f32 0.0, %v3279
      %v3281 = vpop.f32.mrf.mxu0
      %3282 = vmatprep.mubr.f32.mxu0 0.0
      %3283 = vmatmul.mubr.f32.gmra.mxu0 %v3108
      %v3284 = vpop.f32.mrf.mxu0
      %v3285 = vadd.f32 0.0, %v3284
      %v3286 = vpop.f32.mrf.mxu0
      %3287 = vmatprep.mubr.f32.mxu0 0.0
      %3288 = vmatmul.mubr.f32.gmra.mxu0 %v3111
      %v3289 = vpop.f32.mrf.mxu0
      %v3290 = vadd.f32 0.0, %v3289
      %v3291 = vpop.f32.mrf.mxu0
      %3292 = vmatprep.mubr.f32.mxu0 0.0
      %3293 = vmatmul.mubr.f32.gmra.mxu0 %v3114
      %v3294 = vpop.f32.mrf.mxu0
      %v3295 = vadd.f32 0.0, %v3294
      %v3296 = vpop.f32.mrf.mxu0
      %3297 = vmatprep.mubr.f32.mxu0 0.0
      %3298 = vmatmul.mubr.f32.gmra.mxu0 %v3117
      %v3299 = vpop.f32.mrf.mxu0
      %v3300 = vadd.f32 0.0, %v3299
      %v3301 = vpop.f32.mrf.mxu0
      %3302 = vmatprep.mubr.f32.mxu0 0.0
      %3303 = vmatmul.mubr.f32.gmra.mxu0 %v3120
      %v3304 = vpop.f32.mrf.mxu0
      %v3305 = vadd.f32 0.0, %v3304
      %v3306 = vpop.f32.mrf.mxu0
      %3307 = vmatprep.mubr.f32.mxu0 0.0
      %3308 = vmatmul.mubr.f32.gmra.mxu0 %v3123
      %v3309 = vpop.f32.mrf.mxu0
      %v3310 = vadd.f32 0.0, %v3309
      %v3311 = vpop.f32.mrf.mxu0
      %3312 = vmatprep.mubr.f32.mxu0 0.0
      %3313 = vmatmul.mubr.f32.gmra.mxu0 %v3126
      %v3314 = vpop.f32.mrf.mxu0
      %v3315 = vadd.f32 0.0, %v3314
      %v3316 = vpop.f32.mrf.mxu0
      %3317 = vmatprep.mubr.f32.mxu0 0.0
      %3318 = vmatmul.mubr.f32.gmra.mxu0 %v3129
      %v3319 = vpop.f32.mrf.mxu0
      %v3320 = vadd.f32 0.0, %v3319
      %v3321 = vpop.f32.mrf.mxu0
      %3322 = vmatprep.mubr.f32.mxu0 0.0
      %3323 = vmatmul.mubr.f32.gmra.mxu0 %v3132
      %v3324 = vpop.f32.mrf.mxu0
      %v3325 = vadd.f32 0.0, %v3324
      %v3326 = vpop.f32.mrf.mxu0
      %3327 = vmatprep.mubr.f32.mxu0 0.0
      %3328 = vmatmul.mubr.f32.gmra.mxu0 %v3135
      %v3329 = vpop.f32.mrf.mxu0
      %v3330 = vadd.f32 0.0, %v3329
      %v3331 = vpop.f32.mrf.mxu0
      %3332 = vmatprep.mubr.f32.mxu0 0.0
      %3333 = vmatmul.mubr.f32.gmra.mxu0 %v3138
      %v3334 = vpop.f32.mrf.mxu0
      %v3335 = vadd.f32 0.0, %v3334
      %v3336 = vpop.f32.mrf.mxu0
      %3337 = vmatprep.mubr.f32.mxu0 0.0
      %3338 = vmatmul.mubr.f32.gmra.mxu0 %v3141
      %v3339 = vpop.f32.mrf.mxu0
      %v3340 = vadd.f32 0.0, %v3339
      %v3341 = vpop.f32.mrf.mxu0
      %3342 = vmatprep.mubr.f32.mxu0 0.0
      %3343 = vmatmul.mubr.f32.gmra.mxu0 %v3144
      %v3344 = vpop.f32.mrf.mxu0
      %v3345 = vadd.f32 0.0, %v3344
      %v3346 = vpop.f32.mrf.mxu0
      %3347 = vmatprep.mubr.f32.mxu0 0.0
      %3348 = vmatmul.mubr.f32.gmra.mxu0 %v3147
      %v3349 = vpop.f32.mrf.mxu0
      %v3350 = vadd.f32 0.0, %v3349
      %v3351 = vpop.f32.mrf.mxu0
      %3352 = vmatprep.mubr.f32.mxu0 0.0
      %3353 = vmatmul.mubr.f32.gmra.mxu0 %v3150
      %v3354 = vpop.f32.mrf.mxu0
      %v3355 = vadd.f32 0.0, %v3354
      %v3356 = vpop.f32.mrf.mxu0
      %3357 = vmatprep.mubr.f32.mxu0 0.0
      %3358 = vmatmul.mubr.f32.gmra.mxu0 %v3153
      %v3359 = vpop.f32.mrf.mxu0
      %v3360 = vadd.f32 0.0, %v3359
      %v3361 = vpop.f32.mrf.mxu0
      %3362 = vmatprep.mubr.f32.mxu0 0.0
      %3363 = vmatmul.mubr.f32.gmra.mxu0 %v3156
      %v3364 = vpop.f32.mrf.mxu0
      %v3365 = vadd.f32 0.0, %v3364
      %v3366 = vpop.f32.mrf.mxu0
      %3367 = vmatprep.mubr.f32.mxu0 0.0
      %3368 = vmatmul.mubr.f32.gmra.mxu0 %v3159
      %v3369 = vpop.f32.mrf.mxu0
      %v3370 = vadd.f32 0.0, %v3369
      %v3371 = vpop.f32.mrf.mxu0
      %3372 = vmatprep.mubr.f32.mxu0 0.0
      %3373 = vmatmul.mubr.f32.gmra.mxu0 %v3162
      %v3374 = vpop.f32.mrf.mxu0
      %v3375 = vadd.f32 0.0, %v3374
      %v3376 = vpop.f32.mrf.mxu0
      %3377 = vmatprep.mubr.f32.mxu0 0.0
      %3378 = vmatmul.mubr.f32.gmra.mxu0 %v3165
      %v3379 = vpop.f32.mrf.mxu0
      %v3380 = vadd.f32 0.0, %v3379
      %v3381 = vpop.f32.mrf.mxu0
      %3382 = vmatprep.mubr.f32.mxu0 0.0
      %3383 = vmatmul.mubr.f32.gmra.mxu0 %v3168
      %v3384 = vpop.f32.mrf.mxu0
      %v3385 = vadd.f32 0.0, %v3384
      %v3386 = vpop.f32.mrf.mxu0
      %3387 = vmatprep.mubr.f32.mxu0 0.0
      %3388 = vmatmul.mubr.f32.gmra.mxu0 %v3171
      %v3389 = vpop.f32.mrf.mxu0
      %v3390 = vadd.f32 0.0, %v3389
      %v3391 = vpop.f32.mrf.mxu0
      %3392 = vmatprep.mubr.f32.mxu0 0.0
      %3393 = vmatmul.mubr.f32.gmra.mxu0 %v3174
      %v3394 = vpop.f32.mrf.mxu0
      %v3395 = vadd.f32 0.0, %v3394
      %v3396 = vpop.f32.mrf.mxu0
      %3397 = vmatprep.mubr.f32.mxu0 0.0
      %3398 = vmatmul.mubr.f32.gmra.mxu0 %v3177
      %v3399 = vpop.f32.mrf.mxu0
      %v3400 = vadd.f32 0.0, %v3399
      %v3401 = vpop.f32.mrf.mxu0
      %3402 = vmatprep.mubr.f32.mxu0 0.0
      %3403 = vmatmul.mubr.f32.gmra.mxu0 %v3180
      %v3404 = vpop.f32.mrf.mxu0
      %v3405 = vadd.f32 0.0, %v3404
      %v3406 = vpop.f32.mrf.mxu0
      %3407 = vmatprep.mubr.f32.mxu0 0.0
      %3408 = vmatmul.mubr.f32.gmra.mxu0 %v3183
      %v3409 = vpop.f32.mrf.mxu0
      %v3410 = vadd.f32 0.0, %v3409
      %v3411 = vpop.f32.mrf.mxu0
      %3412 = vdwg.mxu0
      %v3413 = vadd.f32 %v3056, %v3255
      %v3414 = vadd.f32 %v3057, %v3260
      %v3415 = vadd.f32 %v3058, %v3265
      %v3416 = vadd.f32 %v3059, %v3270
      %v3417 = vadd.f32 %v3060, %v3275
      %v3418 = vadd.f32 %v3061, %v3280
      %v3419 = vadd.f32 %v3062, %v3285
      %v3420 = vadd.f32 %v3063, %v3290
      %v3421 = vadd.f32 %v3064, %v3295
      %v3422 = vadd.f32 %v3065, %v3300
      %v3423 = vadd.f32 %v3066, %v3305
      %v3424 = vadd.f32 %v3067, %v3310
      %v3425 = vadd.f32 %v3068, %v3315
      %v3426 = vadd.f32 %v3069, %v3320
      %v3427 = vadd.f32 %v3070, %v3325
      %v3428 = vadd.f32 %v3071, %v3330
      %v3429 = vadd.f32 %v3072, %v3335
      %v3430 = vadd.f32 %v3073, %v3340
      %v3431 = vadd.f32 %v3074, %v3345
      %v3432 = vadd.f32 %v3075, %v3350
      %v3433 = vadd.f32 %v3076, %v3355
      %v3434 = vadd.f32 %v3077, %v3360
      %v3435 = vadd.f32 %v3078, %v3365
      %v3436 = vadd.f32 %v3079, %v3370
      %v3437 = vadd.f32 %v3080, %v3375
      %v3438 = vadd.f32 %v3081, %v3380
      %v3439 = vadd.f32 %v3082, %v3385
      %v3440 = vadd.f32 %v3083, %v3390
      %v3441 = vadd.f32 %v3084, %v3395
      %v3442 = vadd.f32 %v3085, %v3400
      %v3443 = vadd.f32 %v3086, %v3405
      %v3444 = vadd.f32 %v3087, %v3410
      %v3445 = vld [vmem:[%s1 + $0x20] sm:$0xf]
      %v3447 = vsel %vm274, %v620, 0
      %v3450 = vsel %vm274, %v621, 0
      %v3453 = vsel %vm274, %v622, 0
      %v3456 = vsel %vm274, %v623, 0
      %v3459 = vsel %vm274, %v624, 0
      %v3462 = vsel %vm274, %v625, 0
      %v3465 = vsel %vm274, %v626, 0
      %v3468 = vsel %vm274, %v627, 0
      %v3471 = vsel %vm274, %v628, 0
      %v3474 = vsel %vm274, %v629, 0
      %v3477 = vsel %vm274, %v630, 0
      %v3480 = vsel %vm274, %v631, 0
      %v3483 = vsel %vm274, %v632, 0
      %v3486 = vsel %vm274, %v633, 0
      %v3489 = vsel %vm274, %v634, 0
      %v3492 = vsel %vm274, %v635, 0
      %v3495 = vsel %vm274, %v636, 0
      %v3498 = vsel %vm274, %v637, 0
      %v3501 = vsel %vm274, %v638, 0
      %v3504 = vsel %vm274, %v639, 0
      %v3507 = vsel %vm274, %v640, 0
      %v3510 = vsel %vm274, %v641, 0
      %v3513 = vsel %vm274, %v642, 0
      %v3516 = vsel %vm274, %v643, 0
      %v3519 = vsel %vm274, %v644, 0
      %v3522 = vsel %vm274, %v645, 0
      %v3525 = vsel %vm274, %v646, 0
      %v3528 = vsel %vm274, %v647, 0
      %v3531 = vsel %vm274, %v648, 0
      %v3534 = vsel %vm274, %v649, 0
      %v3537 = vsel %vm274, %v650, 0
      %v3540 = vsel %vm274, %v651, 0
      %v3543 = vsel %vm750, %v3445, 0
      %3545 = vmatprep.subr.mxu0 0.0
      %3546 = vmatpush1.msra.mxu0 0.0
      %3547 = vmatprep.subr.mxu0 0.0
      %3548 = vmatpush1.msra.mxu0 0.0
      %3549 = vmatprep.subr.mxu0 0.0
      %3550 = vmatpush1.msra.mxu0 0.0
      %3551 = vmatprep.subr.mxu0 0.0
      %3552 = vmatpush1.msra.mxu0 0.0
      %3553 = vmatprep.subr.mxu0 0.0
      %3554 = vmatpush1.msra.mxu0 0.0
      %3555 = vmatprep.subr.mxu0 0.0
      %3556 = vmatpush1.msra.mxu0 0.0
      %3557 = vmatprep.subr.mxu0 0.0
      %3558 = vmatpush1.msra.mxu0 0.0
      %3559 = vmatprep.subr.mxu0 0.0
      %3560 = vmatpush1.msra.mxu0 0.0
      %3561 = vmatprep.subr.mxu0 0.0
      %3562 = vmatpush1.msra.mxu0 0.0
      %3563 = vmatprep.subr.mxu0 0.0
      %3564 = vmatpush1.msra.mxu0 0.0
      %3565 = vmatprep.subr.mxu0 0.0
      %3566 = vmatpush1.msra.mxu0 0.0
      %3567 = vmatprep.subr.mxu0 0.0
      %3568 = vmatpush1.msra.mxu0 0.0
      %3569 = vmatprep.subr.mxu0 0.0
      %3570 = vmatpush1.msra.mxu0 0.0
      %3571 = vmatprep.subr.mxu0 0.0
      %3572 = vmatpush1.msra.mxu0 0.0
      %3573 = vmatprep.subr.mxu0 0.0
      %3574 = vmatpush1.msra.mxu0 0.0
      %3575 = vmatprep.subr.mxu0 0.0
      %3576 = vmatpush1.msra.mxu0 %v3543
      %3577 = vmatprep.subr.mxu0 0.0
      %3578 = vmatpush2.msra.mxu0 0.0
      %3579 = vmatprep.subr.mxu0 0.0
      %3580 = vmatpush2.msra.mxu0 0.0
      %3581 = vmatprep.subr.mxu0 0.0
      %3582 = vmatpush2.msra.mxu0 0.0
      %3583 = vmatprep.subr.mxu0 0.0
      %3584 = vmatpush2.msra.mxu0 0.0
      %3585 = vmatprep.subr.mxu0 0.0
      %3586 = vmatpush2.msra.mxu0 0.0
      %3587 = vmatprep.subr.mxu0 0.0
      %3588 = vmatpush2.msra.mxu0 0.0
      %3589 = vmatprep.subr.mxu0 0.0
      %3590 = vmatpush2.msra.mxu0 0.0
      %3591 = vmatprep.subr.mxu0 0.0
      %3592 = vmatpush2.msra.mxu0 0.0
      %3593 = vmatprep.subr.mxu0 0.0
      %3594 = vmatpush2.msra.mxu0 0.0
      %3595 = vmatprep.subr.mxu0 0.0
      %3596 = vmatpush2.msra.mxu0 0.0
      %3597 = vmatprep.subr.mxu0 0.0
      %3598 = vmatpush2.msra.mxu0 0.0
      %3599 = vmatprep.subr.mxu0 0.0
      %3600 = vmatpush2.msra.mxu0 0.0
      %3601 = vmatprep.subr.mxu0 0.0
      %3602 = vmatpush2.msra.mxu0 0.0
      %3603 = vmatprep.subr.mxu0 0.0
      %3604 = vmatpush2.msra.mxu0 0.0
      %3605 = vmatprep.subr.mxu0 0.0
      %3606 = vmatpush2.msra.mxu0 0.0
      %3607 = vmatprep.subr.mxu0 0.0
      %3608 = vmatpush2.msra.mxu0 0.0
      %3609 = vmatprep.mubr.f32.mxu0 0.0
      %3610 = vmatmul.mubr.f32.gmra.mxu0 %v3447
      %v3611 = vpop.f32.mrf.mxu0
      %v3612 = vadd.f32 0.0, %v3611
      %v3613 = vpop.f32.mrf.mxu0
      %3614 = vmatprep.mubr.f32.mxu0 0.0
      %3615 = vmatmul.mubr.f32.gmra.mxu0 %v3450
      %v3616 = vpop.f32.mrf.mxu0
      %v3617 = vadd.f32 0.0, %v3616
      %v3618 = vpop.f32.mrf.mxu0
      %3619 = vmatprep.mubr.f32.mxu0 0.0
      %3620 = vmatmul.mubr.f32.gmra.mxu0 %v3453
      %v3621 = vpop.f32.mrf.mxu0
      %v3622 = vadd.f32 0.0, %v3621
      %v3623 = vpop.f32.mrf.mxu0
      %3624 = vmatprep.mubr.f32.mxu0 0.0
      %3625 = vmatmul.mubr.f32.gmra.mxu0 %v3456
      %v3626 = vpop.f32.mrf.mxu0
      %v3627 = vadd.f32 0.0, %v3626
      %v3628 = vpop.f32.mrf.mxu0
      %3629 = vmatprep.mubr.f32.mxu0 0.0
      %3630 = vmatmul.mubr.f32.gmra.mxu0 %v3459
      %v3631 = vpop.f32.mrf.mxu0
      %v3632 = vadd.f32 0.0, %v3631
      %v3633 = vpop.f32.mrf.mxu0
      %3634 = vmatprep.mubr.f32.mxu0 0.0
      %3635 = vmatmul.mubr.f32.gmra.mxu0 %v3462
      %v3636 = vpop.f32.mrf.mxu0
      %v3637 = vadd.f32 0.0, %v3636
      %v3638 = vpop.f32.mrf.mxu0
      %3639 = vmatprep.mubr.f32.mxu0 0.0
      %3640 = vmatmul.mubr.f32.gmra.mxu0 %v3465
      %v3641 = vpop.f32.mrf.mxu0
      %v3642 = vadd.f32 0.0, %v3641
      %v3643 = vpop.f32.mrf.mxu0
      %3644 = vmatprep.mubr.f32.mxu0 0.0
      %3645 = vmatmul.mubr.f32.gmra.mxu0 %v3468
      %v3646 = vpop.f32.mrf.mxu0
      %v3647 = vadd.f32 0.0, %v3646
      %v3648 = vpop.f32.mrf.mxu0
      %3649 = vmatprep.mubr.f32.mxu0 0.0
      %3650 = vmatmul.mubr.f32.gmra.mxu0 %v3471
      %v3651 = vpop.f32.mrf.mxu0
      %v3652 = vadd.f32 0.0, %v3651
      %v3653 = vpop.f32.mrf.mxu0
      %3654 = vmatprep.mubr.f32.mxu0 0.0
      %3655 = vmatmul.mubr.f32.gmra.mxu0 %v3474
      %v3656 = vpop.f32.mrf.mxu0
      %v3657 = vadd.f32 0.0, %v3656
      %v3658 = vpop.f32.mrf.mxu0
      %3659 = vmatprep.mubr.f32.mxu0 0.0
      %3660 = vmatmul.mubr.f32.gmra.mxu0 %v3477
      %v3661 = vpop.f32.mrf.mxu0
      %v3662 = vadd.f32 0.0, %v3661
      %v3663 = vpop.f32.mrf.mxu0
      %3664 = vmatprep.mubr.f32.mxu0 0.0
      %3665 = vmatmul.mubr.f32.gmra.mxu0 %v3480
      %v3666 = vpop.f32.mrf.mxu0
      %v3667 = vadd.f32 0.0, %v3666
      %v3668 = vpop.f32.mrf.mxu0
      %3669 = vmatprep.mubr.f32.mxu0 0.0
      %3670 = vmatmul.mubr.f32.gmra.mxu0 %v3483
      %v3671 = vpop.f32.mrf.mxu0
      %v3672 = vadd.f32 0.0, %v3671
      %v3673 = vpop.f32.mrf.mxu0
      %3674 = vmatprep.mubr.f32.mxu0 0.0
      %3675 = vmatmul.mubr.f32.gmra.mxu0 %v3486
      %v3676 = vpop.f32.mrf.mxu0
      %v3677 = vadd.f32 0.0, %v3676
      %v3678 = vpop.f32.mrf.mxu0
      %3679 = vmatprep.mubr.f32.mxu0 0.0
      %3680 = vmatmul.mubr.f32.gmra.mxu0 %v3489
      %v3681 = vpop.f32.mrf.mxu0
      %v3682 = vadd.f32 0.0, %v3681
      %v3683 = vpop.f32.mrf.mxu0
      %3684 = vmatprep.mubr.f32.mxu0 0.0
      %3685 = vmatmul.mubr.f32.gmra.mxu0 %v3492
      %v3686 = vpop.f32.mrf.mxu0
      %v3687 = vadd.f32 0.0, %v3686
      %v3688 = vpop.f32.mrf.mxu0
      %3689 = vmatprep.mubr.f32.mxu0 0.0
      %3690 = vmatmul.mubr.f32.gmra.mxu0 %v3495
      %v3691 = vpop.f32.mrf.mxu0
      %v3692 = vadd.f32 0.0, %v3691
      %v3693 = vpop.f32.mrf.mxu0
      %3694 = vmatprep.mubr.f32.mxu0 0.0
      %3695 = vmatmul.mubr.f32.gmra.mxu0 %v3498
      %v3696 = vpop.f32.mrf.mxu0
      %v3697 = vadd.f32 0.0, %v3696
      %v3698 = vpop.f32.mrf.mxu0
      %3699 = vmatprep.mubr.f32.mxu0 0.0
      %3700 = vmatmul.mubr.f32.gmra.mxu0 %v3501
      %v3701 = vpop.f32.mrf.mxu0
      %v3702 = vadd.f32 0.0, %v3701
      %v3703 = vpop.f32.mrf.mxu0
      %3704 = vmatprep.mubr.f32.mxu0 0.0
      %3705 = vmatmul.mubr.f32.gmra.mxu0 %v3504
      %v3706 = vpop.f32.mrf.mxu0
      %v3707 = vadd.f32 0.0, %v3706
      %v3708 = vpop.f32.mrf.mxu0
      %3709 = vmatprep.mubr.f32.mxu0 0.0
      %3710 = vmatmul.mubr.f32.gmra.mxu0 %v3507
      %v3711 = vpop.f32.mrf.mxu0
      %v3712 = vadd.f32 0.0, %v3711
      %v3713 = vpop.f32.mrf.mxu0
      %3714 = vmatprep.mubr.f32.mxu0 0.0
      %3715 = vmatmul.mubr.f32.gmra.mxu0 %v3510
      %v3716 = vpop.f32.mrf.mxu0
      %v3717 = vadd.f32 0.0, %v3716
      %v3718 = vpop.f32.mrf.mxu0
      %3719 = vmatprep.mubr.f32.mxu0 0.0
      %3720 = vmatmul.mubr.f32.gmra.mxu0 %v3513
      %v3721 = vpop.f32.mrf.mxu0
      %v3722 = vadd.f32 0.0, %v3721
      %v3723 = vpop.f32.mrf.mxu0
      %3724 = vmatprep.mubr.f32.mxu0 0.0
      %3725 = vmatmul.mubr.f32.gmra.mxu0 %v3516
      %v3726 = vpop.f32.mrf.mxu0
      %v3727 = vadd.f32 0.0, %v3726
      %v3728 = vpop.f32.mrf.mxu0
      %3729 = vmatprep.mubr.f32.mxu0 0.0
      %3730 = vmatmul.mubr.f32.gmra.mxu0 %v3519
      %v3731 = vpop.f32.mrf.mxu0
      %v3732 = vadd.f32 0.0, %v3731
      %v3733 = vpop.f32.mrf.mxu0
      %3734 = vmatprep.mubr.f32.mxu0 0.0
      %3735 = vmatmul.mubr.f32.gmra.mxu0 %v3522
      %v3736 = vpop.f32.mrf.mxu0
      %v3737 = vadd.f32 0.0, %v3736
      %v3738 = vpop.f32.mrf.mxu0
      %3739 = vmatprep.mubr.f32.mxu0 0.0
      %3740 = vmatmul.mubr.f32.gmra.mxu0 %v3525
      %v3741 = vpop.f32.mrf.mxu0
      %v3742 = vadd.f32 0.0, %v3741
      %v3743 = vpop.f32.mrf.mxu0
      %3744 = vmatprep.mubr.f32.mxu0 0.0
      %3745 = vmatmul.mubr.f32.gmra.mxu0 %v3528
      %v3746 = vpop.f32.mrf.mxu0
      %v3747 = vadd.f32 0.0, %v3746
      %v3748 = vpop.f32.mrf.mxu0
      %3749 = vmatprep.mubr.f32.mxu0 0.0
      %3750 = vmatmul.mubr.f32.gmra.mxu0 %v3531
      %v3751 = vpop.f32.mrf.mxu0
      %v3752 = vadd.f32 0.0, %v3751
      %v3753 = vpop.f32.mrf.mxu0
      %3754 = vmatprep.mubr.f32.mxu0 0.0
      %3755 = vmatmul.mubr.f32.gmra.mxu0 %v3534
      %v3756 = vpop.f32.mrf.mxu0
      %v3757 = vadd.f32 0.0, %v3756
      %v3758 = vpop.f32.mrf.mxu0
      %3759 = vmatprep.mubr.f32.mxu0 0.0
      %3760 = vmatmul.mubr.f32.gmra.mxu0 %v3537
      %v3761 = vpop.f32.mrf.mxu0
      %v3762 = vadd.f32 0.0, %v3761
      %v3763 = vpop.f32.mrf.mxu0
      %3764 = vmatprep.mubr.f32.mxu0 0.0
      %3765 = vmatmul.mubr.f32.gmra.mxu0 %v3540
      %v3766 = vpop.f32.mrf.mxu0
      %v3767 = vadd.f32 0.0, %v3766
      %v3768 = vpop.f32.mrf.mxu0
      %3769 = vdwg.mxu0
      %v3770 = vadd.f32 %v3413, %v3612
      %v3771 = vadd.f32 %v3414, %v3617
      %v3772 = vadd.f32 %v3415, %v3622
      %v3773 = vadd.f32 %v3416, %v3627
      %v3774 = vadd.f32 %v3417, %v3632
      %v3775 = vadd.f32 %v3418, %v3637
      %v3776 = vadd.f32 %v3419, %v3642
      %v3777 = vadd.f32 %v3420, %v3647
      %v3778 = vadd.f32 %v3421, %v3652
      %v3779 = vadd.f32 %v3422, %v3657
      %v3780 = vadd.f32 %v3423, %v3662
      %v3781 = vadd.f32 %v3424, %v3667
      %v3782 = vadd.f32 %v3425, %v3672
      %v3783 = vadd.f32 %v3426, %v3677
      %v3784 = vadd.f32 %v3427, %v3682
      %v3785 = vadd.f32 %v3428, %v3687
      %v3786 = vadd.f32 %v3429, %v3692
      %v3787 = vadd.f32 %v3430, %v3697
      %v3788 = vadd.f32 %v3431, %v3702
      %v3789 = vadd.f32 %v3432, %v3707
      %v3790 = vadd.f32 %v3433, %v3712
      %v3791 = vadd.f32 %v3434, %v3717
      %v3792 = vadd.f32 %v3435, %v3722
      %v3793 = vadd.f32 %v3436, %v3727
      %v3794 = vadd.f32 %v3437, %v3732
      %v3795 = vadd.f32 %v3438, %v3737
      %v3796 = vadd.f32 %v3439, %v3742
      %v3797 = vadd.f32 %v3440, %v3747
      %v3798 = vadd.f32 %v3441, %v3752
      %v3799 = vadd.f32 %v3442, %v3757
      %v3800 = vadd.f32 %v3443, %v3762
      %v3801 = vadd.f32 %v3444, %v3767
      %v3802 = vld [vmem:[%s2] sm:$0x1]
      %v3804 = vlaneseq
      %v3805 = vshrl.u32 %v3804, 7
      %v3806 = vsub.s32 0, %v3805
      %v3807 = vrot.slane %v3802, %v3806
      %v3809 = vadd.f32 %v3770, %v3807
      %v3810 = vadd.f32 %v3771, %v3807
      %v3811 = vadd.f32 %v3772, %v3807
      %v3812 = vadd.f32 %v3773, %v3807
      %v3813 = vadd.f32 %v3774, %v3807
      %v3814 = vadd.f32 %v3775, %v3807
      %v3815 = vadd.f32 %v3776, %v3807
      %v3816 = vadd.f32 %v3777, %v3807
      %v3817 = vadd.f32 %v3778, %v3807
      %v3818 = vadd.f32 %v3779, %v3807
      %v3819 = vadd.f32 %v3780, %v3807
      %v3820 = vadd.f32 %v3781, %v3807
      %v3821 = vadd.f32 %v3782, %v3807
      %v3822 = vadd.f32 %v3783, %v3807
      %v3823 = vadd.f32 %v3784, %v3807
      %v3824 = vadd.f32 %v3785, %v3807
      %v3825 = vadd.f32 %v3786, %v3807
      %v3826 = vadd.f32 %v3787, %v3807
      %v3827 = vadd.f32 %v3788, %v3807
      %v3828 = vadd.f32 %v3789, %v3807
      %v3829 = vadd.f32 %v3790, %v3807
      %v3830 = vadd.f32 %v3791, %v3807
      %v3831 = vadd.f32 %v3792, %v3807
      %v3832 = vadd.f32 %v3793, %v3807
      %v3833 = vadd.f32 %v3794, %v3807
      %v3834 = vadd.f32 %v3795, %v3807
      %v3835 = vadd.f32 %v3796, %v3807
      %v3836 = vadd.f32 %v3797, %v3807
      %v3837 = vadd.f32 %v3798, %v3807
      %v3838 = vadd.f32 %v3799, %v3807
      %v3839 = vadd.f32 %v3800, %v3807
      %v3840 = vadd.f32 %v3801, %v3807
      %3841 = vst [vmem:[%s235] sm:$0xff] %v3809
      %3842 = vst [vmem:[%s235 + $0x8] sm:$0xff] %v3810
      %3843 = vst [vmem:[%s235 + $0x10] sm:$0xff] %v3811
      %3844 = vst [vmem:[%s235 + $0x18] sm:$0xff] %v3812
      %3845 = vst [vmem:[%s235 + $0x20] sm:$0xff] %v3813
      %3846 = vst [vmem:[%s235 + $0x28] sm:$0xff] %v3814
      %3847 = vst [vmem:[%s235 + $0x30] sm:$0xff] %v3815
      %3848 = vst [vmem:[%s235 + $0x38] sm:$0xff] %v3816
      %3849 = vst [vmem:[%s235 + $0x40] sm:$0xff] %v3817
      %3850 = vst [vmem:[%s235 + $0x48] sm:$0xff] %v3818
      %3851 = vst [vmem:[%s235 + $0x50] sm:$0xff] %v3819
      %3852 = vst [vmem:[%s235 + $0x58] sm:$0xff] %v3820
      %3853 = vst [vmem:[%s235 + $0x60] sm:$0xff] %v3821
      %3854 = vst [vmem:[%s235 + $0x68] sm:$0xff] %v3822
      %3855 = vst [vmem:[%s235 + $0x70] sm:$0xff] %v3823
      %3856 = vst [vmem:[%s235 + $0x78] sm:$0xff] %v3824
      %3857 = vst [vmem:[%s235 + $0x80] sm:$0xff] %v3825
      %3858 = vst [vmem:[%s235 + $0x88] sm:$0xff] %v3826
      %3859 = vst [vmem:[%s235 + $0x90] sm:$0xff] %v3827
      %3860 = vst [vmem:[%s235 + $0x98] sm:$0xff] %v3828
      %3861 = vst [vmem:[%s235 + $0xa0] sm:$0xff] %v3829
      %3862 = vst [vmem:[%s235 + $0xa8] sm:$0xff] %v3830
      %3863 = vst [vmem:[%s235 + $0xb0] sm:$0xff] %v3831
      %3864 = vst [vmem:[%s235 + $0xb8] sm:$0xff] %v3832
      %3865 = vst [vmem:[%s235 + $0xc0] sm:$0xff] %v3833
      %3866 = vst [vmem:[%s235 + $0xc8] sm:$0xff] %v3834
      %3867 = vst [vmem:[%s235 + $0xd0] sm:$0xff] %v3835
      %3868 = vst [vmem:[%s235 + $0xd8] sm:$0xff] %v3836
      %3869 = vst [vmem:[%s235 + $0xe0] sm:$0xff] %v3837
      %3870 = vst [vmem:[%s235 + $0xe8] sm:$0xff] %v3838
      %3871 = vst [vmem:[%s235 + $0xf0] sm:$0xff] %v3839
      %3872 = vst [vmem:[%s235 + $0xf8] sm:$0xff] %v3840
      %v3873 = vadd.f32 %v3809, %v3810
      %v3874 = vadd.f32 %v3873, %v3811
      %v3875 = vadd.f32 %v3874, %v3812
      %v3876 = vadd.f32 %v3875, %v3813
      %v3877 = vadd.f32 %v3876, %v3814
      %v3878 = vadd.f32 %v3877, %v3815
      %v3879 = vadd.f32 %v3878, %v3816
      %v3880 = vadd.f32 %v3879, %v3817
      %v3881 = vadd.f32 %v3880, %v3818
      %v3882 = vadd.f32 %v3881, %v3819
      %v3883 = vadd.f32 %v3882, %v3820
      %v3884 = vadd.f32 %v3883, %v3821
      %v3885 = vadd.f32 %v3884, %v3822
      %v3886 = vadd.f32 %v3885, %v3823
      %v3887 = vadd.f32 %v3886, %v3824
      %v3888 = vadd.f32 %v3887, %v3825
      %v3889 = vadd.f32 %v3888, %v3826
      %v3890 = vadd.f32 %v3889, %v3827
      %v3891 = vadd.f32 %v3890, %v3828
      %v3892 = vadd.f32 %v3891, %v3829
      %v3893 = vadd.f32 %v3892, %v3830
      %v3894 = vadd.f32 %v3893, %v3831
      %v3895 = vadd.f32 %v3894, %v3832
      %v3896 = vadd.f32 %v3895, %v3833
      %v3897 = vadd.f32 %v3896, %v3834
      %v3898 = vadd.f32 %v3897, %v3835
      %v3899 = vadd.f32 %v3898, %v3836
      %v3900 = vadd.f32 %v3899, %v3837
      %v3901 = vadd.f32 %v3900, %v3838
      %v3902 = vadd.f32 %v3901, %v3839
      %v3903 = vadd.f32 %v3902, %v3840
      %v3904 = vrot.slane %v3903, 4
      %v3905 = vadd.f32 %v3903, %v3904
      %v3906 = vrot.slane %v3905, 2
      %v3907 = vadd.f32 %v3905, %v3906
      %v3908 = vrot.slane %v3907, 1
      %v3909 = vadd.f32 %v3907, %v3908
      %3910 = vst [vmem:[%s238] sm:$0x1] %v3909
      %v3911 = vmul.f32 %v3809, %v3809
      %v3912 = vmul.f32 %v3810, %v3810
      %v3913 = vmul.f32 %v3811, %v3811
      %v3914 = vmul.f32 %v3812, %v3812
      %v3915 = vmul.f32 %v3813, %v3813
      %v3916 = vmul.f32 %v3814, %v3814
      %v3917 = vmul.f32 %v3815, %v3815
      %v3918 = vmul.f32 %v3816, %v3816
      %v3919 = vmul.f32 %v3817, %v3817
      %v3920 = vmul.f32 %v3818, %v3818
      %v3921 = vmul.f32 %v3819, %v3819
      %v3922 = vmul.f32 %v3820, %v3820
      %v3923 = vmul.f32 %v3821, %v3821
      %v3924 = vmul.f32 %v3822, %v3822
      %v3925 = vmul.f32 %v3823, %v3823
      %v3926 = vmul.f32 %v3824, %v3824
      %v3927 = vmul.f32 %v3825, %v3825
      %v3928 = vmul.f32 %v3826, %v3826
      %v3929 = vmul.f32 %v3827, %v3827
      %v3930 = vmul.f32 %v3828, %v3828
      %v3931 = vmul.f32 %v3829, %v3829
      %v3932 = vmul.f32 %v3830, %v3830
      %v3933 = vmul.f32 %v3831, %v3831
      %v3934 = vmul.f32 %v3832, %v3832
      %v3935 = vmul.f32 %v3833, %v3833
      %v3936 = vmul.f32 %v3834, %v3834
      %v3937 = vmul.f32 %v3835, %v3835
      %v3938 = vmul.f32 %v3836, %v3836
      %v3939 = vmul.f32 %v3837, %v3837
      %v3940 = vmul.f32 %v3838, %v3838
      %v3941 = vmul.f32 %v3839, %v3839
      %v3942 = vmul.f32 %v3840, %v3840
      %v3943 = vadd.f32 %v3911, %v3912
      %v3944 = vadd.f32 %v3943, %v3913
      %v3945 = vadd.f32 %v3944, %v3914
      %v3946 = vadd.f32 %v3945, %v3915
      %v3947 = vadd.f32 %v3946, %v3916
      %v3948 = vadd.f32 %v3947, %v3917
      %v3949 = vadd.f32 %v3948, %v3918
      %v3950 = vadd.f32 %v3949, %v3919
      %v3951 = vadd.f32 %v3950, %v3920
      %v3952 = vadd.f32 %v3951, %v3921
      %v3953 = vadd.f32 %v3952, %v3922
      %v3954 = vadd.f32 %v3953, %v3923
      %v3955 = vadd.f32 %v3954, %v3924
      %v3956 = vadd.f32 %v3955, %v3925
      %v3957 = vadd.f32 %v3956, %v3926
      %v3958 = vadd.f32 %v3957, %v3927
      %v3959 = vadd.f32 %v3958, %v3928
      %v3960 = vadd.f32 %v3959, %v3929
      %v3961 = vadd.f32 %v3960, %v3930
      %v3962 = vadd.f32 %v3961, %v3931
      %v3963 = vadd.f32 %v3962, %v3932
      %v3964 = vadd.f32 %v3963, %v3933
      %v3965 = vadd.f32 %v3964, %v3934
      %v3966 = vadd.f32 %v3965, %v3935
      %v3967 = vadd.f32 %v3966, %v3936
      %v3968 = vadd.f32 %v3967, %v3937
      %v3969 = vadd.f32 %v3968, %v3938
      %v3970 = vadd.f32 %v3969, %v3939
      %v3971 = vadd.f32 %v3970, %v3940
      %v3972 = vadd.f32 %v3971, %v3941
      %v3973 = vadd.f32 %v3972, %v3942
      %v3974 = vrot.slane %v3973, 4
      %v3975 = vadd.f32 %v3973, %v3974
      %v3976 = vrot.slane %v3975, 2
      %v3977 = vadd.f32 %v3975, %v3976
      %v3978 = vrot.slane %v3977, 1
      %v3979 = vadd.f32 %v3977, %v3978
      %3980 = vst [vmem:[%s241] sm:$0x1] %v3979
      %p3981 = scmp.lt.s32.totalorder %s17, 1
      %s3982 = scalar_select %p3981, %s17, 1
      %s3983 = smul.addr %s3982, 32
      %s3984 = smul.addr %s3983, 8
      %s3985 = scalar_lea.vmem %s3, %s3984
      %p3986 = scmp.lt.s32.totalorder %s17, 1
      %s3987 = scalar_select %p3986, %s17, 1
      %s3988 = scalar_lea.vmem %s4, %s3987
      %p3989 = scmp.lt.s32.totalorder %s17, 1
      %s3990 = scalar_select %p3989, %s17, 1
      %s3991 = scalar_lea.vmem %s5, %s3990
      // Predicated region
      $region33: #{double_conv_forward.3} parent=31 // pred_check
        %p3992 = pneg %p103
      $region34: #{double_conv_forward.3} parent=31 // pred_check_branch
        %3994 = sbr.rel (%p3992) target = $region36
      $region35: #{double_conv_forward.3} parent=31 // pred_region
        _
      $region36: #{double_conv_forward.3} parent=31 // pred_fallthru
        _
      // Predicated region
      $region37: #{double_conv_forward.3} parent=31 // pred_check
        %p3995 = pneg %p129
      $region38: #{double_conv_forward.3} parent=31 // pred_check_branch
        %3997 = sbr.rel (%p3995) target = $region40
      $region39: #{double_conv_forward.3} parent=31 // pred_region
        _
      $region40: #{double_conv_forward.3} parent=31 // pred_fallthru
        _
      // Predicated region
      $region41: #{double_conv_forward.3} parent=31 // pred_check
        %p3998 = pneg %p155
      $region42: #{double_conv_forward.3} parent=31 // pred_check_branch
        %4000 = sbr.rel (%p3998) target = $region44
      $region43: #{double_conv_forward.3} parent=31 // pred_region
        _
      $region44: #{double_conv_forward.3} parent=31 // pred_fallthru
        _
    $region32: #{double_conv_forward.3} parent=5 // pred_fallthru
      _
    %p4001 = scmp.le.s32.totalorder 2, %s12
    // Predicated region
    $region45: #{double_conv_forward.3} parent=5 // pred_check
      %p4002 = pneg %p4001
    $region46: #{double_conv_forward.3} parent=5 // pred_check_branch
      %4004 = sbr.rel (%p4002) target = $region48
    $region47: #{double_conv_forward.3} parent=5 // pred_region
      %s4005 = ssub.s32 %s12, 2
      // Predicated region
      $region49: #{double_conv_forward.3} parent=47 // pred_check
        %p4006 = pneg %p109
      $region50: #{double_conv_forward.3} parent=47 // pred_check_branch
        %4008 = sbr.rel (%p4006) target = $region52
      $region51: #{double_conv_forward.3} parent=47 // pred_region
        %p4009 = scmp.lt.s32.totalorder %s18, 1
        %s4010 = scalar_select %p4009, %s18, 1
        %s4011 = smul.addr %s4010, 32
        %s4012 = smul.addr %s4011, 8
        %s4013 = scalar_lea.vmem %s3, %s4012
      $region52: #{double_conv_forward.3} parent=47 // pred_fallthru
        _
      // Predicated region
      $region53: #{double_conv_forward.3} parent=47 // pred_check
        %p4014 = pneg %p135
      $region54: #{double_conv_forward.3} parent=47 // pred_check_branch
        %4016 = sbr.rel (%p4014) target = $region56
      $region55: #{double_conv_forward.3} parent=47 // pred_region
        %p4017 = scmp.lt.s32.totalorder %s18, 1
        %s4018 = scalar_select %p4017, %s18, 1
        %s4019 = scalar_lea.vmem %s4, %s4018
      $region56: #{double_conv_forward.3} parent=47 // pred_fallthru
        _
      // Predicated region
      $region57: #{double_conv_forward.3} parent=47 // pred_check
        %p4020 = pneg %p161
      $region58: #{double_conv_forward.3} parent=47 // pred_check_branch
        %4022 = sbr.rel (%p4020) target = $region60
      $region59: #{double_conv_forward.3} parent=47 // pred_region
        %p4023 = scmp.lt.s32.totalorder %s18, 1
        %s4024 = scalar_select %p4023, %s18, 1
        %s4025 = scalar_lea.vmem %s5, %s4024
      $region60: #{double_conv_forward.3} parent=47 // pred_fallthru
        _
    $region48: #{double_conv_forward.3} parent=5 // pred_fallthru
      _
  $region6: #{double_conv_forward.3} parent=0 // loop_footer
    %s16 = sadd.s32 1, %s12
  $region7: #{double_conv_forward.3} parent=0 // loop_footer_branch
    %11 = sbr.rel target = $region3
  $region8: #{double_conv_forward.3} parent=0 // loop_exit
    _

</llo_original>
